<compile_context>
chip_gen: v5e
topology: v5e:2x2
jax: 0.10.0
libtpu: 0.0.40
codegen_flags: <defaults>
</compile_context>

<pallas_src>
import math
from functools import partial

import jax
import jax.numpy as jnp
from jax.experimental import pallas as pl
from jax.experimental.pallas import tpu as pltpu

# ----------------------------- config ---------------------------------------
INPUT_DIM = 4
HIDDEN_DIM = 32
LSTM_LAYERS = 2
TRANSFORMER_LAYERS = 2
NHEAD = 4
DIM_FF = 2048          # nn.TransformerEncoderLayer default
LN_EPS = 1e-5
BATCH = 2
SEQ = 8


# ----------------------------- fused kernel ---------------------------------
def _fused_kernel(
    # ---- VMEM inputs ----
    x_ref,                                   # (S*B, Din) f32, rows ordered (s, b)
    bias_ref,                                # (NH, S*B, S*B) f32 additive attn mask
    l1_wih_ref, l1_whh_ref, l1_b_ref,        # (Din, 4H), (H, 4H), (1, 4H)
    l2_wih_ref, l2_whh_ref, l2_b_ref,        # (H, 4H),  (H, 4H), (1, 4H)
    e0_wqkv_ref, e0_bqkv_ref, e0_wo_ref, e0_vec_ref, e0_b1_ref,
    e1_wqkv_ref, e1_bqkv_ref, e1_wo_ref, e1_vec_ref, e1_b1_ref,
    head_w_ref, head_b_ref,                  # (H, 1), (1, 1)
    # ---- HBM inputs (manually prefetched bf16 FFN weights) ----
    e0_w1_hbm, e0_w2_hbm, e1_w1_hbm, e1_w2_hbm,   # (H, DFF), (DFF, H)
    # ---- output ----
    out_ref,                                 # (B, 1) f32
    # ---- scratch ----
    act_ref,                                 # (S*B, H) f32: LSTM layer-2 outputs
    e0_w1_v, e0_w2_v, e1_w1_v, e1_w2_v,      # VMEM bf16 FFN-weight buffers
    dma_sem,                                 # DMA semaphores, shape (4,)
    *, batch, seq, nhead,
):
    B, S, NH = batch, seq, nhead
    H = l2_whh_ref.shape[0]
    HD = H // NH
    f32 = jnp.float32

    # Encoder-0's FFN weights are needed first: start them alone so they do
    # not contend with encoder-1's copies for HBM bandwidth.
    e0_copies = (pltpu.make_async_copy(e0_w1_hbm, e0_w1_v, dma_sem.at[0]),
                 pltpu.make_async_copy(e0_w2_hbm, e0_w2_v, dma_sem.at[1]))
    e1_copies = (pltpu.make_async_copy(e1_w1_hbm, e1_w1_v, dma_sem.at[2]),
                 pltpu.make_async_copy(e1_w2_hbm, e1_w2_v, dma_sem.at[3]))
    for c in e0_copies:
        c.start()

    # ---------------- LSTM: two layers, recurrences interleaved -------------
    # Layer-1 input projection hoisted out of the recurrence (one matmul for
    # all timesteps, off the critical path).
    xw1 = (jnp.dot(x_ref[...], l1_wih_ref[...], preferred_element_type=f32)
           + l1_b_ref[...])                                  # (S*B, 4H), rows (s, b)
    w1hh = l1_whh_ref[...]
    w2ih = l2_wih_ref[...]
    w2hh = l2_whh_ref[...]
    b2 = l2_b_ref[...]

    def lstm_cell(gates, c_prev):
        # gates: (B, 4H) = one vreg; sigmoid over the full tile, tanh only on g.
        sig = jax.nn.sigmoid(gates)
        i_g = sig[:, 0:H]
        f_g = sig[:, H:2 * H]
        o_g = sig[:, 3 * H:4 * H]
        g_g = jnp.tanh(gates[:, 2 * H:3 * H])
        c = f_g * c_prev + i_g * g_g
        h = o_g * jnp.tanh(c)
        return h, c

    h1 = jnp.zeros((B, H), f32)
    c1 = jnp.zeros((B, H), f32)
    h2 = jnp.zeros((B, H), f32)
    c2 = jnp.zeros((B, H), f32)
    for t in range(S):                                       # fully unrolled
        # layer-1 step t (contiguous per-step rows thanks to (s, b) ordering)
        g1 = (xw1[t * B:(t + 1) * B, :]
              + jnp.dot(h1, w1hh, preferred_element_type=f32))
        h1, c1 = lstm_cell(g1, c1)
        # layer-2 step t: depends on the h1 just produced; the h2@W2hh dot is
        # independent of layer-1 step t and overlaps it.  Layer-1 step t+1 is
        # independent of this whole block, so the two chains interleave.
        g2 = (jnp.dot(h1, w2ih, preferred_element_type=f32)
              + jnp.dot(h2, w2hh, preferred_element_type=f32) + b2)
        h2, c2 = lstm_cell(g2, c2)
        act_ref[t * B:(t + 1) * B, :] = h2                   # B contiguous rows

    # Encoder-1's FFN weights: prefetch now, overlapping all of encoder 0.
    for c in e1_copies:
        c.start()

    acts = act_ref[...]                                      # (S*B, H)
    attn_bias = bias_ref[...]                                # (NH, S*B, S*B)

    # ------------------------- transformer encoder --------------------------
    def layer_norm(x, gamma, beta):
        mu = jnp.mean(x, axis=-1, keepdims=True)
        d = x - mu
        var = jnp.mean(d * d, axis=-1, keepdims=True)
        return d * jax.lax.rsqrt(var + LN_EPS) * gamma + beta

    def encoder_layer(x, wqkv_ref, bqkv_ref, wo_ref, vec_ref, b1_ref,
                      w1_v, w2_v, w1_copy, w2_copy):
        vec = vec_ref[...]
        bo, ga1, be1 = vec[0:1], vec[1:2], vec[2:3]
        ga2, be2, b2f = vec[3:4], vec[4:5], vec[5:6]

        # Fused Q/K/V projection: one (S*B, H) x (H, 3H) MXU pass.
        qkv = (jnp.dot(x, wqkv_ref[...], preferred_element_type=f32)
               + bqkv_ref[...])                              # (S*B, 3H)

        # Head split: lane slices + near-free leading-axis stacks.
        qh = jnp.stack([qkv[:, n * HD:(n + 1) * HD]
                        for n in range(NH)], axis=0)          # (NH, S*B, HD)
        kh = jnp.stack([qkv[:, H + n * HD:H + (n + 1) * HD]
                        for n in range(NH)], axis=0)
        vh = jnp.stack([qkv[:, 2 * H + n * HD:2 * H + (n + 1) * HD]
                        for n in range(NH)], axis=0)

        # Attention over the sequence axis per batch row.  Rows are ordered
        # (s, b); the precomputed additive bias (-1e30 on cross-batch pairs)
        # restricts each query row to keys of the same batch element.
        scale = 1.0 / math.sqrt(HD)
        s = (jnp.einsum('nqd,nkd->nqk', qh, kh,
                        preferred_element_type=f32) * scale + attn_bias)
        s = s - jnp.max(s, axis=-1, keepdims=True)
        p = jnp.exp(s)
        p = p * pl.reciprocal(jnp.sum(p, axis=-1, keepdims=True), approx=True)
        oh = jnp.einsum('nqk,nkd->nqd', p, vh,
                        preferred_element_type=f32)           # (NH, S*B, HD)

        attn = jnp.concatenate([oh[n] for n in range(NH)], axis=1)   # (S*B, H)
        attn = jnp.dot(attn, wo_ref[...], preferred_element_type=f32) + bo

        r = layer_norm(x + attn, ga1, be1)

        # FFN: bf16 operands on the MXU, f32 accumulation / element-wise.
        w1_copy.wait()
        f = (jnp.dot(r.astype(jnp.bfloat16), w1_v[...],
                     preferred_element_type=f32) + b1_ref[...])
        f = jnp.maximum(f, 0.0)
        w2_copy.wait()                   # w2's DMA overlaps the first FFN dot
        f = (jnp.dot(f.astype(jnp.bfloat16), w2_v[...],
                     preferred_element_type=f32) + b2f)
        return layer_norm(r + f, ga2, be2)

    y = encoder_layer(acts, e0_wqkv_ref, e0_bqkv_ref, e0_wo_ref, e0_vec_ref,
                      e0_b1_ref, e0_w1_v, e0_w2_v, *e0_copies)
    y = encoder_layer(y, e1_wqkv_ref, e1_bqkv_ref, e1_wo_ref, e1_vec_ref,
                      e1_b1_ref, e1_w1_v, e1_w2_v, *e1_copies)

    # transformer_out[-1, :, :]: with (s, b) row order this is the last B rows.
    y_last = y[(S - 1) * B:S * B, :]                          # (B, H)
    out_ref[...] = (jnp.dot(y_last, head_w_ref[...],
                            preferred_element_type=f32) + head_b_ref[...])


# ----------------------------- wrapper ---------------------------------------
def time_series_model(x_bsd, params):
    """x_bsd: (B, S, input_dim) float32 -> (B, 1) float32 (eval-mode forward)."""
    B, S, D = x_bsd.shape
    # Seq-major (s, b) row order: per-timestep rows are contiguous inside the
    # kernel and the final last-timestep selection is a contiguous row slice.
    x2 = jnp.transpose(x_bsd, (1, 0, 2)).reshape(S * B, D).astype(jnp.float32)

    # Additive attention mask (same for both layers): row (s, b) may only
    # attend to columns (t, b).  Shape-derived constant, folded by XLA.
    rb = jnp.arange(S * B) % B
    bias2d = jnp.where(rb[:, None] == rb[None, :], 0.0, -1e30)
    attn_bias = jnp.broadcast_to(bias2d, (NHEAD, S * B, S * B)).astype(jnp.float32)

    (l1_wih, l1_whh, l1_b), (l2_wih, l2_whh, l2_b) = params["lstm"]
    e0, e1 = params["encoder"]
    head_w, head_b = params["linear"]

    vmem_inputs = [
        x2, attn_bias,
        l1_wih, l1_whh, l1_b,
        l2_wih, l2_whh, l2_b,
        e0["wqkv"], e0["bqkv"], e0["wo"], e0["vec"], e0["b1"],
        e1["wqkv"], e1["bqkv"], e1["wo"], e1["vec"], e1["b1"],
        head_w, head_b,
    ]
    hbm_inputs = [e0["w1"], e0["w2"], e1["w1"], e1["w2"]]

    in_specs = ([pl.BlockSpec(memory_space=pltpu.MemorySpace.VMEM)
                 for _ in vmem_inputs]
                + [pl.BlockSpec(memory_space=pl.ANY) for _ in hbm_inputs])

    return pl.pallas_call(
        partial(_fused_kernel, batch=B, seq=S, nhead=NHEAD),
        out_shape=jax.ShapeDtypeStruct((B, 1), jnp.float32),
        in_specs=in_specs,
        out_specs=pl.BlockSpec(memory_space=pltpu.MemorySpace.VMEM),
        scratch_shapes=[
            pltpu.VMEM((S * B, HIDDEN_DIM), jnp.float32),     # LSTM-2 output slab
            pltpu.VMEM((HIDDEN_DIM, DIM_FF), jnp.bfloat16),
            pltpu.VMEM((DIM_FF, HIDDEN_DIM), jnp.bfloat16),
            pltpu.VMEM((HIDDEN_DIM, DIM_FF), jnp.bfloat16),
            pltpu.VMEM((DIM_FF, HIDDEN_DIM), jnp.bfloat16),
            pltpu.SemaphoreType.DMA((4,)),
        ],
    )(*vmem_inputs, *hbm_inputs)


# ----------------------------- parameter init --------------------------------
def _uniform(key, shape, bound):
    return jax.random.uniform(key, shape, jnp.float32, -bound, bound)


def init_params(key):
    params = {}
    keys = iter(jax.random.split(key, 64))
    H = HIDDEN_DIM

    # LSTM layers (PyTorch: weight_ih (4H, Din), weight_hh (4H, H), gates i,f,g,o)
    lstm = []
    for layer in range(LSTM_LAYERS):
        din = INPUT_DIM if layer == 0 else H
        k = 1.0 / math.sqrt(H)
        wih = _uniform(next(keys), (4 * H, din), k)
        whh = _uniform(next(keys), (4 * H, H), k)
        bih = _uniform(next(keys), (4 * H,), k)
        bhh = _uniform(next(keys), (4 * H,), k)
        lstm.append((wih.T, whh.T, (bih + bhh).reshape(1, -1)))
    params["lstm"] = lstm

    # transformer encoder layers (post-LN, relu FFN, dim_ff=2048 — PyTorch defaults)
    enc = []
    for layer in range(TRANSFORMER_LAYERS):
        k_in = 1.0 / math.sqrt(H)
        k_ff = 1.0 / math.sqrt(DIM_FF)
        win = _uniform(next(keys), (3 * H, H), k_in)     # in_proj_weight [q;k;v]
        bin_ = _uniform(next(keys), (3 * H,), k_in)      # in_proj_bias
        wout = _uniform(next(keys), (H, H), k_in)
        bout = _uniform(next(keys), (H,), k_in)
        w1 = _uniform(next(keys), (DIM_FF, H), k_in)
        b1 = _uniform(next(keys), (DIM_FF,), k_in)
        w2 = _uniform(next(keys), (H, DIM_FF), k_ff)
        b2 = _uniform(next(keys), (H,), k_ff)
        g1 = jnp.ones((H,), jnp.float32)
        be1 = jnp.zeros((H,), jnp.float32)
        g2 = jnp.ones((H,), jnp.float32)
        be2 = jnp.zeros((H,), jnp.float32)

        enc.append(dict(
            wqkv=win.T,                                   # (H, 3H), cols [q|k|v]
            bqkv=bin_.reshape(1, 3 * H),
            wo=wout.T,                                    # (H, H)
            vec=jnp.stack([bout, g1, be1, g2, be2, b2], axis=0),   # (6, H)
            b1=b1.reshape(1, DIM_FF),
            w1=w1.T.astype(jnp.bfloat16),                 # (H, DFF)  -> HBM
            w2=w2.T.astype(jnp.bfloat16),                 # (DFF, H)  -> HBM
        ))
    params["encoder"] = enc

    # final linear (1, H) + (1,)
    k = 1.0 / math.sqrt(H)
    wl = _uniform(next(keys), (1, H), k)
    bl = _uniform(next(keys), (1,), k)
    params["linear"] = (wl.T, bl.reshape(1, 1))
    return params


# ----------------------------- main ------------------------------------------
if __name__ == "__main__":
    key = jax.random.PRNGKey(0)
    k_params, k_x = jax.random.split(key)
    params = init_params(k_params)
    x = jax.random.normal(k_x, (BATCH, SEQ, INPUT_DIM), dtype=jnp.float32)

    out = jax.jit(time_series_model)(x, params)
    out = jax.block_until_ready(out)
    assert out.shape == (BATCH, 1), out.shape
    print("KERNEL_OK")
</pallas_src>

<mosaic_0001>
module attributes {stable_mosaic.version = 11 : i64} {
  func.func @_fused_kernel(%arg0: memref<16x4xf32, #tpu.memory_space<vmem>>, %arg1: memref<4x16x16xf32, #tpu.memory_space<vmem>>, %arg2: memref<4x128xf32, #tpu.memory_space<vmem>>, %arg3: memref<32x128xf32, #tpu.memory_space<vmem>>, %arg4: memref<1x128xf32, #tpu.memory_space<vmem>>, %arg5: memref<32x128xf32, #tpu.memory_space<vmem>>, %arg6: memref<32x128xf32, #tpu.memory_space<vmem>>, %arg7: memref<1x128xf32, #tpu.memory_space<vmem>>, %arg8: memref<32x96xf32, #tpu.memory_space<vmem>>, %arg9: memref<1x96xf32, #tpu.memory_space<vmem>>, %arg10: memref<32x32xf32, #tpu.memory_space<vmem>>, %arg11: memref<6x32xf32, #tpu.memory_space<vmem>>, %arg12: memref<1x2048xf32, #tpu.memory_space<vmem>>, %arg13: memref<32x96xf32, #tpu.memory_space<vmem>>, %arg14: memref<1x96xf32, #tpu.memory_space<vmem>>, %arg15: memref<32x32xf32, #tpu.memory_space<vmem>>, %arg16: memref<6x32xf32, #tpu.memory_space<vmem>>, %arg17: memref<1x2048xf32, #tpu.memory_space<vmem>>, %arg18: memref<32x1xf32, #tpu.memory_space<vmem>>, %arg19: memref<1x1xf32, #tpu.memory_space<vmem>>, %arg20: memref<32x2048xbf16, #tpu.memory_space<any>>, %arg21: memref<2048x32xbf16, #tpu.memory_space<any>>, %arg22: memref<32x2048xbf16, #tpu.memory_space<any>>, %arg23: memref<2048x32xbf16, #tpu.memory_space<any>>, %arg24: memref<2x1xf32, #tpu.memory_space<vmem>>, %arg25: memref<16x32xf32, #tpu.memory_space<vmem>>, %arg26: memref<32x2048xbf16, #tpu.memory_space<vmem>>, %arg27: memref<2048x32xbf16, #tpu.memory_space<vmem>>, %arg28: memref<32x2048xbf16, #tpu.memory_space<vmem>>, %arg29: memref<2048x32xbf16, #tpu.memory_space<vmem>>, %arg30: memref<4x!tpu.dma_semaphore, #tpu.memory_space<semaphore_mem>>) attributes {dimension_semantics = [], scalar_prefetch = 0 : i64, scratch_operands = 6 : i64, tpu.core_type = #tpu.core_type<tc>} {
    %c0_i32 = arith.constant 0 : i32
    %0 = tpu.memref_slice %arg30[%c0_i32] : memref<4x!tpu.dma_semaphore, #tpu.memory_space<semaphore_mem>> -> memref<1x!tpu.dma_semaphore, #tpu.memory_space<semaphore_mem>>
    %1 = tpu.memref_squeeze %0 : memref<1x!tpu.dma_semaphore, #tpu.memory_space<semaphore_mem>> -> memref<!tpu.dma_semaphore, #tpu.memory_space<semaphore_mem>>
    tpu.enqueue_dma source(%arg20 : memref<32x2048xbf16, #tpu.memory_space<any>>) target(%arg26 : memref<32x2048xbf16, #tpu.memory_space<vmem>>) target_semaphore(%1 : memref<!tpu.dma_semaphore, #tpu.memory_space<semaphore_mem>>)
    %c1_i32 = arith.constant 1 : i32
    %2 = tpu.memref_slice %arg30[%c1_i32] : memref<4x!tpu.dma_semaphore, #tpu.memory_space<semaphore_mem>> -> memref<1x!tpu.dma_semaphore, #tpu.memory_space<semaphore_mem>>
    %3 = tpu.memref_squeeze %2 : memref<1x!tpu.dma_semaphore, #tpu.memory_space<semaphore_mem>> -> memref<!tpu.dma_semaphore, #tpu.memory_space<semaphore_mem>>
    tpu.enqueue_dma source(%arg21 : memref<2048x32xbf16, #tpu.memory_space<any>>) target(%arg27 : memref<2048x32xbf16, #tpu.memory_space<vmem>>) target_semaphore(%3 : memref<!tpu.dma_semaphore, #tpu.memory_space<semaphore_mem>>)
    %c0 = arith.constant 0 : index
    %c0_0 = arith.constant 0 : index
    %4 = vector.load %arg0[%c0, %c0_0] : memref<16x4xf32, #tpu.memory_space<vmem>>, vector<16x4xf32>
    %c0_1 = arith.constant 0 : index
    %c0_2 = arith.constant 0 : index
    %5 = vector.load %arg2[%c0_1, %c0_2] : memref<4x128xf32, #tpu.memory_space<vmem>>, vector<4x128xf32>
    %cst = arith.constant dense<0.000000e+00> : vector<16x128xf32>
    %6 = tpu.matmul %4, %5, %cst {dimension_numbers = #tpu.dot_dimension_numbers<[1], [0], [0], [1], [0, 0, 1, 1], [], []>} : vector<16x4xf32>, vector<4x128xf32>, vector<16x128xf32> -> vector<16x128xf32>
    %c0_3 = arith.constant 0 : index
    %c0_4 = arith.constant 0 : index
    %7 = vector.load %arg4[%c0_3, %c0_4] : memref<1x128xf32, #tpu.memory_space<vmem>>, vector<1x128xf32>
    %8 = vector.broadcast %7 : vector<1x128xf32> to vector<16x128xf32>
    %9 = arith.addf %6, %8 : vector<16x128xf32>
    %c0_5 = arith.constant 0 : index
    %c0_6 = arith.constant 0 : index
    %10 = vector.load %arg3[%c0_5, %c0_6] : memref<32x128xf32, #tpu.memory_space<vmem>>, vector<32x128xf32>
    %c0_7 = arith.constant 0 : index
    %c0_8 = arith.constant 0 : index
    %11 = vector.load %arg5[%c0_7, %c0_8] : memref<32x128xf32, #tpu.memory_space<vmem>>, vector<32x128xf32>
    %c0_9 = arith.constant 0 : index
    %c0_10 = arith.constant 0 : index
    %12 = vector.load %arg6[%c0_9, %c0_10] : memref<32x128xf32, #tpu.memory_space<vmem>>, vector<32x128xf32>
    %c0_11 = arith.constant 0 : index
    %c0_12 = arith.constant 0 : index
    %13 = vector.load %arg7[%c0_11, %c0_12] : memref<1x128xf32, #tpu.memory_space<vmem>>, vector<1x128xf32>
    %cst_13 = arith.constant 0.000000e+00 : f32
    %14 = vector.broadcast %cst_13 : f32 to vector<2x32xf32>
    %cst_14 = arith.constant 0.000000e+00 : f32
    %15 = vector.broadcast %cst_14 : f32 to vector<2x32xf32>
    %cst_15 = arith.constant 0.000000e+00 : f32
    %16 = vector.broadcast %cst_15 : f32 to vector<2x32xf32>
    %cst_16 = arith.constant 0.000000e+00 : f32
    %17 = vector.broadcast %cst_16 : f32 to vector<2x32xf32>
    %18 = vector.extract_strided_slice %9 {offsets = [0, 0], sizes = [2, 128], strides = [1, 1]} : vector<16x128xf32> to vector<2x128xf32>
    %cst_17 = arith.constant dense<0.000000e+00> : vector<2x128xf32>
    %19 = tpu.matmul %14, %10, %cst_17 {dimension_numbers = #tpu.dot_dimension_numbers<[1], [0], [0], [1], [0, 0, 1, 1], [], []>} : vector<2x32xf32>, vector<32x128xf32>, vector<2x128xf32> -> vector<2x128xf32>
    %20 = arith.addf %18, %19 : vector<2x128xf32>
    %21 = arith.negf %20 : vector<2x128xf32>
    %22 = math.exp %21 : vector<2x128xf32>
    %cst_18 = arith.constant 1.000000e+00 : f32
    %23 = vector.broadcast %cst_18 : f32 to vector<2x128xf32>
    %24 = arith.addf %23, %22 : vector<2x128xf32>
    %25 = arith.divf %23, %24 : vector<2x128xf32>
    %26 = vector.extract_strided_slice %25 {offsets = [0, 0], sizes = [2, 32], strides = [1, 1]} : vector<2x128xf32> to vector<2x32xf32>
    %27 = vector.extract_strided_slice %25 {offsets = [0, 32], sizes = [2, 32], strides = [1, 1]} : vector<2x128xf32> to vector<2x32xf32>
    %28 = vector.extract_strided_slice %25 {offsets = [0, 96], sizes = [2, 32], strides = [1, 1]} : vector<2x128xf32> to vector<2x32xf32>
    %29 = vector.extract_strided_slice %20 {offsets = [0, 64], sizes = [2, 32], strides = [1, 1]} : vector<2x128xf32> to vector<2x32xf32>
    %30 = math.tanh %29 : vector<2x32xf32>
    %31 = arith.mulf %27, %15 : vector<2x32xf32>
    %32 = arith.mulf %26, %30 : vector<2x32xf32>
    %33 = arith.addf %31, %32 : vector<2x32xf32>
    %34 = math.tanh %33 : vector<2x32xf32>
    %35 = arith.mulf %28, %34 : vector<2x32xf32>
    %cst_19 = arith.constant dense<0.000000e+00> : vector<2x128xf32>
    %36 = tpu.matmul %35, %11, %cst_19 {dimension_numbers = #tpu.dot_dimension_numbers<[1], [0], [0], [1], [0, 0, 1, 1], [], []>} : vector<2x32xf32>, vector<32x128xf32>, vector<2x128xf32> -> vector<2x128xf32>
    %cst_20 = arith.constant dense<0.000000e+00> : vector<2x128xf32>
    %37 = tpu.matmul %16, %12, %cst_20 {dimension_numbers = #tpu.dot_dimension_numbers<[1], [0], [0], [1], [0, 0, 1, 1], [], []>} : vector<2x32xf32>, vector<32x128xf32>, vector<2x128xf32> -> vector<2x128xf32>
    %38 = arith.addf %36, %37 : vector<2x128xf32>
    %39 = vector.broadcast %13 : vector<1x128xf32> to vector<2x128xf32>
    %40 = arith.addf %38, %39 : vector<2x128xf32>
    %41 = arith.negf %40 : vector<2x128xf32>
    %42 = math.exp %41 : vector<2x128xf32>
    %cst_21 = arith.constant 1.000000e+00 : f32
    %43 = vector.broadcast %cst_21 : f32 to vector<2x128xf32>
    %44 = arith.addf %43, %42 : vector<2x128xf32>
    %45 = arith.divf %43, %44 : vector<2x128xf32>
    %46 = vector.extract_strided_slice %45 {offsets = [0, 0], sizes = [2, 32], strides = [1, 1]} : vector<2x128xf32> to vector<2x32xf32>
    %47 = vector.extract_strided_slice %45 {offsets = [0, 32], sizes = [2, 32], strides = [1, 1]} : vector<2x128xf32> to vector<2x32xf32>
    %48 = vector.extract_strided_slice %45 {offsets = [0, 96], sizes = [2, 32], strides = [1, 1]} : vector<2x128xf32> to vector<2x32xf32>
    %49 = vector.extract_strided_slice %40 {offsets = [0, 64], sizes = [2, 32], strides = [1, 1]} : vector<2x128xf32> to vector<2x32xf32>
    %50 = math.tanh %49 : vector<2x32xf32>
    %51 = arith.mulf %47, %17 : vector<2x32xf32>
    %52 = arith.mulf %46, %50 : vector<2x32xf32>
    %53 = arith.addf %51, %52 : vector<2x32xf32>
    %54 = math.tanh %53 : vector<2x32xf32>
    %55 = arith.mulf %48, %54 : vector<2x32xf32>
    %c0_22 = arith.constant 0 : index
    %c0_23 = arith.constant 0 : index
    %56 = vector.load %arg25[%c0_22, %c0_23] : memref<16x32xf32, #tpu.memory_space<vmem>>, vector<2x32xf32>
    tpu.vector_store %arg25[%c0_22, %c0_23], %55 {strides = array<i32>} : memref<16x32xf32, #tpu.memory_space<vmem>>, vector<2x32xf32>,
    %57 = vector.extract_strided_slice %9 {offsets = [2, 0], sizes = [2, 128], strides = [1, 1]} : vector<16x128xf32> to vector<2x128xf32>
    %cst_24 = arith.constant dense<0.000000e+00> : vector<2x128xf32>
    %58 = tpu.matmul %35, %10, %cst_24 {dimension_numbers = #tpu.dot_dimension_numbers<[1], [0], [0], [1], [0, 0, 1, 1], [], []>} : vector<2x32xf32>, vector<32x128xf32>, vector<2x128xf32> -> vector<2x128xf32>
    %59 = arith.addf %57, %58 : vector<2x128xf32>
    %60 = arith.negf %59 : vector<2x128xf32>
    %61 = math.exp %60 : vector<2x128xf32>
    %cst_25 = arith.constant 1.000000e+00 : f32
    %62 = vector.broadcast %cst_25 : f32 to vector<2x128xf32>
    %63 = arith.addf %62, %61 : vector<2x128xf32>
    %64 = arith.divf %62, %63 : vector<2x128xf32>
    %65 = vector.extract_strided_slice %64 {offsets = [0, 0], sizes = [2, 32], strides = [1, 1]} : vector<2x128xf32> to vector<2x32xf32>
    %66 = vector.extract_strided_slice %64 {offsets = [0, 32], sizes = [2, 32], strides = [1, 1]} : vector<2x128xf32> to vector<2x32xf32>
    %67 = vector.extract_strided_slice %64 {offsets = [0, 96], sizes = [2, 32], strides = [1, 1]} : vector<2x128xf32> to vector<2x32xf32>
    %68 = vector.extract_strided_slice %59 {offsets = [0, 64], sizes = [2, 32], strides = [1, 1]} : vector<2x128xf32> to vector<2x32xf32>
    %69 = math.tanh %68 : vector<2x32xf32>
    %70 = arith.mulf %66, %33 : vector<2x32xf32>
    %71 = arith.mulf %65, %69 : vector<2x32xf32>
    %72 = arith.addf %70, %71 : vector<2x32xf32>
    %73 = math.tanh %72 : vector<2x32xf32>
    %74 = arith.mulf %67, %73 : vector<2x32xf32>
    %cst_26 = arith.constant dense<0.000000e+00> : vector<2x128xf32>
    %75 = tpu.matmul %74, %11, %cst_26 {dimension_numbers = #tpu.dot_dimension_numbers<[1], [0], [0], [1], [0, 0, 1, 1], [], []>} : vector<2x32xf32>, vector<32x128xf32>, vector<2x128xf32> -> vector<2x128xf32>
    %cst_27 = arith.constant dense<0.000000e+00> : vector<2x128xf32>
    %76 = tpu.matmul %55, %12, %cst_27 {dimension_numbers = #tpu.dot_dimension_numbers<[1], [0], [0], [1], [0, 0, 1, 1], [], []>} : vector<2x32xf32>, vector<32x128xf32>, vector<2x128xf32> -> vector<2x128xf32>
    %77 = arith.addf %75, %76 : vector<2x128xf32>
    %78 = vector.broadcast %13 : vector<1x128xf32> to vector<2x128xf32>
    %79 = arith.addf %77, %78 : vector<2x128xf32>
    %80 = arith.negf %79 : vector<2x128xf32>
    %81 = math.exp %80 : vector<2x128xf32>
    %cst_28 = arith.constant 1.000000e+00 : f32
    %82 = vector.broadcast %cst_28 : f32 to vector<2x128xf32>
    %83 = arith.addf %82, %81 : vector<2x128xf32>
    %84 = arith.divf %82, %83 : vector<2x128xf32>
    %85 = vector.extract_strided_slice %84 {offsets = [0, 0], sizes = [2, 32], strides = [1, 1]} : vector<2x128xf32> to vector<2x32xf32>
    %86 = vector.extract_strided_slice %84 {offsets = [0, 32], sizes = [2, 32], strides = [1, 1]} : vector<2x128xf32> to vector<2x32xf32>
    %87 = vector.extract_strided_slice %84 {offsets = [0, 96], sizes = [2, 32], strides = [1, 1]} : vector<2x128xf32> to vector<2x32xf32>
    %88 = vector.extract_strided_slice %79 {offsets = [0, 64], sizes = [2, 32], strides = [1, 1]} : vector<2x128xf32> to vector<2x32xf32>
    %89 = math.tanh %88 : vector<2x32xf32>
    %90 = arith.mulf %86, %53 : vector<2x32xf32>
    %91 = arith.mulf %85, %89 : vector<2x32xf32>
    %92 = arith.addf %90, %91 : vector<2x32xf32>
    %93 = math.tanh %92 : vector<2x32xf32>
    %94 = arith.mulf %87, %93 : vector<2x32xf32>
    %c2 = arith.constant 2 : index
    %c0_29 = arith.constant 0 : index
    %95 = vector.load %arg25[%c2, %c0_29] : memref<16x32xf32, #tpu.memory_space<vmem>>, vector<2x32xf32>
    tpu.vector_store %arg25[%c2, %c0_29], %94 {strides = array<i32>} : memref<16x32xf32, #tpu.memory_space<vmem>>, vector<2x32xf32>,
    %96 = vector.extract_strided_slice %9 {offsets = [4, 0], sizes = [2, 128], strides = [1, 1]} : vector<16x128xf32> to vector<2x128xf32>
    %cst_30 = arith.constant dense<0.000000e+00> : vector<2x128xf32>
    %97 = tpu.matmul %74, %10, %cst_30 {dimension_numbers = #tpu.dot_dimension_numbers<[1], [0], [0], [1], [0, 0, 1, 1], [], []>} : vector<2x32xf32>, vector<32x128xf32>, vector<2x128xf32> -> vector<2x128xf32>
    %98 = arith.addf %96, %97 : vector<2x128xf32>
    %99 = arith.negf %98 : vector<2x128xf32>
    %100 = math.exp %99 : vector<2x128xf32>
    %cst_31 = arith.constant 1.000000e+00 : f32
    %101 = vector.broadcast %cst_31 : f32 to vector<2x128xf32>
    %102 = arith.addf %101, %100 : vector<2x128xf32>
    %103 = arith.divf %101, %102 : vector<2x128xf32>
    %104 = vector.extract_strided_slice %103 {offsets = [0, 0], sizes = [2, 32], strides = [1, 1]} : vector<2x128xf32> to vector<2x32xf32>
    %105 = vector.extract_strided_slice %103 {offsets = [0, 32], sizes = [2, 32], strides = [1, 1]} : vector<2x128xf32> to vector<2x32xf32>
    %106 = vector.extract_strided_slice %103 {offsets = [0, 96], sizes = [2, 32], strides = [1, 1]} : vector<2x128xf32> to vector<2x32xf32>
    %107 = vector.extract_strided_slice %98 {offsets = [0, 64], sizes = [2, 32], strides = [1, 1]} : vector<2x128xf32> to vector<2x32xf32>
    %108 = math.tanh %107 : vector<2x32xf32>
    %109 = arith.mulf %105, %72 : vector<2x32xf32>
    %110 = arith.mulf %104, %108 : vector<2x32xf32>
    %111 = arith.addf %109, %110 : vector<2x32xf32>
    %112 = math.tanh %111 : vector<2x32xf32>
    %113 = arith.mulf %106, %112 : vector<2x32xf32>
    %cst_32 = arith.constant dense<0.000000e+00> : vector<2x128xf32>
    %114 = tpu.matmul %113, %11, %cst_32 {dimension_numbers = #tpu.dot_dimension_numbers<[1], [0], [0], [1], [0, 0, 1, 1], [], []>} : vector<2x32xf32>, vector<32x128xf32>, vector<2x128xf32> -> vector<2x128xf32>
    %cst_33 = arith.constant dense<0.000000e+00> : vector<2x128xf32>
    %115 = tpu.matmul %94, %12, %cst_33 {dimension_numbers = #tpu.dot_dimension_numbers<[1], [0], [0], [1], [0, 0, 1, 1], [], []>} : vector<2x32xf32>, vector<32x128xf32>, vector<2x128xf32> -> vector<2x128xf32>
    %116 = arith.addf %114, %115 : vector<2x128xf32>
    %117 = vector.broadcast %13 : vector<1x128xf32> to vector<2x128xf32>
    %118 = arith.addf %116, %117 : vector<2x128xf32>
    %119 = arith.negf %118 : vector<2x128xf32>
    %120 = math.exp %119 : vector<2x128xf32>
    %cst_34 = arith.constant 1.000000e+00 : f32
    %121 = vector.broadcast %cst_34 : f32 to vector<2x128xf32>
    %122 = arith.addf %121, %120 : vector<2x128xf32>
    %123 = arith.divf %121, %122 : vector<2x128xf32>
    %124 = vector.extract_strided_slice %123 {offsets = [0, 0], sizes = [2, 32], strides = [1, 1]} : vector<2x128xf32> to vector<2x32xf32>
    %125 = vector.extract_strided_slice %123 {offsets = [0, 32], sizes = [2, 32], strides = [1, 1]} : vector<2x128xf32> to vector<2x32xf32>
    %126 = vector.extract_strided_slice %123 {offsets = [0, 96], sizes = [2, 32], strides = [1, 1]} : vector<2x128xf32> to vector<2x32xf32>
    %127 = vector.extract_strided_slice %118 {offsets = [0, 64], sizes = [2, 32], strides = [1, 1]} : vector<2x128xf32> to vector<2x32xf32>
    %128 = math.tanh %127 : vector<2x32xf32>
    %129 = arith.mulf %125, %92 : vector<2x32xf32>
    %130 = arith.mulf %124, %128 : vector<2x32xf32>
    %131 = arith.addf %129, %130 : vector<2x32xf32>
    %132 = math.tanh %131 : vector<2x32xf32>
    %133 = arith.mulf %126, %132 : vector<2x32xf32>
    %c4 = arith.constant 4 : index
    %c0_35 = arith.constant 0 : index
    %134 = vector.load %arg25[%c4, %c0_35] : memref<16x32xf32, #tpu.memory_space<vmem>>, vector<2x32xf32>
    tpu.vector_store %arg25[%c4, %c0_35], %133 {strides = array<i32>} : memref<16x32xf32, #tpu.memory_space<vmem>>, vector<2x32xf32>,
    %135 = vector.extract_strided_slice %9 {offsets = [6, 0], sizes = [2, 128], strides = [1, 1]} : vector<16x128xf32> to vector<2x128xf32>
    %cst_36 = arith.constant dense<0.000000e+00> : vector<2x128xf32>
    %136 = tpu.matmul %113, %10, %cst_36 {dimension_numbers = #tpu.dot_dimension_numbers<[1], [0], [0], [1], [0, 0, 1, 1], [], []>} : vector<2x32xf32>, vector<32x128xf32>, vector<2x128xf32> -> vector<2x128xf32>
    %137 = arith.addf %135, %136 : vector<2x128xf32>
    %138 = arith.negf %137 : vector<2x128xf32>
    %139 = math.exp %138 : vector<2x128xf32>
    %cst_37 = arith.constant 1.000000e+00 : f32
    %140 = vector.broadcast %cst_37 : f32 to vector<2x128xf32>
    %141 = arith.addf %140, %139 : vector<2x128xf32>
    %142 = arith.divf %140, %141 : vector<2x128xf32>
    %143 = vector.extract_strided_slice %142 {offsets = [0, 0], sizes = [2, 32], strides = [1, 1]} : vector<2x128xf32> to vector<2x32xf32>
    %144 = vector.extract_strided_slice %142 {offsets = [0, 32], sizes = [2, 32], strides = [1, 1]} : vector<2x128xf32> to vector<2x32xf32>
    %145 = vector.extract_strided_slice %142 {offsets = [0, 96], sizes = [2, 32], strides = [1, 1]} : vector<2x128xf32> to vector<2x32xf32>
    %146 = vector.extract_strided_slice %137 {offsets = [0, 64], sizes = [2, 32], strides = [1, 1]} : vector<2x128xf32> to vector<2x32xf32>
    %147 = math.tanh %146 : vector<2x32xf32>
    %148 = arith.mulf %144, %111 : vector<2x32xf32>
    %149 = arith.mulf %143, %147 : vector<2x32xf32>
    %150 = arith.addf %148, %149 : vector<2x32xf32>
    %151 = math.tanh %150 : vector<2x32xf32>
    %152 = arith.mulf %145, %151 : vector<2x32xf32>
    %cst_38 = arith.constant dense<0.000000e+00> : vector<2x128xf32>
    %153 = tpu.matmul %152, %11, %cst_38 {dimension_numbers = #tpu.dot_dimension_numbers<[1], [0], [0], [1], [0, 0, 1, 1], [], []>} : vector<2x32xf32>, vector<32x128xf32>, vector<2x128xf32> -> vector<2x128xf32>
    %cst_39 = arith.constant dense<0.000000e+00> : vector<2x128xf32>
    %154 = tpu.matmul %133, %12, %cst_39 {dimension_numbers = #tpu.dot_dimension_numbers<[1], [0], [0], [1], [0, 0, 1, 1], [], []>} : vector<2x32xf32>, vector<32x128xf32>, vector<2x128xf32> -> vector<2x128xf32>
    %155 = arith.addf %153, %154 : vector<2x128xf32>
    %156 = vector.broadcast %13 : vector<1x128xf32> to vector<2x128xf32>
    %157 = arith.addf %155, %156 : vector<2x128xf32>
    %158 = arith.negf %157 : vector<2x128xf32>
    %159 = math.exp %158 : vector<2x128xf32>
    %cst_40 = arith.constant 1.000000e+00 : f32
    %160 = vector.broadcast %cst_40 : f32 to vector<2x128xf32>
    %161 = arith.addf %160, %159 : vector<2x128xf32>
    %162 = arith.divf %160, %161 : vector<2x128xf32>
    %163 = vector.extract_strided_slice %162 {offsets = [0, 0], sizes = [2, 32], strides = [1, 1]} : vector<2x128xf32> to vector<2x32xf32>
    %164 = vector.extract_strided_slice %162 {offsets = [0, 32], sizes = [2, 32], strides = [1, 1]} : vector<2x128xf32> to vector<2x32xf32>
    %165 = vector.extract_strided_slice %162 {offsets = [0, 96], sizes = [2, 32], strides = [1, 1]} : vector<2x128xf32> to vector<2x32xf32>
    %166 = vector.extract_strided_slice %157 {offsets = [0, 64], sizes = [2, 32], strides = [1, 1]} : vector<2x128xf32> to vector<2x32xf32>
    %167 = math.tanh %166 : vector<2x32xf32>
    %168 = arith.mulf %164, %131 : vector<2x32xf32>
    %169 = arith.mulf %163, %167 : vector<2x32xf32>
    %170 = arith.addf %168, %169 : vector<2x32xf32>
    %171 = math.tanh %170 : vector<2x32xf32>
    %172 = arith.mulf %165, %171 : vector<2x32xf32>
    %c6 = arith.constant 6 : index
    %c0_41 = arith.constant 0 : index
    %173 = vector.load %arg25[%c6, %c0_41] : memref<16x32xf32, #tpu.memory_space<vmem>>, vector<2x32xf32>
    tpu.vector_store %arg25[%c6, %c0_41], %172 {strides = array<i32>} : memref<16x32xf32, #tpu.memory_space<vmem>>, vector<2x32xf32>,
    %174 = vector.extract_strided_slice %9 {offsets = [8, 0], sizes = [2, 128], strides = [1, 1]} : vector<16x128xf32> to vector<2x128xf32>
    %cst_42 = arith.constant dense<0.000000e+00> : vector<2x128xf32>
    %175 = tpu.matmul %152, %10, %cst_42 {dimension_numbers = #tpu.dot_dimension_numbers<[1], [0], [0], [1], [0, 0, 1, 1], [], []>} : vector<2x32xf32>, vector<32x128xf32>, vector<2x128xf32> -> vector<2x128xf32>
    %176 = arith.addf %174, %175 : vector<2x128xf32>
    %177 = arith.negf %176 : vector<2x128xf32>
    %178 = math.exp %177 : vector<2x128xf32>
    %cst_43 = arith.constant 1.000000e+00 : f32
    %179 = vector.broadcast %cst_43 : f32 to vector<2x128xf32>
    %180 = arith.addf %179, %178 : vector<2x128xf32>
    %181 = arith.divf %179, %180 : vector<2x128xf32>
    %182 = vector.extract_strided_slice %181 {offsets = [0, 0], sizes = [2, 32], strides = [1, 1]} : vector<2x128xf32> to vector<2x32xf32>
    %183 = vector.extract_strided_slice %181 {offsets = [0, 32], sizes = [2, 32], strides = [1, 1]} : vector<2x128xf32> to vector<2x32xf32>
    %184 = vector.extract_strided_slice %181 {offsets = [0, 96], sizes = [2, 32], strides = [1, 1]} : vector<2x128xf32> to vector<2x32xf32>
    %185 = vector.extract_strided_slice %176 {offsets = [0, 64], sizes = [2, 32], strides = [1, 1]} : vector<2x128xf32> to vector<2x32xf32>
    %186 = math.tanh %185 : vector<2x32xf32>
    %187 = arith.mulf %183, %150 : vector<2x32xf32>
    %188 = arith.mulf %182, %186 : vector<2x32xf32>
    %189 = arith.addf %187, %188 : vector<2x32xf32>
    %190 = math.tanh %189 : vector<2x32xf32>
    %191 = arith.mulf %184, %190 : vector<2x32xf32>
    %cst_44 = arith.constant dense<0.000000e+00> : vector<2x128xf32>
    %192 = tpu.matmul %191, %11, %cst_44 {dimension_numbers = #tpu.dot_dimension_numbers<[1], [0], [0], [1], [0, 0, 1, 1], [], []>} : vector<2x32xf32>, vector<32x128xf32>, vector<2x128xf32> -> vector<2x128xf32>
    %cst_45 = arith.constant dense<0.000000e+00> : vector<2x128xf32>
    %193 = tpu.matmul %172, %12, %cst_45 {dimension_numbers = #tpu.dot_dimension_numbers<[1], [0], [0], [1], [0, 0, 1, 1], [], []>} : vector<2x32xf32>, vector<32x128xf32>, vector<2x128xf32> -> vector<2x128xf32>
    %194 = arith.addf %192, %193 : vector<2x128xf32>
    %195 = vector.broadcast %13 : vector<1x128xf32> to vector<2x128xf32>
    %196 = arith.addf %194, %195 : vector<2x128xf32>
    %197 = arith.negf %196 : vector<2x128xf32>
    %198 = math.exp %197 : vector<2x128xf32>
    %cst_46 = arith.constant 1.000000e+00 : f32
    %199 = vector.broadcast %cst_46 : f32 to vector<2x128xf32>
    %200 = arith.addf %199, %198 : vector<2x128xf32>
    %201 = arith.divf %199, %200 : vector<2x128xf32>
    %202 = vector.extract_strided_slice %201 {offsets = [0, 0], sizes = [2, 32], strides = [1, 1]} : vector<2x128xf32> to vector<2x32xf32>
    %203 = vector.extract_strided_slice %201 {offsets = [0, 32], sizes = [2, 32], strides = [1, 1]} : vector<2x128xf32> to vector<2x32xf32>
    %204 = vector.extract_strided_slice %201 {offsets = [0, 96], sizes = [2, 32], strides = [1, 1]} : vector<2x128xf32> to vector<2x32xf32>
    %205 = vector.extract_strided_slice %196 {offsets = [0, 64], sizes = [2, 32], strides = [1, 1]} : vector<2x128xf32> to vector<2x32xf32>
    %206 = math.tanh %205 : vector<2x32xf32>
    %207 = arith.mulf %203, %170 : vector<2x32xf32>
    %208 = arith.mulf %202, %206 : vector<2x32xf32>
    %209 = arith.addf %207, %208 : vector<2x32xf32>
    %210 = math.tanh %209 : vector<2x32xf32>
    %211 = arith.mulf %204, %210 : vector<2x32xf32>
    %c8 = arith.constant 8 : index
    %c0_47 = arith.constant 0 : index
    %212 = vector.load %arg25[%c8, %c0_47] : memref<16x32xf32, #tpu.memory_space<vmem>>, vector<2x32xf32>
    tpu.vector_store %arg25[%c8, %c0_47], %211 {strides = array<i32>} : memref<16x32xf32, #tpu.memory_space<vmem>>, vector<2x32xf32>,
    %213 = vector.extract_strided_slice %9 {offsets = [10, 0], sizes = [2, 128], strides = [1, 1]} : vector<16x128xf32> to vector<2x128xf32>
    %cst_48 = arith.constant dense<0.000000e+00> : vector<2x128xf32>
    %214 = tpu.matmul %191, %10, %cst_48 {dimension_numbers = #tpu.dot_dimension_numbers<[1], [0], [0], [1], [0, 0, 1, 1], [], []>} : vector<2x32xf32>, vector<32x128xf32>, vector<2x128xf32> -> vector<2x128xf32>
    %215 = arith.addf %213, %214 : vector<2x128xf32>
    %216 = arith.negf %215 : vector<2x128xf32>
    %217 = math.exp %216 : vector<2x128xf32>
    %cst_49 = arith.constant 1.000000e+00 : f32
    %218 = vector.broadcast %cst_49 : f32 to vector<2x128xf32>
    %219 = arith.addf %218, %217 : vector<2x128xf32>
    %220 = arith.divf %218, %219 : vector<2x128xf32>
    %221 = vector.extract_strided_slice %220 {offsets = [0, 0], sizes = [2, 32], strides = [1, 1]} : vector<2x128xf32> to vector<2x32xf32>
    %222 = vector.extract_strided_slice %220 {offsets = [0, 32], sizes = [2, 32], strides = [1, 1]} : vector<2x128xf32> to vector<2x32xf32>
    %223 = vector.extract_strided_slice %220 {offsets = [0, 96], sizes = [2, 32], strides = [1, 1]} : vector<2x128xf32> to vector<2x32xf32>
    %224 = vector.extract_strided_slice %215 {offsets = [0, 64], sizes = [2, 32], strides = [1, 1]} : vector<2x128xf32> to vector<2x32xf32>
    %225 = math.tanh %224 : vector<2x32xf32>
    %226 = arith.mulf %222, %189 : vector<2x32xf32>
    %227 = arith.mulf %221, %225 : vector<2x32xf32>
    %228 = arith.addf %226, %227 : vector<2x32xf32>
    %229 = math.tanh %228 : vector<2x32xf32>
    %230 = arith.mulf %223, %229 : vector<2x32xf32>
    %cst_50 = arith.constant dense<0.000000e+00> : vector<2x128xf32>
    %231 = tpu.matmul %230, %11, %cst_50 {dimension_numbers = #tpu.dot_dimension_numbers<[1], [0], [0], [1], [0, 0, 1, 1], [], []>} : vector<2x32xf32>, vector<32x128xf32>, vector<2x128xf32> -> vector<2x128xf32>
    %cst_51 = arith.constant dense<0.000000e+00> : vector<2x128xf32>
    %232 = tpu.matmul %211, %12, %cst_51 {dimension_numbers = #tpu.dot_dimension_numbers<[1], [0], [0], [1], [0, 0, 1, 1], [], []>} : vector<2x32xf32>, vector<32x128xf32>, vector<2x128xf32> -> vector<2x128xf32>
    %233 = arith.addf %231, %232 : vector<2x128xf32>
    %234 = vector.broadcast %13 : vector<1x128xf32> to vector<2x128xf32>
    %235 = arith.addf %233, %234 : vector<2x128xf32>
    %236 = arith.negf %235 : vector<2x128xf32>
    %237 = math.exp %236 : vector<2x128xf32>
    %cst_52 = arith.constant 1.000000e+00 : f32
    %238 = vector.broadcast %cst_52 : f32 to vector<2x128xf32>
    %239 = arith.addf %238, %237 : vector<2x128xf32>
    %240 = arith.divf %238, %239 : vector<2x128xf32>
    %241 = vector.extract_strided_slice %240 {offsets = [0, 0], sizes = [2, 32], strides = [1, 1]} : vector<2x128xf32> to vector<2x32xf32>
    %242 = vector.extract_strided_slice %240 {offsets = [0, 32], sizes = [2, 32], strides = [1, 1]} : vector<2x128xf32> to vector<2x32xf32>
    %243 = vector.extract_strided_slice %240 {offsets = [0, 96], sizes = [2, 32], strides = [1, 1]} : vector<2x128xf32> to vector<2x32xf32>
    %244 = vector.extract_strided_slice %235 {offsets = [0, 64], sizes = [2, 32], strides = [1, 1]} : vector<2x128xf32> to vector<2x32xf32>
    %245 = math.tanh %244 : vector<2x32xf32>
    %246 = arith.mulf %242, %209 : vector<2x32xf32>
    %247 = arith.mulf %241, %245 : vector<2x32xf32>
    %248 = arith.addf %246, %247 : vector<2x32xf32>
    %249 = math.tanh %248 : vector<2x32xf32>
    %250 = arith.mulf %243, %249 : vector<2x32xf32>
    %c10 = arith.constant 10 : index
    %c0_53 = arith.constant 0 : index
    %251 = vector.load %arg25[%c10, %c0_53] : memref<16x32xf32, #tpu.memory_space<vmem>>, vector<2x32xf32>
    tpu.vector_store %arg25[%c10, %c0_53], %250 {strides = array<i32>} : memref<16x32xf32, #tpu.memory_space<vmem>>, vector<2x32xf32>,
    %252 = vector.extract_strided_slice %9 {offsets = [12, 0], sizes = [2, 128], strides = [1, 1]} : vector<16x128xf32> to vector<2x128xf32>
    %cst_54 = arith.constant dense<0.000000e+00> : vector<2x128xf32>
    %253 = tpu.matmul %230, %10, %cst_54 {dimension_numbers = #tpu.dot_dimension_numbers<[1], [0], [0], [1], [0, 0, 1, 1], [], []>} : vector<2x32xf32>, vector<32x128xf32>, vector<2x128xf32> -> vector<2x128xf32>
    %254 = arith.addf %252, %253 : vector<2x128xf32>
    %255 = arith.negf %254 : vector<2x128xf32>
    %256 = math.exp %255 : vector<2x128xf32>
    %cst_55 = arith.constant 1.000000e+00 : f32
    %257 = vector.broadcast %cst_55 : f32 to vector<2x128xf32>
    %258 = arith.addf %257, %256 : vector<2x128xf32>
    %259 = arith.divf %257, %258 : vector<2x128xf32>
    %260 = vector.extract_strided_slice %259 {offsets = [0, 0], sizes = [2, 32], strides = [1, 1]} : vector<2x128xf32> to vector<2x32xf32>
    %261 = vector.extract_strided_slice %259 {offsets = [0, 32], sizes = [2, 32], strides = [1, 1]} : vector<2x128xf32> to vector<2x32xf32>
    %262 = vector.extract_strided_slice %259 {offsets = [0, 96], sizes = [2, 32], strides = [1, 1]} : vector<2x128xf32> to vector<2x32xf32>
    %263 = vector.extract_strided_slice %254 {offsets = [0, 64], sizes = [2, 32], strides = [1, 1]} : vector<2x128xf32> to vector<2x32xf32>
    %264 = math.tanh %263 : vector<2x32xf32>
    %265 = arith.mulf %261, %228 : vector<2x32xf32>
    %266 = arith.mulf %260, %264 : vector<2x32xf32>
    %267 = arith.addf %265, %266 : vector<2x32xf32>
    %268 = math.tanh %267 : vector<2x32xf32>
    %269 = arith.mulf %262, %268 : vector<2x32xf32>
    %cst_56 = arith.constant dense<0.000000e+00> : vector<2x128xf32>
    %270 = tpu.matmul %269, %11, %cst_56 {dimension_numbers = #tpu.dot_dimension_numbers<[1], [0], [0], [1], [0, 0, 1, 1], [], []>} : vector<2x32xf32>, vector<32x128xf32>, vector<2x128xf32> -> vector<2x128xf32>
    %cst_57 = arith.constant dense<0.000000e+00> : vector<2x128xf32>
    %271 = tpu.matmul %250, %12, %cst_57 {dimension_numbers = #tpu.dot_dimension_numbers<[1], [0], [0], [1], [0, 0, 1, 1], [], []>} : vector<2x32xf32>, vector<32x128xf32>, vector<2x128xf32> -> vector<2x128xf32>
    %272 = arith.addf %270, %271 : vector<2x128xf32>
    %273 = vector.broadcast %13 : vector<1x128xf32> to vector<2x128xf32>
    %274 = arith.addf %272, %273 : vector<2x128xf32>
    %275 = arith.negf %274 : vector<2x128xf32>
    %276 = math.exp %275 : vector<2x128xf32>
    %cst_58 = arith.constant 1.000000e+00 : f32
    %277 = vector.broadcast %cst_58 : f32 to vector<2x128xf32>
    %278 = arith.addf %277, %276 : vector<2x128xf32>
    %279 = arith.divf %277, %278 : vector<2x128xf32>
    %280 = vector.extract_strided_slice %279 {offsets = [0, 0], sizes = [2, 32], strides = [1, 1]} : vector<2x128xf32> to vector<2x32xf32>
    %281 = vector.extract_strided_slice %279 {offsets = [0, 32], sizes = [2, 32], strides = [1, 1]} : vector<2x128xf32> to vector<2x32xf32>
    %282 = vector.extract_strided_slice %279 {offsets = [0, 96], sizes = [2, 32], strides = [1, 1]} : vector<2x128xf32> to vector<2x32xf32>
    %283 = vector.extract_strided_slice %274 {offsets = [0, 64], sizes = [2, 32], strides = [1, 1]} : vector<2x128xf32> to vector<2x32xf32>
    %284 = math.tanh %283 : vector<2x32xf32>
    %285 = arith.mulf %281, %248 : vector<2x32xf32>
    %286 = arith.mulf %280, %284 : vector<2x32xf32>
    %287 = arith.addf %285, %286 : vector<2x32xf32>
    %288 = math.tanh %287 : vector<2x32xf32>
    %289 = arith.mulf %282, %288 : vector<2x32xf32>
    %c12 = arith.constant 12 : index
    %c0_59 = arith.constant 0 : index
    %290 = vector.load %arg25[%c12, %c0_59] : memref<16x32xf32, #tpu.memory_space<vmem>>, vector<2x32xf32>
    tpu.vector_store %arg25[%c12, %c0_59], %289 {strides = array<i32>} : memref<16x32xf32, #tpu.memory_space<vmem>>, vector<2x32xf32>,
    %291 = vector.extract_strided_slice %9 {offsets = [14, 0], sizes = [2, 128], strides = [1, 1]} : vector<16x128xf32> to vector<2x128xf32>
    %cst_60 = arith.constant dense<0.000000e+00> : vector<2x128xf32>
    %292 = tpu.matmul %269, %10, %cst_60 {dimension_numbers = #tpu.dot_dimension_numbers<[1], [0], [0], [1], [0, 0, 1, 1], [], []>} : vector<2x32xf32>, vector<32x128xf32>, vector<2x128xf32> -> vector<2x128xf32>
    %293 = arith.addf %291, %292 : vector<2x128xf32>
    %294 = arith.negf %293 : vector<2x128xf32>
    %295 = math.exp %294 : vector<2x128xf32>
    %cst_61 = arith.constant 1.000000e+00 : f32
    %296 = vector.broadcast %cst_61 : f32 to vector<2x128xf32>
    %297 = arith.addf %296, %295 : vector<2x128xf32>
    %298 = arith.divf %296, %297 : vector<2x128xf32>
    %299 = vector.extract_strided_slice %298 {offsets = [0, 0], sizes = [2, 32], strides = [1, 1]} : vector<2x128xf32> to vector<2x32xf32>
    %300 = vector.extract_strided_slice %298 {offsets = [0, 32], sizes = [2, 32], strides = [1, 1]} : vector<2x128xf32> to vector<2x32xf32>
    %301 = vector.extract_strided_slice %298 {offsets = [0, 96], sizes = [2, 32], strides = [1, 1]} : vector<2x128xf32> to vector<2x32xf32>
    %302 = vector.extract_strided_slice %293 {offsets = [0, 64], sizes = [2, 32], strides = [1, 1]} : vector<2x128xf32> to vector<2x32xf32>
    %303 = math.tanh %302 : vector<2x32xf32>
    %304 = arith.mulf %300, %267 : vector<2x32xf32>
    %305 = arith.mulf %299, %303 : vector<2x32xf32>
    %306 = arith.addf %304, %305 : vector<2x32xf32>
    %307 = math.tanh %306 : vector<2x32xf32>
    %308 = arith.mulf %301, %307 : vector<2x32xf32>
    %cst_62 = arith.constant dense<0.000000e+00> : vector<2x128xf32>
    %309 = tpu.matmul %308, %11, %cst_62 {dimension_numbers = #tpu.dot_dimension_numbers<[1], [0], [0], [1], [0, 0, 1, 1], [], []>} : vector<2x32xf32>, vector<32x128xf32>, vector<2x128xf32> -> vector<2x128xf32>
    %cst_63 = arith.constant dense<0.000000e+00> : vector<2x128xf32>
    %310 = tpu.matmul %289, %12, %cst_63 {dimension_numbers = #tpu.dot_dimension_numbers<[1], [0], [0], [1], [0, 0, 1, 1], [], []>} : vector<2x32xf32>, vector<32x128xf32>, vector<2x128xf32> -> vector<2x128xf32>
    %311 = arith.addf %309, %310 : vector<2x128xf32>
    %312 = vector.broadcast %13 : vector<1x128xf32> to vector<2x128xf32>
    %313 = arith.addf %311, %312 : vector<2x128xf32>
    %314 = arith.negf %313 : vector<2x128xf32>
    %315 = math.exp %314 : vector<2x128xf32>
    %cst_64 = arith.constant 1.000000e+00 : f32
    %316 = vector.broadcast %cst_64 : f32 to vector<2x128xf32>
    %317 = arith.addf %316, %315 : vector<2x128xf32>
    %318 = arith.divf %316, %317 : vector<2x128xf32>
    %319 = vector.extract_strided_slice %318 {offsets = [0, 0], sizes = [2, 32], strides = [1, 1]} : vector<2x128xf32> to vector<2x32xf32>
    %320 = vector.extract_strided_slice %318 {offsets = [0, 32], sizes = [2, 32], strides = [1, 1]} : vector<2x128xf32> to vector<2x32xf32>
    %321 = vector.extract_strided_slice %318 {offsets = [0, 96], sizes = [2, 32], strides = [1, 1]} : vector<2x128xf32> to vector<2x32xf32>
    %322 = vector.extract_strided_slice %313 {offsets = [0, 64], sizes = [2, 32], strides = [1, 1]} : vector<2x128xf32> to vector<2x32xf32>
    %323 = math.tanh %322 : vector<2x32xf32>
    %324 = arith.mulf %320, %287 : vector<2x32xf32>
    %325 = arith.mulf %319, %323 : vector<2x32xf32>
    %326 = arith.addf %324, %325 : vector<2x32xf32>
    %327 = math.tanh %326 : vector<2x32xf32>
    %328 = arith.mulf %321, %327 : vector<2x32xf32>
    %c14 = arith.constant 14 : index
    %c0_65 = arith.constant 0 : index
    %329 = vector.load %arg25[%c14, %c0_65] : memref<16x32xf32, #tpu.memory_space<vmem>>, vector<2x32xf32>
    tpu.vector_store %arg25[%c14, %c0_65], %328 {strides = array<i32>} : memref<16x32xf32, #tpu.memory_space<vmem>>, vector<2x32xf32>,
    %c2_i32 = arith.constant 2 : i32
    %330 = tpu.memref_slice %arg30[%c2_i32] : memref<4x!tpu.dma_semaphore, #tpu.memory_space<semaphore_mem>> -> memref<1x!tpu.dma_semaphore, #tpu.memory_space<semaphore_mem>>
    %331 = tpu.memref_squeeze %330 : memref<1x!tpu.dma_semaphore, #tpu.memory_space<semaphore_mem>> -> memref<!tpu.dma_semaphore, #tpu.memory_space<semaphore_mem>>
    tpu.enqueue_dma source(%arg22 : memref<32x2048xbf16, #tpu.memory_space<any>>) target(%arg28 : memref<32x2048xbf16, #tpu.memory_space<vmem>>) target_semaphore(%331 : memref<!tpu.dma_semaphore, #tpu.memory_space<semaphore_mem>>)
    %c3_i32 = arith.constant 3 : i32
    %332 = tpu.memref_slice %arg30[%c3_i32] : memref<4x!tpu.dma_semaphore, #tpu.memory_space<semaphore_mem>> -> memref<1x!tpu.dma_semaphore, #tpu.memory_space<semaphore_mem>>
    %333 = tpu.memref_squeeze %332 : memref<1x!tpu.dma_semaphore, #tpu.memory_space<semaphore_mem>> -> memref<!tpu.dma_semaphore, #tpu.memory_space<semaphore_mem>>
    tpu.enqueue_dma source(%arg23 : memref<2048x32xbf16, #tpu.memory_space<any>>) target(%arg29 : memref<2048x32xbf16, #tpu.memory_space<vmem>>) target_semaphore(%333 : memref<!tpu.dma_semaphore, #tpu.memory_space<semaphore_mem>>)
    %c0_66 = arith.constant 0 : index
    %c0_67 = arith.constant 0 : index
    %334 = vector.load %arg25[%c0_66, %c0_67] : memref<16x32xf32, #tpu.memory_space<vmem>>, vector<16x32xf32>
    %c0_68 = arith.constant 0 : index
    %c0_69 = arith.constant 0 : index
    %c0_70 = arith.constant 0 : index
    %335 = vector.load %arg1[%c0_68, %c0_69, %c0_70] : memref<4x16x16xf32, #tpu.memory_space<vmem>>, vector<4x16x16xf32>
    %c0_71 = arith.constant 0 : index
    %c0_72 = arith.constant 0 : index
    %336 = vector.load %arg11[%c0_71, %c0_72] : memref<6x32xf32, #tpu.memory_space<vmem>>, vector<6x32xf32>
    %337 = vector.extract_strided_slice %336 {offsets = [0, 0], sizes = [1, 32], strides = [1, 1]} : vector<6x32xf32> to vector<1x32xf32>
    %338 = vector.extract_strided_slice %336 {offsets = [1, 0], sizes = [1, 32], strides = [1, 1]} : vector<6x32xf32> to vector<1x32xf32>
    %339 = vector.extract_strided_slice %336 {offsets = [2, 0], sizes = [1, 32], strides = [1, 1]} : vector<6x32xf32> to vector<1x32xf32>
    %340 = vector.extract_strided_slice %336 {offsets = [3, 0], sizes = [1, 32], strides = [1, 1]} : vector<6x32xf32> to vector<1x32xf32>
    %341 = vector.extract_strided_slice %336 {offsets = [4, 0], sizes = [1, 32], strides = [1, 1]} : vector<6x32xf32> to vector<1x32xf32>
    %342 = vector.extract_strided_slice %336 {offsets = [5, 0], sizes = [1, 32], strides = [1, 1]} : vector<6x32xf32> to vector<1x32xf32>
    %c0_73 = arith.constant 0 : index
    %c0_74 = arith.constant 0 : index
    %343 = vector.load %arg8[%c0_73, %c0_74] : memref<32x96xf32, #tpu.memory_space<vmem>>, vector<32x96xf32>
    %cst_75 = arith.constant dense<0.000000e+00> : vector<16x96xf32>
    %344 = tpu.matmul %334, %343, %cst_75 {dimension_numbers = #tpu.dot_dimension_numbers<[1], [0], [0], [1], [0, 0, 1, 1], [], []>} : vector<16x32xf32>, vector<32x96xf32>, vector<16x96xf32> -> vector<16x96xf32>
    %c0_76 = arith.constant 0 : index
    %c0_77 = arith.constant 0 : index
    %345 = vector.load %arg9[%c0_76, %c0_77] : memref<1x96xf32, #tpu.memory_space<vmem>>, vector<1x96xf32>
    %346 = vector.broadcast %345 : vector<1x96xf32> to vector<16x96xf32>
    %347 = arith.addf %344, %346 : vector<16x96xf32>
    %348 = vector.extract_strided_slice %347 {offsets = [0, 0], sizes = [16, 8], strides = [1, 1]} : vector<16x96xf32> to vector<16x8xf32>
    %349 = vector.extract_strided_slice %347 {offsets = [0, 8], sizes = [16, 8], strides = [1, 1]} : vector<16x96xf32> to vector<16x8xf32>
    %350 = vector.extract_strided_slice %347 {offsets = [0, 16], sizes = [16, 8], strides = [1, 1]} : vector<16x96xf32> to vector<16x8xf32>
    %351 = vector.extract_strided_slice %347 {offsets = [0, 24], sizes = [16, 8], strides = [1, 1]} : vector<16x96xf32> to vector<16x8xf32>
    %352 = vector.shape_cast %348 : vector<16x8xf32> to vector<1x16x8xf32>
    %353 = vector.shape_cast %349 : vector<16x8xf32> to vector<1x16x8xf32>
    %354 = vector.shape_cast %350 : vector<16x8xf32> to vector<1x16x8xf32>
    %355 = vector.shape_cast %351 : vector<16x8xf32> to vector<1x16x8xf32>
    %356 = tpu.concatenate %352, %353, %354, %355 in 0 : vector<1x16x8xf32>, vector<1x16x8xf32>, vector<1x16x8xf32>, vector<1x16x8xf32> -> vector<4x16x8xf32>
    %357 = vector.extract_strided_slice %347 {offsets = [0, 32], sizes = [16, 8], strides = [1, 1]} : vector<16x96xf32> to vector<16x8xf32>
    %358 = vector.extract_strided_slice %347 {offsets = [0, 40], sizes = [16, 8], strides = [1, 1]} : vector<16x96xf32> to vector<16x8xf32>
    %359 = vector.extract_strided_slice %347 {offsets = [0, 48], sizes = [16, 8], strides = [1, 1]} : vector<16x96xf32> to vector<16x8xf32>
    %360 = vector.extract_strided_slice %347 {offsets = [0, 56], sizes = [16, 8], strides = [1, 1]} : vector<16x96xf32> to vector<16x8xf32>
    %361 = vector.shape_cast %357 : vector<16x8xf32> to vector<1x16x8xf32>
    %362 = vector.shape_cast %358 : vector<16x8xf32> to vector<1x16x8xf32>
    %363 = vector.shape_cast %359 : vector<16x8xf32> to vector<1x16x8xf32>
    %364 = vector.shape_cast %360 : vector<16x8xf32> to vector<1x16x8xf32>
    %365 = tpu.concatenate %361, %362, %363, %364 in 0 : vector<1x16x8xf32>, vector<1x16x8xf32>, vector<1x16x8xf32>, vector<1x16x8xf32> -> vector<4x16x8xf32>
    %366 = vector.extract_strided_slice %347 {offsets = [0, 64], sizes = [16, 8], strides = [1, 1]} : vector<16x96xf32> to vector<16x8xf32>
    %367 = vector.extract_strided_slice %347 {offsets = [0, 72], sizes = [16, 8], strides = [1, 1]} : vector<16x96xf32> to vector<16x8xf32>
    %368 = vector.extract_strided_slice %347 {offsets = [0, 80], sizes = [16, 8], strides = [1, 1]} : vector<16x96xf32> to vector<16x8xf32>
    %369 = vector.extract_strided_slice %347 {offsets = [0, 88], sizes = [16, 8], strides = [1, 1]} : vector<16x96xf32> to vector<16x8xf32>
    %370 = vector.shape_cast %366 : vector<16x8xf32> to vector<1x16x8xf32>
    %371 = vector.shape_cast %367 : vector<16x8xf32> to vector<1x16x8xf32>
    %372 = vector.shape_cast %368 : vector<16x8xf32> to vector<1x16x8xf32>
    %373 = vector.shape_cast %369 : vector<16x8xf32> to vector<1x16x8xf32>
    %374 = tpu.concatenate %370, %371, %372, %373 in 0 : vector<1x16x8xf32>, vector<1x16x8xf32>, vector<1x16x8xf32>, vector<1x16x8xf32> -> vector<4x16x8xf32>
    "tpu.trace_start"() <{level = 10 : i32, message = "nqd,nkd->nqk"}> : () -> ()
    %cst_78 = arith.constant dense<0.000000e+00> : vector<4x16x16xf32>
    %375 = tpu.matmul %356, %365, %cst_78 {dimension_numbers = #tpu.dot_dimension_numbers<[2], [2], [1], [1], [0, 0, 0, 1, 1, 1], [0], [0]>} : vector<4x16x8xf32>, vector<4x16x8xf32>, vector<4x16x16xf32> -> vector<4x16x16xf32>
    "tpu.trace_stop"() : () -> ()
    %cst_79 = arith.constant 0.353553385 : f32
    %376 = vector.broadcast %cst_79 : f32 to vector<4x16x16xf32>
    %377 = arith.mulf %375, %376 : vector<4x16x16xf32>
    %378 = arith.addf %377, %335 : vector<4x16x16xf32>
    %cst_80 = arith.constant dense<0xFF800000> : vector<4x16xf32>
    %379 = vector.multi_reduction <maximumf>, %378, %cst_80 [2] : vector<4x16x16xf32> to vector<4x16xf32>
    %380 = vector.shape_cast %379 : vector<4x16xf32> to vector<4x16x1xf32>
    %381 = vector.broadcast %380 : vector<4x16x1xf32> to vector<4x16x16xf32>
    %382 = arith.subf %378, %381 : vector<4x16x16xf32>
    %383 = math.exp %382 : vector<4x16x16xf32>
    %cst_81 = arith.constant dense<0.000000e+00> : vector<4x16xf32>
    %384 = vector.multi_reduction <add>, %383, %cst_81 [2] : vector<4x16x16xf32> to vector<4x16xf32>
    %385 = vector.shape_cast %384 : vector<4x16xf32> to vector<4x16x1xf32>
    %386 = tpu.reciprocal %385 {approx = true} : vector<4x16x1xf32> -> vector<4x16x1xf32>
    %387 = vector.broadcast %386 : vector<4x16x1xf32> to vector<4x16x16xf32>
    %388 = arith.mulf %383, %387 : vector<4x16x16xf32>
    "tpu.trace_start"() <{level = 10 : i32, message = "nqk,nkd->nqd"}> : () -> ()
    %cst_82 = arith.constant dense<0.000000e+00> : vector<4x16x8xf32>
    %389 = tpu.matmul %388, %374, %cst_82 {dimension_numbers = #tpu.dot_dimension_numbers<[2], [1], [1], [2], [0, 0, 0, 1, 1, 2], [0], [0]>} : vector<4x16x16xf32>, vector<4x16x8xf32>, vector<4x16x8xf32> -> vector<4x16x8xf32>
    "tpu.trace_stop"() : () -> ()
    %390 = vector.extract_strided_slice %389 {offsets = [0, 0, 0], sizes = [1, 16, 8], strides = [1, 1, 1]} : vector<4x16x8xf32> to vector<1x16x8xf32>
    %391 = vector.shape_cast %390 : vector<1x16x8xf32> to vector<16x8xf32>
    %392 = vector.extract_strided_slice %389 {offsets = [1, 0, 0], sizes = [1, 16, 8], strides = [1, 1, 1]} : vector<4x16x8xf32> to vector<1x16x8xf32>
    %393 = vector.shape_cast %392 : vector<1x16x8xf32> to vector<16x8xf32>
    %394 = vector.extract_strided_slice %389 {offsets = [2, 0, 0], sizes = [1, 16, 8], strides = [1, 1, 1]} : vector<4x16x8xf32> to vector<1x16x8xf32>
    %395 = vector.shape_cast %394 : vector<1x16x8xf32> to vector<16x8xf32>
    %396 = vector.extract_strided_slice %389 {offsets = [3, 0, 0], sizes = [1, 16, 8], strides = [1, 1, 1]} : vector<4x16x8xf32> to vector<1x16x8xf32>
    %397 = vector.shape_cast %396 : vector<1x16x8xf32> to vector<16x8xf32>
    %398 = tpu.concatenate %391, %393, %395, %397 in 1 : vector<16x8xf32>, vector<16x8xf32>, vector<16x8xf32>, vector<16x8xf32> -> vector<16x32xf32>
    %c0_83 = arith.constant 0 : index
    %c0_84 = arith.constant 0 : index
    %399 = vector.load %arg10[%c0_83, %c0_84] : memref<32x32xf32, #tpu.memory_space<vmem>>, vector<32x32xf32>
    %cst_85 = arith.constant dense<0.000000e+00> : vector<16x32xf32>
    %400 = tpu.matmul %398, %399, %cst_85 {dimension_numbers = #tpu.dot_dimension_numbers<[1], [0], [0], [1], [0, 0, 1, 1], [], []>} : vector<16x32xf32>, vector<32x32xf32>, vector<16x32xf32> -> vector<16x32xf32>
    %401 = vector.broadcast %337 : vector<1x32xf32> to vector<16x32xf32>
    %402 = arith.addf %400, %401 : vector<16x32xf32>
    %403 = arith.addf %334, %402 : vector<16x32xf32>
    %cst_86 = arith.constant dense<0.000000e+00> : vector<16xf32>
    %404 = vector.multi_reduction <add>, %403, %cst_86 [1] : vector<16x32xf32> to vector<16xf32>
    %405 = vector.shape_cast %404 : vector<16xf32> to vector<16x1xf32>
    %cst_87 = arith.constant 3.200000e+01 : f32
    %406 = vector.broadcast %cst_87 : f32 to vector<16x1xf32>
    %407 = arith.divf %405, %406 : vector<16x1xf32>
    %408 = vector.broadcast %407 : vector<16x1xf32> to vector<16x32xf32>
    %409 = arith.subf %403, %408 : vector<16x32xf32>
    %410 = arith.mulf %409, %409 : vector<16x32xf32>
    %cst_88 = arith.constant dense<0.000000e+00> : vector<16xf32>
    %411 = vector.multi_reduction <add>, %410, %cst_88 [1] : vector<16x32xf32> to vector<16xf32>
    %412 = vector.shape_cast %411 : vector<16xf32> to vector<16x1xf32>
    %cst_89 = arith.constant 3.200000e+01 : f32
    %413 = vector.broadcast %cst_89 : f32 to vector<16x1xf32>
    %414 = arith.divf %412, %413 : vector<16x1xf32>
    %cst_90 = arith.constant 9.99999974E-6 : f32
    %415 = vector.broadcast %cst_90 : f32 to vector<16x1xf32>
    %416 = arith.addf %414, %415 : vector<16x1xf32>
    %417 = math.rsqrt %416 : vector<16x1xf32>
    %418 = vector.broadcast %417 : vector<16x1xf32> to vector<16x32xf32>
    %419 = arith.mulf %409, %418 : vector<16x32xf32>
    %420 = vector.broadcast %338 : vector<1x32xf32> to vector<16x32xf32>
    %421 = arith.mulf %419, %420 : vector<16x32xf32>
    %422 = vector.broadcast %339 : vector<1x32xf32> to vector<16x32xf32>
    %423 = arith.addf %421, %422 : vector<16x32xf32>
    %c0_i32_91 = arith.constant 0 : i32
    %424 = tpu.memref_slice %arg30[%c0_i32_91] : memref<4x!tpu.dma_semaphore, #tpu.memory_space<semaphore_mem>> -> memref<1x!tpu.dma_semaphore, #tpu.memory_space<semaphore_mem>>
    %425 = tpu.memref_squeeze %424 : memref<1x!tpu.dma_semaphore, #tpu.memory_space<semaphore_mem>> -> memref<!tpu.dma_semaphore, #tpu.memory_space<semaphore_mem>>
    tpu.wait_dma2 semaphore(%425 : memref<!tpu.dma_semaphore, #tpu.memory_space<semaphore_mem>>) src(%arg20 : memref<32x2048xbf16, #tpu.memory_space<any>>) dst(%arg26 : memref<32x2048xbf16, #tpu.memory_space<vmem>>)
    %426 = arith.truncf %423 : vector<16x32xf32> to vector<16x32xbf16>
    %c0_92 = arith.constant 0 : index
    %c0_93 = arith.constant 0 : index
    %427 = vector.load %arg26[%c0_92, %c0_93] : memref<32x2048xbf16, #tpu.memory_space<vmem>>, vector<32x2048xbf16>
    %cst_94 = arith.constant dense<0.000000e+00> : vector<16x2048xf32>
    %428 = tpu.matmul %426, %427, %cst_94 {dimension_numbers = #tpu.dot_dimension_numbers<[1], [0], [0], [1], [0, 0, 1, 1], [], []>} : vector<16x32xbf16>, vector<32x2048xbf16>, vector<16x2048xf32> -> vector<16x2048xf32>
    %c0_95 = arith.constant 0 : index
    %c0_96 = arith.constant 0 : index
    %429 = vector.load %arg12[%c0_95, %c0_96] : memref<1x2048xf32, #tpu.memory_space<vmem>>, vector<1x2048xf32>
    %430 = vector.broadcast %429 : vector<1x2048xf32> to vector<16x2048xf32>
    %431 = arith.addf %428, %430 : vector<16x2048xf32>
    %cst_97 = arith.constant 0.000000e+00 : f32
    %432 = vector.broadcast %cst_97 : f32 to vector<16x2048xf32>
    %433 = arith.maximumf %431, %432 : vector<16x2048xf32>
    %c1_i32_98 = arith.constant 1 : i32
    %434 = tpu.memref_slice %arg30[%c1_i32_98] : memref<4x!tpu.dma_semaphore, #tpu.memory_space<semaphore_mem>> -> memref<1x!tpu.dma_semaphore, #tpu.memory_space<semaphore_mem>>
    %435 = tpu.memref_squeeze %434 : memref<1x!tpu.dma_semaphore, #tpu.memory_space<semaphore_mem>> -> memref<!tpu.dma_semaphore, #tpu.memory_space<semaphore_mem>>
    tpu.wait_dma2 semaphore(%435 : memref<!tpu.dma_semaphore, #tpu.memory_space<semaphore_mem>>) src(%arg21 : memref<2048x32xbf16, #tpu.memory_space<any>>) dst(%arg27 : memref<2048x32xbf16, #tpu.memory_space<vmem>>)
    %436 = arith.truncf %433 : vector<16x2048xf32> to vector<16x2048xbf16>
    %c0_99 = arith.constant 0 : index
    %c0_100 = arith.constant 0 : index
    %437 = vector.load %arg27[%c0_99, %c0_100] : memref<2048x32xbf16, #tpu.memory_space<vmem>>, vector<2048x32xbf16>
    %cst_101 = arith.constant dense<0.000000e+00> : vector<16x32xf32>
    %438 = tpu.matmul %436, %437, %cst_101 {dimension_numbers = #tpu.dot_dimension_numbers<[1], [0], [0], [1], [0, 0, 1, 1], [], []>} : vector<16x2048xbf16>, vector<2048x32xbf16>, vector<16x32xf32> -> vector<16x32xf32>
    %439 = vector.broadcast %342 : vector<1x32xf32> to vector<16x32xf32>
    %440 = arith.addf %438, %439 : vector<16x32xf32>
    %441 = arith.addf %423, %440 : vector<16x32xf32>
    %cst_102 = arith.constant dense<0.000000e+00> : vector<16xf32>
    %442 = vector.multi_reduction <add>, %441, %cst_102 [1] : vector<16x32xf32> to vector<16xf32>
    %443 = vector.shape_cast %442 : vector<16xf32> to vector<16x1xf32>
    %cst_103 = arith.constant 3.200000e+01 : f32
    %444 = vector.broadcast %cst_103 : f32 to vector<16x1xf32>
    %445 = arith.divf %443, %444 : vector<16x1xf32>
    %446 = vector.broadcast %445 : vector<16x1xf32> to vector<16x32xf32>
    %447 = arith.subf %441, %446 : vector<16x32xf32>
    %448 = arith.mulf %447, %447 : vector<16x32xf32>
    %cst_104 = arith.constant dense<0.000000e+00> : vector<16xf32>
    %449 = vector.multi_reduction <add>, %448, %cst_104 [1] : vector<16x32xf32> to vector<16xf32>
    %450 = vector.shape_cast %449 : vector<16xf32> to vector<16x1xf32>
    %cst_105 = arith.constant 3.200000e+01 : f32
    %451 = vector.broadcast %cst_105 : f32 to vector<16x1xf32>
    %452 = arith.divf %450, %451 : vector<16x1xf32>
    %cst_106 = arith.constant 9.99999974E-6 : f32
    %453 = vector.broadcast %cst_106 : f32 to vector<16x1xf32>
    %454 = arith.addf %452, %453 : vector<16x1xf32>
    %455 = math.rsqrt %454 : vector<16x1xf32>
    %456 = vector.broadcast %455 : vector<16x1xf32> to vector<16x32xf32>
    %457 = arith.mulf %447, %456 : vector<16x32xf32>
    %458 = vector.broadcast %340 : vector<1x32xf32> to vector<16x32xf32>
    %459 = arith.mulf %457, %458 : vector<16x32xf32>
    %460 = vector.broadcast %341 : vector<1x32xf32> to vector<16x32xf32>
    %461 = arith.addf %459, %460 : vector<16x32xf32>
    %c0_107 = arith.constant 0 : index
    %c0_108 = arith.constant 0 : index
    %462 = vector.load %arg16[%c0_107, %c0_108] : memref<6x32xf32, #tpu.memory_space<vmem>>, vector<6x32xf32>
    %463 = vector.extract_strided_slice %462 {offsets = [0, 0], sizes = [1, 32], strides = [1, 1]} : vector<6x32xf32> to vector<1x32xf32>
    %464 = vector.extract_strided_slice %462 {offsets = [1, 0], sizes = [1, 32], strides = [1, 1]} : vector<6x32xf32> to vector<1x32xf32>
    %465 = vector.extract_strided_slice %462 {offsets = [2, 0], sizes = [1, 32], strides = [1, 1]} : vector<6x32xf32> to vector<1x32xf32>
    %466 = vector.extract_strided_slice %462 {offsets = [3, 0], sizes = [1, 32], strides = [1, 1]} : vector<6x32xf32> to vector<1x32xf32>
    %467 = vector.extract_strided_slice %462 {offsets = [4, 0], sizes = [1, 32], strides = [1, 1]} : vector<6x32xf32> to vector<1x32xf32>
    %468 = vector.extract_strided_slice %462 {offsets = [5, 0], sizes = [1, 32], strides = [1, 1]} : vector<6x32xf32> to vector<1x32xf32>
    %c0_109 = arith.constant 0 : index
    %c0_110 = arith.constant 0 : index
    %469 = vector.load %arg13[%c0_109, %c0_110] : memref<32x96xf32, #tpu.memory_space<vmem>>, vector<32x96xf32>
    %cst_111 = arith.constant dense<0.000000e+00> : vector<16x96xf32>
    %470 = tpu.matmul %461, %469, %cst_111 {dimension_numbers = #tpu.dot_dimension_numbers<[1], [0], [0], [1], [0, 0, 1, 1], [], []>} : vector<16x32xf32>, vector<32x96xf32>, vector<16x96xf32> -> vector<16x96xf32>
    %c0_112 = arith.constant 0 : index
    %c0_113 = arith.constant 0 : index
    %471 = vector.load %arg14[%c0_112, %c0_113] : memref<1x96xf32, #tpu.memory_space<vmem>>, vector<1x96xf32>
    %472 = vector.broadcast %471 : vector<1x96xf32> to vector<16x96xf32>
    %473 = arith.addf %470, %472 : vector<16x96xf32>
    %474 = vector.extract_strided_slice %473 {offsets = [0, 0], sizes = [16, 8], strides = [1, 1]} : vector<16x96xf32> to vector<16x8xf32>
    %475 = vector.extract_strided_slice %473 {offsets = [0, 8], sizes = [16, 8], strides = [1, 1]} : vector<16x96xf32> to vector<16x8xf32>
    %476 = vector.extract_strided_slice %473 {offsets = [0, 16], sizes = [16, 8], strides = [1, 1]} : vector<16x96xf32> to vector<16x8xf32>
    %477 = vector.extract_strided_slice %473 {offsets = [0, 24], sizes = [16, 8], strides = [1, 1]} : vector<16x96xf32> to vector<16x8xf32>
    %478 = vector.shape_cast %474 : vector<16x8xf32> to vector<1x16x8xf32>
    %479 = vector.shape_cast %475 : vector<16x8xf32> to vector<1x16x8xf32>
    %480 = vector.shape_cast %476 : vector<16x8xf32> to vector<1x16x8xf32>
    %481 = vector.shape_cast %477 : vector<16x8xf32> to vector<1x16x8xf32>
    %482 = tpu.concatenate %478, %479, %480, %481 in 0 : vector<1x16x8xf32>, vector<1x16x8xf32>, vector<1x16x8xf32>, vector<1x16x8xf32> -> vector<4x16x8xf32>
    %483 = vector.extract_strided_slice %473 {offsets = [0, 32], sizes = [16, 8], strides = [1, 1]} : vector<16x96xf32> to vector<16x8xf32>
    %484 = vector.extract_strided_slice %473 {offsets = [0, 40], sizes = [16, 8], strides = [1, 1]} : vector<16x96xf32> to vector<16x8xf32>
    %485 = vector.extract_strided_slice %473 {offsets = [0, 48], sizes = [16, 8], strides = [1, 1]} : vector<16x96xf32> to vector<16x8xf32>
    %486 = vector.extract_strided_slice %473 {offsets = [0, 56], sizes = [16, 8], strides = [1, 1]} : vector<16x96xf32> to vector<16x8xf32>
    %487 = vector.shape_cast %483 : vector<16x8xf32> to vector<1x16x8xf32>
    %488 = vector.shape_cast %484 : vector<16x8xf32> to vector<1x16x8xf32>
    %489 = vector.shape_cast %485 : vector<16x8xf32> to vector<1x16x8xf32>
    %490 = vector.shape_cast %486 : vector<16x8xf32> to vector<1x16x8xf32>
    %491 = tpu.concatenate %487, %488, %489, %490 in 0 : vector<1x16x8xf32>, vector<1x16x8xf32>, vector<1x16x8xf32>, vector<1x16x8xf32> -> vector<4x16x8xf32>
    %492 = vector.extract_strided_slice %473 {offsets = [0, 64], sizes = [16, 8], strides = [1, 1]} : vector<16x96xf32> to vector<16x8xf32>
    %493 = vector.extract_strided_slice %473 {offsets = [0, 72], sizes = [16, 8], strides = [1, 1]} : vector<16x96xf32> to vector<16x8xf32>
    %494 = vector.extract_strided_slice %473 {offsets = [0, 80], sizes = [16, 8], strides = [1, 1]} : vector<16x96xf32> to vector<16x8xf32>
    %495 = vector.extract_strided_slice %473 {offsets = [0, 88], sizes = [16, 8], strides = [1, 1]} : vector<16x96xf32> to vector<16x8xf32>
    %496 = vector.shape_cast %492 : vector<16x8xf32> to vector<1x16x8xf32>
    %497 = vector.shape_cast %493 : vector<16x8xf32> to vector<1x16x8xf32>
    %498 = vector.shape_cast %494 : vector<16x8xf32> to vector<1x16x8xf32>
    %499 = vector.shape_cast %495 : vector<16x8xf32> to vector<1x16x8xf32>
    %500 = tpu.concatenate %496, %497, %498, %499 in 0 : vector<1x16x8xf32>, vector<1x16x8xf32>, vector<1x16x8xf32>, vector<1x16x8xf32> -> vector<4x16x8xf32>
    "tpu.trace_start"() <{level = 10 : i32, message = "nqd,nkd->nqk"}> : () -> ()
    %cst_114 = arith.constant dense<0.000000e+00> : vector<4x16x16xf32>
    %501 = tpu.matmul %482, %491, %cst_114 {dimension_numbers = #tpu.dot_dimension_numbers<[2], [2], [1], [1], [0, 0, 0, 1, 1, 1], [0], [0]>} : vector<4x16x8xf32>, vector<4x16x8xf32>, vector<4x16x16xf32> -> vector<4x16x16xf32>
    "tpu.trace_stop"() : () -> ()
    %cst_115 = arith.constant 0.353553385 : f32
    %502 = vector.broadcast %cst_115 : f32 to vector<4x16x16xf32>
    %503 = arith.mulf %501, %502 : vector<4x16x16xf32>
    %504 = arith.addf %503, %335 : vector<4x16x16xf32>
    %cst_116 = arith.constant dense<0xFF800000> : vector<4x16xf32>
    %505 = vector.multi_reduction <maximumf>, %504, %cst_116 [2] : vector<4x16x16xf32> to vector<4x16xf32>
    %506 = vector.shape_cast %505 : vector<4x16xf32> to vector<4x16x1xf32>
    %507 = vector.broadcast %506 : vector<4x16x1xf32> to vector<4x16x16xf32>
    %508 = arith.subf %504, %507 : vector<4x16x16xf32>
    %509 = math.exp %508 : vector<4x16x16xf32>
    %cst_117 = arith.constant dense<0.000000e+00> : vector<4x16xf32>
    %510 = vector.multi_reduction <add>, %509, %cst_117 [2] : vector<4x16x16xf32> to vector<4x16xf32>
    %511 = vector.shape_cast %510 : vector<4x16xf32> to vector<4x16x1xf32>
    %512 = tpu.reciprocal %511 {approx = true} : vector<4x16x1xf32> -> vector<4x16x1xf32>
    %513 = vector.broadcast %512 : vector<4x16x1xf32> to vector<4x16x16xf32>
    %514 = arith.mulf %509, %513 : vector<4x16x16xf32>
    "tpu.trace_start"() <{level = 10 : i32, message = "nqk,nkd->nqd"}> : () -> ()
    %cst_118 = arith.constant dense<0.000000e+00> : vector<4x16x8xf32>
    %515 = tpu.matmul %514, %500, %cst_118 {dimension_numbers = #tpu.dot_dimension_numbers<[2], [1], [1], [2], [0, 0, 0, 1, 1, 2], [0], [0]>} : vector<4x16x16xf32>, vector<4x16x8xf32>, vector<4x16x8xf32> -> vector<4x16x8xf32>
    "tpu.trace_stop"() : () -> ()
    %516 = vector.extract_strided_slice %515 {offsets = [0, 0, 0], sizes = [1, 16, 8], strides = [1, 1, 1]} : vector<4x16x8xf32> to vector<1x16x8xf32>
    %517 = vector.shape_cast %516 : vector<1x16x8xf32> to vector<16x8xf32>
    %518 = vector.extract_strided_slice %515 {offsets = [1, 0, 0], sizes = [1, 16, 8], strides = [1, 1, 1]} : vector<4x16x8xf32> to vector<1x16x8xf32>
    %519 = vector.shape_cast %518 : vector<1x16x8xf32> to vector<16x8xf32>
    %520 = vector.extract_strided_slice %515 {offsets = [2, 0, 0], sizes = [1, 16, 8], strides = [1, 1, 1]} : vector<4x16x8xf32> to vector<1x16x8xf32>
    %521 = vector.shape_cast %520 : vector<1x16x8xf32> to vector<16x8xf32>
    %522 = vector.extract_strided_slice %515 {offsets = [3, 0, 0], sizes = [1, 16, 8], strides = [1, 1, 1]} : vector<4x16x8xf32> to vector<1x16x8xf32>
    %523 = vector.shape_cast %522 : vector<1x16x8xf32> to vector<16x8xf32>
    %524 = tpu.concatenate %517, %519, %521, %523 in 1 : vector<16x8xf32>, vector<16x8xf32>, vector<16x8xf32>, vector<16x8xf32> -> vector<16x32xf32>
    %c0_119 = arith.constant 0 : index
    %c0_120 = arith.constant 0 : index
    %525 = vector.load %arg15[%c0_119, %c0_120] : memref<32x32xf32, #tpu.memory_space<vmem>>, vector<32x32xf32>
    %cst_121 = arith.constant dense<0.000000e+00> : vector<16x32xf32>
    %526 = tpu.matmul %524, %525, %cst_121 {dimension_numbers = #tpu.dot_dimension_numbers<[1], [0], [0], [1], [0, 0, 1, 1], [], []>} : vector<16x32xf32>, vector<32x32xf32>, vector<16x32xf32> -> vector<16x32xf32>
    %527 = vector.broadcast %463 : vector<1x32xf32> to vector<16x32xf32>
    %528 = arith.addf %526, %527 : vector<16x32xf32>
    %529 = arith.addf %461, %528 : vector<16x32xf32>
    %cst_122 = arith.constant dense<0.000000e+00> : vector<16xf32>
    %530 = vector.multi_reduction <add>, %529, %cst_122 [1] : vector<16x32xf32> to vector<16xf32>
    %531 = vector.shape_cast %530 : vector<16xf32> to vector<16x1xf32>
    %cst_123 = arith.constant 3.200000e+01 : f32
    %532 = vector.broadcast %cst_123 : f32 to vector<16x1xf32>
    %533 = arith.divf %531, %532 : vector<16x1xf32>
    %534 = vector.broadcast %533 : vector<16x1xf32> to vector<16x32xf32>
    %535 = arith.subf %529, %534 : vector<16x32xf32>
    %536 = arith.mulf %535, %535 : vector<16x32xf32>
    %cst_124 = arith.constant dense<0.000000e+00> : vector<16xf32>
    %537 = vector.multi_reduction <add>, %536, %cst_124 [1] : vector<16x32xf32> to vector<16xf32>
    %538 = vector.shape_cast %537 : vector<16xf32> to vector<16x1xf32>
    %cst_125 = arith.constant 3.200000e+01 : f32
    %539 = vector.broadcast %cst_125 : f32 to vector<16x1xf32>
    %540 = arith.divf %538, %539 : vector<16x1xf32>
    %cst_126 = arith.constant 9.99999974E-6 : f32
    %541 = vector.broadcast %cst_126 : f32 to vector<16x1xf32>
    %542 = arith.addf %540, %541 : vector<16x1xf32>
    %543 = math.rsqrt %542 : vector<16x1xf32>
    %544 = vector.broadcast %543 : vector<16x1xf32> to vector<16x32xf32>
    %545 = arith.mulf %535, %544 : vector<16x32xf32>
    %546 = vector.broadcast %464 : vector<1x32xf32> to vector<16x32xf32>
    %547 = arith.mulf %545, %546 : vector<16x32xf32>
    %548 = vector.broadcast %465 : vector<1x32xf32> to vector<16x32xf32>
    %549 = arith.addf %547, %548 : vector<16x32xf32>
    %c2_i32_127 = arith.constant 2 : i32
    %550 = tpu.memref_slice %arg30[%c2_i32_127] : memref<4x!tpu.dma_semaphore, #tpu.memory_space<semaphore_mem>> -> memref<1x!tpu.dma_semaphore, #tpu.memory_space<semaphore_mem>>
    %551 = tpu.memref_squeeze %550 : memref<1x!tpu.dma_semaphore, #tpu.memory_space<semaphore_mem>> -> memref<!tpu.dma_semaphore, #tpu.memory_space<semaphore_mem>>
    tpu.wait_dma2 semaphore(%551 : memref<!tpu.dma_semaphore, #tpu.memory_space<semaphore_mem>>) src(%arg22 : memref<32x2048xbf16, #tpu.memory_space<any>>) dst(%arg28 : memref<32x2048xbf16, #tpu.memory_space<vmem>>)
    %552 = arith.truncf %549 : vector<16x32xf32> to vector<16x32xbf16>
    %c0_128 = arith.constant 0 : index
    %c0_129 = arith.constant 0 : index
    %553 = vector.load %arg28[%c0_128, %c0_129] : memref<32x2048xbf16, #tpu.memory_space<vmem>>, vector<32x2048xbf16>
    %cst_130 = arith.constant dense<0.000000e+00> : vector<16x2048xf32>
    %554 = tpu.matmul %552, %553, %cst_130 {dimension_numbers = #tpu.dot_dimension_numbers<[1], [0], [0], [1], [0, 0, 1, 1], [], []>} : vector<16x32xbf16>, vector<32x2048xbf16>, vector<16x2048xf32> -> vector<16x2048xf32>
    %c0_131 = arith.constant 0 : index
    %c0_132 = arith.constant 0 : index
    %555 = vector.load %arg17[%c0_131, %c0_132] : memref<1x2048xf32, #tpu.memory_space<vmem>>, vector<1x2048xf32>
    %556 = vector.broadcast %555 : vector<1x2048xf32> to vector<16x2048xf32>
    %557 = arith.addf %554, %556 : vector<16x2048xf32>
    %cst_133 = arith.constant 0.000000e+00 : f32
    %558 = vector.broadcast %cst_133 : f32 to vector<16x2048xf32>
    %559 = arith.maximumf %557, %558 : vector<16x2048xf32>
    %c3_i32_134 = arith.constant 3 : i32
    %560 = tpu.memref_slice %arg30[%c3_i32_134] : memref<4x!tpu.dma_semaphore, #tpu.memory_space<semaphore_mem>> -> memref<1x!tpu.dma_semaphore, #tpu.memory_space<semaphore_mem>>
    %561 = tpu.memref_squeeze %560 : memref<1x!tpu.dma_semaphore, #tpu.memory_space<semaphore_mem>> -> memref<!tpu.dma_semaphore, #tpu.memory_space<semaphore_mem>>
    tpu.wait_dma2 semaphore(%561 : memref<!tpu.dma_semaphore, #tpu.memory_space<semaphore_mem>>) src(%arg23 : memref<2048x32xbf16, #tpu.memory_space<any>>) dst(%arg29 : memref<2048x32xbf16, #tpu.memory_space<vmem>>)
    %562 = arith.truncf %559 : vector<16x2048xf32> to vector<16x2048xbf16>
    %c0_135 = arith.constant 0 : index
    %c0_136 = arith.constant 0 : index
    %563 = vector.load %arg29[%c0_135, %c0_136] : memref<2048x32xbf16, #tpu.memory_space<vmem>>, vector<2048x32xbf16>
    %cst_137 = arith.constant dense<0.000000e+00> : vector<16x32xf32>
    %564 = tpu.matmul %562, %563, %cst_137 {dimension_numbers = #tpu.dot_dimension_numbers<[1], [0], [0], [1], [0, 0, 1, 1], [], []>} : vector<16x2048xbf16>, vector<2048x32xbf16>, vector<16x32xf32> -> vector<16x32xf32>
    %565 = vector.broadcast %468 : vector<1x32xf32> to vector<16x32xf32>
    %566 = arith.addf %564, %565 : vector<16x32xf32>
    %567 = arith.addf %549, %566 : vector<16x32xf32>
    %cst_138 = arith.constant dense<0.000000e+00> : vector<16xf32>
    %568 = vector.multi_reduction <add>, %567, %cst_138 [1] : vector<16x32xf32> to vector<16xf32>
    %569 = vector.shape_cast %568 : vector<16xf32> to vector<16x1xf32>
    %cst_139 = arith.constant 3.200000e+01 : f32
    %570 = vector.broadcast %cst_139 : f32 to vector<16x1xf32>
    %571 = arith.divf %569, %570 : vector<16x1xf32>
    %572 = vector.broadcast %571 : vector<16x1xf32> to vector<16x32xf32>
    %573 = arith.subf %567, %572 : vector<16x32xf32>
    %574 = arith.mulf %573, %573 : vector<16x32xf32>
    %cst_140 = arith.constant dense<0.000000e+00> : vector<16xf32>
    %575 = vector.multi_reduction <add>, %574, %cst_140 [1] : vector<16x32xf32> to vector<16xf32>
    %576 = vector.shape_cast %575 : vector<16xf32> to vector<16x1xf32>
    %cst_141 = arith.constant 3.200000e+01 : f32
    %577 = vector.broadcast %cst_141 : f32 to vector<16x1xf32>
    %578 = arith.divf %576, %577 : vector<16x1xf32>
    %cst_142 = arith.constant 9.99999974E-6 : f32
    %579 = vector.broadcast %cst_142 : f32 to vector<16x1xf32>
    %580 = arith.addf %578, %579 : vector<16x1xf32>
    %581 = math.rsqrt %580 : vector<16x1xf32>
    %582 = vector.broadcast %581 : vector<16x1xf32> to vector<16x32xf32>
    %583 = arith.mulf %573, %582 : vector<16x32xf32>
    %584 = vector.broadcast %466 : vector<1x32xf32> to vector<16x32xf32>
    %585 = arith.mulf %583, %584 : vector<16x32xf32>
    %586 = vector.broadcast %467 : vector<1x32xf32> to vector<16x32xf32>
    %587 = arith.addf %585, %586 : vector<16x32xf32>
    %588 = vector.extract_strided_slice %587 {offsets = [14, 0], sizes = [2, 32], strides = [1, 1]} : vector<16x32xf32> to vector<2x32xf32>
    %c0_143 = arith.constant 0 : index
    %c0_144 = arith.constant 0 : index
    %589 = vector.load %arg18[%c0_143, %c0_144] : memref<32x1xf32, #tpu.memory_space<vmem>>, vector<32x1xf32>
    %cst_145 = arith.constant dense<0.000000e+00> : vector<2x1xf32>
    %590 = tpu.matmul %588, %589, %cst_145 {dimension_numbers = #tpu.dot_dimension_numbers<[1], [0], [0], [1], [0, 0, 1, 1], [], []>} : vector<2x32xf32>, vector<32x1xf32>, vector<2x1xf32> -> vector<2x1xf32>
    %c0_146 = arith.constant 0 : index
    %c0_147 = arith.constant 0 : index
    %591 = vector.load %arg19[%c0_146, %c0_147] : memref<1x1xf32, #tpu.memory_space<vmem>>, vector<1x1xf32>
    %592 = vector.broadcast %591 : vector<1x1xf32> to vector<2x1xf32>
    %593 = arith.addf %590, %592 : vector<2x1xf32>
    %c0_148 = arith.constant 0 : index
    %c0_149 = arith.constant 0 : index
    %594 = vector.load %arg24[%c0_148, %c0_149] : memref<2x1xf32, #tpu.memory_space<vmem>>, vector<2x1xf32>
    tpu.vector_store %arg24[%c0_148, %c0_149], %593 {strides = array<i32>} : memref<2x1xf32, #tpu.memory_space<vmem>>, vector<2x1xf32>,
    return
  }
}

</mosaic_0001>

<llo_original>
// kernel: time_series_model.1
$region0: #{time_series_model.1}
  #allocation0 [shape = 'u32[]', space=smem, size = 0x4, offset = 0x4, fixed_abs, tag = 'smem constant byte address 0x4 - core index']
  #allocation1 [shape = 'u32[72,128]{1,0:T(1,128)}', space=vmem, size = 0x9000, scoped, tag = 'internal scratch']
  #allocation2 [shape = 'f32[16,32]{1,0:T(8,128)}', space=vmem, size = 0x2000, scoped, tag = 'scratch operand']
  #allocation3 [shape = 'bf16[32,2048]{1,0:T(8,128)(2,1)}', space=vmem, size = 0x20000, scoped, tag = 'scratch operand']
  #allocation4 [shape = 'bf16[2048,32]{1,0:T(8,128)(2,1)}', space=vmem, size = 0x80000, scoped, tag = 'scratch operand']
  #allocation5 [shape = 'bf16[32,2048]{1,0:T(8,128)(2,1)}', space=vmem, size = 0x20000, scoped, tag = 'scratch operand']
  #allocation6 [shape = 'bf16[2048,32]{1,0:T(8,128)(2,1)}', space=vmem, size = 0x80000, scoped, tag = 'scratch operand']
  #allocation7 [shape = 's32[4]{0}', space=sflag, size = 0x10, scoped, tag = 'scratch operand']
  #allocation8 [shape = 'f32[1,1]{1,0:T(1,128)S(1)}', space=vmem, size = 0x200, scoped, tag = 'scoped memory for time_series_model.1']
  #allocation9 [shape = 's32[]', space=sflag, size = 0x4, offset = 0, fixed_abs, tag = 'sflag constant byte address 0x0 - dummy sync flag']
  #allocation10 [shape = 's32[]', space=sflag, size = 0x4, offset = 0, fixed_abs, tag = 'sflag constant byte address 0x0 - dummy sync flag']
  #allocation11 [shape = 's32[]', space=sflag, size = 0x4, offset = 0, fixed_abs, tag = 'sflag constant byte address 0x0 - dummy sync flag']
  #allocation12 [shape = 's32[]', space=sflag, size = 0x4, offset = 0, fixed_abs, tag = 'sflag constant byte address 0x0 - dummy sync flag']
  %s0 = inlined_call_operand.vmem [shape: f32[16,4], index: 0, kind: input, shape index: {}]
  %s1 = inlined_call_operand.vmem [shape: f32[4,16,16], index: 1, kind: input, shape index: {}]
  %s2 = inlined_call_operand.vmem [shape: f32[4,128], index: 2, kind: input, shape index: {}]
  %s3 = inlined_call_operand.vmem [shape: f32[32,128], index: 3, kind: input, shape index: {}]
  %s4 = inlined_call_operand.vmem [shape: f32[1,128], index: 4, kind: input, shape index: {}]
  %s5 = inlined_call_operand.vmem [shape: f32[32,128], index: 5, kind: input, shape index: {}]
  %s6 = inlined_call_operand.vmem [shape: f32[32,128], index: 6, kind: input, shape index: {}]
  %s7 = inlined_call_operand.vmem [shape: f32[1,128], index: 7, kind: input, shape index: {}]
  %s8 = inlined_call_operand.vmem [shape: f32[32,96], index: 8, kind: input, shape index: {}]
  %s9 = inlined_call_operand.vmem [shape: f32[1,96], index: 9, kind: input, shape index: {}]
  %s10 = inlined_call_operand.vmem [shape: f32[32,32], index: 10, kind: input, shape index: {}]
  %s11 = inlined_call_operand.vmem [shape: f32[6,32], index: 11, kind: input, shape index: {}]
  %s12 = inlined_call_operand.vmem [shape: f32[1,2048], index: 12, kind: input, shape index: {}]
  %s13 = inlined_call_operand.vmem [shape: f32[32,96], index: 13, kind: input, shape index: {}]
  %s14 = inlined_call_operand.vmem [shape: f32[1,96], index: 14, kind: input, shape index: {}]
  %s15 = inlined_call_operand.vmem [shape: f32[32,32], index: 15, kind: input, shape index: {}]
  %s16 = inlined_call_operand.vmem [shape: f32[6,32], index: 16, kind: input, shape index: {}]
  %s17 = inlined_call_operand.vmem [shape: f32[1,2048], index: 17, kind: input, shape index: {}]
  %s18 = inlined_call_operand.vmem [shape: f32[32,1], index: 18, kind: input, shape index: {}]
  %s19 = inlined_call_operand.<no memory space> [shape: f32[1,1], index: 19, kind: input, shape index: {}]
  %s20 = inlined_call_operand.vmem [shape: bf16[32,2048], index: 20, kind: input, shape index: {}]
  %s21 = inlined_call_operand.vmem [shape: bf16[2048,32], index: 21, kind: input, shape index: {}]
  %s22 = inlined_call_operand.vmem [shape: bf16[32,2048], index: 22, kind: input, shape index: {}]
  %s23 = inlined_call_operand.vmem [shape: bf16[2048,32], index: 23, kind: input, shape index: {}]
  %s24 = inlined_call_operand.vmem [shape: f32[2,1], index: 24, kind: output, shape index: {}]
  %s25 = sld [smem:[#allocation0]]
  $region166: #{time_series_model.1} parent=0
    _
  %s27 = ssub.s32 1, %s25
  %s28 = scalar_select 0, %s27, %s25
  %v29 = vstv %s19
  %30 = vst [vmem:[#allocation8] sm:$0x1] %v29
  // Predicated region
  $region2: #{time_series_model.1} parent=0 // pred_check
    _
  $region3: #{time_series_model.1} parent=0 // pred_check_branch
    %32 = sbr.rel (0) target = $region5
  $region4: #{time_series_model.1} parent=0 // pred_region
    _
  $region5: #{time_series_model.1} parent=0 // pred_fallthru
    _
  // Predicated region
  $region6: #{time_series_model.1} parent=0 // pred_check
    _
  $region7: #{time_series_model.1} parent=0 // pred_check_branch
    %34 = sbr.rel (0) target = $region9
  $region8: #{time_series_model.1} parent=0 // pred_region
    _
  $region9: #{time_series_model.1} parent=0 // pred_fallthru
    _
  // Predicated region
  $region10: #{time_series_model.1} parent=0 // pred_check
    _
  $region11: #{time_series_model.1} parent=0 // pred_check_branch
    %36 = sbr.rel (0) target = $region13
  $region12: #{time_series_model.1} parent=0 // pred_region
    _
  $region13: #{time_series_model.1} parent=0 // pred_fallthru
    _
  // Predicated region
  $region14: #{time_series_model.1} parent=0 // pred_check
    _
  $region15: #{time_series_model.1} parent=0 // pred_check_branch
    %38 = sbr.rel (0) target = $region17
  $region16: #{time_series_model.1} parent=0 // pred_region
    _
  $region17: #{time_series_model.1} parent=0 // pred_fallthru
    _
  // Predicated region
  $region18: #{time_series_model.1} parent=0 // pred_check
    _
  $region19: #{time_series_model.1} parent=0 // pred_check_branch
    %40 = sbr.rel (0) target = $region21
  $region20: #{time_series_model.1} parent=0 // pred_region
    _
  $region21: #{time_series_model.1} parent=0 // pred_fallthru
    _
  // Predicated region
  $region22: #{time_series_model.1} parent=0 // pred_check
    _
  $region23: #{time_series_model.1} parent=0 // pred_check_branch
    %42 = sbr.rel (0) target = $region25
  $region24: #{time_series_model.1} parent=0 // pred_region
    _
  $region25: #{time_series_model.1} parent=0 // pred_fallthru
    _
  // Predicated region
  $region26: #{time_series_model.1} parent=0 // pred_check
    _
  $region27: #{time_series_model.1} parent=0 // pred_check_branch
    %44 = sbr.rel (0) target = $region29
  $region28: #{time_series_model.1} parent=0 // pred_region
    _
  $region29: #{time_series_model.1} parent=0 // pred_fallthru
    _
  // Predicated region
  $region30: #{time_series_model.1} parent=0 // pred_check
    _
  $region31: #{time_series_model.1} parent=0 // pred_check_branch
    %46 = sbr.rel (0) target = $region33
  $region32: #{time_series_model.1} parent=0 // pred_region
    _
  $region33: #{time_series_model.1} parent=0 // pred_fallthru
    _
  // Predicated region
  $region34: #{time_series_model.1} parent=0 // pred_check
    _
  $region35: #{time_series_model.1} parent=0 // pred_check_branch
    %48 = sbr.rel (0) target = $region37
  $region36: #{time_series_model.1} parent=0 // pred_region
    _
  $region37: #{time_series_model.1} parent=0 // pred_fallthru
    _
  // Predicated region
  $region38: #{time_series_model.1} parent=0 // pred_check
    _
  $region39: #{time_series_model.1} parent=0 // pred_check_branch
    %50 = sbr.rel (0) target = $region41
  $region40: #{time_series_model.1} parent=0 // pred_region
    _
  $region41: #{time_series_model.1} parent=0 // pred_fallthru
    _
  // Predicated region
  $region42: #{time_series_model.1} parent=0 // pred_check
    _
  $region43: #{time_series_model.1} parent=0 // pred_check_branch
    %52 = sbr.rel (0) target = $region45
  $region44: #{time_series_model.1} parent=0 // pred_region
    _
  $region45: #{time_series_model.1} parent=0 // pred_fallthru
    _
  // Predicated region
  $region46: #{time_series_model.1} parent=0 // pred_check
    _
  $region47: #{time_series_model.1} parent=0 // pred_check_branch
    %54 = sbr.rel (0) target = $region49
  $region48: #{time_series_model.1} parent=0 // pred_region
    _
  $region49: #{time_series_model.1} parent=0 // pred_fallthru
    _
  // Predicated region
  $region50: #{time_series_model.1} parent=0 // pred_check
    _
  $region51: #{time_series_model.1} parent=0 // pred_check_branch
    %56 = sbr.rel (0) target = $region53
  $region52: #{time_series_model.1} parent=0 // pred_region
    _
  $region53: #{time_series_model.1} parent=0 // pred_fallthru
    _
  // Predicated region
  $region54: #{time_series_model.1} parent=0 // pred_check
    _
  $region55: #{time_series_model.1} parent=0 // pred_check_branch
    %58 = sbr.rel (0) target = $region57
  $region56: #{time_series_model.1} parent=0 // pred_region
    _
  $region57: #{time_series_model.1} parent=0 // pred_fallthru
    _
  // Predicated region
  $region58: #{time_series_model.1} parent=0 // pred_check
    _
  $region59: #{time_series_model.1} parent=0 // pred_check_branch
    %60 = sbr.rel (0) target = $region61
  $region60: #{time_series_model.1} parent=0 // pred_region
    _
  $region61: #{time_series_model.1} parent=0 // pred_fallthru
    _
  // Predicated region
  $region62: #{time_series_model.1} parent=0 // pred_check
    _
  $region63: #{time_series_model.1} parent=0 // pred_check_branch
    %62 = sbr.rel (0) target = $region65
  $region64: #{time_series_model.1} parent=0 // pred_region
    _
  $region65: #{time_series_model.1} parent=0 // pred_fallthru
    _
  // Predicated region
  $region66: #{time_series_model.1} parent=0 // pred_check
    _
  $region67: #{time_series_model.1} parent=0 // pred_check_branch
    %64 = sbr.rel (0) target = $region69
  $region68: #{time_series_model.1} parent=0 // pred_region
    _
  $region69: #{time_series_model.1} parent=0 // pred_fallthru
    _
  // Predicated region
  $region70: #{time_series_model.1} parent=0 // pred_check
    _
  $region71: #{time_series_model.1} parent=0 // pred_check_branch
    %66 = sbr.rel (0) target = $region73
  $region72: #{time_series_model.1} parent=0 // pred_region
    _
  $region73: #{time_series_model.1} parent=0 // pred_fallthru
    _
  // Predicated region
  $region74: #{time_series_model.1} parent=0 // pred_check
    _
  $region75: #{time_series_model.1} parent=0 // pred_check_branch
    %68 = sbr.rel (0) target = $region77
  $region76: #{time_series_model.1} parent=0 // pred_region
    _
  $region77: #{time_series_model.1} parent=0 // pred_fallthru
    _
  // Predicated region
  $region78: #{time_series_model.1} parent=0 // pred_check
    _
  $region79: #{time_series_model.1} parent=0 // pred_check_branch
    %70 = sbr.rel (0) target = $region81
  $region80: #{time_series_model.1} parent=0 // pred_region
    _
  $region81: #{time_series_model.1} parent=0 // pred_fallthru
    _
  // Predicated region
  $region82: #{time_series_model.1} parent=0 // pred_check
    _
  $region83: #{time_series_model.1} parent=0 // pred_check_branch
    %73 = sbr.rel (0) target = $region85
  $region84: #{time_series_model.1} parent=0 // pred_region
    loop: start=0, step=1, limit=1
    $region86: #{time_series_model.1} parent=84 // loop_pre_header
      _
    $region87: #{time_series_model.1} parent=84 // loop_header
      %s75 = sphi 0, %s79
      %p76 = scmp.ge.s32.totalorder %s75, 1
      %s80 = sphi %s20, %s20
      %s81 = sphi [#allocation3], [#allocation3]
    $region88: #{time_series_model.1} parent=84 // loop_header_branch
      %78 = sbr.rel (%p76) target = $region92
    $region89: #{time_series_model.1} parent=84 // loop_body
      %v82 = vld [vmem:[%s80] sm:$0xff]
      %83 = vst [vmem:[%s81] sm:$0xff] %v82
      %v84 = vld [vmem:[%s80 + $0x8] sm:$0xff]
      %85 = vst [vmem:[%s81 + $0x8] sm:$0xff] %v84
      %v86 = vld [vmem:[%s80 + $0x10] sm:$0xff]
      %87 = vst [vmem:[%s81 + $0x10] sm:$0xff] %v86
      %v88 = vld [vmem:[%s80 + $0x18] sm:$0xff]
      %89 = vst [vmem:[%s81 + $0x18] sm:$0xff] %v88
      %v90 = vld [vmem:[%s80 + $0x20] sm:$0xff]
      %91 = vst [vmem:[%s81 + $0x20] sm:$0xff] %v90
      %v92 = vld [vmem:[%s80 + $0x28] sm:$0xff]
      %93 = vst [vmem:[%s81 + $0x28] sm:$0xff] %v92
      %v94 = vld [vmem:[%s80 + $0x30] sm:$0xff]
      %95 = vst [vmem:[%s81 + $0x30] sm:$0xff] %v94
      %v96 = vld [vmem:[%s80 + $0x38] sm:$0xff]
      %97 = vst [vmem:[%s81 + $0x38] sm:$0xff] %v96
      %v98 = vld [vmem:[%s80 + $0x40] sm:$0xff]
      %99 = vst [vmem:[%s81 + $0x40] sm:$0xff] %v98
      %v100 = vld [vmem:[%s80 + $0x48] sm:$0xff]
      %101 = vst [vmem:[%s81 + $0x48] sm:$0xff] %v100
      %v102 = vld [vmem:[%s80 + $0x50] sm:$0xff]
      %103 = vst [vmem:[%s81 + $0x50] sm:$0xff] %v102
      %v104 = vld [vmem:[%s80 + $0x58] sm:$0xff]
      %105 = vst [vmem:[%s81 + $0x58] sm:$0xff] %v104
      %v106 = vld [vmem:[%s80 + $0x60] sm:$0xff]
      %107 = vst [vmem:[%s81 + $0x60] sm:$0xff] %v106
      %v108 = vld [vmem:[%s80 + $0x68] sm:$0xff]
      %109 = vst [vmem:[%s81 + $0x68] sm:$0xff] %v108
      %v110 = vld [vmem:[%s80 + $0x70] sm:$0xff]
      %111 = vst [vmem:[%s81 + $0x70] sm:$0xff] %v110
      %v112 = vld [vmem:[%s80 + $0x78] sm:$0xff]
      %113 = vst [vmem:[%s81 + $0x78] sm:$0xff] %v112
      %v114 = vld [vmem:[%s80 + $0x80] sm:$0xff]
      %115 = vst [vmem:[%s81 + $0x80] sm:$0xff] %v114
      %v116 = vld [vmem:[%s80 + $0x88] sm:$0xff]
      %117 = vst [vmem:[%s81 + $0x88] sm:$0xff] %v116
      %v118 = vld [vmem:[%s80 + $0x90] sm:$0xff]
      %119 = vst [vmem:[%s81 + $0x90] sm:$0xff] %v118
      %v120 = vld [vmem:[%s80 + $0x98] sm:$0xff]
      %121 = vst [vmem:[%s81 + $0x98] sm:$0xff] %v120
      %v122 = vld [vmem:[%s80 + $0xa0] sm:$0xff]
      %123 = vst [vmem:[%s81 + $0xa0] sm:$0xff] %v122
      %v124 = vld [vmem:[%s80 + $0xa8] sm:$0xff]
      %125 = vst [vmem:[%s81 + $0xa8] sm:$0xff] %v124
      %v126 = vld [vmem:[%s80 + $0xb0] sm:$0xff]
      %127 = vst [vmem:[%s81 + $0xb0] sm:$0xff] %v126
      %v128 = vld [vmem:[%s80 + $0xb8] sm:$0xff]
      %129 = vst [vmem:[%s81 + $0xb8] sm:$0xff] %v128
      %v130 = vld [vmem:[%s80 + $0xc0] sm:$0xff]
      %131 = vst [vmem:[%s81 + $0xc0] sm:$0xff] %v130
      %v132 = vld [vmem:[%s80 + $0xc8] sm:$0xff]
      %133 = vst [vmem:[%s81 + $0xc8] sm:$0xff] %v132
      %v134 = vld [vmem:[%s80 + $0xd0] sm:$0xff]
      %135 = vst [vmem:[%s81 + $0xd0] sm:$0xff] %v134
      %v136 = vld [vmem:[%s80 + $0xd8] sm:$0xff]
      %137 = vst [vmem:[%s81 + $0xd8] sm:$0xff] %v136
      %v138 = vld [vmem:[%s80 + $0xe0] sm:$0xff]
      %139 = vst [vmem:[%s81 + $0xe0] sm:$0xff] %v138
      %v140 = vld [vmem:[%s80 + $0xe8] sm:$0xff]
      %141 = vst [vmem:[%s81 + $0xe8] sm:$0xff] %v140
      %v142 = vld [vmem:[%s80 + $0xf0] sm:$0xff]
      %143 = vst [vmem:[%s81 + $0xf0] sm:$0xff] %v142
      %v144 = vld [vmem:[%s80 + $0xf8] sm:$0xff]
      %145 = vst [vmem:[%s81 + $0xf8] sm:$0xff] %v144
    $region90: #{time_series_model.1} parent=84 // loop_footer
      %s79 = sadd.s32 1, %s75
    $region91: #{time_series_model.1} parent=84 // loop_footer_branch
      %74 = sbr.rel target = $region87
    $region92: #{time_series_model.1} parent=84 // loop_exit
      _
  $region85: #{time_series_model.1} parent=0 // pred_fallthru
    _
  // Predicated region
  $region93: #{time_series_model.1} parent=0 // pred_check
    _
  $region94: #{time_series_model.1} parent=0 // pred_check_branch
    %147 = sbr.rel target = $region96
  $region95: #{time_series_model.1} parent=0 // pred_region
    _
  $region96: #{time_series_model.1} parent=0 // pred_fallthru
    _
  // Predicated region
  $region97: #{time_series_model.1} parent=0 // pred_check
    _
  $region98: #{time_series_model.1} parent=0 // pred_check_branch
    %150 = sbr.rel (0) target = $region100
  $region99: #{time_series_model.1} parent=0 // pred_region
    %151 = vsyncadd [#allocation7], 4096
  $region100: #{time_series_model.1} parent=0 // pred_fallthru
    _
  %s152 = scalar_lea.sflag [#allocation7], 1
  // Predicated region
  $region101: #{time_series_model.1} parent=0 // pred_check
    _
  $region102: #{time_series_model.1} parent=0 // pred_check_branch
    %154 = sbr.rel (0) target = $region104
  $region103: #{time_series_model.1} parent=0 // pred_region
    loop: start=0, step=1, limit=1
    $region105: #{time_series_model.1} parent=103 // loop_pre_header
      _
    $region106: #{time_series_model.1} parent=103 // loop_header
      %s156 = sphi 0, %s160
      %p157 = scmp.ge.s32.totalorder %s156, 1
      %s161 = sphi %s21, %s21
      %s162 = sphi [#allocation4], [#allocation4]
    $region107: #{time_series_model.1} parent=103 // loop_header_branch
      %159 = sbr.rel (%p157) target = $region111
    $region108: #{time_series_model.1} parent=103 // loop_body
      %v163 = vld [vmem:[%s161] sm:$0xff]
      %164 = vst [vmem:[%s162] sm:$0xff] %v163
      %v165 = vld [vmem:[%s161 + $0x8] sm:$0xff]
      %166 = vst [vmem:[%s162 + $0x8] sm:$0xff] %v165
      %v167 = vld [vmem:[%s161 + $0x10] sm:$0xff]
      %168 = vst [vmem:[%s162 + $0x10] sm:$0xff] %v167
      %v169 = vld [vmem:[%s161 + $0x18] sm:$0xff]
      %170 = vst [vmem:[%s162 + $0x18] sm:$0xff] %v169
      %v171 = vld [vmem:[%s161 + $0x20] sm:$0xff]
      %172 = vst [vmem:[%s162 + $0x20] sm:$0xff] %v171
      %v173 = vld [vmem:[%s161 + $0x28] sm:$0xff]
      %174 = vst [vmem:[%s162 + $0x28] sm:$0xff] %v173
      %v175 = vld [vmem:[%s161 + $0x30] sm:$0xff]
      %176 = vst [vmem:[%s162 + $0x30] sm:$0xff] %v175
      %v177 = vld [vmem:[%s161 + $0x38] sm:$0xff]
      %178 = vst [vmem:[%s162 + $0x38] sm:$0xff] %v177
      %v179 = vld [vmem:[%s161 + $0x40] sm:$0xff]
      %180 = vst [vmem:[%s162 + $0x40] sm:$0xff] %v179
      %v181 = vld [vmem:[%s161 + $0x48] sm:$0xff]
      %182 = vst [vmem:[%s162 + $0x48] sm:$0xff] %v181
      %v183 = vld [vmem:[%s161 + $0x50] sm:$0xff]
      %184 = vst [vmem:[%s162 + $0x50] sm:$0xff] %v183
      %v185 = vld [vmem:[%s161 + $0x58] sm:$0xff]
      %186 = vst [vmem:[%s162 + $0x58] sm:$0xff] %v185
      %v187 = vld [vmem:[%s161 + $0x60] sm:$0xff]
      %188 = vst [vmem:[%s162 + $0x60] sm:$0xff] %v187
      %v189 = vld [vmem:[%s161 + $0x68] sm:$0xff]
      %190 = vst [vmem:[%s162 + $0x68] sm:$0xff] %v189
      %v191 = vld [vmem:[%s161 + $0x70] sm:$0xff]
      %192 = vst [vmem:[%s162 + $0x70] sm:$0xff] %v191
      %v193 = vld [vmem:[%s161 + $0x78] sm:$0xff]
      %194 = vst [vmem:[%s162 + $0x78] sm:$0xff] %v193
      %v195 = vld [vmem:[%s161 + $0x80] sm:$0xff]
      %196 = vst [vmem:[%s162 + $0x80] sm:$0xff] %v195
      %v197 = vld [vmem:[%s161 + $0x88] sm:$0xff]
      %198 = vst [vmem:[%s162 + $0x88] sm:$0xff] %v197
      %v199 = vld [vmem:[%s161 + $0x90] sm:$0xff]
      %200 = vst [vmem:[%s162 + $0x90] sm:$0xff] %v199
      %v201 = vld [vmem:[%s161 + $0x98] sm:$0xff]
      %202 = vst [vmem:[%s162 + $0x98] sm:$0xff] %v201
      %v203 = vld [vmem:[%s161 + $0xa0] sm:$0xff]
      %204 = vst [vmem:[%s162 + $0xa0] sm:$0xff] %v203
      %v205 = vld [vmem:[%s161 + $0xa8] sm:$0xff]
      %206 = vst [vmem:[%s162 + $0xa8] sm:$0xff] %v205
      %v207 = vld [vmem:[%s161 + $0xb0] sm:$0xff]
      %208 = vst [vmem:[%s162 + $0xb0] sm:$0xff] %v207
      %v209 = vld [vmem:[%s161 + $0xb8] sm:$0xff]
      %210 = vst [vmem:[%s162 + $0xb8] sm:$0xff] %v209
      %v211 = vld [vmem:[%s161 + $0xc0] sm:$0xff]
      %212 = vst [vmem:[%s162 + $0xc0] sm:$0xff] %v211
      %v213 = vld [vmem:[%s161 + $0xc8] sm:$0xff]
      %214 = vst [vmem:[%s162 + $0xc8] sm:$0xff] %v213
      %v215 = vld [vmem:[%s161 + $0xd0] sm:$0xff]
      %216 = vst [vmem:[%s162 + $0xd0] sm:$0xff] %v215
      %v217 = vld [vmem:[%s161 + $0xd8] sm:$0xff]
      %218 = vst [vmem:[%s162 + $0xd8] sm:$0xff] %v217
      %v219 = vld [vmem:[%s161 + $0xe0] sm:$0xff]
      %220 = vst [vmem:[%s162 + $0xe0] sm:$0xff] %v219
      %v221 = vld [vmem:[%s161 + $0xe8] sm:$0xff]
      %222 = vst [vmem:[%s162 + $0xe8] sm:$0xff] %v221
      %v223 = vld [vmem:[%s161 + $0xf0] sm:$0xff]
      %224 = vst [vmem:[%s162 + $0xf0] sm:$0xff] %v223
      %v225 = vld [vmem:[%s161 + $0xf8] sm:$0xff]
      %226 = vst [vmem:[%s162 + $0xf8] sm:$0xff] %v225
      %v227 = vld [vmem:[%s161 + $0x100] sm:$0xff]
      %228 = vst [vmem:[%s162 + $0x100] sm:$0xff] %v227
      %v229 = vld [vmem:[%s161 + $0x108] sm:$0xff]
      %230 = vst [vmem:[%s162 + $0x108] sm:$0xff] %v229
      %v231 = vld [vmem:[%s161 + $0x110] sm:$0xff]
      %232 = vst [vmem:[%s162 + $0x110] sm:$0xff] %v231
      %v233 = vld [vmem:[%s161 + $0x118] sm:$0xff]
      %234 = vst [vmem:[%s162 + $0x118] sm:$0xff] %v233
      %v235 = vld [vmem:[%s161 + $0x120] sm:$0xff]
      %236 = vst [vmem:[%s162 + $0x120] sm:$0xff] %v235
      %v237 = vld [vmem:[%s161 + $0x128] sm:$0xff]
      %238 = vst [vmem:[%s162 + $0x128] sm:$0xff] %v237
      %v239 = vld [vmem:[%s161 + $0x130] sm:$0xff]
      %240 = vst [vmem:[%s162 + $0x130] sm:$0xff] %v239
      %v241 = vld [vmem:[%s161 + $0x138] sm:$0xff]
      %242 = vst [vmem:[%s162 + $0x138] sm:$0xff] %v241
      %v243 = vld [vmem:[%s161 + $0x140] sm:$0xff]
      %244 = vst [vmem:[%s162 + $0x140] sm:$0xff] %v243
      %v245 = vld [vmem:[%s161 + $0x148] sm:$0xff]
      %246 = vst [vmem:[%s162 + $0x148] sm:$0xff] %v245
      %v247 = vld [vmem:[%s161 + $0x150] sm:$0xff]
      %248 = vst [vmem:[%s162 + $0x150] sm:$0xff] %v247
      %v249 = vld [vmem:[%s161 + $0x158] sm:$0xff]
      %250 = vst [vmem:[%s162 + $0x158] sm:$0xff] %v249
      %v251 = vld [vmem:[%s161 + $0x160] sm:$0xff]
      %252 = vst [vmem:[%s162 + $0x160] sm:$0xff] %v251
      %v253 = vld [vmem:[%s161 + $0x168] sm:$0xff]
      %254 = vst [vmem:[%s162 + $0x168] sm:$0xff] %v253
      %v255 = vld [vmem:[%s161 + $0x170] sm:$0xff]
      %256 = vst [vmem:[%s162 + $0x170] sm:$0xff] %v255
      %v257 = vld [vmem:[%s161 + $0x178] sm:$0xff]
      %258 = vst [vmem:[%s162 + $0x178] sm:$0xff] %v257
      %v259 = vld [vmem:[%s161 + $0x180] sm:$0xff]
      %260 = vst [vmem:[%s162 + $0x180] sm:$0xff] %v259
      %v261 = vld [vmem:[%s161 + $0x188] sm:$0xff]
      %262 = vst [vmem:[%s162 + $0x188] sm:$0xff] %v261
      %v263 = vld [vmem:[%s161 + $0x190] sm:$0xff]
      %264 = vst [vmem:[%s162 + $0x190] sm:$0xff] %v263
      %v265 = vld [vmem:[%s161 + $0x198] sm:$0xff]
      %266 = vst [vmem:[%s162 + $0x198] sm:$0xff] %v265
      %v267 = vld [vmem:[%s161 + $0x1a0] sm:$0xff]
      %268 = vst [vmem:[%s162 + $0x1a0] sm:$0xff] %v267
      %v269 = vld [vmem:[%s161 + $0x1a8] sm:$0xff]
      %270 = vst [vmem:[%s162 + $0x1a8] sm:$0xff] %v269
      %v271 = vld [vmem:[%s161 + $0x1b0] sm:$0xff]
      %272 = vst [vmem:[%s162 + $0x1b0] sm:$0xff] %v271
      %v273 = vld [vmem:[%s161 + $0x1b8] sm:$0xff]
      %274 = vst [vmem:[%s162 + $0x1b8] sm:$0xff] %v273
      %v275 = vld [vmem:[%s161 + $0x1c0] sm:$0xff]
      %276 = vst [vmem:[%s162 + $0x1c0] sm:$0xff] %v275
      %v277 = vld [vmem:[%s161 + $0x1c8] sm:$0xff]
      %278 = vst [vmem:[%s162 + $0x1c8] sm:$0xff] %v277
      %v279 = vld [vmem:[%s161 + $0x1d0] sm:$0xff]
      %280 = vst [vmem:[%s162 + $0x1d0] sm:$0xff] %v279
      %v281 = vld [vmem:[%s161 + $0x1d8] sm:$0xff]
      %282 = vst [vmem:[%s162 + $0x1d8] sm:$0xff] %v281
      %v283 = vld [vmem:[%s161 + $0x1e0] sm:$0xff]
      %284 = vst [vmem:[%s162 + $0x1e0] sm:$0xff] %v283
      %v285 = vld [vmem:[%s161 + $0x1e8] sm:$0xff]
      %286 = vst [vmem:[%s162 + $0x1e8] sm:$0xff] %v285
      %v287 = vld [vmem:[%s161 + $0x1f0] sm:$0xff]
      %288 = vst [vmem:[%s162 + $0x1f0] sm:$0xff] %v287
      %v289 = vld [vmem:[%s161 + $0x1f8] sm:$0xff]
      %290 = vst [vmem:[%s162 + $0x1f8] sm:$0xff] %v289
      %v291 = vld [vmem:[%s161 + $0x200] sm:$0xff]
      %292 = vst [vmem:[%s162 + $0x200] sm:$0xff] %v291
      %v293 = vld [vmem:[%s161 + $0x208] sm:$0xff]
      %294 = vst [vmem:[%s162 + $0x208] sm:$0xff] %v293
      %v295 = vld [vmem:[%s161 + $0x210] sm:$0xff]
      %296 = vst [vmem:[%s162 + $0x210] sm:$0xff] %v295
      %v297 = vld [vmem:[%s161 + $0x218] sm:$0xff]
      %298 = vst [vmem:[%s162 + $0x218] sm:$0xff] %v297
      %v299 = vld [vmem:[%s161 + $0x220] sm:$0xff]
      %300 = vst [vmem:[%s162 + $0x220] sm:$0xff] %v299
      %v301 = vld [vmem:[%s161 + $0x228] sm:$0xff]
      %302 = vst [vmem:[%s162 + $0x228] sm:$0xff] %v301
      %v303 = vld [vmem:[%s161 + $0x230] sm:$0xff]
      %304 = vst [vmem:[%s162 + $0x230] sm:$0xff] %v303
      %v305 = vld [vmem:[%s161 + $0x238] sm:$0xff]
      %306 = vst [vmem:[%s162 + $0x238] sm:$0xff] %v305
      %v307 = vld [vmem:[%s161 + $0x240] sm:$0xff]
      %308 = vst [vmem:[%s162 + $0x240] sm:$0xff] %v307
      %v309 = vld [vmem:[%s161 + $0x248] sm:$0xff]
      %310 = vst [vmem:[%s162 + $0x248] sm:$0xff] %v309
      %v311 = vld [vmem:[%s161 + $0x250] sm:$0xff]
      %312 = vst [vmem:[%s162 + $0x250] sm:$0xff] %v311
      %v313 = vld [vmem:[%s161 + $0x258] sm:$0xff]
      %314 = vst [vmem:[%s162 + $0x258] sm:$0xff] %v313
      %v315 = vld [vmem:[%s161 + $0x260] sm:$0xff]
      %316 = vst [vmem:[%s162 + $0x260] sm:$0xff] %v315
      %v317 = vld [vmem:[%s161 + $0x268] sm:$0xff]
      %318 = vst [vmem:[%s162 + $0x268] sm:$0xff] %v317
      %v319 = vld [vmem:[%s161 + $0x270] sm:$0xff]
      %320 = vst [vmem:[%s162 + $0x270] sm:$0xff] %v319
      %v321 = vld [vmem:[%s161 + $0x278] sm:$0xff]
      %322 = vst [vmem:[%s162 + $0x278] sm:$0xff] %v321
      %v323 = vld [vmem:[%s161 + $0x280] sm:$0xff]
      %324 = vst [vmem:[%s162 + $0x280] sm:$0xff] %v323
      %v325 = vld [vmem:[%s161 + $0x288] sm:$0xff]
      %326 = vst [vmem:[%s162 + $0x288] sm:$0xff] %v325
      %v327 = vld [vmem:[%s161 + $0x290] sm:$0xff]
      %328 = vst [vmem:[%s162 + $0x290] sm:$0xff] %v327
      %v329 = vld [vmem:[%s161 + $0x298] sm:$0xff]
      %330 = vst [vmem:[%s162 + $0x298] sm:$0xff] %v329
      %v331 = vld [vmem:[%s161 + $0x2a0] sm:$0xff]
      %332 = vst [vmem:[%s162 + $0x2a0] sm:$0xff] %v331
      %v333 = vld [vmem:[%s161 + $0x2a8] sm:$0xff]
      %334 = vst [vmem:[%s162 + $0x2a8] sm:$0xff] %v333
      %v335 = vld [vmem:[%s161 + $0x2b0] sm:$0xff]
      %336 = vst [vmem:[%s162 + $0x2b0] sm:$0xff] %v335
      %v337 = vld [vmem:[%s161 + $0x2b8] sm:$0xff]
      %338 = vst [vmem:[%s162 + $0x2b8] sm:$0xff] %v337
      %v339 = vld [vmem:[%s161 + $0x2c0] sm:$0xff]
      %340 = vst [vmem:[%s162 + $0x2c0] sm:$0xff] %v339
      %v341 = vld [vmem:[%s161 + $0x2c8] sm:$0xff]
      %342 = vst [vmem:[%s162 + $0x2c8] sm:$0xff] %v341
      %v343 = vld [vmem:[%s161 + $0x2d0] sm:$0xff]
      %344 = vst [vmem:[%s162 + $0x2d0] sm:$0xff] %v343
      %v345 = vld [vmem:[%s161 + $0x2d8] sm:$0xff]
      %346 = vst [vmem:[%s162 + $0x2d8] sm:$0xff] %v345
      %v347 = vld [vmem:[%s161 + $0x2e0] sm:$0xff]
      %348 = vst [vmem:[%s162 + $0x2e0] sm:$0xff] %v347
      %v349 = vld [vmem:[%s161 + $0x2e8] sm:$0xff]
      %350 = vst [vmem:[%s162 + $0x2e8] sm:$0xff] %v349
      %v351 = vld [vmem:[%s161 + $0x2f0] sm:$0xff]
      %352 = vst [vmem:[%s162 + $0x2f0] sm:$0xff] %v351
      %v353 = vld [vmem:[%s161 + $0x2f8] sm:$0xff]
      %354 = vst [vmem:[%s162 + $0x2f8] sm:$0xff] %v353
      %v355 = vld [vmem:[%s161 + $0x300] sm:$0xff]
      %356 = vst [vmem:[%s162 + $0x300] sm:$0xff] %v355
      %v357 = vld [vmem:[%s161 + $0x308] sm:$0xff]
      %358 = vst [vmem:[%s162 + $0x308] sm:$0xff] %v357
      %v359 = vld [vmem:[%s161 + $0x310] sm:$0xff]
      %360 = vst [vmem:[%s162 + $0x310] sm:$0xff] %v359
      %v361 = vld [vmem:[%s161 + $0x318] sm:$0xff]
      %362 = vst [vmem:[%s162 + $0x318] sm:$0xff] %v361
      %v363 = vld [vmem:[%s161 + $0x320] sm:$0xff]
      %364 = vst [vmem:[%s162 + $0x320] sm:$0xff] %v363
      %v365 = vld [vmem:[%s161 + $0x328] sm:$0xff]
      %366 = vst [vmem:[%s162 + $0x328] sm:$0xff] %v365
      %v367 = vld [vmem:[%s161 + $0x330] sm:$0xff]
      %368 = vst [vmem:[%s162 + $0x330] sm:$0xff] %v367
      %v369 = vld [vmem:[%s161 + $0x338] sm:$0xff]
      %370 = vst [vmem:[%s162 + $0x338] sm:$0xff] %v369
      %v371 = vld [vmem:[%s161 + $0x340] sm:$0xff]
      %372 = vst [vmem:[%s162 + $0x340] sm:$0xff] %v371
      %v373 = vld [vmem:[%s161 + $0x348] sm:$0xff]
      %374 = vst [vmem:[%s162 + $0x348] sm:$0xff] %v373
      %v375 = vld [vmem:[%s161 + $0x350] sm:$0xff]
      %376 = vst [vmem:[%s162 + $0x350] sm:$0xff] %v375
      %v377 = vld [vmem:[%s161 + $0x358] sm:$0xff]
      %378 = vst [vmem:[%s162 + $0x358] sm:$0xff] %v377
      %v379 = vld [vmem:[%s161 + $0x360] sm:$0xff]
      %380 = vst [vmem:[%s162 + $0x360] sm:$0xff] %v379
      %v381 = vld [vmem:[%s161 + $0x368] sm:$0xff]
      %382 = vst [vmem:[%s162 + $0x368] sm:$0xff] %v381
      %v383 = vld [vmem:[%s161 + $0x370] sm:$0xff]
      %384 = vst [vmem:[%s162 + $0x370] sm:$0xff] %v383
      %v385 = vld [vmem:[%s161 + $0x378] sm:$0xff]
      %386 = vst [vmem:[%s162 + $0x378] sm:$0xff] %v385
      %v387 = vld [vmem:[%s161 + $0x380] sm:$0xff]
      %388 = vst [vmem:[%s162 + $0x380] sm:$0xff] %v387
      %v389 = vld [vmem:[%s161 + $0x388] sm:$0xff]
      %390 = vst [vmem:[%s162 + $0x388] sm:$0xff] %v389
      %v391 = vld [vmem:[%s161 + $0x390] sm:$0xff]
      %392 = vst [vmem:[%s162 + $0x390] sm:$0xff] %v391
      %v393 = vld [vmem:[%s161 + $0x398] sm:$0xff]
      %394 = vst [vmem:[%s162 + $0x398] sm:$0xff] %v393
      %v395 = vld [vmem:[%s161 + $0x3a0] sm:$0xff]
      %396 = vst [vmem:[%s162 + $0x3a0] sm:$0xff] %v395
      %v397 = vld [vmem:[%s161 + $0x3a8] sm:$0xff]
      %398 = vst [vmem:[%s162 + $0x3a8] sm:$0xff] %v397
      %v399 = vld [vmem:[%s161 + $0x3b0] sm:$0xff]
      %400 = vst [vmem:[%s162 + $0x3b0] sm:$0xff] %v399
      %v401 = vld [vmem:[%s161 + $0x3b8] sm:$0xff]
      %402 = vst [vmem:[%s162 + $0x3b8] sm:$0xff] %v401
      %v403 = vld [vmem:[%s161 + $0x3c0] sm:$0xff]
      %404 = vst [vmem:[%s162 + $0x3c0] sm:$0xff] %v403
      %v405 = vld [vmem:[%s161 + $0x3c8] sm:$0xff]
      %406 = vst [vmem:[%s162 + $0x3c8] sm:$0xff] %v405
      %v407 = vld [vmem:[%s161 + $0x3d0] sm:$0xff]
      %408 = vst [vmem:[%s162 + $0x3d0] sm:$0xff] %v407
      %v409 = vld [vmem:[%s161 + $0x3d8] sm:$0xff]
      %410 = vst [vmem:[%s162 + $0x3d8] sm:$0xff] %v409
      %v411 = vld [vmem:[%s161 + $0x3e0] sm:$0xff]
      %412 = vst [vmem:[%s162 + $0x3e0] sm:$0xff] %v411
      %v413 = vld [vmem:[%s161 + $0x3e8] sm:$0xff]
      %414 = vst [vmem:[%s162 + $0x3e8] sm:$0xff] %v413
      %v415 = vld [vmem:[%s161 + $0x3f0] sm:$0xff]
      %416 = vst [vmem:[%s162 + $0x3f0] sm:$0xff] %v415
      %v417 = vld [vmem:[%s161 + $0x3f8] sm:$0xff]
      %418 = vst [vmem:[%s162 + $0x3f8] sm:$0xff] %v417
    $region109: #{time_series_model.1} parent=103 // loop_footer
      %s160 = sadd.s32 1, %s156
    $region110: #{time_series_model.1} parent=103 // loop_footer_branch
      %155 = sbr.rel target = $region106
    $region111: #{time_series_model.1} parent=103 // loop_exit
      _
  $region104: #{time_series_model.1} parent=0 // pred_fallthru
    _
  // Predicated region
  $region112: #{time_series_model.1} parent=0 // pred_check
    _
  $region113: #{time_series_model.1} parent=0 // pred_check_branch
    %420 = sbr.rel target = $region115
  $region114: #{time_series_model.1} parent=0 // pred_region
    _
  $region115: #{time_series_model.1} parent=0 // pred_fallthru
    _
  // Predicated region
  $region116: #{time_series_model.1} parent=0 // pred_check
    _
  $region117: #{time_series_model.1} parent=0 // pred_check_branch
    %423 = sbr.rel (0) target = $region119
  $region118: #{time_series_model.1} parent=0 // pred_region
    %424 = vsyncadd %s152, 16384
  $region119: #{time_series_model.1} parent=0 // pred_fallthru
    _
  %v425 = vld [vmem:[%s0] sm:$0xff]
  %v426 = vld [vmem:[%s0 + $0x8] sm:$0xff]
  %v427 = vld [vmem:[%s2] sm:$0xf]
  %v428 = vld [vmem:[%s4] sm:$0x1]
  %v430 = vperm.slane %v428, 0
  %vm432 = vcmask 31744
  %v434 = vsel %vm432, %v425, 0
  %v437 = vsel %vm432, %v426, 0
  %vm439 = vcmask 1043456
  %v441 = vsel %vm439, %v427, 0
  %443 = vmatpush.msra.mxu0 0.0
  %444 = vmatpush.msra.mxu0 0.0
  %445 = vmatpush.msra.mxu0 0.0
  %446 = vmatpush.msra.mxu0 0.0
  %447 = vmatpush.msra.mxu0 0.0
  %448 = vmatpush.msra.mxu0 0.0
  %449 = vmatpush.msra.mxu0 0.0
  %450 = vmatpush.msra.mxu0 0.0
  %451 = vmatpush.msra.mxu0 0.0
  %452 = vmatpush.msra.mxu0 0.0
  %453 = vmatpush.msra.mxu0 0.0
  %454 = vmatpush.msra.mxu0 0.0
  %455 = vmatpush.msra.mxu0 0.0
  %456 = vmatpush.msra.mxu0 0.0
  %457 = vmatpush.msra.mxu0 0.0
  %458 = vmatpush.msra.mxu0 %v441
  %459 = vmatmul.f32.gmra.mxu0 %v434
  %v460 = vpop.f32.mrf.mxu0
  %v461 = vadd.f32 %v430, %v460
  %462 = vmatmul.f32.gmra.mxu0 %v437
  %v463 = vpop.f32.mrf.mxu0
  %v464 = vadd.f32 %v430, %v463
  %465 = vdwg.mxu0
  %v466 = vld [vmem:[%s3] sm:$0xff]
  %v467 = vld [vmem:[%s3 + $0x8] sm:$0xff]
  %v468 = vld [vmem:[%s3 + $0x10] sm:$0xff]
  %v469 = vld [vmem:[%s3 + $0x18] sm:$0xff]
  %v470 = vld [vmem:[%s5] sm:$0xff]
  %v471 = vld [vmem:[%s5 + $0x8] sm:$0xff]
  %v472 = vld [vmem:[%s5 + $0x10] sm:$0xff]
  %v473 = vld [vmem:[%s5 + $0x18] sm:$0xff]
  %v474 = vld [vmem:[%s6] sm:$0xff]
  %v475 = vld [vmem:[%s6 + $0x8] sm:$0xff]
  %v476 = vld [vmem:[%s6 + $0x10] sm:$0xff]
  %v477 = vld [vmem:[%s6 + $0x18] sm:$0xff]
  %v478 = vld [vmem:[%s7] sm:$0x1]
  %vm479 = vcmask 261120
  %v481 = vsel %vm479, 0.0, 0
  %483 = vmatpush.msra.mxu0 0.0
  %484 = vmatpush.msra.mxu0 0.0
  %485 = vmatpush.msra.mxu0 0.0
  %486 = vmatpush.msra.mxu0 0.0
  %487 = vmatpush.msra.mxu0 0.0
  %488 = vmatpush.msra.mxu0 0.0
  %489 = vmatpush.msra.mxu0 0.0
  %490 = vmatpush.msra.mxu0 0.0
  %491 = vmatpush.msra.mxu0 0.0
  %492 = vmatpush.msra.mxu0 0.0
  %493 = vmatpush.msra.mxu0 0.0
  %494 = vmatpush.msra.mxu0 0.0
  %495 = vmatpush.msra.mxu0 %v469
  %496 = vmatpush.msra.mxu0 %v468
  %497 = vmatpush.msra.mxu0 %v467
  %498 = vmatpush.msra.mxu0 %v466
  %499 = vmatmul.f32.gmra.mxu0 %v481
  %v500 = vpop.f32.mrf.mxu0
  %v501 = vadd.f32 0.0, %v500
  %502 = vdwg.mxu0
  %v503 = vadd.f32 %v461, %v501
  %v504 = vxor.u32 %v503, 2147483648
  %v505 = vmul.f32 %v504, 1.442695
  %v506 = vpow.pop %v505
  %v507 = vadd.f32 %v506, 1.0
  %v508 = vrcp.pop %v507
  %v509 = vmul.f32 %v507, %v508
  %v510 = vsub.f32 1.0, %v509
  %v511 = vmul.f32 %v508, %v510
  %v512 = vadd.f32 %v508, %v511
  %vm513 = vweird.f32 %v507
  %vm514 = vweird.f32 %v508
  %vm515 = vmor %vm513, %vm514
  %v516 = vsel %vm515, %v508, %v512
  %v517 = vand.u32 2147483647, %v507
  %vm518 = vcmp.eq.f32.partialorder %v517, 8.507059e+37
  %v519 = vand.u32 %v507, 2147483648
  %v520 = vor.u32 1.1754944e-38, %v519
  %v521 = vsel %vm518, %v520, %v516
  %v522 = vmul.f32 1.0, %v521
  %v523 = vtanh.pop %v503
  %v524 = vmul.f32 %v522, 0.0
  %526 = vrot.lane.b32.xlu0 %v523, 64
  %v527 = vpop.permute.xlu0 %526
  %v529 = vmul.f32 %v522, %v527
  %531 = vrot.lane.b32.xlu0 %v529, 32
  %v532 = vpop.permute.xlu0 %531
  %v534 = vadd.f32 %v524, %v532
  %v535 = vtanh.pop %v534
  %537 = vrot.lane.b32.xlu0 %v535, 64
  %v538 = vpop.permute.xlu0 %537
  %v540 = vmul.f32 %v522, %v538
  %541 = vmatpush.msra.mxu0 0.0
  %542 = vmatpush.msra.mxu0 0.0
  %543 = vmatpush.msra.mxu0 0.0
  %544 = vmatpush.msra.mxu0 0.0
  %545 = vmatpush.msra.mxu0 0.0
  %546 = vmatpush.msra.mxu0 0.0
  %547 = vmatpush.msra.mxu0 0.0
  %548 = vmatpush.msra.mxu0 0.0
  %549 = vmatpush.msra.mxu0 0.0
  %550 = vmatpush.msra.mxu0 0.0
  %551 = vmatpush.msra.mxu0 0.0
  %552 = vmatpush.msra.mxu0 0.0
  %553 = vmatpush.msra.mxu0 %v477
  %554 = vmatpush.msra.mxu0 %v476
  %555 = vmatpush.msra.mxu0 %v475
  %556 = vmatpush.msra.mxu0 %v474
  %557 = vmatmul.f32.gmra.mxu0 %v481
  %v558 = vpop.f32.mrf.mxu0
  %v559 = vadd.f32 0.0, %v558
  %560 = vdwg.mxu0
  %562 = vrot.lane.b32.xlu0 %v540, 32
  %v563 = vpop.permute.xlu0 %562
  %v564 = vsel %vm479, %v563, 0
  %566 = vmatpush.msra.mxu0 0.0
  %567 = vmatpush.msra.mxu0 0.0
  %568 = vmatpush.msra.mxu0 0.0
  %569 = vmatpush.msra.mxu0 0.0
  %570 = vmatpush.msra.mxu0 0.0
  %571 = vmatpush.msra.mxu0 0.0
  %572 = vmatpush.msra.mxu0 0.0
  %573 = vmatpush.msra.mxu0 0.0
  %574 = vmatpush.msra.mxu0 0.0
  %575 = vmatpush.msra.mxu0 0.0
  %576 = vmatpush.msra.mxu0 0.0
  %577 = vmatpush.msra.mxu0 0.0
  %578 = vmatpush.msra.mxu0 %v473
  %579 = vmatpush.msra.mxu0 %v472
  %580 = vmatpush.msra.mxu0 %v471
  %581 = vmatpush.msra.mxu0 %v470
  %582 = vmatmul.f32.gmra.mxu0 %v564
  %v583 = vpop.f32.mrf.mxu0
  %v584 = vadd.f32 %v559, %v583
  %585 = vdwg.mxu0
  %v587 = vperm.slane %v478, 0
  %v589 = vadd.f32 %v584, %v587
  %v590 = vxor.u32 %v589, 2147483648
  %v591 = vmul.f32 %v590, 1.442695
  %v592 = vpow.pop %v591
  %v593 = vadd.f32 %v592, 1.0
  %v594 = vrcp.pop %v593
  %v595 = vmul.f32 %v593, %v594
  %v596 = vsub.f32 1.0, %v595
  %v597 = vmul.f32 %v594, %v596
  %v598 = vadd.f32 %v594, %v597
  %vm599 = vweird.f32 %v593
  %vm600 = vweird.f32 %v594
  %vm601 = vmor %vm599, %vm600
  %v602 = vsel %vm601, %v594, %v598
  %v603 = vand.u32 2147483647, %v593
  %vm604 = vcmp.eq.f32.partialorder %v603, 8.507059e+37
  %v605 = vand.u32 %v593, 2147483648
  %v606 = vor.u32 1.1754944e-38, %v605
  %v607 = vsel %vm604, %v606, %v602
  %v608 = vmul.f32 1.0, %v607
  %v609 = vtanh.pop %v589
  %v610 = vmul.f32 %v608, 0.0
  %612 = vrot.lane.b32.xlu0 %v609, 64
  %v613 = vpop.permute.xlu0 %612
  %v615 = vmul.f32 %v608, %v613
  %617 = vrot.lane.b32.xlu0 %v615, 32
  %v618 = vpop.permute.xlu0 %617
  %v620 = vadd.f32 %v610, %v618
  %v621 = vtanh.pop %v620
  %623 = vrot.lane.b32.xlu0 %v621, 64
  %v624 = vpop.permute.xlu0 %623
  %v626 = vmul.f32 %v608, %v624
  %628 = vrot.lane.b32.xlu0 %v626, 32
  %v629 = vpop.permute.xlu0 %628
  %vm631 = vcmask 254976
  %632 = vst.msk [vmem:[#allocation2] sm:$0x3] %vm631, %v629
  %633 = vmatpush.msra.mxu0 0.0
  %634 = vmatpush.msra.mxu0 0.0
  %635 = vmatpush.msra.mxu0 0.0
  %636 = vmatpush.msra.mxu0 0.0
  %637 = vmatpush.msra.mxu0 0.0
  %638 = vmatpush.msra.mxu0 0.0
  %639 = vmatpush.msra.mxu0 0.0
  %640 = vmatpush.msra.mxu0 0.0
  %641 = vmatpush.msra.mxu0 0.0
  %642 = vmatpush.msra.mxu0 0.0
  %643 = vmatpush.msra.mxu0 0.0
  %644 = vmatpush.msra.mxu0 0.0
  %645 = vmatpush.msra.mxu0 %v469
  %646 = vmatpush.msra.mxu0 %v468
  %647 = vmatpush.msra.mxu0 %v467
  %648 = vmatpush.msra.mxu0 %v466
  %649 = vmatmul.f32.gmra.mxu0 %v564
  %v650 = vpop.f32.mrf.mxu0
  %v651 = vadd.f32 0.0, %v650
  %652 = vdwg.mxu0
  %v654 = vrot.slane %v651, 6
  %v656 = vadd.f32 %v461, %v654
  %v657 = vxor.u32 %v656, 2147483648
  %v658 = vmul.f32 %v657, 1.442695
  %v659 = vpow.pop %v658
  %v660 = vadd.f32 %v659, 1.0
  %v661 = vrcp.pop %v660
  %v662 = vmul.f32 %v660, %v661
  %v663 = vsub.f32 1.0, %v662
  %v664 = vmul.f32 %v661, %v663
  %v665 = vadd.f32 %v661, %v664
  %vm666 = vweird.f32 %v660
  %vm667 = vweird.f32 %v661
  %vm668 = vmor %vm666, %vm667
  %v669 = vsel %vm668, %v661, %v665
  %v670 = vand.u32 2147483647, %v660
  %vm671 = vcmp.eq.f32.partialorder %v670, 8.507059e+37
  %v672 = vand.u32 %v660, 2147483648
  %v673 = vor.u32 1.1754944e-38, %v672
  %v674 = vsel %vm671, %v673, %v669
  %v675 = vmul.f32 1.0, %v674
  %v676 = vtanh.pop %v656
  %v678 = vrot.slane %v534, 6
  %v680 = vmul.f32 %v675, %v678
  %682 = vrot.lane.b32.xlu0 %v676, 64
  %v683 = vpop.permute.xlu0 %682
  %v685 = vmul.f32 %v675, %v683
  %687 = vrot.lane.b32.xlu0 %v685, 32
  %v688 = vpop.permute.xlu0 %687
  %v690 = vadd.f32 %v680, %v688
  %v691 = vtanh.pop %v690
  %693 = vrot.lane.b32.xlu0 %v691, 64
  %v694 = vpop.permute.xlu0 %693
  %v696 = vmul.f32 %v675, %v694
  %v697 = vsel %vm479, %v629, 0
  %699 = vmatpush.msra.mxu0 0.0
  %700 = vmatpush.msra.mxu0 0.0
  %701 = vmatpush.msra.mxu0 0.0
  %702 = vmatpush.msra.mxu0 0.0
  %703 = vmatpush.msra.mxu0 0.0
  %704 = vmatpush.msra.mxu0 0.0
  %705 = vmatpush.msra.mxu0 0.0
  %706 = vmatpush.msra.mxu0 0.0
  %707 = vmatpush.msra.mxu0 0.0
  %708 = vmatpush.msra.mxu0 0.0
  %709 = vmatpush.msra.mxu0 0.0
  %710 = vmatpush.msra.mxu0 0.0
  %711 = vmatpush.msra.mxu0 %v477
  %712 = vmatpush.msra.mxu0 %v476
  %713 = vmatpush.msra.mxu0 %v475
  %714 = vmatpush.msra.mxu0 %v474
  %715 = vmatmul.f32.gmra.mxu0 %v697
  %v716 = vpop.f32.mrf.mxu0
  %v717 = vadd.f32 0.0, %v716
  %718 = vdwg.mxu0
  %v720 = vrot.slane %v696, 2
  %721 = vrot.lane.b32.xlu0 %v720, 32
  %v722 = vpop.permute.xlu0 %721
  %v723 = vsel %vm479, %v722, 0
  %725 = vmatpush.msra.mxu0 0.0
  %726 = vmatpush.msra.mxu0 0.0
  %727 = vmatpush.msra.mxu0 0.0
  %728 = vmatpush.msra.mxu0 0.0
  %729 = vmatpush.msra.mxu0 0.0
  %730 = vmatpush.msra.mxu0 0.0
  %731 = vmatpush.msra.mxu0 0.0
  %732 = vmatpush.msra.mxu0 0.0
  %733 = vmatpush.msra.mxu0 0.0
  %734 = vmatpush.msra.mxu0 0.0
  %735 = vmatpush.msra.mxu0 0.0
  %736 = vmatpush.msra.mxu0 0.0
  %737 = vmatpush.msra.mxu0 %v473
  %738 = vmatpush.msra.mxu0 %v472
  %739 = vmatpush.msra.mxu0 %v471
  %740 = vmatpush.msra.mxu0 %v470
  %741 = vmatmul.f32.gmra.mxu0 %v723
  %v742 = vpop.f32.mrf.mxu0
  %v743 = vadd.f32 %v717, %v742
  %744 = vdwg.mxu0
  %v745 = vadd.f32 %v743, %v587
  %v746 = vxor.u32 %v745, 2147483648
  %v747 = vmul.f32 %v746, 1.442695
  %v748 = vpow.pop %v747
  %v749 = vadd.f32 %v748, 1.0
  %v750 = vrcp.pop %v749
  %v751 = vmul.f32 %v749, %v750
  %v752 = vsub.f32 1.0, %v751
  %v753 = vmul.f32 %v750, %v752
  %v754 = vadd.f32 %v750, %v753
  %vm755 = vweird.f32 %v749
  %vm756 = vweird.f32 %v750
  %vm757 = vmor %vm755, %vm756
  %v758 = vsel %vm757, %v750, %v754
  %v759 = vand.u32 2147483647, %v749
  %vm760 = vcmp.eq.f32.partialorder %v759, 8.507059e+37
  %v761 = vand.u32 %v749, 2147483648
  %v762 = vor.u32 1.1754944e-38, %v761
  %v763 = vsel %vm760, %v762, %v758
  %v764 = vmul.f32 1.0, %v763
  %v765 = vtanh.pop %v745
  %v766 = vmul.f32 %v764, %v620
  %768 = vrot.lane.b32.xlu0 %v765, 64
  %v769 = vpop.permute.xlu0 %768
  %v771 = vmul.f32 %v764, %v769
  %773 = vrot.lane.b32.xlu0 %v771, 32
  %v774 = vpop.permute.xlu0 %773
  %v776 = vadd.f32 %v766, %v774
  %v777 = vtanh.pop %v776
  %779 = vrot.lane.b32.xlu0 %v777, 64
  %v780 = vpop.permute.xlu0 %779
  %v782 = vmul.f32 %v764, %v780
  %784 = vrot.lane.b32.xlu0 %v782, 32
  %v785 = vpop.permute.xlu0 %784
  %787 = vst.msk [vmem:[#allocation2 + $0x2] sm:$0x3] %vm631, %v785
  %788 = vmatpush.msra.mxu0 0.0
  %789 = vmatpush.msra.mxu0 0.0
  %790 = vmatpush.msra.mxu0 0.0
  %791 = vmatpush.msra.mxu0 0.0
  %792 = vmatpush.msra.mxu0 0.0
  %793 = vmatpush.msra.mxu0 0.0
  %794 = vmatpush.msra.mxu0 0.0
  %795 = vmatpush.msra.mxu0 0.0
  %796 = vmatpush.msra.mxu0 0.0
  %797 = vmatpush.msra.mxu0 0.0
  %798 = vmatpush.msra.mxu0 0.0
  %799 = vmatpush.msra.mxu0 0.0
  %800 = vmatpush.msra.mxu0 %v469
  %801 = vmatpush.msra.mxu0 %v468
  %802 = vmatpush.msra.mxu0 %v467
  %803 = vmatpush.msra.mxu0 %v466
  %804 = vmatmul.f32.gmra.mxu0 %v723
  %v805 = vpop.f32.mrf.mxu0
  %v806 = vadd.f32 0.0, %v805
  %807 = vdwg.mxu0
  %v809 = vrot.slane %v806, 4
  %v811 = vadd.f32 %v461, %v809
  %v812 = vxor.u32 %v811, 2147483648
  %v813 = vmul.f32 %v812, 1.442695
  %v814 = vpow.pop %v813
  %v815 = vadd.f32 %v814, 1.0
  %v816 = vrcp.pop %v815
  %v817 = vmul.f32 %v815, %v816
  %v818 = vsub.f32 1.0, %v817
  %v819 = vmul.f32 %v816, %v818
  %v820 = vadd.f32 %v816, %v819
  %vm821 = vweird.f32 %v815
  %vm822 = vweird.f32 %v816
  %vm823 = vmor %vm821, %vm822
  %v824 = vsel %vm823, %v816, %v820
  %v825 = vand.u32 2147483647, %v815
  %vm826 = vcmp.eq.f32.partialorder %v825, 8.507059e+37
  %v827 = vand.u32 %v815, 2147483648
  %v828 = vor.u32 1.1754944e-38, %v827
  %v829 = vsel %vm826, %v828, %v824
  %v830 = vmul.f32 1.0, %v829
  %v831 = vtanh.pop %v811
  %v833 = vrot.slane %v690, 6
  %v835 = vmul.f32 %v830, %v833
  %837 = vrot.lane.b32.xlu0 %v831, 64
  %v838 = vpop.permute.xlu0 %837
  %v840 = vmul.f32 %v830, %v838
  %842 = vrot.lane.b32.xlu0 %v840, 32
  %v843 = vpop.permute.xlu0 %842
  %v845 = vadd.f32 %v835, %v843
  %v846 = vtanh.pop %v845
  %848 = vrot.lane.b32.xlu0 %v846, 64
  %v849 = vpop.permute.xlu0 %848
  %v851 = vmul.f32 %v830, %v849
  %v852 = vsel %vm479, %v785, 0
  %854 = vmatpush.msra.mxu0 0.0
  %855 = vmatpush.msra.mxu0 0.0
  %856 = vmatpush.msra.mxu0 0.0
  %857 = vmatpush.msra.mxu0 0.0
  %858 = vmatpush.msra.mxu0 0.0
  %859 = vmatpush.msra.mxu0 0.0
  %860 = vmatpush.msra.mxu0 0.0
  %861 = vmatpush.msra.mxu0 0.0
  %862 = vmatpush.msra.mxu0 0.0
  %863 = vmatpush.msra.mxu0 0.0
  %864 = vmatpush.msra.mxu0 0.0
  %865 = vmatpush.msra.mxu0 0.0
  %866 = vmatpush.msra.mxu0 %v477
  %867 = vmatpush.msra.mxu0 %v476
  %868 = vmatpush.msra.mxu0 %v475
  %869 = vmatpush.msra.mxu0 %v474
  %870 = vmatmul.f32.gmra.mxu0 %v852
  %v871 = vpop.f32.mrf.mxu0
  %v872 = vadd.f32 0.0, %v871
  %873 = vdwg.mxu0
  %v875 = vrot.slane %v851, 4
  %876 = vrot.lane.b32.xlu0 %v875, 32
  %v877 = vpop.permute.xlu0 %876
  %v878 = vsel %vm479, %v877, 0
  %880 = vmatpush.msra.mxu0 0.0
  %881 = vmatpush.msra.mxu0 0.0
  %882 = vmatpush.msra.mxu0 0.0
  %883 = vmatpush.msra.mxu0 0.0
  %884 = vmatpush.msra.mxu0 0.0
  %885 = vmatpush.msra.mxu0 0.0
  %886 = vmatpush.msra.mxu0 0.0
  %887 = vmatpush.msra.mxu0 0.0
  %888 = vmatpush.msra.mxu0 0.0
  %889 = vmatpush.msra.mxu0 0.0
  %890 = vmatpush.msra.mxu0 0.0
  %891 = vmatpush.msra.mxu0 0.0
  %892 = vmatpush.msra.mxu0 %v473
  %893 = vmatpush.msra.mxu0 %v472
  %894 = vmatpush.msra.mxu0 %v471
  %895 = vmatpush.msra.mxu0 %v470
  %896 = vmatmul.f32.gmra.mxu0 %v878
  %v897 = vpop.f32.mrf.mxu0
  %v898 = vadd.f32 %v872, %v897
  %899 = vdwg.mxu0
  %v900 = vadd.f32 %v898, %v587
  %v901 = vxor.u32 %v900, 2147483648
  %v902 = vmul.f32 %v901, 1.442695
  %v903 = vpow.pop %v902
  %v904 = vadd.f32 %v903, 1.0
  %v905 = vrcp.pop %v904
  %v906 = vmul.f32 %v904, %v905
  %v907 = vsub.f32 1.0, %v906
  %v908 = vmul.f32 %v905, %v907
  %v909 = vadd.f32 %v905, %v908
  %vm910 = vweird.f32 %v904
  %vm911 = vweird.f32 %v905
  %vm912 = vmor %vm910, %vm911
  %v913 = vsel %vm912, %v905, %v909
  %v914 = vand.u32 2147483647, %v904
  %vm915 = vcmp.eq.f32.partialorder %v914, 8.507059e+37
  %v916 = vand.u32 %v904, 2147483648
  %v917 = vor.u32 1.1754944e-38, %v916
  %v918 = vsel %vm915, %v917, %v913
  %v919 = vmul.f32 1.0, %v918
  %v920 = vtanh.pop %v900
  %v921 = vmul.f32 %v919, %v776
  %923 = vrot.lane.b32.xlu0 %v920, 64
  %v924 = vpop.permute.xlu0 %923
  %v926 = vmul.f32 %v919, %v924
  %928 = vrot.lane.b32.xlu0 %v926, 32
  %v929 = vpop.permute.xlu0 %928
  %v931 = vadd.f32 %v921, %v929
  %v932 = vtanh.pop %v931
  %934 = vrot.lane.b32.xlu0 %v932, 64
  %v935 = vpop.permute.xlu0 %934
  %v937 = vmul.f32 %v919, %v935
  %939 = vrot.lane.b32.xlu0 %v937, 32
  %v940 = vpop.permute.xlu0 %939
  %942 = vst.msk [vmem:[#allocation2 + $0x4] sm:$0x3] %vm631, %v940
  %943 = vmatpush.msra.mxu0 0.0
  %944 = vmatpush.msra.mxu0 0.0
  %945 = vmatpush.msra.mxu0 0.0
  %946 = vmatpush.msra.mxu0 0.0
  %947 = vmatpush.msra.mxu0 0.0
  %948 = vmatpush.msra.mxu0 0.0
  %949 = vmatpush.msra.mxu0 0.0
  %950 = vmatpush.msra.mxu0 0.0
  %951 = vmatpush.msra.mxu0 0.0
  %952 = vmatpush.msra.mxu0 0.0
  %953 = vmatpush.msra.mxu0 0.0
  %954 = vmatpush.msra.mxu0 0.0
  %955 = vmatpush.msra.mxu0 %v469
  %956 = vmatpush.msra.mxu0 %v468
  %957 = vmatpush.msra.mxu0 %v467
  %958 = vmatpush.msra.mxu0 %v466
  %959 = vmatmul.f32.gmra.mxu0 %v878
  %v960 = vpop.f32.mrf.mxu0
  %v961 = vadd.f32 0.0, %v960
  %962 = vdwg.mxu0
  %v964 = vrot.slane %v961, 2
  %v966 = vadd.f32 %v461, %v964
  %v967 = vxor.u32 %v966, 2147483648
  %v968 = vmul.f32 %v967, 1.442695
  %v969 = vpow.pop %v968
  %v970 = vadd.f32 %v969, 1.0
  %v971 = vrcp.pop %v970
  %v972 = vmul.f32 %v970, %v971
  %v973 = vsub.f32 1.0, %v972
  %v974 = vmul.f32 %v971, %v973
  %v975 = vadd.f32 %v971, %v974
  %vm976 = vweird.f32 %v970
  %vm977 = vweird.f32 %v971
  %vm978 = vmor %vm976, %vm977
  %v979 = vsel %vm978, %v971, %v975
  %v980 = vand.u32 2147483647, %v970
  %vm981 = vcmp.eq.f32.partialorder %v980, 8.507059e+37
  %v982 = vand.u32 %v970, 2147483648
  %v983 = vor.u32 1.1754944e-38, %v982
  %v984 = vsel %vm981, %v983, %v979
  %v985 = vmul.f32 1.0, %v984
  %v986 = vtanh.pop %v966
  %v988 = vrot.slane %v845, 6
  %v990 = vmul.f32 %v985, %v988
  %992 = vrot.lane.b32.xlu0 %v986, 64
  %v993 = vpop.permute.xlu0 %992
  %v995 = vmul.f32 %v985, %v993
  %997 = vrot.lane.b32.xlu0 %v995, 32
  %v998 = vpop.permute.xlu0 %997
  %v1000 = vadd.f32 %v990, %v998
  %v1001 = vtanh.pop %v1000
  %1003 = vrot.lane.b32.xlu0 %v1001, 64
  %v1004 = vpop.permute.xlu0 %1003
  %v1006 = vmul.f32 %v985, %v1004
  %v1007 = vsel %vm479, %v940, 0
  %1009 = vmatpush.msra.mxu0 0.0
  %1010 = vmatpush.msra.mxu0 0.0
  %1011 = vmatpush.msra.mxu0 0.0
  %1012 = vmatpush.msra.mxu0 0.0
  %1013 = vmatpush.msra.mxu0 0.0
  %1014 = vmatpush.msra.mxu0 0.0
  %1015 = vmatpush.msra.mxu0 0.0
  %1016 = vmatpush.msra.mxu0 0.0
  %1017 = vmatpush.msra.mxu0 0.0
  %1018 = vmatpush.msra.mxu0 0.0
  %1019 = vmatpush.msra.mxu0 0.0
  %1020 = vmatpush.msra.mxu0 0.0
  %1021 = vmatpush.msra.mxu0 %v477
  %1022 = vmatpush.msra.mxu0 %v476
  %1023 = vmatpush.msra.mxu0 %v475
  %1024 = vmatpush.msra.mxu0 %v474
  %1025 = vmatmul.f32.gmra.mxu0 %v1007
  %v1026 = vpop.f32.mrf.mxu0
  %v1027 = vadd.f32 0.0, %v1026
  %1028 = vdwg.mxu0
  %v1030 = vrot.slane %v1006, 6
  %1031 = vrot.lane.b32.xlu0 %v1030, 32
  %v1032 = vpop.permute.xlu0 %1031
  %v1033 = vsel %vm479, %v1032, 0
  %1035 = vmatpush.msra.mxu0 0.0
  %1036 = vmatpush.msra.mxu0 0.0
  %1037 = vmatpush.msra.mxu0 0.0
  %1038 = vmatpush.msra.mxu0 0.0
  %1039 = vmatpush.msra.mxu0 0.0
  %1040 = vmatpush.msra.mxu0 0.0
  %1041 = vmatpush.msra.mxu0 0.0
  %1042 = vmatpush.msra.mxu0 0.0
  %1043 = vmatpush.msra.mxu0 0.0
  %1044 = vmatpush.msra.mxu0 0.0
  %1045 = vmatpush.msra.mxu0 0.0
  %1046 = vmatpush.msra.mxu0 0.0
  %1047 = vmatpush.msra.mxu0 %v473
  %1048 = vmatpush.msra.mxu0 %v472
  %1049 = vmatpush.msra.mxu0 %v471
  %1050 = vmatpush.msra.mxu0 %v470
  %1051 = vmatmul.f32.gmra.mxu0 %v1033
  %v1052 = vpop.f32.mrf.mxu0
  %v1053 = vadd.f32 %v1027, %v1052
  %1054 = vdwg.mxu0
  %v1055 = vadd.f32 %v1053, %v587
  %v1056 = vxor.u32 %v1055, 2147483648
  %v1057 = vmul.f32 %v1056, 1.442695
  %v1058 = vpow.pop %v1057
  %v1059 = vadd.f32 %v1058, 1.0
  %v1060 = vrcp.pop %v1059
  %v1061 = vmul.f32 %v1059, %v1060
  %v1062 = vsub.f32 1.0, %v1061
  %v1063 = vmul.f32 %v1060, %v1062
  %v1064 = vadd.f32 %v1060, %v1063
  %vm1065 = vweird.f32 %v1059
  %vm1066 = vweird.f32 %v1060
  %vm1067 = vmor %vm1065, %vm1066
  %v1068 = vsel %vm1067, %v1060, %v1064
  %v1069 = vand.u32 2147483647, %v1059
  %vm1070 = vcmp.eq.f32.partialorder %v1069, 8.507059e+37
  %v1071 = vand.u32 %v1059, 2147483648
  %v1072 = vor.u32 1.1754944e-38, %v1071
  %v1073 = vsel %vm1070, %v1072, %v1068
  %v1074 = vmul.f32 1.0, %v1073
  %v1075 = vtanh.pop %v1055
  %v1076 = vmul.f32 %v1074, %v931
  %1078 = vrot.lane.b32.xlu0 %v1075, 64
  %v1079 = vpop.permute.xlu0 %1078
  %v1081 = vmul.f32 %v1074, %v1079
  %1083 = vrot.lane.b32.xlu0 %v1081, 32
  %v1084 = vpop.permute.xlu0 %1083
  %v1086 = vadd.f32 %v1076, %v1084
  %v1087 = vtanh.pop %v1086
  %1089 = vrot.lane.b32.xlu0 %v1087, 64
  %v1090 = vpop.permute.xlu0 %1089
  %v1092 = vmul.f32 %v1074, %v1090
  %1094 = vrot.lane.b32.xlu0 %v1092, 32
  %v1095 = vpop.permute.xlu0 %1094
  %1097 = vst.msk [vmem:[#allocation2 + $0x6] sm:$0x3] %vm631, %v1095
  %1098 = vmatpush.msra.mxu0 0.0
  %1099 = vmatpush.msra.mxu0 0.0
  %1100 = vmatpush.msra.mxu0 0.0
  %1101 = vmatpush.msra.mxu0 0.0
  %1102 = vmatpush.msra.mxu0 0.0
  %1103 = vmatpush.msra.mxu0 0.0
  %1104 = vmatpush.msra.mxu0 0.0
  %1105 = vmatpush.msra.mxu0 0.0
  %1106 = vmatpush.msra.mxu0 0.0
  %1107 = vmatpush.msra.mxu0 0.0
  %1108 = vmatpush.msra.mxu0 0.0
  %1109 = vmatpush.msra.mxu0 0.0
  %1110 = vmatpush.msra.mxu0 %v469
  %1111 = vmatpush.msra.mxu0 %v468
  %1112 = vmatpush.msra.mxu0 %v467
  %1113 = vmatpush.msra.mxu0 %v466
  %1114 = vmatmul.f32.gmra.mxu0 %v1033
  %v1115 = vpop.f32.mrf.mxu0
  %v1116 = vadd.f32 0.0, %v1115
  %1117 = vdwg.mxu0
  %v1118 = vadd.f32 %v464, %v1116
  %v1119 = vxor.u32 %v1118, 2147483648
  %v1120 = vmul.f32 %v1119, 1.442695
  %v1121 = vpow.pop %v1120
  %v1122 = vadd.f32 %v1121, 1.0
  %v1123 = vrcp.pop %v1122
  %v1124 = vmul.f32 %v1122, %v1123
  %v1125 = vsub.f32 1.0, %v1124
  %v1126 = vmul.f32 %v1123, %v1125
  %v1127 = vadd.f32 %v1123, %v1126
  %vm1128 = vweird.f32 %v1122
  %vm1129 = vweird.f32 %v1123
  %vm1130 = vmor %vm1128, %vm1129
  %v1131 = vsel %vm1130, %v1123, %v1127
  %v1132 = vand.u32 2147483647, %v1122
  %vm1133 = vcmp.eq.f32.partialorder %v1132, 8.507059e+37
  %v1134 = vand.u32 %v1122, 2147483648
  %v1135 = vor.u32 1.1754944e-38, %v1134
  %v1136 = vsel %vm1133, %v1135, %v1131
  %v1137 = vmul.f32 1.0, %v1136
  %v1138 = vtanh.pop %v1118
  %v1140 = vrot.slane %v1000, 6
  %v1142 = vmul.f32 %v1137, %v1140
  %1144 = vrot.lane.b32.xlu0 %v1138, 64
  %v1145 = vpop.permute.xlu0 %1144
  %v1147 = vmul.f32 %v1137, %v1145
  %1149 = vrot.lane.b32.xlu0 %v1147, 32
  %v1150 = vpop.permute.xlu0 %1149
  %v1152 = vadd.f32 %v1142, %v1150
  %v1153 = vtanh.pop %v1152
  %1155 = vrot.lane.b32.xlu0 %v1153, 64
  %v1156 = vpop.permute.xlu0 %1155
  %v1158 = vmul.f32 %v1137, %v1156
  %v1159 = vsel %vm479, %v1095, 0
  %1161 = vmatpush.msra.mxu0 0.0
  %1162 = vmatpush.msra.mxu0 0.0
  %1163 = vmatpush.msra.mxu0 0.0
  %1164 = vmatpush.msra.mxu0 0.0
  %1165 = vmatpush.msra.mxu0 0.0
  %1166 = vmatpush.msra.mxu0 0.0
  %1167 = vmatpush.msra.mxu0 0.0
  %1168 = vmatpush.msra.mxu0 0.0
  %1169 = vmatpush.msra.mxu0 0.0
  %1170 = vmatpush.msra.mxu0 0.0
  %1171 = vmatpush.msra.mxu0 0.0
  %1172 = vmatpush.msra.mxu0 0.0
  %1173 = vmatpush.msra.mxu0 %v477
  %1174 = vmatpush.msra.mxu0 %v476
  %1175 = vmatpush.msra.mxu0 %v475
  %1176 = vmatpush.msra.mxu0 %v474
  %1177 = vmatmul.f32.gmra.mxu0 %v1159
  %v1178 = vpop.f32.mrf.mxu0
  %v1179 = vadd.f32 0.0, %v1178
  %1180 = vdwg.mxu0
  %1182 = vrot.lane.b32.xlu0 %v1158, 32
  %v1183 = vpop.permute.xlu0 %1182
  %v1184 = vsel %vm479, %v1183, 0
  %1186 = vmatpush.msra.mxu0 0.0
  %1187 = vmatpush.msra.mxu0 0.0
  %1188 = vmatpush.msra.mxu0 0.0
  %1189 = vmatpush.msra.mxu0 0.0
  %1190 = vmatpush.msra.mxu0 0.0
  %1191 = vmatpush.msra.mxu0 0.0
  %1192 = vmatpush.msra.mxu0 0.0
  %1193 = vmatpush.msra.mxu0 0.0
  %1194 = vmatpush.msra.mxu0 0.0
  %1195 = vmatpush.msra.mxu0 0.0
  %1196 = vmatpush.msra.mxu0 0.0
  %1197 = vmatpush.msra.mxu0 0.0
  %1198 = vmatpush.msra.mxu0 %v473
  %1199 = vmatpush.msra.mxu0 %v472
  %1200 = vmatpush.msra.mxu0 %v471
  %1201 = vmatpush.msra.mxu0 %v470
  %1202 = vmatmul.f32.gmra.mxu0 %v1184
  %v1203 = vpop.f32.mrf.mxu0
  %v1204 = vadd.f32 %v1179, %v1203
  %1205 = vdwg.mxu0
  %v1206 = vadd.f32 %v1204, %v587
  %v1207 = vxor.u32 %v1206, 2147483648
  %v1208 = vmul.f32 %v1207, 1.442695
  %v1209 = vpow.pop %v1208
  %v1210 = vadd.f32 %v1209, 1.0
  %v1211 = vrcp.pop %v1210
  %v1212 = vmul.f32 %v1210, %v1211
  %v1213 = vsub.f32 1.0, %v1212
  %v1214 = vmul.f32 %v1211, %v1213
  %v1215 = vadd.f32 %v1211, %v1214
  %vm1216 = vweird.f32 %v1210
  %vm1217 = vweird.f32 %v1211
  %vm1218 = vmor %vm1216, %vm1217
  %v1219 = vsel %vm1218, %v1211, %v1215
  %v1220 = vand.u32 2147483647, %v1210
  %vm1221 = vcmp.eq.f32.partialorder %v1220, 8.507059e+37
  %v1222 = vand.u32 %v1210, 2147483648
  %v1223 = vor.u32 1.1754944e-38, %v1222
  %v1224 = vsel %vm1221, %v1223, %v1219
  %v1225 = vmul.f32 1.0, %v1224
  %v1226 = vtanh.pop %v1206
  %v1227 = vmul.f32 %v1225, %v1086
  %1229 = vrot.lane.b32.xlu0 %v1226, 64
  %v1230 = vpop.permute.xlu0 %1229
  %v1232 = vmul.f32 %v1225, %v1230
  %1234 = vrot.lane.b32.xlu0 %v1232, 32
  %v1235 = vpop.permute.xlu0 %1234
  %v1237 = vadd.f32 %v1227, %v1235
  %v1238 = vtanh.pop %v1237
  %1240 = vrot.lane.b32.xlu0 %v1238, 64
  %v1241 = vpop.permute.xlu0 %1240
  %v1243 = vmul.f32 %v1225, %v1241
  %1245 = vrot.lane.b32.xlu0 %v1243, 32
  %v1246 = vpop.permute.xlu0 %1245
  %1248 = vst.msk [vmem:[#allocation2 + $0x8] sm:$0x3] %vm631, %v1246
  %1249 = vmatpush.msra.mxu0 0.0
  %1250 = vmatpush.msra.mxu0 0.0
  %1251 = vmatpush.msra.mxu0 0.0
  %1252 = vmatpush.msra.mxu0 0.0
  %1253 = vmatpush.msra.mxu0 0.0
  %1254 = vmatpush.msra.mxu0 0.0
  %1255 = vmatpush.msra.mxu0 0.0
  %1256 = vmatpush.msra.mxu0 0.0
  %1257 = vmatpush.msra.mxu0 0.0
  %1258 = vmatpush.msra.mxu0 0.0
  %1259 = vmatpush.msra.mxu0 0.0
  %1260 = vmatpush.msra.mxu0 0.0
  %1261 = vmatpush.msra.mxu0 %v469
  %1262 = vmatpush.msra.mxu0 %v468
  %1263 = vmatpush.msra.mxu0 %v467
  %1264 = vmatpush.msra.mxu0 %v466
  %1265 = vmatmul.f32.gmra.mxu0 %v1184
  %v1266 = vpop.f32.mrf.mxu0
  %v1267 = vadd.f32 0.0, %v1266
  %1268 = vdwg.mxu0
  %v1270 = vrot.slane %v1267, 6
  %v1272 = vadd.f32 %v464, %v1270
  %v1273 = vxor.u32 %v1272, 2147483648
  %v1274 = vmul.f32 %v1273, 1.442695
  %v1275 = vpow.pop %v1274
  %v1276 = vadd.f32 %v1275, 1.0
  %v1277 = vrcp.pop %v1276
  %v1278 = vmul.f32 %v1276, %v1277
  %v1279 = vsub.f32 1.0, %v1278
  %v1280 = vmul.f32 %v1277, %v1279
  %v1281 = vadd.f32 %v1277, %v1280
  %vm1282 = vweird.f32 %v1276
  %vm1283 = vweird.f32 %v1277
  %vm1284 = vmor %vm1282, %vm1283
  %v1285 = vsel %vm1284, %v1277, %v1281
  %v1286 = vand.u32 2147483647, %v1276
  %vm1287 = vcmp.eq.f32.partialorder %v1286, 8.507059e+37
  %v1288 = vand.u32 %v1276, 2147483648
  %v1289 = vor.u32 1.1754944e-38, %v1288
  %v1290 = vsel %vm1287, %v1289, %v1285
  %v1291 = vmul.f32 1.0, %v1290
  %v1292 = vtanh.pop %v1272
  %v1294 = vrot.slane %v1152, 6
  %v1296 = vmul.f32 %v1291, %v1294
  %1298 = vrot.lane.b32.xlu0 %v1292, 64
  %v1299 = vpop.permute.xlu0 %1298
  %v1301 = vmul.f32 %v1291, %v1299
  %1303 = vrot.lane.b32.xlu0 %v1301, 32
  %v1304 = vpop.permute.xlu0 %1303
  %v1306 = vadd.f32 %v1296, %v1304
  %v1307 = vtanh.pop %v1306
  %1309 = vrot.lane.b32.xlu0 %v1307, 64
  %v1310 = vpop.permute.xlu0 %1309
  %v1312 = vmul.f32 %v1291, %v1310
  %v1313 = vsel %vm479, %v1246, 0
  %1315 = vmatpush.msra.mxu0 0.0
  %1316 = vmatpush.msra.mxu0 0.0
  %1317 = vmatpush.msra.mxu0 0.0
  %1318 = vmatpush.msra.mxu0 0.0
  %1319 = vmatpush.msra.mxu0 0.0
  %1320 = vmatpush.msra.mxu0 0.0
  %1321 = vmatpush.msra.mxu0 0.0
  %1322 = vmatpush.msra.mxu0 0.0
  %1323 = vmatpush.msra.mxu0 0.0
  %1324 = vmatpush.msra.mxu0 0.0
  %1325 = vmatpush.msra.mxu0 0.0
  %1326 = vmatpush.msra.mxu0 0.0
  %1327 = vmatpush.msra.mxu0 %v477
  %1328 = vmatpush.msra.mxu0 %v476
  %1329 = vmatpush.msra.mxu0 %v475
  %1330 = vmatpush.msra.mxu0 %v474
  %1331 = vmatmul.f32.gmra.mxu0 %v1313
  %v1332 = vpop.f32.mrf.mxu0
  %v1333 = vadd.f32 0.0, %v1332
  %1334 = vdwg.mxu0
  %v1336 = vrot.slane %v1312, 2
  %1337 = vrot.lane.b32.xlu0 %v1336, 32
  %v1338 = vpop.permute.xlu0 %1337
  %v1339 = vsel %vm479, %v1338, 0
  %1341 = vmatpush.msra.mxu0 0.0
  %1342 = vmatpush.msra.mxu0 0.0
  %1343 = vmatpush.msra.mxu0 0.0
  %1344 = vmatpush.msra.mxu0 0.0
  %1345 = vmatpush.msra.mxu0 0.0
  %1346 = vmatpush.msra.mxu0 0.0
  %1347 = vmatpush.msra.mxu0 0.0
  %1348 = vmatpush.msra.mxu0 0.0
  %1349 = vmatpush.msra.mxu0 0.0
  %1350 = vmatpush.msra.mxu0 0.0
  %1351 = vmatpush.msra.mxu0 0.0
  %1352 = vmatpush.msra.mxu0 0.0
  %1353 = vmatpush.msra.mxu0 %v473
  %1354 = vmatpush.msra.mxu0 %v472
  %1355 = vmatpush.msra.mxu0 %v471
  %1356 = vmatpush.msra.mxu0 %v470
  %1357 = vmatmul.f32.gmra.mxu0 %v1339
  %v1358 = vpop.f32.mrf.mxu0
  %v1359 = vadd.f32 %v1333, %v1358
  %1360 = vdwg.mxu0
  %v1361 = vadd.f32 %v1359, %v587
  %v1362 = vxor.u32 %v1361, 2147483648
  %v1363 = vmul.f32 %v1362, 1.442695
  %v1364 = vpow.pop %v1363
  %v1365 = vadd.f32 %v1364, 1.0
  %v1366 = vrcp.pop %v1365
  %v1367 = vmul.f32 %v1365, %v1366
  %v1368 = vsub.f32 1.0, %v1367
  %v1369 = vmul.f32 %v1366, %v1368
  %v1370 = vadd.f32 %v1366, %v1369
  %vm1371 = vweird.f32 %v1365
  %vm1372 = vweird.f32 %v1366
  %vm1373 = vmor %vm1371, %vm1372
  %v1374 = vsel %vm1373, %v1366, %v1370
  %v1375 = vand.u32 2147483647, %v1365
  %vm1376 = vcmp.eq.f32.partialorder %v1375, 8.507059e+37
  %v1377 = vand.u32 %v1365, 2147483648
  %v1378 = vor.u32 1.1754944e-38, %v1377
  %v1379 = vsel %vm1376, %v1378, %v1374
  %v1380 = vmul.f32 1.0, %v1379
  %v1381 = vtanh.pop %v1361
  %v1382 = vmul.f32 %v1380, %v1237
  %1384 = vrot.lane.b32.xlu0 %v1381, 64
  %v1385 = vpop.permute.xlu0 %1384
  %v1387 = vmul.f32 %v1380, %v1385
  %1389 = vrot.lane.b32.xlu0 %v1387, 32
  %v1390 = vpop.permute.xlu0 %1389
  %v1392 = vadd.f32 %v1382, %v1390
  %v1393 = vtanh.pop %v1392
  %1395 = vrot.lane.b32.xlu0 %v1393, 64
  %v1396 = vpop.permute.xlu0 %1395
  %v1398 = vmul.f32 %v1380, %v1396
  %1400 = vrot.lane.b32.xlu0 %v1398, 32
  %v1401 = vpop.permute.xlu0 %1400
  %1403 = vst.msk [vmem:[#allocation2 + $0xa] sm:$0x3] %vm631, %v1401
  %1404 = vmatpush.msra.mxu0 0.0
  %1405 = vmatpush.msra.mxu0 0.0
  %1406 = vmatpush.msra.mxu0 0.0
  %1407 = vmatpush.msra.mxu0 0.0
  %1408 = vmatpush.msra.mxu0 0.0
  %1409 = vmatpush.msra.mxu0 0.0
  %1410 = vmatpush.msra.mxu0 0.0
  %1411 = vmatpush.msra.mxu0 0.0
  %1412 = vmatpush.msra.mxu0 0.0
  %1413 = vmatpush.msra.mxu0 0.0
  %1414 = vmatpush.msra.mxu0 0.0
  %1415 = vmatpush.msra.mxu0 0.0
  %1416 = vmatpush.msra.mxu0 %v469
  %1417 = vmatpush.msra.mxu0 %v468
  %1418 = vmatpush.msra.mxu0 %v467
  %1419 = vmatpush.msra.mxu0 %v466
  %1420 = vmatmul.f32.gmra.mxu0 %v1339
  %v1421 = vpop.f32.mrf.mxu0
  %v1422 = vadd.f32 0.0, %v1421
  %1423 = vdwg.mxu0
  %v1425 = vrot.slane %v1422, 4
  %v1427 = vadd.f32 %v464, %v1425
  %v1428 = vxor.u32 %v1427, 2147483648
  %v1429 = vmul.f32 %v1428, 1.442695
  %v1430 = vpow.pop %v1429
  %v1431 = vadd.f32 %v1430, 1.0
  %v1432 = vrcp.pop %v1431
  %v1433 = vmul.f32 %v1431, %v1432
  %v1434 = vsub.f32 1.0, %v1433
  %v1435 = vmul.f32 %v1432, %v1434
  %v1436 = vadd.f32 %v1432, %v1435
  %vm1437 = vweird.f32 %v1431
  %vm1438 = vweird.f32 %v1432
  %vm1439 = vmor %vm1437, %vm1438
  %v1440 = vsel %vm1439, %v1432, %v1436
  %v1441 = vand.u32 2147483647, %v1431
  %vm1442 = vcmp.eq.f32.partialorder %v1441, 8.507059e+37
  %v1443 = vand.u32 %v1431, 2147483648
  %v1444 = vor.u32 1.1754944e-38, %v1443
  %v1445 = vsel %vm1442, %v1444, %v1440
  %v1446 = vmul.f32 1.0, %v1445
  %v1447 = vtanh.pop %v1427
  %v1449 = vrot.slane %v1306, 6
  %v1451 = vmul.f32 %v1446, %v1449
  %1453 = vrot.lane.b32.xlu0 %v1447, 64
  %v1454 = vpop.permute.xlu0 %1453
  %v1456 = vmul.f32 %v1446, %v1454
  %1458 = vrot.lane.b32.xlu0 %v1456, 32
  %v1459 = vpop.permute.xlu0 %1458
  %v1461 = vadd.f32 %v1451, %v1459
  %v1462 = vtanh.pop %v1461
  %1464 = vrot.lane.b32.xlu0 %v1462, 64
  %v1465 = vpop.permute.xlu0 %1464
  %v1467 = vmul.f32 %v1446, %v1465
  %v1468 = vsel %vm479, %v1401, 0
  %1470 = vmatpush.msra.mxu0 0.0
  %1471 = vmatpush.msra.mxu0 0.0
  %1472 = vmatpush.msra.mxu0 0.0
  %1473 = vmatpush.msra.mxu0 0.0
  %1474 = vmatpush.msra.mxu0 0.0
  %1475 = vmatpush.msra.mxu0 0.0
  %1476 = vmatpush.msra.mxu0 0.0
  %1477 = vmatpush.msra.mxu0 0.0
  %1478 = vmatpush.msra.mxu0 0.0
  %1479 = vmatpush.msra.mxu0 0.0
  %1480 = vmatpush.msra.mxu0 0.0
  %1481 = vmatpush.msra.mxu0 0.0
  %1482 = vmatpush.msra.mxu0 %v477
  %1483 = vmatpush.msra.mxu0 %v476
  %1484 = vmatpush.msra.mxu0 %v475
  %1485 = vmatpush.msra.mxu0 %v474
  %1486 = vmatmul.f32.gmra.mxu0 %v1468
  %v1487 = vpop.f32.mrf.mxu0
  %v1488 = vadd.f32 0.0, %v1487
  %1489 = vdwg.mxu0
  %v1491 = vrot.slane %v1467, 4
  %1492 = vrot.lane.b32.xlu0 %v1491, 32
  %v1493 = vpop.permute.xlu0 %1492
  %v1494 = vsel %vm479, %v1493, 0
  %1496 = vmatpush.msra.mxu0 0.0
  %1497 = vmatpush.msra.mxu0 0.0
  %1498 = vmatpush.msra.mxu0 0.0
  %1499 = vmatpush.msra.mxu0 0.0
  %1500 = vmatpush.msra.mxu0 0.0
  %1501 = vmatpush.msra.mxu0 0.0
  %1502 = vmatpush.msra.mxu0 0.0
  %1503 = vmatpush.msra.mxu0 0.0
  %1504 = vmatpush.msra.mxu0 0.0
  %1505 = vmatpush.msra.mxu0 0.0
  %1506 = vmatpush.msra.mxu0 0.0
  %1507 = vmatpush.msra.mxu0 0.0
  %1508 = vmatpush.msra.mxu0 %v473
  %1509 = vmatpush.msra.mxu0 %v472
  %1510 = vmatpush.msra.mxu0 %v471
  %1511 = vmatpush.msra.mxu0 %v470
  %1512 = vmatmul.f32.gmra.mxu0 %v1494
  %v1513 = vpop.f32.mrf.mxu0
  %v1514 = vadd.f32 %v1488, %v1513
  %1515 = vdwg.mxu0
  %v1516 = vadd.f32 %v1514, %v587
  %v1517 = vxor.u32 %v1516, 2147483648
  %v1518 = vmul.f32 %v1517, 1.442695
  %v1519 = vpow.pop %v1518
  %v1520 = vadd.f32 %v1519, 1.0
  %v1521 = vrcp.pop %v1520
  %v1522 = vmul.f32 %v1520, %v1521
  %v1523 = vsub.f32 1.0, %v1522
  %v1524 = vmul.f32 %v1521, %v1523
  %v1525 = vadd.f32 %v1521, %v1524
  %vm1526 = vweird.f32 %v1520
  %vm1527 = vweird.f32 %v1521
  %vm1528 = vmor %vm1526, %vm1527
  %v1529 = vsel %vm1528, %v1521, %v1525
  %v1530 = vand.u32 2147483647, %v1520
  %vm1531 = vcmp.eq.f32.partialorder %v1530, 8.507059e+37
  %v1532 = vand.u32 %v1520, 2147483648
  %v1533 = vor.u32 1.1754944e-38, %v1532
  %v1534 = vsel %vm1531, %v1533, %v1529
  %v1535 = vmul.f32 1.0, %v1534
  %v1536 = vtanh.pop %v1516
  %v1537 = vmul.f32 %v1535, %v1392
  %1539 = vrot.lane.b32.xlu0 %v1536, 64
  %v1540 = vpop.permute.xlu0 %1539
  %v1542 = vmul.f32 %v1535, %v1540
  %1544 = vrot.lane.b32.xlu0 %v1542, 32
  %v1545 = vpop.permute.xlu0 %1544
  %v1547 = vadd.f32 %v1537, %v1545
  %v1548 = vtanh.pop %v1547
  %1550 = vrot.lane.b32.xlu0 %v1548, 64
  %v1551 = vpop.permute.xlu0 %1550
  %v1553 = vmul.f32 %v1535, %v1551
  %1555 = vrot.lane.b32.xlu0 %v1553, 32
  %v1556 = vpop.permute.xlu0 %1555
  %1558 = vst.msk [vmem:[#allocation2 + $0xc] sm:$0x3] %vm631, %v1556
  %1559 = vmatpush.msra.mxu0 0.0
  %1560 = vmatpush.msra.mxu0 0.0
  %1561 = vmatpush.msra.mxu0 0.0
  %1562 = vmatpush.msra.mxu0 0.0
  %1563 = vmatpush.msra.mxu0 0.0
  %1564 = vmatpush.msra.mxu0 0.0
  %1565 = vmatpush.msra.mxu0 0.0
  %1566 = vmatpush.msra.mxu0 0.0
  %1567 = vmatpush.msra.mxu0 0.0
  %1568 = vmatpush.msra.mxu0 0.0
  %1569 = vmatpush.msra.mxu0 0.0
  %1570 = vmatpush.msra.mxu0 0.0
  %1571 = vmatpush.msra.mxu0 %v469
  %1572 = vmatpush.msra.mxu0 %v468
  %1573 = vmatpush.msra.mxu0 %v467
  %1574 = vmatpush.msra.mxu0 %v466
  %1575 = vmatmul.f32.gmra.mxu0 %v1494
  %v1576 = vpop.f32.mrf.mxu0
  %v1577 = vadd.f32 0.0, %v1576
  %1578 = vdwg.mxu0
  %v1580 = vrot.slane %v1577, 2
  %v1582 = vadd.f32 %v464, %v1580
  %v1583 = vxor.u32 %v1582, 2147483648
  %v1584 = vmul.f32 %v1583, 1.442695
  %v1585 = vpow.pop %v1584
  %v1586 = vadd.f32 %v1585, 1.0
  %v1587 = vrcp.pop %v1586
  %v1588 = vmul.f32 %v1586, %v1587
  %v1589 = vsub.f32 1.0, %v1588
  %v1590 = vmul.f32 %v1587, %v1589
  %v1591 = vadd.f32 %v1587, %v1590
  %vm1592 = vweird.f32 %v1586
  %vm1593 = vweird.f32 %v1587
  %vm1594 = vmor %vm1592, %vm1593
  %v1595 = vsel %vm1594, %v1587, %v1591
  %v1596 = vand.u32 2147483647, %v1586
  %vm1597 = vcmp.eq.f32.partialorder %v1596, 8.507059e+37
  %v1598 = vand.u32 %v1586, 2147483648
  %v1599 = vor.u32 1.1754944e-38, %v1598
  %v1600 = vsel %vm1597, %v1599, %v1595
  %v1601 = vmul.f32 1.0, %v1600
  %v1602 = vtanh.pop %v1582
  %v1604 = vrot.slane %v1461, 6
  %v1606 = vmul.f32 %v1601, %v1604
  %1608 = vrot.lane.b32.xlu0 %v1602, 64
  %v1609 = vpop.permute.xlu0 %1608
  %v1611 = vmul.f32 %v1601, %v1609
  %1613 = vrot.lane.b32.xlu0 %v1611, 32
  %v1614 = vpop.permute.xlu0 %1613
  %v1616 = vadd.f32 %v1606, %v1614
  %v1617 = vtanh.pop %v1616
  %1619 = vrot.lane.b32.xlu0 %v1617, 64
  %v1620 = vpop.permute.xlu0 %1619
  %v1622 = vmul.f32 %v1601, %v1620
  %v1623 = vsel %vm479, %v1556, 0
  %1625 = vmatpush.msra.mxu0 0.0
  %1626 = vmatpush.msra.mxu0 0.0
  %1627 = vmatpush.msra.mxu0 0.0
  %1628 = vmatpush.msra.mxu0 0.0
  %1629 = vmatpush.msra.mxu0 0.0
  %1630 = vmatpush.msra.mxu0 0.0
  %1631 = vmatpush.msra.mxu0 0.0
  %1632 = vmatpush.msra.mxu0 0.0
  %1633 = vmatpush.msra.mxu0 0.0
  %1634 = vmatpush.msra.mxu0 0.0
  %1635 = vmatpush.msra.mxu0 0.0
  %1636 = vmatpush.msra.mxu0 0.0
  %1637 = vmatpush.msra.mxu0 %v477
  %1638 = vmatpush.msra.mxu0 %v476
  %1639 = vmatpush.msra.mxu0 %v475
  %1640 = vmatpush.msra.mxu0 %v474
  %1641 = vmatmul.f32.gmra.mxu0 %v1623
  %v1642 = vpop.f32.mrf.mxu0
  %v1643 = vadd.f32 0.0, %v1642
  %1644 = vdwg.mxu0
  %v1646 = vrot.slane %v1622, 6
  %1647 = vrot.lane.b32.xlu0 %v1646, 32
  %v1648 = vpop.permute.xlu0 %1647
  %v1649 = vsel %vm479, %v1648, 0
  %1651 = vmatpush.msra.mxu0 0.0
  %1652 = vmatpush.msra.mxu0 0.0
  %1653 = vmatpush.msra.mxu0 0.0
  %1654 = vmatpush.msra.mxu0 0.0
  %1655 = vmatpush.msra.mxu0 0.0
  %1656 = vmatpush.msra.mxu0 0.0
  %1657 = vmatpush.msra.mxu0 0.0
  %1658 = vmatpush.msra.mxu0 0.0
  %1659 = vmatpush.msra.mxu0 0.0
  %1660 = vmatpush.msra.mxu0 0.0
  %1661 = vmatpush.msra.mxu0 0.0
  %1662 = vmatpush.msra.mxu0 0.0
  %1663 = vmatpush.msra.mxu0 %v473
  %1664 = vmatpush.msra.mxu0 %v472
  %1665 = vmatpush.msra.mxu0 %v471
  %1666 = vmatpush.msra.mxu0 %v470
  %1667 = vmatmul.f32.gmra.mxu0 %v1649
  %v1668 = vpop.f32.mrf.mxu0
  %v1669 = vadd.f32 %v1643, %v1668
  %1670 = vdwg.mxu0
  %v1671 = vadd.f32 %v1669, %v587
  %v1672 = vxor.u32 %v1671, 2147483648
  %v1673 = vmul.f32 %v1672, 1.442695
  %v1674 = vpow.pop %v1673
  %v1675 = vadd.f32 %v1674, 1.0
  %v1676 = vrcp.pop %v1675
  %v1677 = vmul.f32 %v1675, %v1676
  %v1678 = vsub.f32 1.0, %v1677
  %v1679 = vmul.f32 %v1676, %v1678
  %v1680 = vadd.f32 %v1676, %v1679
  %vm1681 = vweird.f32 %v1675
  %vm1682 = vweird.f32 %v1676
  %vm1683 = vmor %vm1681, %vm1682
  %v1684 = vsel %vm1683, %v1676, %v1680
  %v1685 = vand.u32 2147483647, %v1675
  %vm1686 = vcmp.eq.f32.partialorder %v1685, 8.507059e+37
  %v1687 = vand.u32 %v1675, 2147483648
  %v1688 = vor.u32 1.1754944e-38, %v1687
  %v1689 = vsel %vm1686, %v1688, %v1684
  %v1690 = vmul.f32 1.0, %v1689
  %v1691 = vtanh.pop %v1671
  %v1692 = vmul.f32 %v1690, %v1547
  %1694 = vrot.lane.b32.xlu0 %v1691, 64
  %v1695 = vpop.permute.xlu0 %1694
  %v1697 = vmul.f32 %v1690, %v1695
  %1699 = vrot.lane.b32.xlu0 %v1697, 32
  %v1700 = vpop.permute.xlu0 %1699
  %v1702 = vadd.f32 %v1692, %v1700
  %v1703 = vtanh.pop %v1702
  %1705 = vrot.lane.b32.xlu0 %v1703, 64
  %v1706 = vpop.permute.xlu0 %1705
  %v1708 = vmul.f32 %v1690, %v1706
  %1710 = vrot.lane.b32.xlu0 %v1708, 32
  %v1711 = vpop.permute.xlu0 %1710
  %1713 = vst.msk [vmem:[#allocation2 + $0xe] sm:$0x3] %vm631, %v1711
  %s1714 = scalar_lea.sflag [#allocation7], 2
  // Predicated region
  $region120: #{time_series_model.1} parent=0 // pred_check
    _
  $region121: #{time_series_model.1} parent=0 // pred_check_branch
    %1716 = sbr.rel (0) target = $region123
  $region122: #{time_series_model.1} parent=0 // pred_region
    loop: start=0, step=1, limit=1
    $region124: #{time_series_model.1} parent=122 // loop_pre_header
      _
    $region125: #{time_series_model.1} parent=122 // loop_header
      %s1718 = sphi 0, %s1722
      %p1719 = scmp.ge.s32.totalorder %s1718, 1
      %s1723 = sphi %s22, %s22
      %s1724 = sphi [#allocation5], [#allocation5]
    $region126: #{time_series_model.1} parent=122 // loop_header_branch
      %1721 = sbr.rel (%p1719) target = $region130
    $region127: #{time_series_model.1} parent=122 // loop_body
      %v1725 = vld [vmem:[%s1723] sm:$0xff]
      %1726 = vst [vmem:[%s1724] sm:$0xff] %v1725
      %v1727 = vld [vmem:[%s1723 + $0x8] sm:$0xff]
      %1728 = vst [vmem:[%s1724 + $0x8] sm:$0xff] %v1727
      %v1729 = vld [vmem:[%s1723 + $0x10] sm:$0xff]
      %1730 = vst [vmem:[%s1724 + $0x10] sm:$0xff] %v1729
      %v1731 = vld [vmem:[%s1723 + $0x18] sm:$0xff]
      %1732 = vst [vmem:[%s1724 + $0x18] sm:$0xff] %v1731
      %v1733 = vld [vmem:[%s1723 + $0x20] sm:$0xff]
      %1734 = vst [vmem:[%s1724 + $0x20] sm:$0xff] %v1733
      %v1735 = vld [vmem:[%s1723 + $0x28] sm:$0xff]
      %1736 = vst [vmem:[%s1724 + $0x28] sm:$0xff] %v1735
      %v1737 = vld [vmem:[%s1723 + $0x30] sm:$0xff]
      %1738 = vst [vmem:[%s1724 + $0x30] sm:$0xff] %v1737
      %v1739 = vld [vmem:[%s1723 + $0x38] sm:$0xff]
      %1740 = vst [vmem:[%s1724 + $0x38] sm:$0xff] %v1739
      %v1741 = vld [vmem:[%s1723 + $0x40] sm:$0xff]
      %1742 = vst [vmem:[%s1724 + $0x40] sm:$0xff] %v1741
      %v1743 = vld [vmem:[%s1723 + $0x48] sm:$0xff]
      %1744 = vst [vmem:[%s1724 + $0x48] sm:$0xff] %v1743
      %v1745 = vld [vmem:[%s1723 + $0x50] sm:$0xff]
      %1746 = vst [vmem:[%s1724 + $0x50] sm:$0xff] %v1745
      %v1747 = vld [vmem:[%s1723 + $0x58] sm:$0xff]
      %1748 = vst [vmem:[%s1724 + $0x58] sm:$0xff] %v1747
      %v1749 = vld [vmem:[%s1723 + $0x60] sm:$0xff]
      %1750 = vst [vmem:[%s1724 + $0x60] sm:$0xff] %v1749
      %v1751 = vld [vmem:[%s1723 + $0x68] sm:$0xff]
      %1752 = vst [vmem:[%s1724 + $0x68] sm:$0xff] %v1751
      %v1753 = vld [vmem:[%s1723 + $0x70] sm:$0xff]
      %1754 = vst [vmem:[%s1724 + $0x70] sm:$0xff] %v1753
      %v1755 = vld [vmem:[%s1723 + $0x78] sm:$0xff]
      %1756 = vst [vmem:[%s1724 + $0x78] sm:$0xff] %v1755
      %v1757 = vld [vmem:[%s1723 + $0x80] sm:$0xff]
      %1758 = vst [vmem:[%s1724 + $0x80] sm:$0xff] %v1757
      %v1759 = vld [vmem:[%s1723 + $0x88] sm:$0xff]
      %1760 = vst [vmem:[%s1724 + $0x88] sm:$0xff] %v1759
      %v1761 = vld [vmem:[%s1723 + $0x90] sm:$0xff]
      %1762 = vst [vmem:[%s1724 + $0x90] sm:$0xff] %v1761
      %v1763 = vld [vmem:[%s1723 + $0x98] sm:$0xff]
      %1764 = vst [vmem:[%s1724 + $0x98] sm:$0xff] %v1763
      %v1765 = vld [vmem:[%s1723 + $0xa0] sm:$0xff]
      %1766 = vst [vmem:[%s1724 + $0xa0] sm:$0xff] %v1765
      %v1767 = vld [vmem:[%s1723 + $0xa8] sm:$0xff]
      %1768 = vst [vmem:[%s1724 + $0xa8] sm:$0xff] %v1767
      %v1769 = vld [vmem:[%s1723 + $0xb0] sm:$0xff]
      %1770 = vst [vmem:[%s1724 + $0xb0] sm:$0xff] %v1769
      %v1771 = vld [vmem:[%s1723 + $0xb8] sm:$0xff]
      %1772 = vst [vmem:[%s1724 + $0xb8] sm:$0xff] %v1771
      %v1773 = vld [vmem:[%s1723 + $0xc0] sm:$0xff]
      %1774 = vst [vmem:[%s1724 + $0xc0] sm:$0xff] %v1773
      %v1775 = vld [vmem:[%s1723 + $0xc8] sm:$0xff]
      %1776 = vst [vmem:[%s1724 + $0xc8] sm:$0xff] %v1775
      %v1777 = vld [vmem:[%s1723 + $0xd0] sm:$0xff]
      %1778 = vst [vmem:[%s1724 + $0xd0] sm:$0xff] %v1777
      %v1779 = vld [vmem:[%s1723 + $0xd8] sm:$0xff]
      %1780 = vst [vmem:[%s1724 + $0xd8] sm:$0xff] %v1779
      %v1781 = vld [vmem:[%s1723 + $0xe0] sm:$0xff]
      %1782 = vst [vmem:[%s1724 + $0xe0] sm:$0xff] %v1781
      %v1783 = vld [vmem:[%s1723 + $0xe8] sm:$0xff]
      %1784 = vst [vmem:[%s1724 + $0xe8] sm:$0xff] %v1783
      %v1785 = vld [vmem:[%s1723 + $0xf0] sm:$0xff]
      %1786 = vst [vmem:[%s1724 + $0xf0] sm:$0xff] %v1785
      %v1787 = vld [vmem:[%s1723 + $0xf8] sm:$0xff]
      %1788 = vst [vmem:[%s1724 + $0xf8] sm:$0xff] %v1787
    $region128: #{time_series_model.1} parent=122 // loop_footer
      %s1722 = sadd.s32 1, %s1718
    $region129: #{time_series_model.1} parent=122 // loop_footer_branch
      %1717 = sbr.rel target = $region125
    $region130: #{time_series_model.1} parent=122 // loop_exit
      _
  $region123: #{time_series_model.1} parent=0 // pred_fallthru
    _
  // Predicated region
  $region131: #{time_series_model.1} parent=0 // pred_check
    _
  $region132: #{time_series_model.1} parent=0 // pred_check_branch
    %1790 = sbr.rel target = $region134
  $region133: #{time_series_model.1} parent=0 // pred_region
    _
  $region134: #{time_series_model.1} parent=0 // pred_fallthru
    _
  // Predicated region
  $region135: #{time_series_model.1} parent=0 // pred_check
    _
  $region136: #{time_series_model.1} parent=0 // pred_check_branch
    %1793 = sbr.rel (0) target = $region138
  $region137: #{time_series_model.1} parent=0 // pred_region
    %1794 = vsyncadd %s1714, 4096
  $region138: #{time_series_model.1} parent=0 // pred_fallthru
    _
  %s1795 = scalar_lea.sflag [#allocation7], 3
  // Predicated region
  $region139: #{time_series_model.1} parent=0 // pred_check
    _
  $region140: #{time_series_model.1} parent=0 // pred_check_branch
    %1797 = sbr.rel (0) target = $region142
  $region141: #{time_series_model.1} parent=0 // pred_region
    loop: start=0, step=1, limit=1
    $region143: #{time_series_model.1} parent=141 // loop_pre_header
      _
    $region144: #{time_series_model.1} parent=141 // loop_header
      %s1799 = sphi 0, %s1803
      %p1800 = scmp.ge.s32.totalorder %s1799, 1
      %s1804 = sphi %s23, %s23
      %s1805 = sphi [#allocation6], [#allocation6]
    $region145: #{time_series_model.1} parent=141 // loop_header_branch
      %1802 = sbr.rel (%p1800) target = $region149
    $region146: #{time_series_model.1} parent=141 // loop_body
      %v1806 = vld [vmem:[%s1804] sm:$0xff]
      %1807 = vst [vmem:[%s1805] sm:$0xff] %v1806
      %v1808 = vld [vmem:[%s1804 + $0x8] sm:$0xff]
      %1809 = vst [vmem:[%s1805 + $0x8] sm:$0xff] %v1808
      %v1810 = vld [vmem:[%s1804 + $0x10] sm:$0xff]
      %1811 = vst [vmem:[%s1805 + $0x10] sm:$0xff] %v1810
      %v1812 = vld [vmem:[%s1804 + $0x18] sm:$0xff]
      %1813 = vst [vmem:[%s1805 + $0x18] sm:$0xff] %v1812
      %v1814 = vld [vmem:[%s1804 + $0x20] sm:$0xff]
      %1815 = vst [vmem:[%s1805 + $0x20] sm:$0xff] %v1814
      %v1816 = vld [vmem:[%s1804 + $0x28] sm:$0xff]
      %1817 = vst [vmem:[%s1805 + $0x28] sm:$0xff] %v1816
      %v1818 = vld [vmem:[%s1804 + $0x30] sm:$0xff]
      %1819 = vst [vmem:[%s1805 + $0x30] sm:$0xff] %v1818
      %v1820 = vld [vmem:[%s1804 + $0x38] sm:$0xff]
      %1821 = vst [vmem:[%s1805 + $0x38] sm:$0xff] %v1820
      %v1822 = vld [vmem:[%s1804 + $0x40] sm:$0xff]
      %1823 = vst [vmem:[%s1805 + $0x40] sm:$0xff] %v1822
      %v1824 = vld [vmem:[%s1804 + $0x48] sm:$0xff]
      %1825 = vst [vmem:[%s1805 + $0x48] sm:$0xff] %v1824
      %v1826 = vld [vmem:[%s1804 + $0x50] sm:$0xff]
      %1827 = vst [vmem:[%s1805 + $0x50] sm:$0xff] %v1826
      %v1828 = vld [vmem:[%s1804 + $0x58] sm:$0xff]
      %1829 = vst [vmem:[%s1805 + $0x58] sm:$0xff] %v1828
      %v1830 = vld [vmem:[%s1804 + $0x60] sm:$0xff]
      %1831 = vst [vmem:[%s1805 + $0x60] sm:$0xff] %v1830
      %v1832 = vld [vmem:[%s1804 + $0x68] sm:$0xff]
      %1833 = vst [vmem:[%s1805 + $0x68] sm:$0xff] %v1832
      %v1834 = vld [vmem:[%s1804 + $0x70] sm:$0xff]
      %1835 = vst [vmem:[%s1805 + $0x70] sm:$0xff] %v1834
      %v1836 = vld [vmem:[%s1804 + $0x78] sm:$0xff]
      %1837 = vst [vmem:[%s1805 + $0x78] sm:$0xff] %v1836
      %v1838 = vld [vmem:[%s1804 + $0x80] sm:$0xff]
      %1839 = vst [vmem:[%s1805 + $0x80] sm:$0xff] %v1838
      %v1840 = vld [vmem:[%s1804 + $0x88] sm:$0xff]
      %1841 = vst [vmem:[%s1805 + $0x88] sm:$0xff] %v1840
      %v1842 = vld [vmem:[%s1804 + $0x90] sm:$0xff]
      %1843 = vst [vmem:[%s1805 + $0x90] sm:$0xff] %v1842
      %v1844 = vld [vmem:[%s1804 + $0x98] sm:$0xff]
      %1845 = vst [vmem:[%s1805 + $0x98] sm:$0xff] %v1844
      %v1846 = vld [vmem:[%s1804 + $0xa0] sm:$0xff]
      %1847 = vst [vmem:[%s1805 + $0xa0] sm:$0xff] %v1846
      %v1848 = vld [vmem:[%s1804 + $0xa8] sm:$0xff]
      %1849 = vst [vmem:[%s1805 + $0xa8] sm:$0xff] %v1848
      %v1850 = vld [vmem:[%s1804 + $0xb0] sm:$0xff]
      %1851 = vst [vmem:[%s1805 + $0xb0] sm:$0xff] %v1850
      %v1852 = vld [vmem:[%s1804 + $0xb8] sm:$0xff]
      %1853 = vst [vmem:[%s1805 + $0xb8] sm:$0xff] %v1852
      %v1854 = vld [vmem:[%s1804 + $0xc0] sm:$0xff]
      %1855 = vst [vmem:[%s1805 + $0xc0] sm:$0xff] %v1854
      %v1856 = vld [vmem:[%s1804 + $0xc8] sm:$0xff]
      %1857 = vst [vmem:[%s1805 + $0xc8] sm:$0xff] %v1856
      %v1858 = vld [vmem:[%s1804 + $0xd0] sm:$0xff]
      %1859 = vst [vmem:[%s1805 + $0xd0] sm:$0xff] %v1858
      %v1860 = vld [vmem:[%s1804 + $0xd8] sm:$0xff]
      %1861 = vst [vmem:[%s1805 + $0xd8] sm:$0xff] %v1860
      %v1862 = vld [vmem:[%s1804 + $0xe0] sm:$0xff]
      %1863 = vst [vmem:[%s1805 + $0xe0] sm:$0xff] %v1862
      %v1864 = vld [vmem:[%s1804 + $0xe8] sm:$0xff]
      %1865 = vst [vmem:[%s1805 + $0xe8] sm:$0xff] %v1864
      %v1866 = vld [vmem:[%s1804 + $0xf0] sm:$0xff]
      %1867 = vst [vmem:[%s1805 + $0xf0] sm:$0xff] %v1866
      %v1868 = vld [vmem:[%s1804 + $0xf8] sm:$0xff]
      %1869 = vst [vmem:[%s1805 + $0xf8] sm:$0xff] %v1868
      %v1870 = vld [vmem:[%s1804 + $0x100] sm:$0xff]
      %1871 = vst [vmem:[%s1805 + $0x100] sm:$0xff] %v1870
      %v1872 = vld [vmem:[%s1804 + $0x108] sm:$0xff]
      %1873 = vst [vmem:[%s1805 + $0x108] sm:$0xff] %v1872
      %v1874 = vld [vmem:[%s1804 + $0x110] sm:$0xff]
      %1875 = vst [vmem:[%s1805 + $0x110] sm:$0xff] %v1874
      %v1876 = vld [vmem:[%s1804 + $0x118] sm:$0xff]
      %1877 = vst [vmem:[%s1805 + $0x118] sm:$0xff] %v1876
      %v1878 = vld [vmem:[%s1804 + $0x120] sm:$0xff]
      %1879 = vst [vmem:[%s1805 + $0x120] sm:$0xff] %v1878
      %v1880 = vld [vmem:[%s1804 + $0x128] sm:$0xff]
      %1881 = vst [vmem:[%s1805 + $0x128] sm:$0xff] %v1880
      %v1882 = vld [vmem:[%s1804 + $0x130] sm:$0xff]
      %1883 = vst [vmem:[%s1805 + $0x130] sm:$0xff] %v1882
      %v1884 = vld [vmem:[%s1804 + $0x138] sm:$0xff]
      %1885 = vst [vmem:[%s1805 + $0x138] sm:$0xff] %v1884
      %v1886 = vld [vmem:[%s1804 + $0x140] sm:$0xff]
      %1887 = vst [vmem:[%s1805 + $0x140] sm:$0xff] %v1886
      %v1888 = vld [vmem:[%s1804 + $0x148] sm:$0xff]
      %1889 = vst [vmem:[%s1805 + $0x148] sm:$0xff] %v1888
      %v1890 = vld [vmem:[%s1804 + $0x150] sm:$0xff]
      %1891 = vst [vmem:[%s1805 + $0x150] sm:$0xff] %v1890
      %v1892 = vld [vmem:[%s1804 + $0x158] sm:$0xff]
      %1893 = vst [vmem:[%s1805 + $0x158] sm:$0xff] %v1892
      %v1894 = vld [vmem:[%s1804 + $0x160] sm:$0xff]
      %1895 = vst [vmem:[%s1805 + $0x160] sm:$0xff] %v1894
      %v1896 = vld [vmem:[%s1804 + $0x168] sm:$0xff]
      %1897 = vst [vmem:[%s1805 + $0x168] sm:$0xff] %v1896
      %v1898 = vld [vmem:[%s1804 + $0x170] sm:$0xff]
      %1899 = vst [vmem:[%s1805 + $0x170] sm:$0xff] %v1898
      %v1900 = vld [vmem:[%s1804 + $0x178] sm:$0xff]
      %1901 = vst [vmem:[%s1805 + $0x178] sm:$0xff] %v1900
      %v1902 = vld [vmem:[%s1804 + $0x180] sm:$0xff]
      %1903 = vst [vmem:[%s1805 + $0x180] sm:$0xff] %v1902
      %v1904 = vld [vmem:[%s1804 + $0x188] sm:$0xff]
      %1905 = vst [vmem:[%s1805 + $0x188] sm:$0xff] %v1904
      %v1906 = vld [vmem:[%s1804 + $0x190] sm:$0xff]
      %1907 = vst [vmem:[%s1805 + $0x190] sm:$0xff] %v1906
      %v1908 = vld [vmem:[%s1804 + $0x198] sm:$0xff]
      %1909 = vst [vmem:[%s1805 + $0x198] sm:$0xff] %v1908
      %v1910 = vld [vmem:[%s1804 + $0x1a0] sm:$0xff]
      %1911 = vst [vmem:[%s1805 + $0x1a0] sm:$0xff] %v1910
      %v1912 = vld [vmem:[%s1804 + $0x1a8] sm:$0xff]
      %1913 = vst [vmem:[%s1805 + $0x1a8] sm:$0xff] %v1912
      %v1914 = vld [vmem:[%s1804 + $0x1b0] sm:$0xff]
      %1915 = vst [vmem:[%s1805 + $0x1b0] sm:$0xff] %v1914
      %v1916 = vld [vmem:[%s1804 + $0x1b8] sm:$0xff]
      %1917 = vst [vmem:[%s1805 + $0x1b8] sm:$0xff] %v1916
      %v1918 = vld [vmem:[%s1804 + $0x1c0] sm:$0xff]
      %1919 = vst [vmem:[%s1805 + $0x1c0] sm:$0xff] %v1918
      %v1920 = vld [vmem:[%s1804 + $0x1c8] sm:$0xff]
      %1921 = vst [vmem:[%s1805 + $0x1c8] sm:$0xff] %v1920
      %v1922 = vld [vmem:[%s1804 + $0x1d0] sm:$0xff]
      %1923 = vst [vmem:[%s1805 + $0x1d0] sm:$0xff] %v1922
      %v1924 = vld [vmem:[%s1804 + $0x1d8] sm:$0xff]
      %1925 = vst [vmem:[%s1805 + $0x1d8] sm:$0xff] %v1924
      %v1926 = vld [vmem:[%s1804 + $0x1e0] sm:$0xff]
      %1927 = vst [vmem:[%s1805 + $0x1e0] sm:$0xff] %v1926
      %v1928 = vld [vmem:[%s1804 + $0x1e8] sm:$0xff]
      %1929 = vst [vmem:[%s1805 + $0x1e8] sm:$0xff] %v1928
      %v1930 = vld [vmem:[%s1804 + $0x1f0] sm:$0xff]
      %1931 = vst [vmem:[%s1805 + $0x1f0] sm:$0xff] %v1930
      %v1932 = vld [vmem:[%s1804 + $0x1f8] sm:$0xff]
      %1933 = vst [vmem:[%s1805 + $0x1f8] sm:$0xff] %v1932
      %v1934 = vld [vmem:[%s1804 + $0x200] sm:$0xff]
      %1935 = vst [vmem:[%s1805 + $0x200] sm:$0xff] %v1934
      %v1936 = vld [vmem:[%s1804 + $0x208] sm:$0xff]
      %1937 = vst [vmem:[%s1805 + $0x208] sm:$0xff] %v1936
      %v1938 = vld [vmem:[%s1804 + $0x210] sm:$0xff]
      %1939 = vst [vmem:[%s1805 + $0x210] sm:$0xff] %v1938
      %v1940 = vld [vmem:[%s1804 + $0x218] sm:$0xff]
      %1941 = vst [vmem:[%s1805 + $0x218] sm:$0xff] %v1940
      %v1942 = vld [vmem:[%s1804 + $0x220] sm:$0xff]
      %1943 = vst [vmem:[%s1805 + $0x220] sm:$0xff] %v1942
      %v1944 = vld [vmem:[%s1804 + $0x228] sm:$0xff]
      %1945 = vst [vmem:[%s1805 + $0x228] sm:$0xff] %v1944
      %v1946 = vld [vmem:[%s1804 + $0x230] sm:$0xff]
      %1947 = vst [vmem:[%s1805 + $0x230] sm:$0xff] %v1946
      %v1948 = vld [vmem:[%s1804 + $0x238] sm:$0xff]
      %1949 = vst [vmem:[%s1805 + $0x238] sm:$0xff] %v1948
      %v1950 = vld [vmem:[%s1804 + $0x240] sm:$0xff]
      %1951 = vst [vmem:[%s1805 + $0x240] sm:$0xff] %v1950
      %v1952 = vld [vmem:[%s1804 + $0x248] sm:$0xff]
      %1953 = vst [vmem:[%s1805 + $0x248] sm:$0xff] %v1952
      %v1954 = vld [vmem:[%s1804 + $0x250] sm:$0xff]
      %1955 = vst [vmem:[%s1805 + $0x250] sm:$0xff] %v1954
      %v1956 = vld [vmem:[%s1804 + $0x258] sm:$0xff]
      %1957 = vst [vmem:[%s1805 + $0x258] sm:$0xff] %v1956
      %v1958 = vld [vmem:[%s1804 + $0x260] sm:$0xff]
      %1959 = vst [vmem:[%s1805 + $0x260] sm:$0xff] %v1958
      %v1960 = vld [vmem:[%s1804 + $0x268] sm:$0xff]
      %1961 = vst [vmem:[%s1805 + $0x268] sm:$0xff] %v1960
      %v1962 = vld [vmem:[%s1804 + $0x270] sm:$0xff]
      %1963 = vst [vmem:[%s1805 + $0x270] sm:$0xff] %v1962
      %v1964 = vld [vmem:[%s1804 + $0x278] sm:$0xff]
      %1965 = vst [vmem:[%s1805 + $0x278] sm:$0xff] %v1964
      %v1966 = vld [vmem:[%s1804 + $0x280] sm:$0xff]
      %1967 = vst [vmem:[%s1805 + $0x280] sm:$0xff] %v1966
      %v1968 = vld [vmem:[%s1804 + $0x288] sm:$0xff]
      %1969 = vst [vmem:[%s1805 + $0x288] sm:$0xff] %v1968
      %v1970 = vld [vmem:[%s1804 + $0x290] sm:$0xff]
      %1971 = vst [vmem:[%s1805 + $0x290] sm:$0xff] %v1970
      %v1972 = vld [vmem:[%s1804 + $0x298] sm:$0xff]
      %1973 = vst [vmem:[%s1805 + $0x298] sm:$0xff] %v1972
      %v1974 = vld [vmem:[%s1804 + $0x2a0] sm:$0xff]
      %1975 = vst [vmem:[%s1805 + $0x2a0] sm:$0xff] %v1974
      %v1976 = vld [vmem:[%s1804 + $0x2a8] sm:$0xff]
      %1977 = vst [vmem:[%s1805 + $0x2a8] sm:$0xff] %v1976
      %v1978 = vld [vmem:[%s1804 + $0x2b0] sm:$0xff]
      %1979 = vst [vmem:[%s1805 + $0x2b0] sm:$0xff] %v1978
      %v1980 = vld [vmem:[%s1804 + $0x2b8] sm:$0xff]
      %1981 = vst [vmem:[%s1805 + $0x2b8] sm:$0xff] %v1980
      %v1982 = vld [vmem:[%s1804 + $0x2c0] sm:$0xff]
      %1983 = vst [vmem:[%s1805 + $0x2c0] sm:$0xff] %v1982
      %v1984 = vld [vmem:[%s1804 + $0x2c8] sm:$0xff]
      %1985 = vst [vmem:[%s1805 + $0x2c8] sm:$0xff] %v1984
      %v1986 = vld [vmem:[%s1804 + $0x2d0] sm:$0xff]
      %1987 = vst [vmem:[%s1805 + $0x2d0] sm:$0xff] %v1986
      %v1988 = vld [vmem:[%s1804 + $0x2d8] sm:$0xff]
      %1989 = vst [vmem:[%s1805 + $0x2d8] sm:$0xff] %v1988
      %v1990 = vld [vmem:[%s1804 + $0x2e0] sm:$0xff]
      %1991 = vst [vmem:[%s1805 + $0x2e0] sm:$0xff] %v1990
      %v1992 = vld [vmem:[%s1804 + $0x2e8] sm:$0xff]
      %1993 = vst [vmem:[%s1805 + $0x2e8] sm:$0xff] %v1992
      %v1994 = vld [vmem:[%s1804 + $0x2f0] sm:$0xff]
      %1995 = vst [vmem:[%s1805 + $0x2f0] sm:$0xff] %v1994
      %v1996 = vld [vmem:[%s1804 + $0x2f8] sm:$0xff]
      %1997 = vst [vmem:[%s1805 + $0x2f8] sm:$0xff] %v1996
      %v1998 = vld [vmem:[%s1804 + $0x300] sm:$0xff]
      %1999 = vst [vmem:[%s1805 + $0x300] sm:$0xff] %v1998
      %v2000 = vld [vmem:[%s1804 + $0x308] sm:$0xff]
      %2001 = vst [vmem:[%s1805 + $0x308] sm:$0xff] %v2000
      %v2002 = vld [vmem:[%s1804 + $0x310] sm:$0xff]
      %2003 = vst [vmem:[%s1805 + $0x310] sm:$0xff] %v2002
      %v2004 = vld [vmem:[%s1804 + $0x318] sm:$0xff]
      %2005 = vst [vmem:[%s1805 + $0x318] sm:$0xff] %v2004
      %v2006 = vld [vmem:[%s1804 + $0x320] sm:$0xff]
      %2007 = vst [vmem:[%s1805 + $0x320] sm:$0xff] %v2006
      %v2008 = vld [vmem:[%s1804 + $0x328] sm:$0xff]
      %2009 = vst [vmem:[%s1805 + $0x328] sm:$0xff] %v2008
      %v2010 = vld [vmem:[%s1804 + $0x330] sm:$0xff]
      %2011 = vst [vmem:[%s1805 + $0x330] sm:$0xff] %v2010
      %v2012 = vld [vmem:[%s1804 + $0x338] sm:$0xff]
      %2013 = vst [vmem:[%s1805 + $0x338] sm:$0xff] %v2012
      %v2014 = vld [vmem:[%s1804 + $0x340] sm:$0xff]
      %2015 = vst [vmem:[%s1805 + $0x340] sm:$0xff] %v2014
      %v2016 = vld [vmem:[%s1804 + $0x348] sm:$0xff]
      %2017 = vst [vmem:[%s1805 + $0x348] sm:$0xff] %v2016
      %v2018 = vld [vmem:[%s1804 + $0x350] sm:$0xff]
      %2019 = vst [vmem:[%s1805 + $0x350] sm:$0xff] %v2018
      %v2020 = vld [vmem:[%s1804 + $0x358] sm:$0xff]
      %2021 = vst [vmem:[%s1805 + $0x358] sm:$0xff] %v2020
      %v2022 = vld [vmem:[%s1804 + $0x360] sm:$0xff]
      %2023 = vst [vmem:[%s1805 + $0x360] sm:$0xff] %v2022
      %v2024 = vld [vmem:[%s1804 + $0x368] sm:$0xff]
      %2025 = vst [vmem:[%s1805 + $0x368] sm:$0xff] %v2024
      %v2026 = vld [vmem:[%s1804 + $0x370] sm:$0xff]
      %2027 = vst [vmem:[%s1805 + $0x370] sm:$0xff] %v2026
      %v2028 = vld [vmem:[%s1804 + $0x378] sm:$0xff]
      %2029 = vst [vmem:[%s1805 + $0x378] sm:$0xff] %v2028
      %v2030 = vld [vmem:[%s1804 + $0x380] sm:$0xff]
      %2031 = vst [vmem:[%s1805 + $0x380] sm:$0xff] %v2030
      %v2032 = vld [vmem:[%s1804 + $0x388] sm:$0xff]
      %2033 = vst [vmem:[%s1805 + $0x388] sm:$0xff] %v2032
      %v2034 = vld [vmem:[%s1804 + $0x390] sm:$0xff]
      %2035 = vst [vmem:[%s1805 + $0x390] sm:$0xff] %v2034
      %v2036 = vld [vmem:[%s1804 + $0x398] sm:$0xff]
      %2037 = vst [vmem:[%s1805 + $0x398] sm:$0xff] %v2036
      %v2038 = vld [vmem:[%s1804 + $0x3a0] sm:$0xff]
      %2039 = vst [vmem:[%s1805 + $0x3a0] sm:$0xff] %v2038
      %v2040 = vld [vmem:[%s1804 + $0x3a8] sm:$0xff]
      %2041 = vst [vmem:[%s1805 + $0x3a8] sm:$0xff] %v2040
      %v2042 = vld [vmem:[%s1804 + $0x3b0] sm:$0xff]
      %2043 = vst [vmem:[%s1805 + $0x3b0] sm:$0xff] %v2042
      %v2044 = vld [vmem:[%s1804 + $0x3b8] sm:$0xff]
      %2045 = vst [vmem:[%s1805 + $0x3b8] sm:$0xff] %v2044
      %v2046 = vld [vmem:[%s1804 + $0x3c0] sm:$0xff]
      %2047 = vst [vmem:[%s1805 + $0x3c0] sm:$0xff] %v2046
      %v2048 = vld [vmem:[%s1804 + $0x3c8] sm:$0xff]
      %2049 = vst [vmem:[%s1805 + $0x3c8] sm:$0xff] %v2048
      %v2050 = vld [vmem:[%s1804 + $0x3d0] sm:$0xff]
      %2051 = vst [vmem:[%s1805 + $0x3d0] sm:$0xff] %v2050
      %v2052 = vld [vmem:[%s1804 + $0x3d8] sm:$0xff]
      %2053 = vst [vmem:[%s1805 + $0x3d8] sm:$0xff] %v2052
      %v2054 = vld [vmem:[%s1804 + $0x3e0] sm:$0xff]
      %2055 = vst [vmem:[%s1805 + $0x3e0] sm:$0xff] %v2054
      %v2056 = vld [vmem:[%s1804 + $0x3e8] sm:$0xff]
      %2057 = vst [vmem:[%s1805 + $0x3e8] sm:$0xff] %v2056
      %v2058 = vld [vmem:[%s1804 + $0x3f0] sm:$0xff]
      %2059 = vst [vmem:[%s1805 + $0x3f0] sm:$0xff] %v2058
      %v2060 = vld [vmem:[%s1804 + $0x3f8] sm:$0xff]
      %2061 = vst [vmem:[%s1805 + $0x3f8] sm:$0xff] %v2060
    $region147: #{time_series_model.1} parent=141 // loop_footer
      %s1803 = sadd.s32 1, %s1799
    $region148: #{time_series_model.1} parent=141 // loop_footer_branch
      %1798 = sbr.rel target = $region144
    $region149: #{time_series_model.1} parent=141 // loop_exit
      _
  $region142: #{time_series_model.1} parent=0 // pred_fallthru
    _
  // Predicated region
  $region150: #{time_series_model.1} parent=0 // pred_check
    _
  $region151: #{time_series_model.1} parent=0 // pred_check_branch
    %2063 = sbr.rel target = $region153
  $region152: #{time_series_model.1} parent=0 // pred_region
    _
  $region153: #{time_series_model.1} parent=0 // pred_fallthru
    _
  // Predicated region
  $region154: #{time_series_model.1} parent=0 // pred_check
    _
  $region155: #{time_series_model.1} parent=0 // pred_check_branch
    %2066 = sbr.rel (0) target = $region157
  $region156: #{time_series_model.1} parent=0 // pred_region
    %2067 = vsyncadd %s1795, 16384
  $region157: #{time_series_model.1} parent=0 // pred_fallthru
    _
  %v2068 = vld [vmem:[#allocation2] sm:$0xff]
  %v2069 = vld [vmem:[#allocation2 + $0x8] sm:$0xff]
  %v2070 = vld [vmem:[%s1] sm:$0xff]
  %v2071 = vld [vmem:[%s1 + $0x8] sm:$0xff]
  %v2072 = vld [vmem:[%s1 + $0x10] sm:$0xff]
  %v2073 = vld [vmem:[%s1 + $0x18] sm:$0xff]
  %v2074 = vld [vmem:[%s1 + $0x20] sm:$0xff]
  %v2075 = vld [vmem:[%s1 + $0x28] sm:$0xff]
  %v2076 = vld [vmem:[%s1 + $0x30] sm:$0xff]
  %v2077 = vld [vmem:[%s1 + $0x38] sm:$0xff]
  %v2078 = vld [vmem:[%s11] sm:$0x3f]
  %v2079 = vld [vmem:[%s8] sm:$0xff]
  %v2080 = vld [vmem:[%s8 + $0x8] sm:$0xff]
  %v2081 = vld [vmem:[%s8 + $0x10] sm:$0xff]
  %v2082 = vld [vmem:[%s8 + $0x18] sm:$0xff]
  %v2083 = vld [vmem:[%s9] sm:$0x1]
  %v2085 = vperm.slane %v2083, 0
  %v2088 = vsel %vm479, %v2068, 0
  %v2091 = vsel %vm479, %v2069, 0
  %2093 = vmatpush.msra.mxu0 0.0
  %2094 = vmatpush.msra.mxu0 0.0
  %2095 = vmatpush.msra.mxu0 0.0
  %2096 = vmatpush.msra.mxu0 0.0
  %2097 = vmatpush.msra.mxu0 0.0
  %2098 = vmatpush.msra.mxu0 0.0
  %2099 = vmatpush.msra.mxu0 0.0
  %2100 = vmatpush.msra.mxu0 0.0
  %2101 = vmatpush.msra.mxu0 0.0
  %2102 = vmatpush.msra.mxu0 0.0
  %2103 = vmatpush.msra.mxu0 0.0
  %2104 = vmatpush.msra.mxu0 0.0
  %2105 = vmatpush.msra.mxu0 %v2082
  %2106 = vmatpush.msra.mxu0 %v2081
  %2107 = vmatpush.msra.mxu0 %v2080
  %2108 = vmatpush.msra.mxu0 %v2079
  %2109 = vmatmul.f32.gmra.mxu0 %v2088
  %v2110 = vpop.f32.mrf.mxu0
  %v2111 = vadd.f32 %v2085, %v2110
  %2112 = vmatmul.f32.gmra.mxu0 %v2091
  %v2113 = vpop.f32.mrf.mxu0
  %v2114 = vadd.f32 %v2085, %v2113
  %2115 = vdwg.mxu0
  %2118 = vrot.lane.b32.xlu0 %v2111, 120
  %v2119 = vpop.permute.xlu0 %2118
  %2120 = vrot.lane.b32.xlu0 %v2114, 120
  %v2121 = vpop.permute.xlu0 %2120
  %2122 = vrot.lane.b32.xlu0 %v2111, 112
  %v2123 = vpop.permute.xlu0 %2122
  %2124 = vrot.lane.b32.xlu0 %v2114, 112
  %v2125 = vpop.permute.xlu0 %2124
  %2126 = vrot.lane.b32.xlu0 %v2111, 104
  %v2127 = vpop.permute.xlu0 %2126
  %2128 = vrot.lane.b32.xlu0 %v2114, 104
  %v2129 = vpop.permute.xlu0 %2128
  %2130 = vrot.lane.b32.xlu0 %v2111, 96
  %v2131 = vpop.permute.xlu0 %2130
  %2132 = vrot.lane.b32.xlu0 %v2114, 96
  %v2133 = vpop.permute.xlu0 %2132
  %vm2134 = vcmask 64512
  %v2135 = vsel %vm2134, %v2111, 0
  %v2137 = vsel %vm2134, %v2114, 0
  %v2139 = vsel %vm2134, %v2131, 0
  %v2141 = vsel %vm2134, %v2133, 0
  %2143 = vmatpush.xpose.msra.mxu0 0.0
  %2144 = vmatpush.xpose.msra.mxu0 0.0
  %2145 = vmatpush.xpose.msra.mxu0 0.0
  %2146 = vmatpush.xpose.msra.mxu0 0.0
  %2147 = vmatpush.xpose.msra.mxu0 0.0
  %2148 = vmatpush.xpose.msra.mxu0 0.0
  %2149 = vmatpush.xpose.msra.mxu0 0.0
  %2150 = vmatpush.xpose.msra.mxu0 0.0
  %2151 = vmatpush.xpose.msra.mxu0 0.0
  %2152 = vmatpush.xpose.msra.mxu0 0.0
  %2153 = vmatpush.xpose.msra.mxu0 0.0
  %2154 = vmatpush.xpose.msra.mxu0 0.0
  %2155 = vmatpush.xpose.msra.mxu0 0.0
  %2156 = vmatpush.xpose.msra.mxu0 0.0
  %2157 = vmatpush.xpose.msra.mxu0 %v2141
  %2158 = vmatpush.xpose.msra.mxu0 %v2139
  %2159 = vmatmul.f32.gmra.mxu0 %v2135
  %v2160 = vpop.f32.mrf.mxu0
  %v2161 = vadd.f32 0.0, %v2160
  %2162 = vmatmul.f32.gmra.mxu0 %v2137
  %v2163 = vpop.f32.mrf.mxu0
  %v2164 = vadd.f32 0.0, %v2163
  %2165 = vdwg.mxu0
  %2166 = vrot.lane.b32.xlu0 %v2119, 96
  %v2167 = vpop.permute.xlu0 %2166
  %2168 = vrot.lane.b32.xlu0 %v2121, 96
  %v2169 = vpop.permute.xlu0 %2168
  %v2170 = vsel %vm2134, %v2119, 0
  %v2172 = vsel %vm2134, %v2121, 0
  %v2174 = vsel %vm2134, %v2167, 0
  %v2176 = vsel %vm2134, %v2169, 0
  %2178 = vmatpush.xpose.msra.mxu0 0.0
  %2179 = vmatpush.xpose.msra.mxu0 0.0
  %2180 = vmatpush.xpose.msra.mxu0 0.0
  %2181 = vmatpush.xpose.msra.mxu0 0.0
  %2182 = vmatpush.xpose.msra.mxu0 0.0
  %2183 = vmatpush.xpose.msra.mxu0 0.0
  %2184 = vmatpush.xpose.msra.mxu0 0.0
  %2185 = vmatpush.xpose.msra.mxu0 0.0
  %2186 = vmatpush.xpose.msra.mxu0 0.0
  %2187 = vmatpush.xpose.msra.mxu0 0.0
  %2188 = vmatpush.xpose.msra.mxu0 0.0
  %2189 = vmatpush.xpose.msra.mxu0 0.0
  %2190 = vmatpush.xpose.msra.mxu0 0.0
  %2191 = vmatpush.xpose.msra.mxu0 0.0
  %2192 = vmatpush.xpose.msra.mxu0 %v2176
  %2193 = vmatpush.xpose.msra.mxu0 %v2174
  %2194 = vmatmul.f32.gmra.mxu0 %v2170
  %v2195 = vpop.f32.mrf.mxu0
  %v2196 = vadd.f32 0.0, %v2195
  %2197 = vmatmul.f32.gmra.mxu0 %v2172
  %v2198 = vpop.f32.mrf.mxu0
  %v2199 = vadd.f32 0.0, %v2198
  %2200 = vdwg.mxu0
  %2201 = vrot.lane.b32.xlu0 %v2123, 96
  %v2202 = vpop.permute.xlu0 %2201
  %2203 = vrot.lane.b32.xlu0 %v2125, 96
  %v2204 = vpop.permute.xlu0 %2203
  %v2205 = vsel %vm2134, %v2123, 0
  %v2207 = vsel %vm2134, %v2125, 0
  %v2209 = vsel %vm2134, %v2202, 0
  %v2211 = vsel %vm2134, %v2204, 0
  %2213 = vmatpush.xpose.msra.mxu0 0.0
  %2214 = vmatpush.xpose.msra.mxu0 0.0
  %2215 = vmatpush.xpose.msra.mxu0 0.0
  %2216 = vmatpush.xpose.msra.mxu0 0.0
  %2217 = vmatpush.xpose.msra.mxu0 0.0
  %2218 = vmatpush.xpose.msra.mxu0 0.0
  %2219 = vmatpush.xpose.msra.mxu0 0.0
  %2220 = vmatpush.xpose.msra.mxu0 0.0
  %2221 = vmatpush.xpose.msra.mxu0 0.0
  %2222 = vmatpush.xpose.msra.mxu0 0.0
  %2223 = vmatpush.xpose.msra.mxu0 0.0
  %2224 = vmatpush.xpose.msra.mxu0 0.0
  %2225 = vmatpush.xpose.msra.mxu0 0.0
  %2226 = vmatpush.xpose.msra.mxu0 0.0
  %2227 = vmatpush.xpose.msra.mxu0 %v2211
  %2228 = vmatpush.xpose.msra.mxu0 %v2209
  %2229 = vmatmul.f32.gmra.mxu0 %v2205
  %v2230 = vpop.f32.mrf.mxu0
  %v2231 = vadd.f32 0.0, %v2230
  %2232 = vmatmul.f32.gmra.mxu0 %v2207
  %v2233 = vpop.f32.mrf.mxu0
  %v2234 = vadd.f32 0.0, %v2233
  %2235 = vdwg.mxu0
  %2236 = vrot.lane.b32.xlu0 %v2127, 96
  %v2237 = vpop.permute.xlu0 %2236
  %2238 = vrot.lane.b32.xlu0 %v2129, 96
  %v2239 = vpop.permute.xlu0 %2238
  %v2240 = vsel %vm2134, %v2127, 0
  %v2242 = vsel %vm2134, %v2129, 0
  %v2244 = vsel %vm2134, %v2237, 0
  %v2246 = vsel %vm2134, %v2239, 0
  %2248 = vmatpush.xpose.msra.mxu0 0.0
  %2249 = vmatpush.xpose.msra.mxu0 0.0
  %2250 = vmatpush.xpose.msra.mxu0 0.0
  %2251 = vmatpush.xpose.msra.mxu0 0.0
  %2252 = vmatpush.xpose.msra.mxu0 0.0
  %2253 = vmatpush.xpose.msra.mxu0 0.0
  %2254 = vmatpush.xpose.msra.mxu0 0.0
  %2255 = vmatpush.xpose.msra.mxu0 0.0
  %2256 = vmatpush.xpose.msra.mxu0 0.0
  %2257 = vmatpush.xpose.msra.mxu0 0.0
  %2258 = vmatpush.xpose.msra.mxu0 0.0
  %2259 = vmatpush.xpose.msra.mxu0 0.0
  %2260 = vmatpush.xpose.msra.mxu0 0.0
  %2261 = vmatpush.xpose.msra.mxu0 0.0
  %2262 = vmatpush.xpose.msra.mxu0 %v2246
  %2263 = vmatpush.xpose.msra.mxu0 %v2244
  %2264 = vmatmul.f32.gmra.mxu0 %v2240
  %v2265 = vpop.f32.mrf.mxu0
  %v2266 = vadd.f32 0.0, %v2265
  %2267 = vmatmul.f32.gmra.mxu0 %v2242
  %v2268 = vpop.f32.mrf.mxu0
  %v2269 = vadd.f32 0.0, %v2268
  %2270 = vdwg.mxu0
  %v2271 = vmul.f32 %v2161, 0.35355338
  %v2272 = vmul.f32 %v2164, 0.35355338
  %v2273 = vmul.f32 %v2196, 0.35355338
  %v2274 = vmul.f32 %v2199, 0.35355338
  %v2275 = vmul.f32 %v2231, 0.35355338
  %v2276 = vmul.f32 %v2234, 0.35355338
  %v2277 = vmul.f32 %v2266, 0.35355338
  %v2278 = vmul.f32 %v2269, 0.35355338
  %v2279 = vadd.f32 %v2271, %v2070
  %v2280 = vadd.f32 %v2272, %v2071
  %v2281 = vadd.f32 %v2273, %v2072
  %v2282 = vadd.f32 %v2274, %v2073
  %v2283 = vadd.f32 %v2275, %v2074
  %v2284 = vadd.f32 %v2276, %v2075
  %v2285 = vadd.f32 %v2277, %v2076
  %v2286 = vadd.f32 %v2278, %v2077
  %vm2287 = vcmask 130048
  %v2288 = vsel %vm2287, %v2279, -inf
  %2289 = vmax.xlane.f32.xlu0 %v2288
  %v2290 = vpop.xlane.xlu0 %2289
  %v2291 = vsel %vm2287, %v2280, -inf
  %2292 = vmax.xlane.f32.xlu0 %v2291
  %v2293 = vpop.xlane.xlu0 %2292
  %v2294 = vsel %vm2287, %v2281, -inf
  %2295 = vmax.xlane.f32.xlu0 %v2294
  %v2296 = vpop.xlane.xlu0 %2295
  %v2297 = vsel %vm2287, %v2282, -inf
  %2298 = vmax.xlane.f32.xlu0 %v2297
  %v2299 = vpop.xlane.xlu0 %2298
  %v2300 = vsel %vm2287, %v2283, -inf
  %2301 = vmax.xlane.f32.xlu0 %v2300
  %v2302 = vpop.xlane.xlu0 %2301
  %v2303 = vsel %vm2287, %v2284, -inf
  %2304 = vmax.xlane.f32.xlu0 %v2303
  %v2305 = vpop.xlane.xlu0 %2304
  %v2306 = vsel %vm2287, %v2285, -inf
  %2307 = vmax.xlane.f32.xlu0 %v2306
  %v2308 = vpop.xlane.xlu0 %2307
  %v2309 = vsel %vm2287, %v2286, -inf
  %2310 = vmax.xlane.f32.xlu0 %v2309
  %v2311 = vpop.xlane.xlu0 %2310
  %v2312 = vsub.f32 %v2279, %v2290
  %v2313 = vsub.f32 %v2280, %v2293
  %v2314 = vsub.f32 %v2281, %v2296
  %v2315 = vsub.f32 %v2282, %v2299
  %v2316 = vsub.f32 %v2283, %v2302
  %v2317 = vsub.f32 %v2284, %v2305
  %v2318 = vsub.f32 %v2285, %v2308
  %v2319 = vsub.f32 %v2286, %v2311
  %v2320 = vmul.f32 %v2312, 1.442695
  %v2321 = vpow.pop %v2320
  %v2322 = vmul.f32 %v2313, 1.442695
  %v2323 = vpow.pop %v2322
  %v2324 = vmul.f32 %v2314, 1.442695
  %v2325 = vpow.pop %v2324
  %v2326 = vmul.f32 %v2315, 1.442695
  %v2327 = vpow.pop %v2326
  %v2328 = vmul.f32 %v2316, 1.442695
  %v2329 = vpow.pop %v2328
  %v2330 = vmul.f32 %v2317, 1.442695
  %v2331 = vpow.pop %v2330
  %v2332 = vmul.f32 %v2318, 1.442695
  %v2333 = vpow.pop %v2332
  %v2334 = vmul.f32 %v2319, 1.442695
  %v2335 = vpow.pop %v2334
  %v2336 = vsel %vm2287, %v2321, 0.0
  %2337 = vadd.xlane.f32.xlu0 %v2336
  %v2338 = vpop.xlane.xlu0 %2337
  %v2339 = vsel %vm2287, %v2323, 0.0
  %2340 = vadd.xlane.f32.xlu0 %v2339
  %v2341 = vpop.xlane.xlu0 %2340
  %v2342 = vsel %vm2287, %v2325, 0.0
  %2343 = vadd.xlane.f32.xlu0 %v2342
  %v2344 = vpop.xlane.xlu0 %2343
  %v2345 = vsel %vm2287, %v2327, 0.0
  %2346 = vadd.xlane.f32.xlu0 %v2345
  %v2347 = vpop.xlane.xlu0 %2346
  %v2348 = vsel %vm2287, %v2329, 0.0
  %2349 = vadd.xlane.f32.xlu0 %v2348
  %v2350 = vpop.xlane.xlu0 %2349
  %v2351 = vsel %vm2287, %v2331, 0.0
  %2352 = vadd.xlane.f32.xlu0 %v2351
  %v2353 = vpop.xlane.xlu0 %2352
  %v2354 = vsel %vm2287, %v2333, 0.0
  %2355 = vadd.xlane.f32.xlu0 %v2354
  %v2356 = vpop.xlane.xlu0 %2355
  %v2357 = vsel %vm2287, %v2335, 0.0
  %2358 = vadd.xlane.f32.xlu0 %v2357
  %v2359 = vpop.xlane.xlu0 %2358
  %v2360 = vrcp.pop %v2338
  %v2361 = vrcp.pop %v2341
  %v2362 = vrcp.pop %v2344
  %v2363 = vrcp.pop %v2347
  %v2364 = vrcp.pop %v2350
  %v2365 = vrcp.pop %v2353
  %v2366 = vrcp.pop %v2356
  %v2367 = vrcp.pop %v2359
  %v2368 = vmul.f32 %v2321, %v2360
  %v2369 = vmul.f32 %v2323, %v2361
  %v2370 = vmul.f32 %v2325, %v2362
  %v2371 = vmul.f32 %v2327, %v2363
  %v2372 = vmul.f32 %v2329, %v2364
  %v2373 = vmul.f32 %v2331, %v2365
  %v2374 = vmul.f32 %v2333, %v2366
  %v2375 = vmul.f32 %v2335, %v2367
  %2376 = vrot.lane.b32.xlu0 %v2111, 64
  %v2377 = vpop.permute.xlu0 %2376
  %2378 = vrot.lane.b32.xlu0 %v2114, 64
  %v2379 = vpop.permute.xlu0 %2378
  %v2383 = vsel %vm2287, %v2368, 0
  %v2386 = vsel %vm2287, %v2369, 0
  %2388 = vmatpush.msra.mxu0 0.0
  %2389 = vmatpush.msra.mxu0 0.0
  %2390 = vmatpush.msra.mxu0 0.0
  %2391 = vmatpush.msra.mxu0 0.0
  %2392 = vmatpush.msra.mxu0 0.0
  %2393 = vmatpush.msra.mxu0 0.0
  %2394 = vmatpush.msra.mxu0 0.0
  %2395 = vmatpush.msra.mxu0 0.0
  %2396 = vmatpush.msra.mxu0 0.0
  %2397 = vmatpush.msra.mxu0 0.0
  %2398 = vmatpush.msra.mxu0 0.0
  %2399 = vmatpush.msra.mxu0 0.0
  %2400 = vmatpush.msra.mxu0 0.0
  %2401 = vmatpush.msra.mxu0 0.0
  %2402 = vmatpush.msra.mxu0 %v2379
  %2403 = vmatpush.msra.mxu0 %v2377
  %2404 = vmatmul.f32.gmra.mxu0 %v2383
  %v2405 = vpop.f32.mrf.mxu0
  %v2406 = vadd.f32 0.0, %v2405
  %2407 = vmatmul.f32.gmra.mxu0 %v2386
  %v2408 = vpop.f32.mrf.mxu0
  %v2409 = vadd.f32 0.0, %v2408
  %2410 = vdwg.mxu0
  %2411 = vrot.lane.b32.xlu0 %v2119, 64
  %v2412 = vpop.permute.xlu0 %2411
  %2413 = vrot.lane.b32.xlu0 %v2121, 64
  %v2414 = vpop.permute.xlu0 %2413
  %v2418 = vsel %vm2287, %v2370, 0
  %v2421 = vsel %vm2287, %v2371, 0
  %2423 = vmatpush.msra.mxu0 0.0
  %2424 = vmatpush.msra.mxu0 0.0
  %2425 = vmatpush.msra.mxu0 0.0
  %2426 = vmatpush.msra.mxu0 0.0
  %2427 = vmatpush.msra.mxu0 0.0
  %2428 = vmatpush.msra.mxu0 0.0
  %2429 = vmatpush.msra.mxu0 0.0
  %2430 = vmatpush.msra.mxu0 0.0
  %2431 = vmatpush.msra.mxu0 0.0
  %2432 = vmatpush.msra.mxu0 0.0
  %2433 = vmatpush.msra.mxu0 0.0
  %2434 = vmatpush.msra.mxu0 0.0
  %2435 = vmatpush.msra.mxu0 0.0
  %2436 = vmatpush.msra.mxu0 0.0
  %2437 = vmatpush.msra.mxu0 %v2414
  %2438 = vmatpush.msra.mxu0 %v2412
  %2439 = vmatmul.f32.gmra.mxu0 %v2418
  %v2440 = vpop.f32.mrf.mxu0
  %v2441 = vadd.f32 0.0, %v2440
  %2442 = vmatmul.f32.gmra.mxu0 %v2421
  %v2443 = vpop.f32.mrf.mxu0
  %v2444 = vadd.f32 0.0, %v2443
  %2445 = vdwg.mxu0
  %2446 = vrot.lane.b32.xlu0 %v2123, 64
  %v2447 = vpop.permute.xlu0 %2446
  %2448 = vrot.lane.b32.xlu0 %v2125, 64
  %v2449 = vpop.permute.xlu0 %2448
  %v2453 = vsel %vm2287, %v2372, 0
  %v2456 = vsel %vm2287, %v2373, 0
  %2458 = vmatpush.msra.mxu0 0.0
  %2459 = vmatpush.msra.mxu0 0.0
  %2460 = vmatpush.msra.mxu0 0.0
  %2461 = vmatpush.msra.mxu0 0.0
  %2462 = vmatpush.msra.mxu0 0.0
  %2463 = vmatpush.msra.mxu0 0.0
  %2464 = vmatpush.msra.mxu0 0.0
  %2465 = vmatpush.msra.mxu0 0.0
  %2466 = vmatpush.msra.mxu0 0.0
  %2467 = vmatpush.msra.mxu0 0.0
  %2468 = vmatpush.msra.mxu0 0.0
  %2469 = vmatpush.msra.mxu0 0.0
  %2470 = vmatpush.msra.mxu0 0.0
  %2471 = vmatpush.msra.mxu0 0.0
  %2472 = vmatpush.msra.mxu0 %v2449
  %2473 = vmatpush.msra.mxu0 %v2447
  %2474 = vmatmul.f32.gmra.mxu0 %v2453
  %v2475 = vpop.f32.mrf.mxu0
  %v2476 = vadd.f32 0.0, %v2475
  %2477 = vmatmul.f32.gmra.mxu0 %v2456
  %v2478 = vpop.f32.mrf.mxu0
  %v2479 = vadd.f32 0.0, %v2478
  %2480 = vdwg.mxu0
  %2481 = vrot.lane.b32.xlu0 %v2127, 64
  %v2482 = vpop.permute.xlu0 %2481
  %2483 = vrot.lane.b32.xlu0 %v2129, 64
  %v2484 = vpop.permute.xlu0 %2483
  %v2488 = vsel %vm2287, %v2374, 0
  %v2491 = vsel %vm2287, %v2375, 0
  %2493 = vmatpush.msra.mxu0 0.0
  %2494 = vmatpush.msra.mxu0 0.0
  %2495 = vmatpush.msra.mxu0 0.0
  %2496 = vmatpush.msra.mxu0 0.0
  %2497 = vmatpush.msra.mxu0 0.0
  %2498 = vmatpush.msra.mxu0 0.0
  %2499 = vmatpush.msra.mxu0 0.0
  %2500 = vmatpush.msra.mxu0 0.0
  %2501 = vmatpush.msra.mxu0 0.0
  %2502 = vmatpush.msra.mxu0 0.0
  %2503 = vmatpush.msra.mxu0 0.0
  %2504 = vmatpush.msra.mxu0 0.0
  %2505 = vmatpush.msra.mxu0 0.0
  %2506 = vmatpush.msra.mxu0 0.0
  %2507 = vmatpush.msra.mxu0 %v2484
  %2508 = vmatpush.msra.mxu0 %v2482
  %2509 = vmatmul.f32.gmra.mxu0 %v2488
  %v2510 = vpop.f32.mrf.mxu0
  %v2511 = vadd.f32 0.0, %v2510
  %2512 = vmatmul.f32.gmra.mxu0 %v2491
  %v2513 = vpop.f32.mrf.mxu0
  %v2514 = vadd.f32 0.0, %v2513
  %2515 = vdwg.mxu0
  %2518 = vrot.lane.b32.xlu0 %v2441, 8
  %v2519 = vpop.permute.xlu0 %2518
  %2520 = vrot.lane.b32.xlu0 %v2444, 8
  %v2521 = vpop.permute.xlu0 %2520
  %2526 = vrot.lane.b32.xlu0 %v2476, 16
  %v2527 = vpop.permute.xlu0 %2526
  %2528 = vrot.lane.b32.xlu0 %v2479, 16
  %v2529 = vpop.permute.xlu0 %2528
  %2534 = vrot.lane.b32.xlu0 %v2511, 24
  %v2535 = vpop.permute.xlu0 %2534
  %2536 = vrot.lane.b32.xlu0 %v2514, 24
  %v2537 = vpop.permute.xlu0 %2536
  %v2540 = vsel %vm2134, %v2406, %v2519
  %v2541 = vsel %vm2134, %v2409, %v2521
  %v2542 = vsel %vm2287, %v2540, %v2527
  %v2543 = vsel %vm2287, %v2541, %v2529
  %vm2544 = vcmask 195584
  %v2545 = vsel %vm2544, %v2542, %v2535
  %v2546 = vsel %vm2544, %v2543, %v2537
  %v2547 = vld [vmem:[%s10] sm:$0xff]
  %v2548 = vld [vmem:[%s10 + $0x8] sm:$0xff]
  %v2549 = vld [vmem:[%s10 + $0x10] sm:$0xff]
  %v2550 = vld [vmem:[%s10 + $0x18] sm:$0xff]
  %v2551 = vperm.slane %v2078, 0
  %v2553 = vsel %vm479, %v2545, 0
  %v2556 = vsel %vm479, %v2546, 0
  %2558 = vmatpush.msra.mxu0 0.0
  %2559 = vmatpush.msra.mxu0 0.0
  %2560 = vmatpush.msra.mxu0 0.0
  %2561 = vmatpush.msra.mxu0 0.0
  %2562 = vmatpush.msra.mxu0 0.0
  %2563 = vmatpush.msra.mxu0 0.0
  %2564 = vmatpush.msra.mxu0 0.0
  %2565 = vmatpush.msra.mxu0 0.0
  %2566 = vmatpush.msra.mxu0 0.0
  %2567 = vmatpush.msra.mxu0 0.0
  %2568 = vmatpush.msra.mxu0 0.0
  %2569 = vmatpush.msra.mxu0 0.0
  %2570 = vmatpush.msra.mxu0 %v2550
  %2571 = vmatpush.msra.mxu0 %v2549
  %2572 = vmatpush.msra.mxu0 %v2548
  %2573 = vmatpush.msra.mxu0 %v2547
  %2574 = vmatmul.f32.gmra.mxu0 %v2553
  %v2575 = vpop.f32.mrf.mxu0
  %v2576 = vadd.f32 %v2551, %v2575
  %2577 = vmatmul.f32.gmra.mxu0 %v2556
  %v2578 = vpop.f32.mrf.mxu0
  %v2579 = vadd.f32 %v2551, %v2578
  %2580 = vdwg.mxu0
  %v2581 = vadd.f32 %v2068, %v2576
  %v2582 = vadd.f32 %v2069, %v2579
  %v2583 = vsel %vm479, %v2581, 0.0
  %2584 = vadd.xlane.f32.xlu0 %v2583
  %v2585 = vpop.xlane.xlu0 %2584
  %v2586 = vsel %vm479, %v2582, 0.0
  %2587 = vadd.xlane.f32.xlu0 %v2586
  %v2588 = vpop.xlane.xlu0 %2587
  %v2589 = vrcp.pop 32.0
  %v2590 = vmul.f32 32.0, %v2589
  %v2591 = vsub.f32 1.0, %v2590
  %v2592 = vmul.f32 %v2589, %v2591
  %v2593 = vadd.f32 %v2589, %v2592
  %vm2594 = vweird.f32 %v2589
  %v2595 = vsel %vm2594, %v2589, %v2593
  %v2596 = vmul.f32 %v2585, %v2595
  %v2597 = vmul.f32 %v2588, %v2595
  %v2598 = vsub.f32 %v2581, %v2596
  %v2599 = vsub.f32 %v2582, %v2597
  %v2600 = vmul.f32 %v2598, %v2598
  %v2601 = vmul.f32 %v2599, %v2599
  %v2602 = vsel %vm479, %v2600, 0.0
  %2603 = vadd.xlane.f32.xlu0 %v2602
  %v2604 = vpop.xlane.xlu0 %2603
  %v2605 = vsel %vm479, %v2601, 0.0
  %2606 = vadd.xlane.f32.xlu0 %v2605
  %v2607 = vpop.xlane.xlu0 %2606
  %v2608 = vmul.f32 %v2604, %v2595
  %v2609 = vmul.f32 %v2607, %v2595
  %v2610 = vadd.f32 %v2608, 1e-05
  %v2611 = vadd.f32 %v2609, 1e-05
  %v2612 = vrsqrt.pop %v2610
  %v2613 = vmul.f32 %v2612, %v2610
  %v2614 = vmul.f32 %v2613, %v2612
  %v2615 = vmul.f32 0.5, %v2614
  %v2616 = vsub.f32 1.5, %v2615
  %v2617 = vmul.f32 %v2612, %v2616
  %vm2618 = vweird.f32 %v2610
  %vm2619 = vweird.f32 %v2612
  %vm2620 = vmor %vm2618, %vm2619
  %v2621 = vsel %vm2620, %v2612, %v2617
  %v2622 = vrsqrt.pop %v2611
  %v2623 = vmul.f32 %v2622, %v2611
  %v2624 = vmul.f32 %v2623, %v2622
  %v2625 = vmul.f32 0.5, %v2624
  %v2626 = vsub.f32 1.5, %v2625
  %v2627 = vmul.f32 %v2622, %v2626
  %vm2628 = vweird.f32 %v2611
  %vm2629 = vweird.f32 %v2622
  %vm2630 = vmor %vm2628, %vm2629
  %v2631 = vsel %vm2630, %v2622, %v2627
  %v2632 = vmul.f32 %v2598, %v2621
  %v2633 = vmul.f32 %v2599, %v2631
  %v2634 = vperm.slane %v2078, 1
  %v2635 = vmul.f32 %v2632, %v2634
  %v2636 = vmul.f32 %v2633, %v2634
  %v2637 = vperm.slane %v2078, 2
  %v2638 = vadd.f32 %v2635, %v2637
  %v2639 = vadd.f32 %v2636, %v2637
  %s2640 = smul.u32 4, 4
  %s2641 = smul.u32 %s2640, 16
  %s2642 = sshll.u32 %s2641, 4
  %2643 = dma.done [#allocation7], %s2642
  %v2644 = vpack.c.bf16 %v2639, %v2638
  %v2645 = vld [vmem:[#allocation3] sm:$0xff]
  %v2646 = vld [vmem:[#allocation3 + $0x8] sm:$0xff]
  %v2647 = vld [vmem:[#allocation3 + $0x10] sm:$0xff]
  %v2648 = vld [vmem:[#allocation3 + $0x18] sm:$0xff]
  %v2649 = vld [vmem:[#allocation3 + $0x20] sm:$0xff]
  %v2650 = vld [vmem:[#allocation3 + $0x28] sm:$0xff]
  %v2651 = vld [vmem:[#allocation3 + $0x30] sm:$0xff]
  %v2652 = vld [vmem:[#allocation3 + $0x38] sm:$0xff]
  %v2653 = vld [vmem:[#allocation3 + $0x40] sm:$0xff]
  %v2654 = vld [vmem:[#allocation3 + $0x48] sm:$0xff]
  %v2655 = vld [vmem:[#allocation3 + $0x50] sm:$0xff]
  %v2656 = vld [vmem:[#allocation3 + $0x58] sm:$0xff]
  %v2657 = vld [vmem:[#allocation3 + $0x60] sm:$0xff]
  %v2658 = vld [vmem:[#allocation3 + $0x68] sm:$0xff]
  %v2659 = vld [vmem:[#allocation3 + $0x70] sm:$0xff]
  %v2660 = vld [vmem:[#allocation3 + $0x78] sm:$0xff]
  %v2661 = vld [vmem:[#allocation3 + $0x80] sm:$0xff]
  %v2662 = vld [vmem:[#allocation3 + $0x88] sm:$0xff]
  %v2663 = vld [vmem:[#allocation3 + $0x90] sm:$0xff]
  %v2664 = vld [vmem:[#allocation3 + $0x98] sm:$0xff]
  %v2665 = vld [vmem:[#allocation3 + $0xa0] sm:$0xff]
  %v2666 = vld [vmem:[#allocation3 + $0xa8] sm:$0xff]
  %v2667 = vld [vmem:[#allocation3 + $0xb0] sm:$0xff]
  %v2668 = vld [vmem:[#allocation3 + $0xb8] sm:$0xff]
  %v2669 = vld [vmem:[#allocation3 + $0xc0] sm:$0xff]
  %v2670 = vld [vmem:[#allocation3 + $0xc8] sm:$0xff]
  %v2671 = vld [vmem:[#allocation3 + $0xd0] sm:$0xff]
  %v2672 = vld [vmem:[#allocation3 + $0xd8] sm:$0xff]
  %v2673 = vld [vmem:[#allocation3 + $0xe0] sm:$0xff]
  %v2674 = vld [vmem:[#allocation3 + $0xe8] sm:$0xff]
  %v2675 = vld [vmem:[#allocation3 + $0xf0] sm:$0xff]
  %v2676 = vld [vmem:[#allocation3 + $0xf8] sm:$0xff]
  %v2677 = vld [vmem:[%s12] sm:$0xff]
  %v2678 = vld [vmem:[%s12 + $0x8] sm:$0xff]
  %v2681 = vperm.slane %v2677, 0
  %v2682 = vperm.slane %v2677, 1
  %v2683 = vperm.slane %v2677, 2
  %v2684 = vperm.slane %v2677, 3
  %v2685 = vperm.slane %v2677, 4
  %v2686 = vperm.slane %v2677, 5
  %v2687 = vperm.slane %v2677, 6
  %v2688 = vperm.slane %v2677, 7
  %v2689 = vperm.slane %v2678, 0
  %v2690 = vperm.slane %v2678, 1
  %v2691 = vperm.slane %v2678, 2
  %v2692 = vperm.slane %v2678, 3
  %v2693 = vperm.slane %v2678, 4
  %v2694 = vperm.slane %v2678, 5
  %v2695 = vperm.slane %v2678, 6
  %v2696 = vperm.slane %v2678, 7
  %v2745 = vunpack.c.l.b16 %v2645
  %v2746 = vunpack.c.h.b16 %v2645
  %v2747 = vunpack.c.l.b16 %v2646
  %v2748 = vunpack.c.h.b16 %v2646
  %v2749 = vunpack.c.l.b16 %v2647
  %v2750 = vunpack.c.h.b16 %v2647
  %v2751 = vunpack.c.l.b16 %v2648
  %v2752 = vunpack.c.h.b16 %v2648
  %v2753 = vunpack.c.l.b16 %v2649
  %v2754 = vunpack.c.h.b16 %v2649
  %v2755 = vunpack.c.l.b16 %v2650
  %v2756 = vunpack.c.h.b16 %v2650
  %v2757 = vunpack.c.l.b16 %v2651
  %v2758 = vunpack.c.h.b16 %v2651
  %v2759 = vunpack.c.l.b16 %v2652
  %v2760 = vunpack.c.h.b16 %v2652
  %v2761 = vunpack.c.l.b16 %v2653
  %v2762 = vunpack.c.h.b16 %v2653
  %v2763 = vunpack.c.l.b16 %v2654
  %v2764 = vunpack.c.h.b16 %v2654
  %v2765 = vunpack.c.l.b16 %v2655
  %v2766 = vunpack.c.h.b16 %v2655
  %v2767 = vunpack.c.l.b16 %v2656
  %v2768 = vunpack.c.h.b16 %v2656
  %v2769 = vunpack.c.l.b16 %v2657
  %v2770 = vunpack.c.h.b16 %v2657
  %v2771 = vunpack.c.l.b16 %v2658
  %v2772 = vunpack.c.h.b16 %v2658
  %v2773 = vunpack.c.l.b16 %v2659
  %v2774 = vunpack.c.h.b16 %v2659
  %v2775 = vunpack.c.l.b16 %v2660
  %v2776 = vunpack.c.h.b16 %v2660
  %v2777 = vunpack.c.l.b16 %v2661
  %v2778 = vunpack.c.h.b16 %v2661
  %v2779 = vunpack.c.l.b16 %v2662
  %v2780 = vunpack.c.h.b16 %v2662
  %v2781 = vunpack.c.l.b16 %v2663
  %v2782 = vunpack.c.h.b16 %v2663
  %v2783 = vunpack.c.l.b16 %v2664
  %v2784 = vunpack.c.h.b16 %v2664
  %v2785 = vunpack.c.l.b16 %v2665
  %v2786 = vunpack.c.h.b16 %v2665
  %v2787 = vunpack.c.l.b16 %v2666
  %v2788 = vunpack.c.h.b16 %v2666
  %v2789 = vunpack.c.l.b16 %v2667
  %v2790 = vunpack.c.h.b16 %v2667
  %v2791 = vunpack.c.l.b16 %v2668
  %v2792 = vunpack.c.h.b16 %v2668
  %v2793 = vunpack.c.l.b16 %v2669
  %v2794 = vunpack.c.h.b16 %v2669
  %v2795 = vunpack.c.l.b16 %v2670
  %v2796 = vunpack.c.h.b16 %v2670
  %v2797 = vunpack.c.l.b16 %v2671
  %v2798 = vunpack.c.h.b16 %v2671
  %v2799 = vunpack.c.l.b16 %v2672
  %v2800 = vunpack.c.h.b16 %v2672
  %v2801 = vunpack.c.l.b16 %v2673
  %v2802 = vunpack.c.h.b16 %v2673
  %v2803 = vunpack.c.l.b16 %v2674
  %v2804 = vunpack.c.h.b16 %v2674
  %v2805 = vunpack.c.l.b16 %v2675
  %v2806 = vunpack.c.h.b16 %v2675
  %v2807 = vunpack.c.l.b16 %v2676
  %v2808 = vunpack.c.h.b16 %v2676
  %v2809 = vpack.c.b16 %v2761, %v2745
  %v2810 = vpack.c.b16 %v2762, %v2746
  %v2811 = vpack.c.b16 %v2763, %v2747
  %v2812 = vpack.c.b16 %v2764, %v2748
  %v2813 = vpack.c.b16 %v2765, %v2749
  %v2814 = vpack.c.b16 %v2766, %v2750
  %v2815 = vpack.c.b16 %v2767, %v2751
  %v2816 = vpack.c.b16 %v2768, %v2752
  %v2817 = vpack.c.b16 %v2769, %v2753
  %v2818 = vpack.c.b16 %v2770, %v2754
  %v2819 = vpack.c.b16 %v2771, %v2755
  %v2820 = vpack.c.b16 %v2772, %v2756
  %v2821 = vpack.c.b16 %v2773, %v2757
  %v2822 = vpack.c.b16 %v2774, %v2758
  %v2823 = vpack.c.b16 %v2775, %v2759
  %v2824 = vpack.c.b16 %v2776, %v2760
  %v2825 = vpack.c.b16 %v2793, %v2777
  %v2826 = vpack.c.b16 %v2794, %v2778
  %v2827 = vpack.c.b16 %v2795, %v2779
  %v2828 = vpack.c.b16 %v2796, %v2780
  %v2829 = vpack.c.b16 %v2797, %v2781
  %v2830 = vpack.c.b16 %v2798, %v2782
  %v2831 = vpack.c.b16 %v2799, %v2783
  %v2832 = vpack.c.b16 %v2800, %v2784
  %v2833 = vpack.c.b16 %v2801, %v2785
  %v2834 = vpack.c.b16 %v2802, %v2786
  %v2835 = vpack.c.b16 %v2803, %v2787
  %v2836 = vpack.c.b16 %v2804, %v2788
  %v2837 = vpack.c.b16 %v2805, %v2789
  %v2838 = vpack.c.b16 %v2806, %v2790
  %v2839 = vpack.c.b16 %v2807, %v2791
  %v2840 = vpack.c.b16 %v2808, %v2792
  %v2874 = vsel %vm479, %v2644, 0
  %2876 = vmatpush.bf16.msra.mxu0 0
  %2877 = vmatpush.bf16.msra.mxu0 0
  %2878 = vmatpush.bf16.msra.mxu0 0
  %2879 = vmatpush.bf16.msra.mxu0 0
  %2880 = vmatpush.bf16.msra.mxu0 0
  %2881 = vmatpush.bf16.msra.mxu0 0
  %2882 = vmatpush.bf16.msra.mxu0 %v2825
  %2883 = vmatpush.bf16.msra.mxu0 %v2809
  %2884 = vmatmul.bf16.gmra.mxu0 %v2874
  %v2885 = vpop.f32.mrf.mxu0
  %v2886 = vadd.f32 %v2681, %v2885
  %v2887 = vpop.f32.mrf.mxu0
  %v2888 = vadd.f32 %v2681, %v2887
  %2889 = vdwg.mxu0
  %2890 = vmatpush.bf16.msra.mxu0 0
  %2891 = vmatpush.bf16.msra.mxu0 0
  %2892 = vmatpush.bf16.msra.mxu0 0
  %2893 = vmatpush.bf16.msra.mxu0 0
  %2894 = vmatpush.bf16.msra.mxu0 0
  %2895 = vmatpush.bf16.msra.mxu0 0
  %2896 = vmatpush.bf16.msra.mxu0 %v2826
  %2897 = vmatpush.bf16.msra.mxu0 %v2810
  %2898 = vmatmul.bf16.gmra.mxu0 %v2874
  %v2899 = vpop.f32.mrf.mxu0
  %v2900 = vadd.f32 %v2682, %v2899
  %v2901 = vpop.f32.mrf.mxu0
  %v2902 = vadd.f32 %v2682, %v2901
  %2903 = vdwg.mxu0
  %2904 = vmatpush.bf16.msra.mxu0 0
  %2905 = vmatpush.bf16.msra.mxu0 0
  %2906 = vmatpush.bf16.msra.mxu0 0
  %2907 = vmatpush.bf16.msra.mxu0 0
  %2908 = vmatpush.bf16.msra.mxu0 0
  %2909 = vmatpush.bf16.msra.mxu0 0
  %2910 = vmatpush.bf16.msra.mxu0 %v2827
  %2911 = vmatpush.bf16.msra.mxu0 %v2811
  %2912 = vmatmul.bf16.gmra.mxu0 %v2874
  %v2913 = vpop.f32.mrf.mxu0
  %v2914 = vadd.f32 %v2683, %v2913
  %v2915 = vpop.f32.mrf.mxu0
  %v2916 = vadd.f32 %v2683, %v2915
  %2917 = vdwg.mxu0
  %2918 = vmatpush.bf16.msra.mxu0 0
  %2919 = vmatpush.bf16.msra.mxu0 0
  %2920 = vmatpush.bf16.msra.mxu0 0
  %2921 = vmatpush.bf16.msra.mxu0 0
  %2922 = vmatpush.bf16.msra.mxu0 0
  %2923 = vmatpush.bf16.msra.mxu0 0
  %2924 = vmatpush.bf16.msra.mxu0 %v2828
  %2925 = vmatpush.bf16.msra.mxu0 %v2812
  %2926 = vmatmul.bf16.gmra.mxu0 %v2874
  %v2927 = vpop.f32.mrf.mxu0
  %v2928 = vadd.f32 %v2684, %v2927
  %v2929 = vpop.f32.mrf.mxu0
  %v2930 = vadd.f32 %v2684, %v2929
  %2931 = vdwg.mxu0
  %2932 = vmatpush.bf16.msra.mxu0 0
  %2933 = vmatpush.bf16.msra.mxu0 0
  %2934 = vmatpush.bf16.msra.mxu0 0
  %2935 = vmatpush.bf16.msra.mxu0 0
  %2936 = vmatpush.bf16.msra.mxu0 0
  %2937 = vmatpush.bf16.msra.mxu0 0
  %2938 = vmatpush.bf16.msra.mxu0 %v2829
  %2939 = vmatpush.bf16.msra.mxu0 %v2813
  %2940 = vmatmul.bf16.gmra.mxu0 %v2874
  %v2941 = vpop.f32.mrf.mxu0
  %v2942 = vadd.f32 %v2685, %v2941
  %v2943 = vpop.f32.mrf.mxu0
  %v2944 = vadd.f32 %v2685, %v2943
  %2945 = vdwg.mxu0
  %2946 = vmatpush.bf16.msra.mxu0 0
  %2947 = vmatpush.bf16.msra.mxu0 0
  %2948 = vmatpush.bf16.msra.mxu0 0
  %2949 = vmatpush.bf16.msra.mxu0 0
  %2950 = vmatpush.bf16.msra.mxu0 0
  %2951 = vmatpush.bf16.msra.mxu0 0
  %2952 = vmatpush.bf16.msra.mxu0 %v2830
  %2953 = vmatpush.bf16.msra.mxu0 %v2814
  %2954 = vmatmul.bf16.gmra.mxu0 %v2874
  %v2955 = vpop.f32.mrf.mxu0
  %v2956 = vadd.f32 %v2686, %v2955
  %v2957 = vpop.f32.mrf.mxu0
  %v2958 = vadd.f32 %v2686, %v2957
  %2959 = vdwg.mxu0
  %2960 = vmatpush.bf16.msra.mxu0 0
  %2961 = vmatpush.bf16.msra.mxu0 0
  %2962 = vmatpush.bf16.msra.mxu0 0
  %2963 = vmatpush.bf16.msra.mxu0 0
  %2964 = vmatpush.bf16.msra.mxu0 0
  %2965 = vmatpush.bf16.msra.mxu0 0
  %2966 = vmatpush.bf16.msra.mxu0 %v2831
  %2967 = vmatpush.bf16.msra.mxu0 %v2815
  %2968 = vmatmul.bf16.gmra.mxu0 %v2874
  %v2969 = vpop.f32.mrf.mxu0
  %v2970 = vadd.f32 %v2687, %v2969
  %v2971 = vpop.f32.mrf.mxu0
  %v2972 = vadd.f32 %v2687, %v2971
  %2973 = vdwg.mxu0
  %2974 = vmatpush.bf16.msra.mxu0 0
  %2975 = vmatpush.bf16.msra.mxu0 0
  %2976 = vmatpush.bf16.msra.mxu0 0
  %2977 = vmatpush.bf16.msra.mxu0 0
  %2978 = vmatpush.bf16.msra.mxu0 0
  %2979 = vmatpush.bf16.msra.mxu0 0
  %2980 = vmatpush.bf16.msra.mxu0 %v2832
  %2981 = vmatpush.bf16.msra.mxu0 %v2816
  %2982 = vmatmul.bf16.gmra.mxu0 %v2874
  %v2983 = vpop.f32.mrf.mxu0
  %v2984 = vadd.f32 %v2688, %v2983
  %v2985 = vpop.f32.mrf.mxu0
  %v2986 = vadd.f32 %v2688, %v2985
  %2987 = vdwg.mxu0
  %2988 = vmatpush.bf16.msra.mxu0 0
  %2989 = vmatpush.bf16.msra.mxu0 0
  %2990 = vmatpush.bf16.msra.mxu0 0
  %2991 = vmatpush.bf16.msra.mxu0 0
  %2992 = vmatpush.bf16.msra.mxu0 0
  %2993 = vmatpush.bf16.msra.mxu0 0
  %2994 = vmatpush.bf16.msra.mxu0 %v2833
  %2995 = vmatpush.bf16.msra.mxu0 %v2817
  %2996 = vmatmul.bf16.gmra.mxu0 %v2874
  %v2997 = vpop.f32.mrf.mxu0
  %v2998 = vadd.f32 %v2689, %v2997
  %v2999 = vpop.f32.mrf.mxu0
  %v3000 = vadd.f32 %v2689, %v2999
  %3001 = vdwg.mxu0
  %3002 = vmatpush.bf16.msra.mxu0 0
  %3003 = vmatpush.bf16.msra.mxu0 0
  %3004 = vmatpush.bf16.msra.mxu0 0
  %3005 = vmatpush.bf16.msra.mxu0 0
  %3006 = vmatpush.bf16.msra.mxu0 0
  %3007 = vmatpush.bf16.msra.mxu0 0
  %3008 = vmatpush.bf16.msra.mxu0 %v2834
  %3009 = vmatpush.bf16.msra.mxu0 %v2818
  %3010 = vmatmul.bf16.gmra.mxu0 %v2874
  %v3011 = vpop.f32.mrf.mxu0
  %v3012 = vadd.f32 %v2690, %v3011
  %v3013 = vpop.f32.mrf.mxu0
  %v3014 = vadd.f32 %v2690, %v3013
  %3015 = vdwg.mxu0
  %3016 = vmatpush.bf16.msra.mxu0 0
  %3017 = vmatpush.bf16.msra.mxu0 0
  %3018 = vmatpush.bf16.msra.mxu0 0
  %3019 = vmatpush.bf16.msra.mxu0 0
  %3020 = vmatpush.bf16.msra.mxu0 0
  %3021 = vmatpush.bf16.msra.mxu0 0
  %3022 = vmatpush.bf16.msra.mxu0 %v2835
  %3023 = vmatpush.bf16.msra.mxu0 %v2819
  %3024 = vmatmul.bf16.gmra.mxu0 %v2874
  %v3025 = vpop.f32.mrf.mxu0
  %v3026 = vadd.f32 %v2691, %v3025
  %v3027 = vpop.f32.mrf.mxu0
  %v3028 = vadd.f32 %v2691, %v3027
  %3029 = vdwg.mxu0
  %3030 = vmatpush.bf16.msra.mxu0 0
  %3031 = vmatpush.bf16.msra.mxu0 0
  %3032 = vmatpush.bf16.msra.mxu0 0
  %3033 = vmatpush.bf16.msra.mxu0 0
  %3034 = vmatpush.bf16.msra.mxu0 0
  %3035 = vmatpush.bf16.msra.mxu0 0
  %3036 = vmatpush.bf16.msra.mxu0 %v2836
  %3037 = vmatpush.bf16.msra.mxu0 %v2820
  %3038 = vmatmul.bf16.gmra.mxu0 %v2874
  %v3039 = vpop.f32.mrf.mxu0
  %v3040 = vadd.f32 %v2692, %v3039
  %v3041 = vpop.f32.mrf.mxu0
  %v3042 = vadd.f32 %v2692, %v3041
  %3043 = vdwg.mxu0
  %3044 = vmatpush.bf16.msra.mxu0 0
  %3045 = vmatpush.bf16.msra.mxu0 0
  %3046 = vmatpush.bf16.msra.mxu0 0
  %3047 = vmatpush.bf16.msra.mxu0 0
  %3048 = vmatpush.bf16.msra.mxu0 0
  %3049 = vmatpush.bf16.msra.mxu0 0
  %3050 = vmatpush.bf16.msra.mxu0 %v2837
  %3051 = vmatpush.bf16.msra.mxu0 %v2821
  %3052 = vmatmul.bf16.gmra.mxu0 %v2874
  %v3053 = vpop.f32.mrf.mxu0
  %v3054 = vadd.f32 %v2693, %v3053
  %v3055 = vpop.f32.mrf.mxu0
  %v3056 = vadd.f32 %v2693, %v3055
  %3057 = vdwg.mxu0
  %3058 = vmatpush.bf16.msra.mxu0 0
  %3059 = vmatpush.bf16.msra.mxu0 0
  %3060 = vmatpush.bf16.msra.mxu0 0
  %3061 = vmatpush.bf16.msra.mxu0 0
  %3062 = vmatpush.bf16.msra.mxu0 0
  %3063 = vmatpush.bf16.msra.mxu0 0
  %3064 = vmatpush.bf16.msra.mxu0 %v2838
  %3065 = vmatpush.bf16.msra.mxu0 %v2822
  %3066 = vmatmul.bf16.gmra.mxu0 %v2874
  %v3067 = vpop.f32.mrf.mxu0
  %v3068 = vadd.f32 %v2694, %v3067
  %v3069 = vpop.f32.mrf.mxu0
  %v3070 = vadd.f32 %v2694, %v3069
  %3071 = vdwg.mxu0
  %3072 = vmatpush.bf16.msra.mxu0 0
  %3073 = vmatpush.bf16.msra.mxu0 0
  %3074 = vmatpush.bf16.msra.mxu0 0
  %3075 = vmatpush.bf16.msra.mxu0 0
  %3076 = vmatpush.bf16.msra.mxu0 0
  %3077 = vmatpush.bf16.msra.mxu0 0
  %3078 = vmatpush.bf16.msra.mxu0 %v2839
  %3079 = vmatpush.bf16.msra.mxu0 %v2823
  %3080 = vmatmul.bf16.gmra.mxu0 %v2874
  %v3081 = vpop.f32.mrf.mxu0
  %v3082 = vadd.f32 %v2695, %v3081
  %v3083 = vpop.f32.mrf.mxu0
  %v3084 = vadd.f32 %v2695, %v3083
  %3085 = vdwg.mxu0
  %3086 = vmatpush.bf16.msra.mxu0 0
  %3087 = vmatpush.bf16.msra.mxu0 0
  %3088 = vmatpush.bf16.msra.mxu0 0
  %3089 = vmatpush.bf16.msra.mxu0 0
  %3090 = vmatpush.bf16.msra.mxu0 0
  %3091 = vmatpush.bf16.msra.mxu0 0
  %3092 = vmatpush.bf16.msra.mxu0 %v2840
  %3093 = vmatpush.bf16.msra.mxu0 %v2824
  %3094 = vmatmul.bf16.gmra.mxu0 %v2874
  %v3095 = vpop.f32.mrf.mxu0
  %v3096 = vadd.f32 %v2696, %v3095
  %v3097 = vpop.f32.mrf.mxu0
  %v3098 = vadd.f32 %v2696, %v3097
  %3099 = vdwg.mxu0
  %v3100 = vmax.f32 %v2886, 0.0
  %v3101 = vmax.f32 %v2900, 0.0
  %v3102 = vmax.f32 %v2914, 0.0
  %v3103 = vmax.f32 %v2928, 0.0
  %v3104 = vmax.f32 %v2942, 0.0
  %v3105 = vmax.f32 %v2956, 0.0
  %v3106 = vmax.f32 %v2970, 0.0
  %v3107 = vmax.f32 %v2984, 0.0
  %v3108 = vmax.f32 %v2998, 0.0
  %v3109 = vmax.f32 %v3012, 0.0
  %v3110 = vmax.f32 %v3026, 0.0
  %v3111 = vmax.f32 %v3040, 0.0
  %v3112 = vmax.f32 %v3054, 0.0
  %v3113 = vmax.f32 %v3068, 0.0
  %v3114 = vmax.f32 %v3082, 0.0
  %v3115 = vmax.f32 %v3096, 0.0
  %v3116 = vmax.f32 %v2888, 0.0
  %v3117 = vmax.f32 %v2902, 0.0
  %v3118 = vmax.f32 %v2916, 0.0
  %v3119 = vmax.f32 %v2930, 0.0
  %v3120 = vmax.f32 %v2944, 0.0
  %v3121 = vmax.f32 %v2958, 0.0
  %v3122 = vmax.f32 %v2972, 0.0
  %v3123 = vmax.f32 %v2986, 0.0
  %v3124 = vmax.f32 %v3000, 0.0
  %v3125 = vmax.f32 %v3014, 0.0
  %v3126 = vmax.f32 %v3028, 0.0
  %v3127 = vmax.f32 %v3042, 0.0
  %v3128 = vmax.f32 %v3056, 0.0
  %v3129 = vmax.f32 %v3070, 0.0
  %v3130 = vmax.f32 %v3084, 0.0
  %v3131 = vmax.f32 %v3098, 0.0
  %s3132 = smul.u32 4, 256
  %s3133 = smul.u32 %s3132, 1
  %s3134 = sshll.u32 %s3133, 4
  %3135 = dma.done %s152, %s3134
  %v3136 = vpack.c.bf16 %v3116, %v3100
  %v3137 = vpack.c.bf16 %v3117, %v3101
  %v3138 = vpack.c.bf16 %v3118, %v3102
  %v3139 = vpack.c.bf16 %v3119, %v3103
  %v3140 = vpack.c.bf16 %v3120, %v3104
  %v3141 = vpack.c.bf16 %v3121, %v3105
  %v3142 = vpack.c.bf16 %v3122, %v3106
  %v3143 = vpack.c.bf16 %v3123, %v3107
  %v3144 = vpack.c.bf16 %v3124, %v3108
  %v3145 = vpack.c.bf16 %v3125, %v3109
  %v3146 = vpack.c.bf16 %v3126, %v3110
  %v3147 = vpack.c.bf16 %v3127, %v3111
  %v3148 = vpack.c.bf16 %v3128, %v3112
  %v3149 = vpack.c.bf16 %v3129, %v3113
  %v3150 = vpack.c.bf16 %v3130, %v3114
  %v3151 = vpack.c.bf16 %v3131, %v3115
  %v3152 = vld [vmem:[#allocation4] sm:$0xf]
  %v3153 = vld [vmem:[#allocation4 + $0x4] sm:$0xf]
  %v3154 = vld [vmem:[#allocation4 + $0x8] sm:$0xf]
  %v3155 = vld [vmem:[#allocation4 + $0xc] sm:$0xf]
  %v3156 = vld [vmem:[#allocation4 + $0x10] sm:$0xf]
  %v3157 = vld [vmem:[#allocation4 + $0x14] sm:$0xf]
  %v3158 = vld [vmem:[#allocation4 + $0x18] sm:$0xf]
  %v3159 = vld [vmem:[#allocation4 + $0x1c] sm:$0xf]
  %v3160 = vld [vmem:[#allocation4 + $0x20] sm:$0xf]
  %v3161 = vld [vmem:[#allocation4 + $0x24] sm:$0xf]
  %v3162 = vld [vmem:[#allocation4 + $0x28] sm:$0xf]
  %v3163 = vld [vmem:[#allocation4 + $0x2c] sm:$0xf]
  %v3164 = vld [vmem:[#allocation4 + $0x30] sm:$0xf]
  %v3165 = vld [vmem:[#allocation4 + $0x34] sm:$0xf]
  %v3166 = vld [vmem:[#allocation4 + $0x38] sm:$0xf]
  %v3167 = vld [vmem:[#allocation4 + $0x3c] sm:$0xf]
  %v3168 = vld [vmem:[#allocation4 + $0x40] sm:$0xf]
  %v3169 = vld [vmem:[#allocation4 + $0x44] sm:$0xf]
  %v3170 = vld [vmem:[#allocation4 + $0x48] sm:$0xf]
  %v3171 = vld [vmem:[#allocation4 + $0x4c] sm:$0xf]
  %v3172 = vld [vmem:[#allocation4 + $0x50] sm:$0xf]
  %v3173 = vld [vmem:[#allocation4 + $0x54] sm:$0xf]
  %v3174 = vld [vmem:[#allocation4 + $0x58] sm:$0xf]
  %v3175 = vld [vmem:[#allocation4 + $0x5c] sm:$0xf]
  %v3176 = vld [vmem:[#allocation4 + $0x60] sm:$0xf]
  %v3177 = vld [vmem:[#allocation4 + $0x64] sm:$0xf]
  %v3178 = vld [vmem:[#allocation4 + $0x68] sm:$0xf]
  %v3179 = vld [vmem:[#allocation4 + $0x6c] sm:$0xf]
  %v3180 = vld [vmem:[#allocation4 + $0x70] sm:$0xf]
  %v3181 = vld [vmem:[#allocation4 + $0x74] sm:$0xf]
  %v3182 = vld [vmem:[#allocation4 + $0x78] sm:$0xf]
  %v3183 = vld [vmem:[#allocation4 + $0x7c] sm:$0xf]
  %v3184 = vld [vmem:[#allocation4 + $0x80] sm:$0xf]
  %v3185 = vld [vmem:[#allocation4 + $0x84] sm:$0xf]
  %v3186 = vld [vmem:[#allocation4 + $0x88] sm:$0xf]
  %v3187 = vld [vmem:[#allocation4 + $0x8c] sm:$0xf]
  %v3188 = vld [vmem:[#allocation4 + $0x90] sm:$0xf]
  %v3189 = vld [vmem:[#allocation4 + $0x94] sm:$0xf]
  %v3190 = vld [vmem:[#allocation4 + $0x98] sm:$0xf]
  %v3191 = vld [vmem:[#allocation4 + $0x9c] sm:$0xf]
  %v3192 = vld [vmem:[#allocation4 + $0xa0] sm:$0xf]
  %v3193 = vld [vmem:[#allocation4 + $0xa4] sm:$0xf]
  %v3194 = vld [vmem:[#allocation4 + $0xa8] sm:$0xf]
  %v3195 = vld [vmem:[#allocation4 + $0xac] sm:$0xf]
  %v3196 = vld [vmem:[#allocation4 + $0xb0] sm:$0xf]
  %v3197 = vld [vmem:[#allocation4 + $0xb4] sm:$0xf]
  %v3198 = vld [vmem:[#allocation4 + $0xb8] sm:$0xf]
  %v3199 = vld [vmem:[#allocation4 + $0xbc] sm:$0xf]
  %v3200 = vld [vmem:[#allocation4 + $0xc0] sm:$0xf]
  %v3201 = vld [vmem:[#allocation4 + $0xc4] sm:$0xf]
  %v3202 = vld [vmem:[#allocation4 + $0xc8] sm:$0xf]
  %v3203 = vld [vmem:[#allocation4 + $0xcc] sm:$0xf]
  %v3204 = vld [vmem:[#allocation4 + $0xd0] sm:$0xf]
  %v3205 = vld [vmem:[#allocation4 + $0xd4] sm:$0xf]
  %v3206 = vld [vmem:[#allocation4 + $0xd8] sm:$0xf]
  %v3207 = vld [vmem:[#allocation4 + $0xdc] sm:$0xf]
  %v3208 = vld [vmem:[#allocation4 + $0xe0] sm:$0xf]
  %v3209 = vld [vmem:[#allocation4 + $0xe4] sm:$0xf]
  %v3210 = vld [vmem:[#allocation4 + $0xe8] sm:$0xf]
  %v3211 = vld [vmem:[#allocation4 + $0xec] sm:$0xf]
  %v3212 = vld [vmem:[#allocation4 + $0xf0] sm:$0xf]
  %v3213 = vld [vmem:[#allocation4 + $0xf4] sm:$0xf]
  %v3214 = vld [vmem:[#allocation4 + $0xf8] sm:$0xf]
  %v3215 = vld [vmem:[#allocation4 + $0xfc] sm:$0xf]
  %v3216 = vld [vmem:[#allocation4 + $0x100] sm:$0xf]
  %v3217 = vld [vmem:[#allocation4 + $0x104] sm:$0xf]
  %v3218 = vld [vmem:[#allocation4 + $0x108] sm:$0xf]
  %v3219 = vld [vmem:[#allocation4 + $0x10c] sm:$0xf]
  %v3220 = vld [vmem:[#allocation4 + $0x110] sm:$0xf]
  %v3221 = vld [vmem:[#allocation4 + $0x114] sm:$0xf]
  %v3222 = vld [vmem:[#allocation4 + $0x118] sm:$0xf]
  %v3223 = vld [vmem:[#allocation4 + $0x11c] sm:$0xf]
  %v3224 = vld [vmem:[#allocation4 + $0x120] sm:$0xf]
  %v3225 = vld [vmem:[#allocation4 + $0x124] sm:$0xf]
  %v3226 = vld [vmem:[#allocation4 + $0x128] sm:$0xf]
  %v3227 = vld [vmem:[#allocation4 + $0x12c] sm:$0xf]
  %v3228 = vld [vmem:[#allocation4 + $0x130] sm:$0xf]
  %v3229 = vld [vmem:[#allocation4 + $0x134] sm:$0xf]
  %v3230 = vld [vmem:[#allocation4 + $0x138] sm:$0xf]
  %v3231 = vld [vmem:[#allocation4 + $0x13c] sm:$0xf]
  %v3232 = vld [vmem:[#allocation4 + $0x140] sm:$0xf]
  %v3233 = vld [vmem:[#allocation4 + $0x144] sm:$0xf]
  %v3234 = vld [vmem:[#allocation4 + $0x148] sm:$0xf]
  %v3235 = vld [vmem:[#allocation4 + $0x14c] sm:$0xf]
  %v3236 = vld [vmem:[#allocation4 + $0x150] sm:$0xf]
  %v3237 = vld [vmem:[#allocation4 + $0x154] sm:$0xf]
  %v3238 = vld [vmem:[#allocation4 + $0x158] sm:$0xf]
  %v3239 = vld [vmem:[#allocation4 + $0x15c] sm:$0xf]
  %v3240 = vld [vmem:[#allocation4 + $0x160] sm:$0xf]
  %v3241 = vld [vmem:[#allocation4 + $0x164] sm:$0xf]
  %v3242 = vld [vmem:[#allocation4 + $0x168] sm:$0xf]
  %v3243 = vld [vmem:[#allocation4 + $0x16c] sm:$0xf]
  %v3244 = vld [vmem:[#allocation4 + $0x170] sm:$0xf]
  %v3245 = vld [vmem:[#allocation4 + $0x174] sm:$0xf]
  %v3246 = vld [vmem:[#allocation4 + $0x178] sm:$0xf]
  %v3247 = vld [vmem:[#allocation4 + $0x17c] sm:$0xf]
  %v3248 = vld [vmem:[#allocation4 + $0x180] sm:$0xf]
  %v3249 = vld [vmem:[#allocation4 + $0x184] sm:$0xf]
  %v3250 = vld [vmem:[#allocation4 + $0x188] sm:$0xf]
  %v3251 = vld [vmem:[#allocation4 + $0x18c] sm:$0xf]
  %v3252 = vld [vmem:[#allocation4 + $0x190] sm:$0xf]
  %v3253 = vld [vmem:[#allocation4 + $0x194] sm:$0xf]
  %v3254 = vld [vmem:[#allocation4 + $0x198] sm:$0xf]
  %v3255 = vld [vmem:[#allocation4 + $0x19c] sm:$0xf]
  %v3256 = vld [vmem:[#allocation4 + $0x1a0] sm:$0xf]
  %v3257 = vld [vmem:[#allocation4 + $0x1a4] sm:$0xf]
  %v3258 = vld [vmem:[#allocation4 + $0x1a8] sm:$0xf]
  %v3259 = vld [vmem:[#allocation4 + $0x1ac] sm:$0xf]
  %v3260 = vld [vmem:[#allocation4 + $0x1b0] sm:$0xf]
  %v3261 = vld [vmem:[#allocation4 + $0x1b4] sm:$0xf]
  %v3262 = vld [vmem:[#allocation4 + $0x1b8] sm:$0xf]
  %v3263 = vld [vmem:[#allocation4 + $0x1bc] sm:$0xf]
  %v3264 = vld [vmem:[#allocation4 + $0x1c0] sm:$0xf]
  %v3265 = vld [vmem:[#allocation4 + $0x1c4] sm:$0xf]
  %v3266 = vld [vmem:[#allocation4 + $0x1c8] sm:$0xf]
  %v3267 = vld [vmem:[#allocation4 + $0x1cc] sm:$0xf]
  %v3268 = vld [vmem:[#allocation4 + $0x1d0] sm:$0xf]
  %v3269 = vld [vmem:[#allocation4 + $0x1d4] sm:$0xf]
  %v3270 = vld [vmem:[#allocation4 + $0x1d8] sm:$0xf]
  %v3271 = vld [vmem:[#allocation4 + $0x1dc] sm:$0xf]
  %v3272 = vld [vmem:[#allocation4 + $0x1e0] sm:$0xf]
  %v3273 = vld [vmem:[#allocation4 + $0x1e4] sm:$0xf]
  %v3274 = vld [vmem:[#allocation4 + $0x1e8] sm:$0xf]
  %v3275 = vld [vmem:[#allocation4 + $0x1ec] sm:$0xf]
  %v3276 = vld [vmem:[#allocation4 + $0x1f0] sm:$0xf]
  %v3277 = vld [vmem:[#allocation4 + $0x1f4] sm:$0xf]
  %v3278 = vld [vmem:[#allocation4 + $0x1f8] sm:$0xf]
  %v3279 = vld [vmem:[#allocation4 + $0x1fc] sm:$0xf]
  %v3280 = vld [vmem:[#allocation4 + $0x200] sm:$0xf]
  %v3281 = vld [vmem:[#allocation4 + $0x204] sm:$0xf]
  %v3282 = vld [vmem:[#allocation4 + $0x208] sm:$0xf]
  %v3283 = vld [vmem:[#allocation4 + $0x20c] sm:$0xf]
  %v3284 = vld [vmem:[#allocation4 + $0x210] sm:$0xf]
  %v3285 = vld [vmem:[#allocation4 + $0x214] sm:$0xf]
  %v3286 = vld [vmem:[#allocation4 + $0x218] sm:$0xf]
  %v3287 = vld [vmem:[#allocation4 + $0x21c] sm:$0xf]
  %v3288 = vld [vmem:[#allocation4 + $0x220] sm:$0xf]
  %v3289 = vld [vmem:[#allocation4 + $0x224] sm:$0xf]
  %v3290 = vld [vmem:[#allocation4 + $0x228] sm:$0xf]
  %v3291 = vld [vmem:[#allocation4 + $0x22c] sm:$0xf]
  %v3292 = vld [vmem:[#allocation4 + $0x230] sm:$0xf]
  %v3293 = vld [vmem:[#allocation4 + $0x234] sm:$0xf]
  %v3294 = vld [vmem:[#allocation4 + $0x238] sm:$0xf]
  %v3295 = vld [vmem:[#allocation4 + $0x23c] sm:$0xf]
  %v3296 = vld [vmem:[#allocation4 + $0x240] sm:$0xf]
  %v3297 = vld [vmem:[#allocation4 + $0x244] sm:$0xf]
  %v3298 = vld [vmem:[#allocation4 + $0x248] sm:$0xf]
  %v3299 = vld [vmem:[#allocation4 + $0x24c] sm:$0xf]
  %v3300 = vld [vmem:[#allocation4 + $0x250] sm:$0xf]
  %v3301 = vld [vmem:[#allocation4 + $0x254] sm:$0xf]
  %v3302 = vld [vmem:[#allocation4 + $0x258] sm:$0xf]
  %v3303 = vld [vmem:[#allocation4 + $0x25c] sm:$0xf]
  %v3304 = vld [vmem:[#allocation4 + $0x260] sm:$0xf]
  %v3305 = vld [vmem:[#allocation4 + $0x264] sm:$0xf]
  %v3306 = vld [vmem:[#allocation4 + $0x268] sm:$0xf]
  %v3307 = vld [vmem:[#allocation4 + $0x26c] sm:$0xf]
  %v3308 = vld [vmem:[#allocation4 + $0x270] sm:$0xf]
  %v3309 = vld [vmem:[#allocation4 + $0x274] sm:$0xf]
  %v3310 = vld [vmem:[#allocation4 + $0x278] sm:$0xf]
  %v3311 = vld [vmem:[#allocation4 + $0x27c] sm:$0xf]
  %v3312 = vld [vmem:[#allocation4 + $0x280] sm:$0xf]
  %v3313 = vld [vmem:[#allocation4 + $0x284] sm:$0xf]
  %v3314 = vld [vmem:[#allocation4 + $0x288] sm:$0xf]
  %v3315 = vld [vmem:[#allocation4 + $0x28c] sm:$0xf]
  %v3316 = vld [vmem:[#allocation4 + $0x290] sm:$0xf]
  %v3317 = vld [vmem:[#allocation4 + $0x294] sm:$0xf]
  %v3318 = vld [vmem:[#allocation4 + $0x298] sm:$0xf]
  %v3319 = vld [vmem:[#allocation4 + $0x29c] sm:$0xf]
  %v3320 = vld [vmem:[#allocation4 + $0x2a0] sm:$0xf]
  %v3321 = vld [vmem:[#allocation4 + $0x2a4] sm:$0xf]
  %v3322 = vld [vmem:[#allocation4 + $0x2a8] sm:$0xf]
  %v3323 = vld [vmem:[#allocation4 + $0x2ac] sm:$0xf]
  %v3324 = vld [vmem:[#allocation4 + $0x2b0] sm:$0xf]
  %v3325 = vld [vmem:[#allocation4 + $0x2b4] sm:$0xf]
  %v3326 = vld [vmem:[#allocation4 + $0x2b8] sm:$0xf]
  %v3327 = vld [vmem:[#allocation4 + $0x2bc] sm:$0xf]
  %v3328 = vld [vmem:[#allocation4 + $0x2c0] sm:$0xf]
  %v3329 = vld [vmem:[#allocation4 + $0x2c4] sm:$0xf]
  %v3330 = vld [vmem:[#allocation4 + $0x2c8] sm:$0xf]
  %v3331 = vld [vmem:[#allocation4 + $0x2cc] sm:$0xf]
  %v3332 = vld [vmem:[#allocation4 + $0x2d0] sm:$0xf]
  %v3333 = vld [vmem:[#allocation4 + $0x2d4] sm:$0xf]
  %v3334 = vld [vmem:[#allocation4 + $0x2d8] sm:$0xf]
  %v3335 = vld [vmem:[#allocation4 + $0x2dc] sm:$0xf]
  %v3336 = vld [vmem:[#allocation4 + $0x2e0] sm:$0xf]
  %v3337 = vld [vmem:[#allocation4 + $0x2e4] sm:$0xf]
  %v3338 = vld [vmem:[#allocation4 + $0x2e8] sm:$0xf]
  %v3339 = vld [vmem:[#allocation4 + $0x2ec] sm:$0xf]
  %v3340 = vld [vmem:[#allocation4 + $0x2f0] sm:$0xf]
  %v3341 = vld [vmem:[#allocation4 + $0x2f4] sm:$0xf]
  %v3342 = vld [vmem:[#allocation4 + $0x2f8] sm:$0xf]
  %v3343 = vld [vmem:[#allocation4 + $0x2fc] sm:$0xf]
  %v3344 = vld [vmem:[#allocation4 + $0x300] sm:$0xf]
  %v3345 = vld [vmem:[#allocation4 + $0x304] sm:$0xf]
  %v3346 = vld [vmem:[#allocation4 + $0x308] sm:$0xf]
  %v3347 = vld [vmem:[#allocation4 + $0x30c] sm:$0xf]
  %v3348 = vld [vmem:[#allocation4 + $0x310] sm:$0xf]
  %v3349 = vld [vmem:[#allocation4 + $0x314] sm:$0xf]
  %v3350 = vld [vmem:[#allocation4 + $0x318] sm:$0xf]
  %v3351 = vld [vmem:[#allocation4 + $0x31c] sm:$0xf]
  %v3352 = vld [vmem:[#allocation4 + $0x320] sm:$0xf]
  %v3353 = vld [vmem:[#allocation4 + $0x324] sm:$0xf]
  %v3354 = vld [vmem:[#allocation4 + $0x328] sm:$0xf]
  %v3355 = vld [vmem:[#allocation4 + $0x32c] sm:$0xf]
  %v3356 = vld [vmem:[#allocation4 + $0x330] sm:$0xf]
  %v3357 = vld [vmem:[#allocation4 + $0x334] sm:$0xf]
  %v3358 = vld [vmem:[#allocation4 + $0x338] sm:$0xf]
  %v3359 = vld [vmem:[#allocation4 + $0x33c] sm:$0xf]
  %v3360 = vld [vmem:[#allocation4 + $0x340] sm:$0xf]
  %v3361 = vld [vmem:[#allocation4 + $0x344] sm:$0xf]
  %v3362 = vld [vmem:[#allocation4 + $0x348] sm:$0xf]
  %v3363 = vld [vmem:[#allocation4 + $0x34c] sm:$0xf]
  %v3364 = vld [vmem:[#allocation4 + $0x350] sm:$0xf]
  %v3365 = vld [vmem:[#allocation4 + $0x354] sm:$0xf]
  %v3366 = vld [vmem:[#allocation4 + $0x358] sm:$0xf]
  %v3367 = vld [vmem:[#allocation4 + $0x35c] sm:$0xf]
  %v3368 = vld [vmem:[#allocation4 + $0x360] sm:$0xf]
  %v3369 = vld [vmem:[#allocation4 + $0x364] sm:$0xf]
  %v3370 = vld [vmem:[#allocation4 + $0x368] sm:$0xf]
  %v3371 = vld [vmem:[#allocation4 + $0x36c] sm:$0xf]
  %v3372 = vld [vmem:[#allocation4 + $0x370] sm:$0xf]
  %v3373 = vld [vmem:[#allocation4 + $0x374] sm:$0xf]
  %v3374 = vld [vmem:[#allocation4 + $0x378] sm:$0xf]
  %v3375 = vld [vmem:[#allocation4 + $0x37c] sm:$0xf]
  %v3376 = vld [vmem:[#allocation4 + $0x380] sm:$0xf]
  %v3377 = vld [vmem:[#allocation4 + $0x384] sm:$0xf]
  %v3378 = vld [vmem:[#allocation4 + $0x388] sm:$0xf]
  %v3379 = vld [vmem:[#allocation4 + $0x38c] sm:$0xf]
  %v3380 = vld [vmem:[#allocation4 + $0x390] sm:$0xf]
  %v3381 = vld [vmem:[#allocation4 + $0x394] sm:$0xf]
  %v3382 = vld [vmem:[#allocation4 + $0x398] sm:$0xf]
  %v3383 = vld [vmem:[#allocation4 + $0x39c] sm:$0xf]
  %v3384 = vld [vmem:[#allocation4 + $0x3a0] sm:$0xf]
  %v3385 = vld [vmem:[#allocation4 + $0x3a4] sm:$0xf]
  %v3386 = vld [vmem:[#allocation4 + $0x3a8] sm:$0xf]
  %v3387 = vld [vmem:[#allocation4 + $0x3ac] sm:$0xf]
  %v3388 = vld [vmem:[#allocation4 + $0x3b0] sm:$0xf]
  %v3389 = vld [vmem:[#allocation4 + $0x3b4] sm:$0xf]
  %v3390 = vld [vmem:[#allocation4 + $0x3b8] sm:$0xf]
  %v3391 = vld [vmem:[#allocation4 + $0x3bc] sm:$0xf]
  %v3392 = vld [vmem:[#allocation4 + $0x3c0] sm:$0xf]
  %v3393 = vld [vmem:[#allocation4 + $0x3c4] sm:$0xf]
  %v3394 = vld [vmem:[#allocation4 + $0x3c8] sm:$0xf]
  %v3395 = vld [vmem:[#allocation4 + $0x3cc] sm:$0xf]
  %v3396 = vld [vmem:[#allocation4 + $0x3d0] sm:$0xf]
  %v3397 = vld [vmem:[#allocation4 + $0x3d4] sm:$0xf]
  %v3398 = vld [vmem:[#allocation4 + $0x3d8] sm:$0xf]
  %v3399 = vld [vmem:[#allocation4 + $0x3dc] sm:$0xf]
  %v3400 = vld [vmem:[#allocation4 + $0x3e0] sm:$0xf]
  %v3401 = vld [vmem:[#allocation4 + $0x3e4] sm:$0xf]
  %v3402 = vld [vmem:[#allocation4 + $0x3e8] sm:$0xf]
  %v3403 = vld [vmem:[#allocation4 + $0x3ec] sm:$0xf]
  %v3404 = vld [vmem:[#allocation4 + $0x3f0] sm:$0xf]
  %v3405 = vld [vmem:[#allocation4 + $0x3f4] sm:$0xf]
  %v3406 = vld [vmem:[#allocation4 + $0x3f8] sm:$0xf]
  %v3407 = vld [vmem:[#allocation4 + $0x3fc] sm:$0xf]
  %v3408 = vperm.slane %v2078, 5
  %v3665 = vunpack.c.l.b16 %v3152
  %v3666 = vunpack.c.l.b16 %v3153
  %v3667 = vunpack.c.l.b16 %v3154
  %v3668 = vunpack.c.l.b16 %v3155
  %v3669 = vunpack.c.l.b16 %v3156
  %v3670 = vunpack.c.l.b16 %v3157
  %v3671 = vunpack.c.l.b16 %v3158
  %v3672 = vunpack.c.l.b16 %v3159
  %v3673 = vunpack.c.l.b16 %v3160
  %v3674 = vunpack.c.l.b16 %v3161
  %v3675 = vunpack.c.l.b16 %v3162
  %v3676 = vunpack.c.l.b16 %v3163
  %v3677 = vunpack.c.l.b16 %v3164
  %v3678 = vunpack.c.l.b16 %v3165
  %v3679 = vunpack.c.l.b16 %v3166
  %v3680 = vunpack.c.l.b16 %v3167
  %v3681 = vunpack.c.l.b16 %v3168
  %v3682 = vunpack.c.l.b16 %v3169
  %v3683 = vunpack.c.l.b16 %v3170
  %v3684 = vunpack.c.l.b16 %v3171
  %v3685 = vunpack.c.l.b16 %v3172
  %v3686 = vunpack.c.l.b16 %v3173
  %v3687 = vunpack.c.l.b16 %v3174
  %v3688 = vunpack.c.l.b16 %v3175
  %v3689 = vunpack.c.l.b16 %v3176
  %v3690 = vunpack.c.l.b16 %v3177
  %v3691 = vunpack.c.l.b16 %v3178
  %v3692 = vunpack.c.l.b16 %v3179
  %v3693 = vunpack.c.l.b16 %v3180
  %v3694 = vunpack.c.l.b16 %v3181
  %v3695 = vunpack.c.l.b16 %v3182
  %v3696 = vunpack.c.l.b16 %v3183
  %v3697 = vunpack.c.l.b16 %v3184
  %v3698 = vunpack.c.l.b16 %v3185
  %v3699 = vunpack.c.l.b16 %v3186
  %v3700 = vunpack.c.l.b16 %v3187
  %v3701 = vunpack.c.l.b16 %v3188
  %v3702 = vunpack.c.l.b16 %v3189
  %v3703 = vunpack.c.l.b16 %v3190
  %v3704 = vunpack.c.l.b16 %v3191
  %v3705 = vunpack.c.l.b16 %v3192
  %v3706 = vunpack.c.l.b16 %v3193
  %v3707 = vunpack.c.l.b16 %v3194
  %v3708 = vunpack.c.l.b16 %v3195
  %v3709 = vunpack.c.l.b16 %v3196
  %v3710 = vunpack.c.l.b16 %v3197
  %v3711 = vunpack.c.l.b16 %v3198
  %v3712 = vunpack.c.l.b16 %v3199
  %v3713 = vunpack.c.l.b16 %v3200
  %v3714 = vunpack.c.l.b16 %v3201
  %v3715 = vunpack.c.l.b16 %v3202
  %v3716 = vunpack.c.l.b16 %v3203
  %v3717 = vunpack.c.l.b16 %v3204
  %v3718 = vunpack.c.l.b16 %v3205
  %v3719 = vunpack.c.l.b16 %v3206
  %v3720 = vunpack.c.l.b16 %v3207
  %v3721 = vunpack.c.l.b16 %v3208
  %v3722 = vunpack.c.l.b16 %v3209
  %v3723 = vunpack.c.l.b16 %v3210
  %v3724 = vunpack.c.l.b16 %v3211
  %v3725 = vunpack.c.l.b16 %v3212
  %v3726 = vunpack.c.l.b16 %v3213
  %v3727 = vunpack.c.l.b16 %v3214
  %v3728 = vunpack.c.l.b16 %v3215
  %v3729 = vunpack.c.l.b16 %v3216
  %v3730 = vunpack.c.l.b16 %v3217
  %v3731 = vunpack.c.l.b16 %v3218
  %v3732 = vunpack.c.l.b16 %v3219
  %v3733 = vunpack.c.l.b16 %v3220
  %v3734 = vunpack.c.l.b16 %v3221
  %v3735 = vunpack.c.l.b16 %v3222
  %v3736 = vunpack.c.l.b16 %v3223
  %v3737 = vunpack.c.l.b16 %v3224
  %v3738 = vunpack.c.l.b16 %v3225
  %v3739 = vunpack.c.l.b16 %v3226
  %v3740 = vunpack.c.l.b16 %v3227
  %v3741 = vunpack.c.l.b16 %v3228
  %v3742 = vunpack.c.l.b16 %v3229
  %v3743 = vunpack.c.l.b16 %v3230
  %v3744 = vunpack.c.l.b16 %v3231
  %v3745 = vunpack.c.l.b16 %v3232
  %v3746 = vunpack.c.l.b16 %v3233
  %v3747 = vunpack.c.l.b16 %v3234
  %v3748 = vunpack.c.l.b16 %v3235
  %v3749 = vunpack.c.l.b16 %v3236
  %v3750 = vunpack.c.l.b16 %v3237
  %v3751 = vunpack.c.l.b16 %v3238
  %v3752 = vunpack.c.l.b16 %v3239
  %v3753 = vunpack.c.l.b16 %v3240
  %v3754 = vunpack.c.l.b16 %v3241
  %v3755 = vunpack.c.l.b16 %v3242
  %v3756 = vunpack.c.l.b16 %v3243
  %v3757 = vunpack.c.l.b16 %v3244
  %v3758 = vunpack.c.l.b16 %v3245
  %v3759 = vunpack.c.l.b16 %v3246
  %v3760 = vunpack.c.l.b16 %v3247
  %v3761 = vunpack.c.l.b16 %v3248
  %v3762 = vunpack.c.l.b16 %v3249
  %v3763 = vunpack.c.l.b16 %v3250
  %v3764 = vunpack.c.l.b16 %v3251
  %v3765 = vunpack.c.l.b16 %v3252
  %v3766 = vunpack.c.l.b16 %v3253
  %v3767 = vunpack.c.l.b16 %v3254
  %v3768 = vunpack.c.l.b16 %v3255
  %v3769 = vunpack.c.l.b16 %v3256
  %v3770 = vunpack.c.l.b16 %v3257
  %v3771 = vunpack.c.l.b16 %v3258
  %v3772 = vunpack.c.l.b16 %v3259
  %v3773 = vunpack.c.l.b16 %v3260
  %v3774 = vunpack.c.l.b16 %v3261
  %v3775 = vunpack.c.l.b16 %v3262
  %v3776 = vunpack.c.l.b16 %v3263
  %v3777 = vunpack.c.l.b16 %v3264
  %v3778 = vunpack.c.l.b16 %v3265
  %v3779 = vunpack.c.l.b16 %v3266
  %v3780 = vunpack.c.l.b16 %v3267
  %v3781 = vunpack.c.l.b16 %v3268
  %v3782 = vunpack.c.l.b16 %v3269
  %v3783 = vunpack.c.l.b16 %v3270
  %v3784 = vunpack.c.l.b16 %v3271
  %v3785 = vunpack.c.l.b16 %v3272
  %v3786 = vunpack.c.l.b16 %v3273
  %v3787 = vunpack.c.l.b16 %v3274
  %v3788 = vunpack.c.l.b16 %v3275
  %v3789 = vunpack.c.l.b16 %v3276
  %v3790 = vunpack.c.l.b16 %v3277
  %v3791 = vunpack.c.l.b16 %v3278
  %v3792 = vunpack.c.l.b16 %v3279
  %v3793 = vunpack.c.l.b16 %v3280
  %v3794 = vunpack.c.l.b16 %v3281
  %v3795 = vunpack.c.l.b16 %v3282
  %v3796 = vunpack.c.l.b16 %v3283
  %v3797 = vunpack.c.l.b16 %v3284
  %v3798 = vunpack.c.l.b16 %v3285
  %v3799 = vunpack.c.l.b16 %v3286
  %v3800 = vunpack.c.l.b16 %v3287
  %v3801 = vunpack.c.l.b16 %v3288
  %v3802 = vunpack.c.l.b16 %v3289
  %v3803 = vunpack.c.l.b16 %v3290
  %v3804 = vunpack.c.l.b16 %v3291
  %v3805 = vunpack.c.l.b16 %v3292
  %v3806 = vunpack.c.l.b16 %v3293
  %v3807 = vunpack.c.l.b16 %v3294
  %v3808 = vunpack.c.l.b16 %v3295
  %v3809 = vunpack.c.l.b16 %v3296
  %v3810 = vunpack.c.l.b16 %v3297
  %v3811 = vunpack.c.l.b16 %v3298
  %v3812 = vunpack.c.l.b16 %v3299
  %v3813 = vunpack.c.l.b16 %v3300
  %v3814 = vunpack.c.l.b16 %v3301
  %v3815 = vunpack.c.l.b16 %v3302
  %v3816 = vunpack.c.l.b16 %v3303
  %v3817 = vunpack.c.l.b16 %v3304
  %v3818 = vunpack.c.l.b16 %v3305
  %v3819 = vunpack.c.l.b16 %v3306
  %v3820 = vunpack.c.l.b16 %v3307
  %v3821 = vunpack.c.l.b16 %v3308
  %v3822 = vunpack.c.l.b16 %v3309
  %v3823 = vunpack.c.l.b16 %v3310
  %v3824 = vunpack.c.l.b16 %v3311
  %v3825 = vunpack.c.l.b16 %v3312
  %v3826 = vunpack.c.l.b16 %v3313
  %v3827 = vunpack.c.l.b16 %v3314
  %v3828 = vunpack.c.l.b16 %v3315
  %v3829 = vunpack.c.l.b16 %v3316
  %v3830 = vunpack.c.l.b16 %v3317
  %v3831 = vunpack.c.l.b16 %v3318
  %v3832 = vunpack.c.l.b16 %v3319
  %v3833 = vunpack.c.l.b16 %v3320
  %v3834 = vunpack.c.l.b16 %v3321
  %v3835 = vunpack.c.l.b16 %v3322
  %v3836 = vunpack.c.l.b16 %v3323
  %v3837 = vunpack.c.l.b16 %v3324
  %v3838 = vunpack.c.l.b16 %v3325
  %v3839 = vunpack.c.l.b16 %v3326
  %v3840 = vunpack.c.l.b16 %v3327
  %v3841 = vunpack.c.l.b16 %v3328
  %v3842 = vunpack.c.l.b16 %v3329
  %v3843 = vunpack.c.l.b16 %v3330
  %v3844 = vunpack.c.l.b16 %v3331
  %v3845 = vunpack.c.l.b16 %v3332
  %v3846 = vunpack.c.l.b16 %v3333
  %v3847 = vunpack.c.l.b16 %v3334
  %v3848 = vunpack.c.l.b16 %v3335
  %v3849 = vunpack.c.l.b16 %v3336
  %v3850 = vunpack.c.l.b16 %v3337
  %v3851 = vunpack.c.l.b16 %v3338
  %v3852 = vunpack.c.l.b16 %v3339
  %v3853 = vunpack.c.l.b16 %v3340
  %v3854 = vunpack.c.l.b16 %v3341
  %v3855 = vunpack.c.l.b16 %v3342
  %v3856 = vunpack.c.l.b16 %v3343
  %v3857 = vunpack.c.l.b16 %v3344
  %v3858 = vunpack.c.l.b16 %v3345
  %v3859 = vunpack.c.l.b16 %v3346
  %v3860 = vunpack.c.l.b16 %v3347
  %v3861 = vunpack.c.l.b16 %v3348
  %v3862 = vunpack.c.l.b16 %v3349
  %v3863 = vunpack.c.l.b16 %v3350
  %v3864 = vunpack.c.l.b16 %v3351
  %v3865 = vunpack.c.l.b16 %v3352
  %v3866 = vunpack.c.l.b16 %v3353
  %v3867 = vunpack.c.l.b16 %v3354
  %v3868 = vunpack.c.l.b16 %v3355
  %v3869 = vunpack.c.l.b16 %v3356
  %v3870 = vunpack.c.l.b16 %v3357
  %v3871 = vunpack.c.l.b16 %v3358
  %v3872 = vunpack.c.l.b16 %v3359
  %v3873 = vunpack.c.l.b16 %v3360
  %v3874 = vunpack.c.l.b16 %v3361
  %v3875 = vunpack.c.l.b16 %v3362
  %v3876 = vunpack.c.l.b16 %v3363
  %v3877 = vunpack.c.l.b16 %v3364
  %v3878 = vunpack.c.l.b16 %v3365
  %v3879 = vunpack.c.l.b16 %v3366
  %v3880 = vunpack.c.l.b16 %v3367
  %v3881 = vunpack.c.l.b16 %v3368
  %v3882 = vunpack.c.l.b16 %v3369
  %v3883 = vunpack.c.l.b16 %v3370
  %v3884 = vunpack.c.l.b16 %v3371
  %v3885 = vunpack.c.l.b16 %v3372
  %v3886 = vunpack.c.l.b16 %v3373
  %v3887 = vunpack.c.l.b16 %v3374
  %v3888 = vunpack.c.l.b16 %v3375
  %v3889 = vunpack.c.l.b16 %v3376
  %v3890 = vunpack.c.l.b16 %v3377
  %v3891 = vunpack.c.l.b16 %v3378
  %v3892 = vunpack.c.l.b16 %v3379
  %v3893 = vunpack.c.l.b16 %v3380
  %v3894 = vunpack.c.l.b16 %v3381
  %v3895 = vunpack.c.l.b16 %v3382
  %v3896 = vunpack.c.l.b16 %v3383
  %v3897 = vunpack.c.l.b16 %v3384
  %v3898 = vunpack.c.l.b16 %v3385
  %v3899 = vunpack.c.l.b16 %v3386
  %v3900 = vunpack.c.l.b16 %v3387
  %v3901 = vunpack.c.l.b16 %v3388
  %v3902 = vunpack.c.l.b16 %v3389
  %v3903 = vunpack.c.l.b16 %v3390
  %v3904 = vunpack.c.l.b16 %v3391
  %v3905 = vunpack.c.l.b16 %v3392
  %v3906 = vunpack.c.l.b16 %v3393
  %v3907 = vunpack.c.l.b16 %v3394
  %v3908 = vunpack.c.l.b16 %v3395
  %v3909 = vunpack.c.l.b16 %v3396
  %v3910 = vunpack.c.l.b16 %v3397
  %v3911 = vunpack.c.l.b16 %v3398
  %v3912 = vunpack.c.l.b16 %v3399
  %v3913 = vunpack.c.l.b16 %v3400
  %v3914 = vunpack.c.l.b16 %v3401
  %v3915 = vunpack.c.l.b16 %v3402
  %v3916 = vunpack.c.l.b16 %v3403
  %v3917 = vunpack.c.l.b16 %v3404
  %v3918 = vunpack.c.l.b16 %v3405
  %v3919 = vunpack.c.l.b16 %v3406
  %v3920 = vunpack.c.l.b16 %v3407
  %v3921 = vpack.c.b16 %v3666, %v3665
  %v3922 = vpack.c.b16 %v3668, %v3667
  %v3923 = vpack.c.b16 %v3670, %v3669
  %v3924 = vpack.c.b16 %v3672, %v3671
  %v3925 = vpack.c.b16 %v3674, %v3673
  %v3926 = vpack.c.b16 %v3676, %v3675
  %v3927 = vpack.c.b16 %v3678, %v3677
  %v3928 = vpack.c.b16 %v3680, %v3679
  %v3929 = vpack.c.b16 %v3682, %v3681
  %v3930 = vpack.c.b16 %v3684, %v3683
  %v3931 = vpack.c.b16 %v3686, %v3685
  %v3932 = vpack.c.b16 %v3688, %v3687
  %v3933 = vpack.c.b16 %v3690, %v3689
  %v3934 = vpack.c.b16 %v3692, %v3691
  %v3935 = vpack.c.b16 %v3694, %v3693
  %v3936 = vpack.c.b16 %v3696, %v3695
  %v3937 = vpack.c.b16 %v3698, %v3697
  %v3938 = vpack.c.b16 %v3700, %v3699
  %v3939 = vpack.c.b16 %v3702, %v3701
  %v3940 = vpack.c.b16 %v3704, %v3703
  %v3941 = vpack.c.b16 %v3706, %v3705
  %v3942 = vpack.c.b16 %v3708, %v3707
  %v3943 = vpack.c.b16 %v3710, %v3709
  %v3944 = vpack.c.b16 %v3712, %v3711
  %v3945 = vpack.c.b16 %v3714, %v3713
  %v3946 = vpack.c.b16 %v3716, %v3715
  %v3947 = vpack.c.b16 %v3718, %v3717
  %v3948 = vpack.c.b16 %v3720, %v3719
  %v3949 = vpack.c.b16 %v3722, %v3721
  %v3950 = vpack.c.b16 %v3724, %v3723
  %v3951 = vpack.c.b16 %v3726, %v3725
  %v3952 = vpack.c.b16 %v3728, %v3727
  %v3953 = vpack.c.b16 %v3730, %v3729
  %v3954 = vpack.c.b16 %v3732, %v3731
  %v3955 = vpack.c.b16 %v3734, %v3733
  %v3956 = vpack.c.b16 %v3736, %v3735
  %v3957 = vpack.c.b16 %v3738, %v3737
  %v3958 = vpack.c.b16 %v3740, %v3739
  %v3959 = vpack.c.b16 %v3742, %v3741
  %v3960 = vpack.c.b16 %v3744, %v3743
  %v3961 = vpack.c.b16 %v3746, %v3745
  %v3962 = vpack.c.b16 %v3748, %v3747
  %v3963 = vpack.c.b16 %v3750, %v3749
  %v3964 = vpack.c.b16 %v3752, %v3751
  %v3965 = vpack.c.b16 %v3754, %v3753
  %v3966 = vpack.c.b16 %v3756, %v3755
  %v3967 = vpack.c.b16 %v3758, %v3757
  %v3968 = vpack.c.b16 %v3760, %v3759
  %v3969 = vpack.c.b16 %v3762, %v3761
  %v3970 = vpack.c.b16 %v3764, %v3763
  %v3971 = vpack.c.b16 %v3766, %v3765
  %v3972 = vpack.c.b16 %v3768, %v3767
  %v3973 = vpack.c.b16 %v3770, %v3769
  %v3974 = vpack.c.b16 %v3772, %v3771
  %v3975 = vpack.c.b16 %v3774, %v3773
  %v3976 = vpack.c.b16 %v3776, %v3775
  %v3977 = vpack.c.b16 %v3778, %v3777
  %v3978 = vpack.c.b16 %v3780, %v3779
  %v3979 = vpack.c.b16 %v3782, %v3781
  %v3980 = vpack.c.b16 %v3784, %v3783
  %v3981 = vpack.c.b16 %v3786, %v3785
  %v3982 = vpack.c.b16 %v3788, %v3787
  %v3983 = vpack.c.b16 %v3790, %v3789
  %v3984 = vpack.c.b16 %v3792, %v3791
  %v3985 = vpack.c.b16 %v3794, %v3793
  %v3986 = vpack.c.b16 %v3796, %v3795
  %v3987 = vpack.c.b16 %v3798, %v3797
  %v3988 = vpack.c.b16 %v3800, %v3799
  %v3989 = vpack.c.b16 %v3802, %v3801
  %v3990 = vpack.c.b16 %v3804, %v3803
  %v3991 = vpack.c.b16 %v3806, %v3805
  %v3992 = vpack.c.b16 %v3808, %v3807
  %v3993 = vpack.c.b16 %v3810, %v3809
  %v3994 = vpack.c.b16 %v3812, %v3811
  %v3995 = vpack.c.b16 %v3814, %v3813
  %v3996 = vpack.c.b16 %v3816, %v3815
  %v3997 = vpack.c.b16 %v3818, %v3817
  %v3998 = vpack.c.b16 %v3820, %v3819
  %v3999 = vpack.c.b16 %v3822, %v3821
  %v4000 = vpack.c.b16 %v3824, %v3823
  %v4001 = vpack.c.b16 %v3826, %v3825
  %v4002 = vpack.c.b16 %v3828, %v3827
  %v4003 = vpack.c.b16 %v3830, %v3829
  %v4004 = vpack.c.b16 %v3832, %v3831
  %v4005 = vpack.c.b16 %v3834, %v3833
  %v4006 = vpack.c.b16 %v3836, %v3835
  %v4007 = vpack.c.b16 %v3838, %v3837
  %v4008 = vpack.c.b16 %v3840, %v3839
  %v4009 = vpack.c.b16 %v3842, %v3841
  %v4010 = vpack.c.b16 %v3844, %v3843
  %v4011 = vpack.c.b16 %v3846, %v3845
  %v4012 = vpack.c.b16 %v3848, %v3847
  %v4013 = vpack.c.b16 %v3850, %v3849
  %v4014 = vpack.c.b16 %v3852, %v3851
  %v4015 = vpack.c.b16 %v3854, %v3853
  %v4016 = vpack.c.b16 %v3856, %v3855
  %v4017 = vpack.c.b16 %v3858, %v3857
  %v4018 = vpack.c.b16 %v3860, %v3859
  %v4019 = vpack.c.b16 %v3862, %v3861
  %v4020 = vpack.c.b16 %v3864, %v3863
  %v4021 = vpack.c.b16 %v3866, %v3865
  %v4022 = vpack.c.b16 %v3868, %v3867
  %v4023 = vpack.c.b16 %v3870, %v3869
  %v4024 = vpack.c.b16 %v3872, %v3871
  %v4025 = vpack.c.b16 %v3874, %v3873
  %v4026 = vpack.c.b16 %v3876, %v3875
  %v4027 = vpack.c.b16 %v3878, %v3877
  %v4028 = vpack.c.b16 %v3880, %v3879
  %v4029 = vpack.c.b16 %v3882, %v3881
  %v4030 = vpack.c.b16 %v3884, %v3883
  %v4031 = vpack.c.b16 %v3886, %v3885
  %v4032 = vpack.c.b16 %v3888, %v3887
  %v4033 = vpack.c.b16 %v3890, %v3889
  %v4034 = vpack.c.b16 %v3892, %v3891
  %v4035 = vpack.c.b16 %v3894, %v3893
  %v4036 = vpack.c.b16 %v3896, %v3895
  %v4037 = vpack.c.b16 %v3898, %v3897
  %v4038 = vpack.c.b16 %v3900, %v3899
  %v4039 = vpack.c.b16 %v3902, %v3901
  %v4040 = vpack.c.b16 %v3904, %v3903
  %v4041 = vpack.c.b16 %v3906, %v3905
  %v4042 = vpack.c.b16 %v3908, %v3907
  %v4043 = vpack.c.b16 %v3910, %v3909
  %v4044 = vpack.c.b16 %v3912, %v3911
  %v4045 = vpack.c.b16 %v3914, %v3913
  %v4046 = vpack.c.b16 %v3916, %v3915
  %v4047 = vpack.c.b16 %v3918, %v3917
  %v4048 = vpack.c.b16 %v3920, %v3919
  %4177 = vmatpush.bf16.msra.mxu0 %v3928
  %4178 = vmatpush.bf16.msra.mxu0 %v3927
  %4179 = vmatpush.bf16.msra.mxu0 %v3926
  %4180 = vmatpush.bf16.msra.mxu0 %v3925
  %4181 = vmatpush.bf16.msra.mxu0 %v3924
  %4182 = vmatpush.bf16.msra.mxu0 %v3923
  %4183 = vmatpush.bf16.msra.mxu0 %v3922
  %4184 = vmatpush.bf16.msra.mxu0 %v3921
  %4185 = vmatmul.bf16.gmra.mxu0 %v3136
  %v4186 = vpop.f32.mrf.mxu0
  %v4187 = vadd.f32 %v3408, %v4186
  %v4188 = vpop.f32.mrf.mxu0
  %v4189 = vadd.f32 %v3408, %v4188
  %4190 = vdwg.mxu0
  %4191 = vmatpush.bf16.msra.mxu0 %v3936
  %4192 = vmatpush.bf16.msra.mxu0 %v3935
  %4193 = vmatpush.bf16.msra.mxu0 %v3934
  %4194 = vmatpush.bf16.msra.mxu0 %v3933
  %4195 = vmatpush.bf16.msra.mxu0 %v3932
  %4196 = vmatpush.bf16.msra.mxu0 %v3931
  %4197 = vmatpush.bf16.msra.mxu0 %v3930
  %4198 = vmatpush.bf16.msra.mxu0 %v3929
  %4199 = vmatmul.bf16.gmra.mxu0 %v3137
  %v4200 = vpop.f32.mrf.mxu0
  %v4201 = vadd.f32 %v4187, %v4200
  %v4202 = vpop.f32.mrf.mxu0
  %v4203 = vadd.f32 %v4189, %v4202
  %4204 = vdwg.mxu0
  %4205 = vmatpush.bf16.msra.mxu0 %v3944
  %4206 = vmatpush.bf16.msra.mxu0 %v3943
  %4207 = vmatpush.bf16.msra.mxu0 %v3942
  %4208 = vmatpush.bf16.msra.mxu0 %v3941
  %4209 = vmatpush.bf16.msra.mxu0 %v3940
  %4210 = vmatpush.bf16.msra.mxu0 %v3939
  %4211 = vmatpush.bf16.msra.mxu0 %v3938
  %4212 = vmatpush.bf16.msra.mxu0 %v3937
  %4213 = vmatmul.bf16.gmra.mxu0 %v3138
  %v4214 = vpop.f32.mrf.mxu0
  %v4215 = vadd.f32 %v4201, %v4214
  %v4216 = vpop.f32.mrf.mxu0
  %v4217 = vadd.f32 %v4203, %v4216
  %4218 = vdwg.mxu0
  %4219 = vmatpush.bf16.msra.mxu0 %v3952
  %4220 = vmatpush.bf16.msra.mxu0 %v3951
  %4221 = vmatpush.bf16.msra.mxu0 %v3950
  %4222 = vmatpush.bf16.msra.mxu0 %v3949
  %4223 = vmatpush.bf16.msra.mxu0 %v3948
  %4224 = vmatpush.bf16.msra.mxu0 %v3947
  %4225 = vmatpush.bf16.msra.mxu0 %v3946
  %4226 = vmatpush.bf16.msra.mxu0 %v3945
  %4227 = vmatmul.bf16.gmra.mxu0 %v3139
  %v4228 = vpop.f32.mrf.mxu0
  %v4229 = vadd.f32 %v4215, %v4228
  %v4230 = vpop.f32.mrf.mxu0
  %v4231 = vadd.f32 %v4217, %v4230
  %4232 = vdwg.mxu0
  %4233 = vmatpush.bf16.msra.mxu0 %v3960
  %4234 = vmatpush.bf16.msra.mxu0 %v3959
  %4235 = vmatpush.bf16.msra.mxu0 %v3958
  %4236 = vmatpush.bf16.msra.mxu0 %v3957
  %4237 = vmatpush.bf16.msra.mxu0 %v3956
  %4238 = vmatpush.bf16.msra.mxu0 %v3955
  %4239 = vmatpush.bf16.msra.mxu0 %v3954
  %4240 = vmatpush.bf16.msra.mxu0 %v3953
  %4241 = vmatmul.bf16.gmra.mxu0 %v3140
  %v4242 = vpop.f32.mrf.mxu0
  %v4243 = vadd.f32 %v4229, %v4242
  %v4244 = vpop.f32.mrf.mxu0
  %v4245 = vadd.f32 %v4231, %v4244
  %4246 = vdwg.mxu0
  %4247 = vmatpush.bf16.msra.mxu0 %v3968
  %4248 = vmatpush.bf16.msra.mxu0 %v3967
  %4249 = vmatpush.bf16.msra.mxu0 %v3966
  %4250 = vmatpush.bf16.msra.mxu0 %v3965
  %4251 = vmatpush.bf16.msra.mxu0 %v3964
  %4252 = vmatpush.bf16.msra.mxu0 %v3963
  %4253 = vmatpush.bf16.msra.mxu0 %v3962
  %4254 = vmatpush.bf16.msra.mxu0 %v3961
  %4255 = vmatmul.bf16.gmra.mxu0 %v3141
  %v4256 = vpop.f32.mrf.mxu0
  %v4257 = vadd.f32 %v4243, %v4256
  %v4258 = vpop.f32.mrf.mxu0
  %v4259 = vadd.f32 %v4245, %v4258
  %4260 = vdwg.mxu0
  %4261 = vmatpush.bf16.msra.mxu0 %v3976
  %4262 = vmatpush.bf16.msra.mxu0 %v3975
  %4263 = vmatpush.bf16.msra.mxu0 %v3974
  %4264 = vmatpush.bf16.msra.mxu0 %v3973
  %4265 = vmatpush.bf16.msra.mxu0 %v3972
  %4266 = vmatpush.bf16.msra.mxu0 %v3971
  %4267 = vmatpush.bf16.msra.mxu0 %v3970
  %4268 = vmatpush.bf16.msra.mxu0 %v3969
  %4269 = vmatmul.bf16.gmra.mxu0 %v3142
  %v4270 = vpop.f32.mrf.mxu0
  %v4271 = vadd.f32 %v4257, %v4270
  %v4272 = vpop.f32.mrf.mxu0
  %v4273 = vadd.f32 %v4259, %v4272
  %4274 = vdwg.mxu0
  %4275 = vmatpush.bf16.msra.mxu0 %v3984
  %4276 = vmatpush.bf16.msra.mxu0 %v3983
  %4277 = vmatpush.bf16.msra.mxu0 %v3982
  %4278 = vmatpush.bf16.msra.mxu0 %v3981
  %4279 = vmatpush.bf16.msra.mxu0 %v3980
  %4280 = vmatpush.bf16.msra.mxu0 %v3979
  %4281 = vmatpush.bf16.msra.mxu0 %v3978
  %4282 = vmatpush.bf16.msra.mxu0 %v3977
  %4283 = vmatmul.bf16.gmra.mxu0 %v3143
  %v4284 = vpop.f32.mrf.mxu0
  %v4285 = vadd.f32 %v4271, %v4284
  %v4286 = vpop.f32.mrf.mxu0
  %v4287 = vadd.f32 %v4273, %v4286
  %4288 = vdwg.mxu0
  %4289 = vmatpush.bf16.msra.mxu0 %v3992
  %4290 = vmatpush.bf16.msra.mxu0 %v3991
  %4291 = vmatpush.bf16.msra.mxu0 %v3990
  %4292 = vmatpush.bf16.msra.mxu0 %v3989
  %4293 = vmatpush.bf16.msra.mxu0 %v3988
  %4294 = vmatpush.bf16.msra.mxu0 %v3987
  %4295 = vmatpush.bf16.msra.mxu0 %v3986
  %4296 = vmatpush.bf16.msra.mxu0 %v3985
  %4297 = vmatmul.bf16.gmra.mxu0 %v3144
  %v4298 = vpop.f32.mrf.mxu0
  %v4299 = vadd.f32 %v4285, %v4298
  %v4300 = vpop.f32.mrf.mxu0
  %v4301 = vadd.f32 %v4287, %v4300
  %4302 = vdwg.mxu0
  %4303 = vmatpush.bf16.msra.mxu0 %v4000
  %4304 = vmatpush.bf16.msra.mxu0 %v3999
  %4305 = vmatpush.bf16.msra.mxu0 %v3998
  %4306 = vmatpush.bf16.msra.mxu0 %v3997
  %4307 = vmatpush.bf16.msra.mxu0 %v3996
  %4308 = vmatpush.bf16.msra.mxu0 %v3995
  %4309 = vmatpush.bf16.msra.mxu0 %v3994
  %4310 = vmatpush.bf16.msra.mxu0 %v3993
  %4311 = vmatmul.bf16.gmra.mxu0 %v3145
  %v4312 = vpop.f32.mrf.mxu0
  %v4313 = vadd.f32 %v4299, %v4312
  %v4314 = vpop.f32.mrf.mxu0
  %v4315 = vadd.f32 %v4301, %v4314
  %4316 = vdwg.mxu0
  %4317 = vmatpush.bf16.msra.mxu0 %v4008
  %4318 = vmatpush.bf16.msra.mxu0 %v4007
  %4319 = vmatpush.bf16.msra.mxu0 %v4006
  %4320 = vmatpush.bf16.msra.mxu0 %v4005
  %4321 = vmatpush.bf16.msra.mxu0 %v4004
  %4322 = vmatpush.bf16.msra.mxu0 %v4003
  %4323 = vmatpush.bf16.msra.mxu0 %v4002
  %4324 = vmatpush.bf16.msra.mxu0 %v4001
  %4325 = vmatmul.bf16.gmra.mxu0 %v3146
  %v4326 = vpop.f32.mrf.mxu0
  %v4327 = vadd.f32 %v4313, %v4326
  %v4328 = vpop.f32.mrf.mxu0
  %v4329 = vadd.f32 %v4315, %v4328
  %4330 = vdwg.mxu0
  %4331 = vmatpush.bf16.msra.mxu0 %v4016
  %4332 = vmatpush.bf16.msra.mxu0 %v4015
  %4333 = vmatpush.bf16.msra.mxu0 %v4014
  %4334 = vmatpush.bf16.msra.mxu0 %v4013
  %4335 = vmatpush.bf16.msra.mxu0 %v4012
  %4336 = vmatpush.bf16.msra.mxu0 %v4011
  %4337 = vmatpush.bf16.msra.mxu0 %v4010
  %4338 = vmatpush.bf16.msra.mxu0 %v4009
  %4339 = vmatmul.bf16.gmra.mxu0 %v3147
  %v4340 = vpop.f32.mrf.mxu0
  %v4341 = vadd.f32 %v4327, %v4340
  %v4342 = vpop.f32.mrf.mxu0
  %v4343 = vadd.f32 %v4329, %v4342
  %4344 = vdwg.mxu0
  %4345 = vmatpush.bf16.msra.mxu0 %v4024
  %4346 = vmatpush.bf16.msra.mxu0 %v4023
  %4347 = vmatpush.bf16.msra.mxu0 %v4022
  %4348 = vmatpush.bf16.msra.mxu0 %v4021
  %4349 = vmatpush.bf16.msra.mxu0 %v4020
  %4350 = vmatpush.bf16.msra.mxu0 %v4019
  %4351 = vmatpush.bf16.msra.mxu0 %v4018
  %4352 = vmatpush.bf16.msra.mxu0 %v4017
  %4353 = vmatmul.bf16.gmra.mxu0 %v3148
  %v4354 = vpop.f32.mrf.mxu0
  %v4355 = vadd.f32 %v4341, %v4354
  %v4356 = vpop.f32.mrf.mxu0
  %v4357 = vadd.f32 %v4343, %v4356
  %4358 = vdwg.mxu0
  %4359 = vmatpush.bf16.msra.mxu0 %v4032
  %4360 = vmatpush.bf16.msra.mxu0 %v4031
  %4361 = vmatpush.bf16.msra.mxu0 %v4030
  %4362 = vmatpush.bf16.msra.mxu0 %v4029
  %4363 = vmatpush.bf16.msra.mxu0 %v4028
  %4364 = vmatpush.bf16.msra.mxu0 %v4027
  %4365 = vmatpush.bf16.msra.mxu0 %v4026
  %4366 = vmatpush.bf16.msra.mxu0 %v4025
  %4367 = vmatmul.bf16.gmra.mxu0 %v3149
  %v4368 = vpop.f32.mrf.mxu0
  %v4369 = vadd.f32 %v4355, %v4368
  %v4370 = vpop.f32.mrf.mxu0
  %v4371 = vadd.f32 %v4357, %v4370
  %4372 = vdwg.mxu0
  %4373 = vmatpush.bf16.msra.mxu0 %v4040
  %4374 = vmatpush.bf16.msra.mxu0 %v4039
  %4375 = vmatpush.bf16.msra.mxu0 %v4038
  %4376 = vmatpush.bf16.msra.mxu0 %v4037
  %4377 = vmatpush.bf16.msra.mxu0 %v4036
  %4378 = vmatpush.bf16.msra.mxu0 %v4035
  %4379 = vmatpush.bf16.msra.mxu0 %v4034
  %4380 = vmatpush.bf16.msra.mxu0 %v4033
  %4381 = vmatmul.bf16.gmra.mxu0 %v3150
  %v4382 = vpop.f32.mrf.mxu0
  %v4383 = vadd.f32 %v4369, %v4382
  %v4384 = vpop.f32.mrf.mxu0
  %v4385 = vadd.f32 %v4371, %v4384
  %4386 = vdwg.mxu0
  %4387 = vmatpush.bf16.msra.mxu0 %v4048
  %4388 = vmatpush.bf16.msra.mxu0 %v4047
  %4389 = vmatpush.bf16.msra.mxu0 %v4046
  %4390 = vmatpush.bf16.msra.mxu0 %v4045
  %4391 = vmatpush.bf16.msra.mxu0 %v4044
  %4392 = vmatpush.bf16.msra.mxu0 %v4043
  %4393 = vmatpush.bf16.msra.mxu0 %v4042
  %4394 = vmatpush.bf16.msra.mxu0 %v4041
  %4395 = vmatmul.bf16.gmra.mxu0 %v3151
  %v4396 = vpop.f32.mrf.mxu0
  %v4397 = vadd.f32 %v4383, %v4396
  %v4398 = vpop.f32.mrf.mxu0
  %v4399 = vadd.f32 %v4385, %v4398
  %4400 = vdwg.mxu0
  %v4401 = vadd.f32 %v2638, %v4397
  %v4402 = vadd.f32 %v2639, %v4399
  %v4403 = vsel %vm479, %v4401, 0.0
  %4404 = vadd.xlane.f32.xlu0 %v4403
  %v4405 = vpop.xlane.xlu0 %4404
  %v4406 = vsel %vm479, %v4402, 0.0
  %4407 = vadd.xlane.f32.xlu0 %v4406
  %v4408 = vpop.xlane.xlu0 %4407
  %v4409 = vmul.f32 %v4405, %v2595
  %v4410 = vmul.f32 %v4408, %v2595
  %v4411 = vsub.f32 %v4401, %v4409
  %v4412 = vsub.f32 %v4402, %v4410
  %v4413 = vmul.f32 %v4411, %v4411
  %v4414 = vmul.f32 %v4412, %v4412
  %v4415 = vsel %vm479, %v4413, 0.0
  %4416 = vadd.xlane.f32.xlu0 %v4415
  %v4417 = vpop.xlane.xlu0 %4416
  %v4418 = vsel %vm479, %v4414, 0.0
  %4419 = vadd.xlane.f32.xlu0 %v4418
  %v4420 = vpop.xlane.xlu0 %4419
  %v4421 = vmul.f32 %v4417, %v2595
  %v4422 = vmul.f32 %v4420, %v2595
  %v4423 = vadd.f32 %v4421, 1e-05
  %v4424 = vadd.f32 %v4422, 1e-05
  %v4425 = vrsqrt.pop %v4423
  %v4426 = vmul.f32 %v4425, %v4423
  %v4427 = vmul.f32 %v4426, %v4425
  %v4428 = vmul.f32 0.5, %v4427
  %v4429 = vsub.f32 1.5, %v4428
  %v4430 = vmul.f32 %v4425, %v4429
  %vm4431 = vweird.f32 %v4423
  %vm4432 = vweird.f32 %v4425
  %vm4433 = vmor %vm4431, %vm4432
  %v4434 = vsel %vm4433, %v4425, %v4430
  %v4435 = vrsqrt.pop %v4424
  %v4436 = vmul.f32 %v4435, %v4424
  %v4437 = vmul.f32 %v4436, %v4435
  %v4438 = vmul.f32 0.5, %v4437
  %v4439 = vsub.f32 1.5, %v4438
  %v4440 = vmul.f32 %v4435, %v4439
  %vm4441 = vweird.f32 %v4424
  %vm4442 = vweird.f32 %v4435
  %vm4443 = vmor %vm4441, %vm4442
  %v4444 = vsel %vm4443, %v4435, %v4440
  %v4445 = vmul.f32 %v4411, %v4434
  %v4446 = vmul.f32 %v4412, %v4444
  %v4447 = vperm.slane %v2078, 3
  %v4448 = vmul.f32 %v4445, %v4447
  %v4449 = vmul.f32 %v4446, %v4447
  %v4450 = vperm.slane %v2078, 4
  %v4451 = vadd.f32 %v4448, %v4450
  %v4452 = vadd.f32 %v4449, %v4450
  %v4453 = vld [vmem:[%s16] sm:$0x3f]
  %v4454 = vld [vmem:[%s13] sm:$0xff]
  %v4455 = vld [vmem:[%s13 + $0x8] sm:$0xff]
  %v4456 = vld [vmem:[%s13 + $0x10] sm:$0xff]
  %v4457 = vld [vmem:[%s13 + $0x18] sm:$0xff]
  %v4458 = vld [vmem:[%s14] sm:$0x1]
  %v4460 = vperm.slane %v4458, 0
  %v4463 = vsel %vm479, %v4451, 0
  %v4466 = vsel %vm479, %v4452, 0
  %4468 = vmatpush.msra.mxu0 0.0
  %4469 = vmatpush.msra.mxu0 0.0
  %4470 = vmatpush.msra.mxu0 0.0
  %4471 = vmatpush.msra.mxu0 0.0
  %4472 = vmatpush.msra.mxu0 0.0
  %4473 = vmatpush.msra.mxu0 0.0
  %4474 = vmatpush.msra.mxu0 0.0
  %4475 = vmatpush.msra.mxu0 0.0
  %4476 = vmatpush.msra.mxu0 0.0
  %4477 = vmatpush.msra.mxu0 0.0
  %4478 = vmatpush.msra.mxu0 0.0
  %4479 = vmatpush.msra.mxu0 0.0
  %4480 = vmatpush.msra.mxu0 %v4457
  %4481 = vmatpush.msra.mxu0 %v4456
  %4482 = vmatpush.msra.mxu0 %v4455
  %4483 = vmatpush.msra.mxu0 %v4454
  %4484 = vmatmul.f32.gmra.mxu0 %v4463
  %v4485 = vpop.f32.mrf.mxu0
  %v4486 = vadd.f32 %v4460, %v4485
  %4487 = vmatmul.f32.gmra.mxu0 %v4466
  %v4488 = vpop.f32.mrf.mxu0
  %v4489 = vadd.f32 %v4460, %v4488
  %4490 = vdwg.mxu0
  %4493 = vrot.lane.b32.xlu0 %v4486, 120
  %v4494 = vpop.permute.xlu0 %4493
  %4495 = vrot.lane.b32.xlu0 %v4489, 120
  %v4496 = vpop.permute.xlu0 %4495
  %4497 = vrot.lane.b32.xlu0 %v4486, 112
  %v4498 = vpop.permute.xlu0 %4497
  %4499 = vrot.lane.b32.xlu0 %v4489, 112
  %v4500 = vpop.permute.xlu0 %4499
  %4501 = vrot.lane.b32.xlu0 %v4486, 104
  %v4502 = vpop.permute.xlu0 %4501
  %4503 = vrot.lane.b32.xlu0 %v4489, 104
  %v4504 = vpop.permute.xlu0 %4503
  %4505 = vrot.lane.b32.xlu0 %v4486, 96
  %v4506 = vpop.permute.xlu0 %4505
  %4507 = vrot.lane.b32.xlu0 %v4489, 96
  %v4508 = vpop.permute.xlu0 %4507
  %v4509 = vsel %vm2134, %v4486, 0
  %v4511 = vsel %vm2134, %v4489, 0
  %v4513 = vsel %vm2134, %v4506, 0
  %v4515 = vsel %vm2134, %v4508, 0
  %4517 = vmatpush.xpose.msra.mxu0 0.0
  %4518 = vmatpush.xpose.msra.mxu0 0.0
  %4519 = vmatpush.xpose.msra.mxu0 0.0
  %4520 = vmatpush.xpose.msra.mxu0 0.0
  %4521 = vmatpush.xpose.msra.mxu0 0.0
  %4522 = vmatpush.xpose.msra.mxu0 0.0
  %4523 = vmatpush.xpose.msra.mxu0 0.0
  %4524 = vmatpush.xpose.msra.mxu0 0.0
  %4525 = vmatpush.xpose.msra.mxu0 0.0
  %4526 = vmatpush.xpose.msra.mxu0 0.0
  %4527 = vmatpush.xpose.msra.mxu0 0.0
  %4528 = vmatpush.xpose.msra.mxu0 0.0
  %4529 = vmatpush.xpose.msra.mxu0 0.0
  %4530 = vmatpush.xpose.msra.mxu0 0.0
  %4531 = vmatpush.xpose.msra.mxu0 %v4515
  %4532 = vmatpush.xpose.msra.mxu0 %v4513
  %4533 = vmatmul.f32.gmra.mxu0 %v4509
  %v4534 = vpop.f32.mrf.mxu0
  %v4535 = vadd.f32 0.0, %v4534
  %4536 = vmatmul.f32.gmra.mxu0 %v4511
  %v4537 = vpop.f32.mrf.mxu0
  %v4538 = vadd.f32 0.0, %v4537
  %4539 = vdwg.mxu0
  %4540 = vrot.lane.b32.xlu0 %v4494, 96
  %v4541 = vpop.permute.xlu0 %4540
  %4542 = vrot.lane.b32.xlu0 %v4496, 96
  %v4543 = vpop.permute.xlu0 %4542
  %v4544 = vsel %vm2134, %v4494, 0
  %v4546 = vsel %vm2134, %v4496, 0
  %v4548 = vsel %vm2134, %v4541, 0
  %v4550 = vsel %vm2134, %v4543, 0
  %4552 = vmatpush.xpose.msra.mxu0 0.0
  %4553 = vmatpush.xpose.msra.mxu0 0.0
  %4554 = vmatpush.xpose.msra.mxu0 0.0
  %4555 = vmatpush.xpose.msra.mxu0 0.0
  %4556 = vmatpush.xpose.msra.mxu0 0.0
  %4557 = vmatpush.xpose.msra.mxu0 0.0
  %4558 = vmatpush.xpose.msra.mxu0 0.0
  %4559 = vmatpush.xpose.msra.mxu0 0.0
  %4560 = vmatpush.xpose.msra.mxu0 0.0
  %4561 = vmatpush.xpose.msra.mxu0 0.0
  %4562 = vmatpush.xpose.msra.mxu0 0.0
  %4563 = vmatpush.xpose.msra.mxu0 0.0
  %4564 = vmatpush.xpose.msra.mxu0 0.0
  %4565 = vmatpush.xpose.msra.mxu0 0.0
  %4566 = vmatpush.xpose.msra.mxu0 %v4550
  %4567 = vmatpush.xpose.msra.mxu0 %v4548
  %4568 = vmatmul.f32.gmra.mxu0 %v4544
  %v4569 = vpop.f32.mrf.mxu0
  %v4570 = vadd.f32 0.0, %v4569
  %4571 = vmatmul.f32.gmra.mxu0 %v4546
  %v4572 = vpop.f32.mrf.mxu0
  %v4573 = vadd.f32 0.0, %v4572
  %4574 = vdwg.mxu0
  %4575 = vrot.lane.b32.xlu0 %v4498, 96
  %v4576 = vpop.permute.xlu0 %4575
  %4577 = vrot.lane.b32.xlu0 %v4500, 96
  %v4578 = vpop.permute.xlu0 %4577
  %v4579 = vsel %vm2134, %v4498, 0
  %v4581 = vsel %vm2134, %v4500, 0
  %v4583 = vsel %vm2134, %v4576, 0
  %v4585 = vsel %vm2134, %v4578, 0
  %4587 = vmatpush.xpose.msra.mxu0 0.0
  %4588 = vmatpush.xpose.msra.mxu0 0.0
  %4589 = vmatpush.xpose.msra.mxu0 0.0
  %4590 = vmatpush.xpose.msra.mxu0 0.0
  %4591 = vmatpush.xpose.msra.mxu0 0.0
  %4592 = vmatpush.xpose.msra.mxu0 0.0
  %4593 = vmatpush.xpose.msra.mxu0 0.0
  %4594 = vmatpush.xpose.msra.mxu0 0.0
  %4595 = vmatpush.xpose.msra.mxu0 0.0
  %4596 = vmatpush.xpose.msra.mxu0 0.0
  %4597 = vmatpush.xpose.msra.mxu0 0.0
  %4598 = vmatpush.xpose.msra.mxu0 0.0
  %4599 = vmatpush.xpose.msra.mxu0 0.0
  %4600 = vmatpush.xpose.msra.mxu0 0.0
  %4601 = vmatpush.xpose.msra.mxu0 %v4585
  %4602 = vmatpush.xpose.msra.mxu0 %v4583
  %4603 = vmatmul.f32.gmra.mxu0 %v4579
  %v4604 = vpop.f32.mrf.mxu0
  %v4605 = vadd.f32 0.0, %v4604
  %4606 = vmatmul.f32.gmra.mxu0 %v4581
  %v4607 = vpop.f32.mrf.mxu0
  %v4608 = vadd.f32 0.0, %v4607
  %4609 = vdwg.mxu0
  %4610 = vrot.lane.b32.xlu0 %v4502, 96
  %v4611 = vpop.permute.xlu0 %4610
  %4612 = vrot.lane.b32.xlu0 %v4504, 96
  %v4613 = vpop.permute.xlu0 %4612
  %v4614 = vsel %vm2134, %v4502, 0
  %v4616 = vsel %vm2134, %v4504, 0
  %v4618 = vsel %vm2134, %v4611, 0
  %v4620 = vsel %vm2134, %v4613, 0
  %4622 = vmatpush.xpose.msra.mxu0 0.0
  %4623 = vmatpush.xpose.msra.mxu0 0.0
  %4624 = vmatpush.xpose.msra.mxu0 0.0
  %4625 = vmatpush.xpose.msra.mxu0 0.0
  %4626 = vmatpush.xpose.msra.mxu0 0.0
  %4627 = vmatpush.xpose.msra.mxu0 0.0
  %4628 = vmatpush.xpose.msra.mxu0 0.0
  %4629 = vmatpush.xpose.msra.mxu0 0.0
  %4630 = vmatpush.xpose.msra.mxu0 0.0
  %4631 = vmatpush.xpose.msra.mxu0 0.0
  %4632 = vmatpush.xpose.msra.mxu0 0.0
  %4633 = vmatpush.xpose.msra.mxu0 0.0
  %4634 = vmatpush.xpose.msra.mxu0 0.0
  %4635 = vmatpush.xpose.msra.mxu0 0.0
  %4636 = vmatpush.xpose.msra.mxu0 %v4620
  %4637 = vmatpush.xpose.msra.mxu0 %v4618
  %4638 = vmatmul.f32.gmra.mxu0 %v4614
  %v4639 = vpop.f32.mrf.mxu0
  %v4640 = vadd.f32 0.0, %v4639
  %4641 = vmatmul.f32.gmra.mxu0 %v4616
  %v4642 = vpop.f32.mrf.mxu0
  %v4643 = vadd.f32 0.0, %v4642
  %4644 = vdwg.mxu0
  %v4645 = vmul.f32 %v4535, 0.35355338
  %v4646 = vmul.f32 %v4538, 0.35355338
  %v4647 = vmul.f32 %v4570, 0.35355338
  %v4648 = vmul.f32 %v4573, 0.35355338
  %v4649 = vmul.f32 %v4605, 0.35355338
  %v4650 = vmul.f32 %v4608, 0.35355338
  %v4651 = vmul.f32 %v4640, 0.35355338
  %v4652 = vmul.f32 %v4643, 0.35355338
  %v4653 = vadd.f32 %v4645, %v2070
  %v4654 = vadd.f32 %v4646, %v2071
  %v4655 = vadd.f32 %v4647, %v2072
  %v4656 = vadd.f32 %v4648, %v2073
  %v4657 = vadd.f32 %v4649, %v2074
  %v4658 = vadd.f32 %v4650, %v2075
  %v4659 = vadd.f32 %v4651, %v2076
  %v4660 = vadd.f32 %v4652, %v2077
  %v4661 = vsel %vm2287, %v4653, -inf
  %4662 = vmax.xlane.f32.xlu0 %v4661
  %v4663 = vpop.xlane.xlu0 %4662
  %v4664 = vsel %vm2287, %v4654, -inf
  %4665 = vmax.xlane.f32.xlu0 %v4664
  %v4666 = vpop.xlane.xlu0 %4665
  %v4667 = vsel %vm2287, %v4655, -inf
  %4668 = vmax.xlane.f32.xlu0 %v4667
  %v4669 = vpop.xlane.xlu0 %4668
  %v4670 = vsel %vm2287, %v4656, -inf
  %4671 = vmax.xlane.f32.xlu0 %v4670
  %v4672 = vpop.xlane.xlu0 %4671
  %v4673 = vsel %vm2287, %v4657, -inf
  %4674 = vmax.xlane.f32.xlu0 %v4673
  %v4675 = vpop.xlane.xlu0 %4674
  %v4676 = vsel %vm2287, %v4658, -inf
  %4677 = vmax.xlane.f32.xlu0 %v4676
  %v4678 = vpop.xlane.xlu0 %4677
  %v4679 = vsel %vm2287, %v4659, -inf
  %4680 = vmax.xlane.f32.xlu0 %v4679
  %v4681 = vpop.xlane.xlu0 %4680
  %v4682 = vsel %vm2287, %v4660, -inf
  %4683 = vmax.xlane.f32.xlu0 %v4682
  %v4684 = vpop.xlane.xlu0 %4683
  %v4685 = vsub.f32 %v4653, %v4663
  %v4686 = vsub.f32 %v4654, %v4666
  %v4687 = vsub.f32 %v4655, %v4669
  %v4688 = vsub.f32 %v4656, %v4672
  %v4689 = vsub.f32 %v4657, %v4675
  %v4690 = vsub.f32 %v4658, %v4678
  %v4691 = vsub.f32 %v4659, %v4681
  %v4692 = vsub.f32 %v4660, %v4684
  %v4693 = vmul.f32 %v4685, 1.442695
  %v4694 = vpow.pop %v4693
  %v4695 = vmul.f32 %v4686, 1.442695
  %v4696 = vpow.pop %v4695
  %v4697 = vmul.f32 %v4687, 1.442695
  %v4698 = vpow.pop %v4697
  %v4699 = vmul.f32 %v4688, 1.442695
  %v4700 = vpow.pop %v4699
  %v4701 = vmul.f32 %v4689, 1.442695
  %v4702 = vpow.pop %v4701
  %v4703 = vmul.f32 %v4690, 1.442695
  %v4704 = vpow.pop %v4703
  %v4705 = vmul.f32 %v4691, 1.442695
  %v4706 = vpow.pop %v4705
  %v4707 = vmul.f32 %v4692, 1.442695
  %v4708 = vpow.pop %v4707
  %v4709 = vsel %vm2287, %v4694, 0.0
  %4710 = vadd.xlane.f32.xlu0 %v4709
  %v4711 = vpop.xlane.xlu0 %4710
  %v4712 = vsel %vm2287, %v4696, 0.0
  %4713 = vadd.xlane.f32.xlu0 %v4712
  %v4714 = vpop.xlane.xlu0 %4713
  %v4715 = vsel %vm2287, %v4698, 0.0
  %4716 = vadd.xlane.f32.xlu0 %v4715
  %v4717 = vpop.xlane.xlu0 %4716
  %v4718 = vsel %vm2287, %v4700, 0.0
  %4719 = vadd.xlane.f32.xlu0 %v4718
  %v4720 = vpop.xlane.xlu0 %4719
  %v4721 = vsel %vm2287, %v4702, 0.0
  %4722 = vadd.xlane.f32.xlu0 %v4721
  %v4723 = vpop.xlane.xlu0 %4722
  %v4724 = vsel %vm2287, %v4704, 0.0
  %4725 = vadd.xlane.f32.xlu0 %v4724
  %v4726 = vpop.xlane.xlu0 %4725
  %v4727 = vsel %vm2287, %v4706, 0.0
  %4728 = vadd.xlane.f32.xlu0 %v4727
  %v4729 = vpop.xlane.xlu0 %4728
  %v4730 = vsel %vm2287, %v4708, 0.0
  %4731 = vadd.xlane.f32.xlu0 %v4730
  %v4732 = vpop.xlane.xlu0 %4731
  %v4733 = vrcp.pop %v4711
  %v4734 = vrcp.pop %v4714
  %v4735 = vrcp.pop %v4717
  %v4736 = vrcp.pop %v4720
  %v4737 = vrcp.pop %v4723
  %v4738 = vrcp.pop %v4726
  %v4739 = vrcp.pop %v4729
  %v4740 = vrcp.pop %v4732
  %v4741 = vmul.f32 %v4694, %v4733
  %v4742 = vmul.f32 %v4696, %v4734
  %v4743 = vmul.f32 %v4698, %v4735
  %v4744 = vmul.f32 %v4700, %v4736
  %v4745 = vmul.f32 %v4702, %v4737
  %v4746 = vmul.f32 %v4704, %v4738
  %v4747 = vmul.f32 %v4706, %v4739
  %v4748 = vmul.f32 %v4708, %v4740
  %4749 = vrot.lane.b32.xlu0 %v4486, 64
  %v4750 = vpop.permute.xlu0 %4749
  %4751 = vrot.lane.b32.xlu0 %v4489, 64
  %v4752 = vpop.permute.xlu0 %4751
  %v4756 = vsel %vm2287, %v4741, 0
  %v4759 = vsel %vm2287, %v4742, 0
  %4761 = vmatpush.msra.mxu0 0.0
  %4762 = vmatpush.msra.mxu0 0.0
  %4763 = vmatpush.msra.mxu0 0.0
  %4764 = vmatpush.msra.mxu0 0.0
  %4765 = vmatpush.msra.mxu0 0.0
  %4766 = vmatpush.msra.mxu0 0.0
  %4767 = vmatpush.msra.mxu0 0.0
  %4768 = vmatpush.msra.mxu0 0.0
  %4769 = vmatpush.msra.mxu0 0.0
  %4770 = vmatpush.msra.mxu0 0.0
  %4771 = vmatpush.msra.mxu0 0.0
  %4772 = vmatpush.msra.mxu0 0.0
  %4773 = vmatpush.msra.mxu0 0.0
  %4774 = vmatpush.msra.mxu0 0.0
  %4775 = vmatpush.msra.mxu0 %v4752
  %4776 = vmatpush.msra.mxu0 %v4750
  %4777 = vmatmul.f32.gmra.mxu0 %v4756
  %v4778 = vpop.f32.mrf.mxu0
  %v4779 = vadd.f32 0.0, %v4778
  %4780 = vmatmul.f32.gmra.mxu0 %v4759
  %v4781 = vpop.f32.mrf.mxu0
  %v4782 = vadd.f32 0.0, %v4781
  %4783 = vdwg.mxu0
  %4784 = vrot.lane.b32.xlu0 %v4494, 64
  %v4785 = vpop.permute.xlu0 %4784
  %4786 = vrot.lane.b32.xlu0 %v4496, 64
  %v4787 = vpop.permute.xlu0 %4786
  %v4791 = vsel %vm2287, %v4743, 0
  %v4794 = vsel %vm2287, %v4744, 0
  %4796 = vmatpush.msra.mxu0 0.0
  %4797 = vmatpush.msra.mxu0 0.0
  %4798 = vmatpush.msra.mxu0 0.0
  %4799 = vmatpush.msra.mxu0 0.0
  %4800 = vmatpush.msra.mxu0 0.0
  %4801 = vmatpush.msra.mxu0 0.0
  %4802 = vmatpush.msra.mxu0 0.0
  %4803 = vmatpush.msra.mxu0 0.0
  %4804 = vmatpush.msra.mxu0 0.0
  %4805 = vmatpush.msra.mxu0 0.0
  %4806 = vmatpush.msra.mxu0 0.0
  %4807 = vmatpush.msra.mxu0 0.0
  %4808 = vmatpush.msra.mxu0 0.0
  %4809 = vmatpush.msra.mxu0 0.0
  %4810 = vmatpush.msra.mxu0 %v4787
  %4811 = vmatpush.msra.mxu0 %v4785
  %4812 = vmatmul.f32.gmra.mxu0 %v4791
  %v4813 = vpop.f32.mrf.mxu0
  %v4814 = vadd.f32 0.0, %v4813
  %4815 = vmatmul.f32.gmra.mxu0 %v4794
  %v4816 = vpop.f32.mrf.mxu0
  %v4817 = vadd.f32 0.0, %v4816
  %4818 = vdwg.mxu0
  %4819 = vrot.lane.b32.xlu0 %v4498, 64
  %v4820 = vpop.permute.xlu0 %4819
  %4821 = vrot.lane.b32.xlu0 %v4500, 64
  %v4822 = vpop.permute.xlu0 %4821
  %v4826 = vsel %vm2287, %v4745, 0
  %v4829 = vsel %vm2287, %v4746, 0
  %4831 = vmatpush.msra.mxu0 0.0
  %4832 = vmatpush.msra.mxu0 0.0
  %4833 = vmatpush.msra.mxu0 0.0
  %4834 = vmatpush.msra.mxu0 0.0
  %4835 = vmatpush.msra.mxu0 0.0
  %4836 = vmatpush.msra.mxu0 0.0
  %4837 = vmatpush.msra.mxu0 0.0
  %4838 = vmatpush.msra.mxu0 0.0
  %4839 = vmatpush.msra.mxu0 0.0
  %4840 = vmatpush.msra.mxu0 0.0
  %4841 = vmatpush.msra.mxu0 0.0
  %4842 = vmatpush.msra.mxu0 0.0
  %4843 = vmatpush.msra.mxu0 0.0
  %4844 = vmatpush.msra.mxu0 0.0
  %4845 = vmatpush.msra.mxu0 %v4822
  %4846 = vmatpush.msra.mxu0 %v4820
  %4847 = vmatmul.f32.gmra.mxu0 %v4826
  %v4848 = vpop.f32.mrf.mxu0
  %v4849 = vadd.f32 0.0, %v4848
  %4850 = vmatmul.f32.gmra.mxu0 %v4829
  %v4851 = vpop.f32.mrf.mxu0
  %v4852 = vadd.f32 0.0, %v4851
  %4853 = vdwg.mxu0
  %4854 = vrot.lane.b32.xlu0 %v4502, 64
  %v4855 = vpop.permute.xlu0 %4854
  %4856 = vrot.lane.b32.xlu0 %v4504, 64
  %v4857 = vpop.permute.xlu0 %4856
  %v4861 = vsel %vm2287, %v4747, 0
  %v4864 = vsel %vm2287, %v4748, 0
  %4866 = vmatpush.msra.mxu0 0.0
  %4867 = vmatpush.msra.mxu0 0.0
  %4868 = vmatpush.msra.mxu0 0.0
  %4869 = vmatpush.msra.mxu0 0.0
  %4870 = vmatpush.msra.mxu0 0.0
  %4871 = vmatpush.msra.mxu0 0.0
  %4872 = vmatpush.msra.mxu0 0.0
  %4873 = vmatpush.msra.mxu0 0.0
  %4874 = vmatpush.msra.mxu0 0.0
  %4875 = vmatpush.msra.mxu0 0.0
  %4876 = vmatpush.msra.mxu0 0.0
  %4877 = vmatpush.msra.mxu0 0.0
  %4878 = vmatpush.msra.mxu0 0.0
  %4879 = vmatpush.msra.mxu0 0.0
  %4880 = vmatpush.msra.mxu0 %v4857
  %4881 = vmatpush.msra.mxu0 %v4855
  %4882 = vmatmul.f32.gmra.mxu0 %v4861
  %v4883 = vpop.f32.mrf.mxu0
  %v4884 = vadd.f32 0.0, %v4883
  %4885 = vmatmul.f32.gmra.mxu0 %v4864
  %v4886 = vpop.f32.mrf.mxu0
  %v4887 = vadd.f32 0.0, %v4886
  %4888 = vdwg.mxu0
  %4891 = vrot.lane.b32.xlu0 %v4814, 8
  %v4892 = vpop.permute.xlu0 %4891
  %4893 = vrot.lane.b32.xlu0 %v4817, 8
  %v4894 = vpop.permute.xlu0 %4893
  %4899 = vrot.lane.b32.xlu0 %v4849, 16
  %v4900 = vpop.permute.xlu0 %4899
  %4901 = vrot.lane.b32.xlu0 %v4852, 16
  %v4902 = vpop.permute.xlu0 %4901
  %4907 = vrot.lane.b32.xlu0 %v4884, 24
  %v4908 = vpop.permute.xlu0 %4907
  %4909 = vrot.lane.b32.xlu0 %v4887, 24
  %v4910 = vpop.permute.xlu0 %4909
  %v4913 = vsel %vm2134, %v4779, %v4892
  %v4914 = vsel %vm2134, %v4782, %v4894
  %v4915 = vsel %vm2287, %v4913, %v4900
  %v4916 = vsel %vm2287, %v4914, %v4902
  %v4917 = vsel %vm2544, %v4915, %v4908
  %v4918 = vsel %vm2544, %v4916, %v4910
  %v4919 = vld [vmem:[%s15] sm:$0xff]
  %v4920 = vld [vmem:[%s15 + $0x8] sm:$0xff]
  %v4921 = vld [vmem:[%s15 + $0x10] sm:$0xff]
  %v4922 = vld [vmem:[%s15 + $0x18] sm:$0xff]
  %v4923 = vperm.slane %v4453, 0
  %v4925 = vsel %vm479, %v4917, 0
  %v4928 = vsel %vm479, %v4918, 0
  %4930 = vmatpush.msra.mxu0 0.0
  %4931 = vmatpush.msra.mxu0 0.0
  %4932 = vmatpush.msra.mxu0 0.0
  %4933 = vmatpush.msra.mxu0 0.0
  %4934 = vmatpush.msra.mxu0 0.0
  %4935 = vmatpush.msra.mxu0 0.0
  %4936 = vmatpush.msra.mxu0 0.0
  %4937 = vmatpush.msra.mxu0 0.0
  %4938 = vmatpush.msra.mxu0 0.0
  %4939 = vmatpush.msra.mxu0 0.0
  %4940 = vmatpush.msra.mxu0 0.0
  %4941 = vmatpush.msra.mxu0 0.0
  %4942 = vmatpush.msra.mxu0 %v4922
  %4943 = vmatpush.msra.mxu0 %v4921
  %4944 = vmatpush.msra.mxu0 %v4920
  %4945 = vmatpush.msra.mxu0 %v4919
  %4946 = vmatmul.f32.gmra.mxu0 %v4925
  %v4947 = vpop.f32.mrf.mxu0
  %v4948 = vadd.f32 %v4923, %v4947
  %4949 = vmatmul.f32.gmra.mxu0 %v4928
  %v4950 = vpop.f32.mrf.mxu0
  %v4951 = vadd.f32 %v4923, %v4950
  %4952 = vdwg.mxu0
  %v4953 = vadd.f32 %v4451, %v4948
  %v4954 = vadd.f32 %v4452, %v4951
  %v4955 = vsel %vm479, %v4953, 0.0
  %4956 = vadd.xlane.f32.xlu0 %v4955
  %v4957 = vpop.xlane.xlu0 %4956
  %v4958 = vsel %vm479, %v4954, 0.0
  %4959 = vadd.xlane.f32.xlu0 %v4958
  %v4960 = vpop.xlane.xlu0 %4959
  %v4961 = vmul.f32 %v4957, %v2595
  %v4962 = vmul.f32 %v4960, %v2595
  %v4963 = vsub.f32 %v4953, %v4961
  %v4964 = vsub.f32 %v4954, %v4962
  %v4965 = vmul.f32 %v4963, %v4963
  %v4966 = vmul.f32 %v4964, %v4964
  %v4967 = vsel %vm479, %v4965, 0.0
  %4968 = vadd.xlane.f32.xlu0 %v4967
  %v4969 = vpop.xlane.xlu0 %4968
  %v4970 = vsel %vm479, %v4966, 0.0
  %4971 = vadd.xlane.f32.xlu0 %v4970
  %v4972 = vpop.xlane.xlu0 %4971
  %v4973 = vmul.f32 %v4969, %v2595
  %v4974 = vmul.f32 %v4972, %v2595
  %v4975 = vadd.f32 %v4973, 1e-05
  %v4976 = vadd.f32 %v4974, 1e-05
  %v4977 = vrsqrt.pop %v4975
  %v4978 = vmul.f32 %v4977, %v4975
  %v4979 = vmul.f32 %v4978, %v4977
  %v4980 = vmul.f32 0.5, %v4979
  %v4981 = vsub.f32 1.5, %v4980
  %v4982 = vmul.f32 %v4977, %v4981
  %vm4983 = vweird.f32 %v4975
  %vm4984 = vweird.f32 %v4977
  %vm4985 = vmor %vm4983, %vm4984
  %v4986 = vsel %vm4985, %v4977, %v4982
  %v4987 = vrsqrt.pop %v4976
  %v4988 = vmul.f32 %v4987, %v4976
  %v4989 = vmul.f32 %v4988, %v4987
  %v4990 = vmul.f32 0.5, %v4989
  %v4991 = vsub.f32 1.5, %v4990
  %v4992 = vmul.f32 %v4987, %v4991
  %vm4993 = vweird.f32 %v4976
  %vm4994 = vweird.f32 %v4987
  %vm4995 = vmor %vm4993, %vm4994
  %v4996 = vsel %vm4995, %v4987, %v4992
  %v4997 = vmul.f32 %v4963, %v4986
  %v4998 = vmul.f32 %v4964, %v4996
  %v4999 = vperm.slane %v4453, 1
  %v5000 = vmul.f32 %v4997, %v4999
  %v5001 = vmul.f32 %v4998, %v4999
  %v5002 = vperm.slane %v4453, 2
  %v5003 = vadd.f32 %v5000, %v5002
  %v5004 = vadd.f32 %v5001, %v5002
  %s5005 = sshll.u32 %s2641, 4
  %5006 = dma.done %s1714, %s5005
  %v5007 = vpack.c.bf16 %v5004, %v5003
  %v5008 = vld [vmem:[#allocation5] sm:$0xff]
  %v5009 = vld [vmem:[#allocation5 + $0x8] sm:$0xff]
  %v5010 = vld [vmem:[#allocation5 + $0x10] sm:$0xff]
  %v5011 = vld [vmem:[#allocation5 + $0x18] sm:$0xff]
  %v5012 = vld [vmem:[#allocation5 + $0x20] sm:$0xff]
  %v5013 = vld [vmem:[#allocation5 + $0x28] sm:$0xff]
  %v5014 = vld [vmem:[#allocation5 + $0x30] sm:$0xff]
  %v5015 = vld [vmem:[#allocation5 + $0x38] sm:$0xff]
  %v5016 = vld [vmem:[#allocation5 + $0x40] sm:$0xff]
  %v5017 = vld [vmem:[#allocation5 + $0x48] sm:$0xff]
  %v5018 = vld [vmem:[#allocation5 + $0x50] sm:$0xff]
  %v5019 = vld [vmem:[#allocation5 + $0x58] sm:$0xff]
  %v5020 = vld [vmem:[#allocation5 + $0x60] sm:$0xff]
  %v5021 = vld [vmem:[#allocation5 + $0x68] sm:$0xff]
  %v5022 = vld [vmem:[#allocation5 + $0x70] sm:$0xff]
  %v5023 = vld [vmem:[#allocation5 + $0x78] sm:$0xff]
  %v5024 = vld [vmem:[#allocation5 + $0x80] sm:$0xff]
  %v5025 = vld [vmem:[#allocation5 + $0x88] sm:$0xff]
  %v5026 = vld [vmem:[#allocation5 + $0x90] sm:$0xff]
  %v5027 = vld [vmem:[#allocation5 + $0x98] sm:$0xff]
  %v5028 = vld [vmem:[#allocation5 + $0xa0] sm:$0xff]
  %v5029 = vld [vmem:[#allocation5 + $0xa8] sm:$0xff]
  %v5030 = vld [vmem:[#allocation5 + $0xb0] sm:$0xff]
  %v5031 = vld [vmem:[#allocation5 + $0xb8] sm:$0xff]
  %v5032 = vld [vmem:[#allocation5 + $0xc0] sm:$0xff]
  %v5033 = vld [vmem:[#allocation5 + $0xc8] sm:$0xff]
  %v5034 = vld [vmem:[#allocation5 + $0xd0] sm:$0xff]
  %v5035 = vld [vmem:[#allocation5 + $0xd8] sm:$0xff]
  %v5036 = vld [vmem:[#allocation5 + $0xe0] sm:$0xff]
  %v5037 = vld [vmem:[#allocation5 + $0xe8] sm:$0xff]
  %v5038 = vld [vmem:[#allocation5 + $0xf0] sm:$0xff]
  %v5039 = vld [vmem:[#allocation5 + $0xf8] sm:$0xff]
  %v5040 = vld [vmem:[%s17] sm:$0xff]
  %v5041 = vld [vmem:[%s17 + $0x8] sm:$0xff]
  %v5044 = vperm.slane %v5040, 0
  %v5045 = vperm.slane %v5040, 1
  %v5046 = vperm.slane %v5040, 2
  %v5047 = vperm.slane %v5040, 3
  %v5048 = vperm.slane %v5040, 4
  %v5049 = vperm.slane %v5040, 5
  %v5050 = vperm.slane %v5040, 6
  %v5051 = vperm.slane %v5040, 7
  %v5052 = vperm.slane %v5041, 0
  %v5053 = vperm.slane %v5041, 1
  %v5054 = vperm.slane %v5041, 2
  %v5055 = vperm.slane %v5041, 3
  %v5056 = vperm.slane %v5041, 4
  %v5057 = vperm.slane %v5041, 5
  %v5058 = vperm.slane %v5041, 6
  %v5059 = vperm.slane %v5041, 7
  %v5108 = vunpack.c.l.b16 %v5008
  %v5109 = vunpack.c.h.b16 %v5008
  %v5110 = vunpack.c.l.b16 %v5009
  %v5111 = vunpack.c.h.b16 %v5009
  %v5112 = vunpack.c.l.b16 %v5010
  %v5113 = vunpack.c.h.b16 %v5010
  %v5114 = vunpack.c.l.b16 %v5011
  %v5115 = vunpack.c.h.b16 %v5011
  %v5116 = vunpack.c.l.b16 %v5012
  %v5117 = vunpack.c.h.b16 %v5012
  %v5118 = vunpack.c.l.b16 %v5013
  %v5119 = vunpack.c.h.b16 %v5013
  %v5120 = vunpack.c.l.b16 %v5014
  %v5121 = vunpack.c.h.b16 %v5014
  %v5122 = vunpack.c.l.b16 %v5015
  %v5123 = vunpack.c.h.b16 %v5015
  %v5124 = vunpack.c.l.b16 %v5016
  %v5125 = vunpack.c.h.b16 %v5016
  %v5126 = vunpack.c.l.b16 %v5017
  %v5127 = vunpack.c.h.b16 %v5017
  %v5128 = vunpack.c.l.b16 %v5018
  %v5129 = vunpack.c.h.b16 %v5018
  %v5130 = vunpack.c.l.b16 %v5019
  %v5131 = vunpack.c.h.b16 %v5019
  %v5132 = vunpack.c.l.b16 %v5020
  %v5133 = vunpack.c.h.b16 %v5020
  %v5134 = vunpack.c.l.b16 %v5021
  %v5135 = vunpack.c.h.b16 %v5021
  %v5136 = vunpack.c.l.b16 %v5022
  %v5137 = vunpack.c.h.b16 %v5022
  %v5138 = vunpack.c.l.b16 %v5023
  %v5139 = vunpack.c.h.b16 %v5023
  %v5140 = vunpack.c.l.b16 %v5024
  %v5141 = vunpack.c.h.b16 %v5024
  %v5142 = vunpack.c.l.b16 %v5025
  %v5143 = vunpack.c.h.b16 %v5025
  %v5144 = vunpack.c.l.b16 %v5026
  %v5145 = vunpack.c.h.b16 %v5026
  %v5146 = vunpack.c.l.b16 %v5027
  %v5147 = vunpack.c.h.b16 %v5027
  %v5148 = vunpack.c.l.b16 %v5028
  %v5149 = vunpack.c.h.b16 %v5028
  %v5150 = vunpack.c.l.b16 %v5029
  %v5151 = vunpack.c.h.b16 %v5029
  %v5152 = vunpack.c.l.b16 %v5030
  %v5153 = vunpack.c.h.b16 %v5030
  %v5154 = vunpack.c.l.b16 %v5031
  %v5155 = vunpack.c.h.b16 %v5031
  %v5156 = vunpack.c.l.b16 %v5032
  %v5157 = vunpack.c.h.b16 %v5032
  %v5158 = vunpack.c.l.b16 %v5033
  %v5159 = vunpack.c.h.b16 %v5033
  %v5160 = vunpack.c.l.b16 %v5034
  %v5161 = vunpack.c.h.b16 %v5034
  %v5162 = vunpack.c.l.b16 %v5035
  %v5163 = vunpack.c.h.b16 %v5035
  %v5164 = vunpack.c.l.b16 %v5036
  %v5165 = vunpack.c.h.b16 %v5036
  %v5166 = vunpack.c.l.b16 %v5037
  %v5167 = vunpack.c.h.b16 %v5037
  %v5168 = vunpack.c.l.b16 %v5038
  %v5169 = vunpack.c.h.b16 %v5038
  %v5170 = vunpack.c.l.b16 %v5039
  %v5171 = vunpack.c.h.b16 %v5039
  %v5172 = vpack.c.b16 %v5124, %v5108
  %v5173 = vpack.c.b16 %v5125, %v5109
  %v5174 = vpack.c.b16 %v5126, %v5110
  %v5175 = vpack.c.b16 %v5127, %v5111
  %v5176 = vpack.c.b16 %v5128, %v5112
  %v5177 = vpack.c.b16 %v5129, %v5113
  %v5178 = vpack.c.b16 %v5130, %v5114
  %v5179 = vpack.c.b16 %v5131, %v5115
  %v5180 = vpack.c.b16 %v5132, %v5116
  %v5181 = vpack.c.b16 %v5133, %v5117
  %v5182 = vpack.c.b16 %v5134, %v5118
  %v5183 = vpack.c.b16 %v5135, %v5119
  %v5184 = vpack.c.b16 %v5136, %v5120
  %v5185 = vpack.c.b16 %v5137, %v5121
  %v5186 = vpack.c.b16 %v5138, %v5122
  %v5187 = vpack.c.b16 %v5139, %v5123
  %v5188 = vpack.c.b16 %v5156, %v5140
  %v5189 = vpack.c.b16 %v5157, %v5141
  %v5190 = vpack.c.b16 %v5158, %v5142
  %v5191 = vpack.c.b16 %v5159, %v5143
  %v5192 = vpack.c.b16 %v5160, %v5144
  %v5193 = vpack.c.b16 %v5161, %v5145
  %v5194 = vpack.c.b16 %v5162, %v5146
  %v5195 = vpack.c.b16 %v5163, %v5147
  %v5196 = vpack.c.b16 %v5164, %v5148
  %v5197 = vpack.c.b16 %v5165, %v5149
  %v5198 = vpack.c.b16 %v5166, %v5150
  %v5199 = vpack.c.b16 %v5167, %v5151
  %v5200 = vpack.c.b16 %v5168, %v5152
  %v5201 = vpack.c.b16 %v5169, %v5153
  %v5202 = vpack.c.b16 %v5170, %v5154
  %v5203 = vpack.c.b16 %v5171, %v5155
  %v5237 = vsel %vm479, %v5007, 0
  %5239 = vmatpush.bf16.msra.mxu0 0
  %5240 = vmatpush.bf16.msra.mxu0 0
  %5241 = vmatpush.bf16.msra.mxu0 0
  %5242 = vmatpush.bf16.msra.mxu0 0
  %5243 = vmatpush.bf16.msra.mxu0 0
  %5244 = vmatpush.bf16.msra.mxu0 0
  %5245 = vmatpush.bf16.msra.mxu0 %v5188
  %5246 = vmatpush.bf16.msra.mxu0 %v5172
  %5247 = vmatmul.bf16.gmra.mxu0 %v5237
  %v5248 = vpop.f32.mrf.mxu0
  %v5249 = vadd.f32 %v5044, %v5248
  %v5250 = vpop.f32.mrf.mxu0
  %v5251 = vadd.f32 %v5044, %v5250
  %5252 = vdwg.mxu0
  %5253 = vmatpush.bf16.msra.mxu0 0
  %5254 = vmatpush.bf16.msra.mxu0 0
  %5255 = vmatpush.bf16.msra.mxu0 0
  %5256 = vmatpush.bf16.msra.mxu0 0
  %5257 = vmatpush.bf16.msra.mxu0 0
  %5258 = vmatpush.bf16.msra.mxu0 0
  %5259 = vmatpush.bf16.msra.mxu0 %v5189
  %5260 = vmatpush.bf16.msra.mxu0 %v5173
  %5261 = vmatmul.bf16.gmra.mxu0 %v5237
  %v5262 = vpop.f32.mrf.mxu0
  %v5263 = vadd.f32 %v5045, %v5262
  %v5264 = vpop.f32.mrf.mxu0
  %v5265 = vadd.f32 %v5045, %v5264
  %5266 = vdwg.mxu0
  %5267 = vmatpush.bf16.msra.mxu0 0
  %5268 = vmatpush.bf16.msra.mxu0 0
  %5269 = vmatpush.bf16.msra.mxu0 0
  %5270 = vmatpush.bf16.msra.mxu0 0
  %5271 = vmatpush.bf16.msra.mxu0 0
  %5272 = vmatpush.bf16.msra.mxu0 0
  %5273 = vmatpush.bf16.msra.mxu0 %v5190
  %5274 = vmatpush.bf16.msra.mxu0 %v5174
  %5275 = vmatmul.bf16.gmra.mxu0 %v5237
  %v5276 = vpop.f32.mrf.mxu0
  %v5277 = vadd.f32 %v5046, %v5276
  %v5278 = vpop.f32.mrf.mxu0
  %v5279 = vadd.f32 %v5046, %v5278
  %5280 = vdwg.mxu0
  %5281 = vmatpush.bf16.msra.mxu0 0
  %5282 = vmatpush.bf16.msra.mxu0 0
  %5283 = vmatpush.bf16.msra.mxu0 0
  %5284 = vmatpush.bf16.msra.mxu0 0
  %5285 = vmatpush.bf16.msra.mxu0 0
  %5286 = vmatpush.bf16.msra.mxu0 0
  %5287 = vmatpush.bf16.msra.mxu0 %v5191
  %5288 = vmatpush.bf16.msra.mxu0 %v5175
  %5289 = vmatmul.bf16.gmra.mxu0 %v5237
  %v5290 = vpop.f32.mrf.mxu0
  %v5291 = vadd.f32 %v5047, %v5290
  %v5292 = vpop.f32.mrf.mxu0
  %v5293 = vadd.f32 %v5047, %v5292
  %5294 = vdwg.mxu0
  %5295 = vmatpush.bf16.msra.mxu0 0
  %5296 = vmatpush.bf16.msra.mxu0 0
  %5297 = vmatpush.bf16.msra.mxu0 0
  %5298 = vmatpush.bf16.msra.mxu0 0
  %5299 = vmatpush.bf16.msra.mxu0 0
  %5300 = vmatpush.bf16.msra.mxu0 0
  %5301 = vmatpush.bf16.msra.mxu0 %v5192
  %5302 = vmatpush.bf16.msra.mxu0 %v5176
  %5303 = vmatmul.bf16.gmra.mxu0 %v5237
  %v5304 = vpop.f32.mrf.mxu0
  %v5305 = vadd.f32 %v5048, %v5304
  %v5306 = vpop.f32.mrf.mxu0
  %v5307 = vadd.f32 %v5048, %v5306
  %5308 = vdwg.mxu0
  %5309 = vmatpush.bf16.msra.mxu0 0
  %5310 = vmatpush.bf16.msra.mxu0 0
  %5311 = vmatpush.bf16.msra.mxu0 0
  %5312 = vmatpush.bf16.msra.mxu0 0
  %5313 = vmatpush.bf16.msra.mxu0 0
  %5314 = vmatpush.bf16.msra.mxu0 0
  %5315 = vmatpush.bf16.msra.mxu0 %v5193
  %5316 = vmatpush.bf16.msra.mxu0 %v5177
  %5317 = vmatmul.bf16.gmra.mxu0 %v5237
  %v5318 = vpop.f32.mrf.mxu0
  %v5319 = vadd.f32 %v5049, %v5318
  %v5320 = vpop.f32.mrf.mxu0
  %v5321 = vadd.f32 %v5049, %v5320
  %5322 = vdwg.mxu0
  %5323 = vmatpush.bf16.msra.mxu0 0
  %5324 = vmatpush.bf16.msra.mxu0 0
  %5325 = vmatpush.bf16.msra.mxu0 0
  %5326 = vmatpush.bf16.msra.mxu0 0
  %5327 = vmatpush.bf16.msra.mxu0 0
  %5328 = vmatpush.bf16.msra.mxu0 0
  %5329 = vmatpush.bf16.msra.mxu0 %v5194
  %5330 = vmatpush.bf16.msra.mxu0 %v5178
  %5331 = vmatmul.bf16.gmra.mxu0 %v5237
  %v5332 = vpop.f32.mrf.mxu0
  %v5333 = vadd.f32 %v5050, %v5332
  %v5334 = vpop.f32.mrf.mxu0
  %v5335 = vadd.f32 %v5050, %v5334
  %5336 = vdwg.mxu0
  %5337 = vmatpush.bf16.msra.mxu0 0
  %5338 = vmatpush.bf16.msra.mxu0 0
  %5339 = vmatpush.bf16.msra.mxu0 0
  %5340 = vmatpush.bf16.msra.mxu0 0
  %5341 = vmatpush.bf16.msra.mxu0 0
  %5342 = vmatpush.bf16.msra.mxu0 0
  %5343 = vmatpush.bf16.msra.mxu0 %v5195
  %5344 = vmatpush.bf16.msra.mxu0 %v5179
  %5345 = vmatmul.bf16.gmra.mxu0 %v5237
  %v5346 = vpop.f32.mrf.mxu0
  %v5347 = vadd.f32 %v5051, %v5346
  %v5348 = vpop.f32.mrf.mxu0
  %v5349 = vadd.f32 %v5051, %v5348
  %5350 = vdwg.mxu0
  %5351 = vmatpush.bf16.msra.mxu0 0
  %5352 = vmatpush.bf16.msra.mxu0 0
  %5353 = vmatpush.bf16.msra.mxu0 0
  %5354 = vmatpush.bf16.msra.mxu0 0
  %5355 = vmatpush.bf16.msra.mxu0 0
  %5356 = vmatpush.bf16.msra.mxu0 0
  %5357 = vmatpush.bf16.msra.mxu0 %v5196
  %5358 = vmatpush.bf16.msra.mxu0 %v5180
  %5359 = vmatmul.bf16.gmra.mxu0 %v5237
  %v5360 = vpop.f32.mrf.mxu0
  %v5361 = vadd.f32 %v5052, %v5360
  %v5362 = vpop.f32.mrf.mxu0
  %v5363 = vadd.f32 %v5052, %v5362
  %5364 = vdwg.mxu0
  %5365 = vmatpush.bf16.msra.mxu0 0
  %5366 = vmatpush.bf16.msra.mxu0 0
  %5367 = vmatpush.bf16.msra.mxu0 0
  %5368 = vmatpush.bf16.msra.mxu0 0
  %5369 = vmatpush.bf16.msra.mxu0 0
  %5370 = vmatpush.bf16.msra.mxu0 0
  %5371 = vmatpush.bf16.msra.mxu0 %v5197
  %5372 = vmatpush.bf16.msra.mxu0 %v5181
  %5373 = vmatmul.bf16.gmra.mxu0 %v5237
  %v5374 = vpop.f32.mrf.mxu0
  %v5375 = vadd.f32 %v5053, %v5374
  %v5376 = vpop.f32.mrf.mxu0
  %v5377 = vadd.f32 %v5053, %v5376
  %5378 = vdwg.mxu0
  %5379 = vmatpush.bf16.msra.mxu0 0
  %5380 = vmatpush.bf16.msra.mxu0 0
  %5381 = vmatpush.bf16.msra.mxu0 0
  %5382 = vmatpush.bf16.msra.mxu0 0
  %5383 = vmatpush.bf16.msra.mxu0 0
  %5384 = vmatpush.bf16.msra.mxu0 0
  %5385 = vmatpush.bf16.msra.mxu0 %v5198
  %5386 = vmatpush.bf16.msra.mxu0 %v5182
  %5387 = vmatmul.bf16.gmra.mxu0 %v5237
  %v5388 = vpop.f32.mrf.mxu0
  %v5389 = vadd.f32 %v5054, %v5388
  %v5390 = vpop.f32.mrf.mxu0
  %v5391 = vadd.f32 %v5054, %v5390
  %5392 = vdwg.mxu0
  %5393 = vmatpush.bf16.msra.mxu0 0
  %5394 = vmatpush.bf16.msra.mxu0 0
  %5395 = vmatpush.bf16.msra.mxu0 0
  %5396 = vmatpush.bf16.msra.mxu0 0
  %5397 = vmatpush.bf16.msra.mxu0 0
  %5398 = vmatpush.bf16.msra.mxu0 0
  %5399 = vmatpush.bf16.msra.mxu0 %v5199
  %5400 = vmatpush.bf16.msra.mxu0 %v5183
  %5401 = vmatmul.bf16.gmra.mxu0 %v5237
  %v5402 = vpop.f32.mrf.mxu0
  %v5403 = vadd.f32 %v5055, %v5402
  %v5404 = vpop.f32.mrf.mxu0
  %v5405 = vadd.f32 %v5055, %v5404
  %5406 = vdwg.mxu0
  %5407 = vmatpush.bf16.msra.mxu0 0
  %5408 = vmatpush.bf16.msra.mxu0 0
  %5409 = vmatpush.bf16.msra.mxu0 0
  %5410 = vmatpush.bf16.msra.mxu0 0
  %5411 = vmatpush.bf16.msra.mxu0 0
  %5412 = vmatpush.bf16.msra.mxu0 0
  %5413 = vmatpush.bf16.msra.mxu0 %v5200
  %5414 = vmatpush.bf16.msra.mxu0 %v5184
  %5415 = vmatmul.bf16.gmra.mxu0 %v5237
  %v5416 = vpop.f32.mrf.mxu0
  %v5417 = vadd.f32 %v5056, %v5416
  %v5418 = vpop.f32.mrf.mxu0
  %v5419 = vadd.f32 %v5056, %v5418
  %5420 = vdwg.mxu0
  %5421 = vmatpush.bf16.msra.mxu0 0
  %5422 = vmatpush.bf16.msra.mxu0 0
  %5423 = vmatpush.bf16.msra.mxu0 0
  %5424 = vmatpush.bf16.msra.mxu0 0
  %5425 = vmatpush.bf16.msra.mxu0 0
  %5426 = vmatpush.bf16.msra.mxu0 0
  %5427 = vmatpush.bf16.msra.mxu0 %v5201
  %5428 = vmatpush.bf16.msra.mxu0 %v5185
  %5429 = vmatmul.bf16.gmra.mxu0 %v5237
  %v5430 = vpop.f32.mrf.mxu0
  %v5431 = vadd.f32 %v5057, %v5430
  %v5432 = vpop.f32.mrf.mxu0
  %v5433 = vadd.f32 %v5057, %v5432
  %5434 = vdwg.mxu0
  %5435 = vmatpush.bf16.msra.mxu0 0
  %5436 = vmatpush.bf16.msra.mxu0 0
  %5437 = vmatpush.bf16.msra.mxu0 0
  %5438 = vmatpush.bf16.msra.mxu0 0
  %5439 = vmatpush.bf16.msra.mxu0 0
  %5440 = vmatpush.bf16.msra.mxu0 0
  %5441 = vmatpush.bf16.msra.mxu0 %v5202
  %5442 = vmatpush.bf16.msra.mxu0 %v5186
  %5443 = vmatmul.bf16.gmra.mxu0 %v5237
  %v5444 = vpop.f32.mrf.mxu0
  %v5445 = vadd.f32 %v5058, %v5444
  %v5446 = vpop.f32.mrf.mxu0
  %v5447 = vadd.f32 %v5058, %v5446
  %5448 = vdwg.mxu0
  %5449 = vmatpush.bf16.msra.mxu0 0
  %5450 = vmatpush.bf16.msra.mxu0 0
  %5451 = vmatpush.bf16.msra.mxu0 0
  %5452 = vmatpush.bf16.msra.mxu0 0
  %5453 = vmatpush.bf16.msra.mxu0 0
  %5454 = vmatpush.bf16.msra.mxu0 0
  %5455 = vmatpush.bf16.msra.mxu0 %v5203
  %5456 = vmatpush.bf16.msra.mxu0 %v5187
  %5457 = vmatmul.bf16.gmra.mxu0 %v5237
  %v5458 = vpop.f32.mrf.mxu0
  %v5459 = vadd.f32 %v5059, %v5458
  %v5460 = vpop.f32.mrf.mxu0
  %v5461 = vadd.f32 %v5059, %v5460
  %5462 = vdwg.mxu0
  %v5463 = vmax.f32 %v5249, 0.0
  %v5464 = vmax.f32 %v5263, 0.0
  %v5465 = vmax.f32 %v5277, 0.0
  %v5466 = vmax.f32 %v5291, 0.0
  %v5467 = vmax.f32 %v5305, 0.0
  %v5468 = vmax.f32 %v5319, 0.0
  %v5469 = vmax.f32 %v5333, 0.0
  %v5470 = vmax.f32 %v5347, 0.0
  %v5471 = vmax.f32 %v5361, 0.0
  %v5472 = vmax.f32 %v5375, 0.0
  %v5473 = vmax.f32 %v5389, 0.0
  %v5474 = vmax.f32 %v5403, 0.0
  %v5475 = vmax.f32 %v5417, 0.0
  %v5476 = vmax.f32 %v5431, 0.0
  %v5477 = vmax.f32 %v5445, 0.0
  %v5478 = vmax.f32 %v5459, 0.0
  %v5479 = vmax.f32 %v5251, 0.0
  %v5480 = vmax.f32 %v5265, 0.0
  %v5481 = vmax.f32 %v5279, 0.0
  %v5482 = vmax.f32 %v5293, 0.0
  %v5483 = vmax.f32 %v5307, 0.0
  %v5484 = vmax.f32 %v5321, 0.0
  %v5485 = vmax.f32 %v5335, 0.0
  %v5486 = vmax.f32 %v5349, 0.0
  %v5487 = vmax.f32 %v5363, 0.0
  %v5488 = vmax.f32 %v5377, 0.0
  %v5489 = vmax.f32 %v5391, 0.0
  %v5490 = vmax.f32 %v5405, 0.0
  %v5491 = vmax.f32 %v5419, 0.0
  %v5492 = vmax.f32 %v5433, 0.0
  %v5493 = vmax.f32 %v5447, 0.0
  %v5494 = vmax.f32 %v5461, 0.0
  %s5495 = sshll.u32 %s3133, 4
  %5496 = dma.done %s1795, %s5495
  %v5497 = vpack.c.bf16 %v5479, %v5463
  %v5498 = vpack.c.bf16 %v5480, %v5464
  %v5499 = vpack.c.bf16 %v5481, %v5465
  %v5500 = vpack.c.bf16 %v5482, %v5466
  %v5501 = vpack.c.bf16 %v5483, %v5467
  %v5502 = vpack.c.bf16 %v5484, %v5468
  %v5503 = vpack.c.bf16 %v5485, %v5469
  %v5504 = vpack.c.bf16 %v5486, %v5470
  %v5505 = vpack.c.bf16 %v5487, %v5471
  %v5506 = vpack.c.bf16 %v5488, %v5472
  %v5507 = vpack.c.bf16 %v5489, %v5473
  %v5508 = vpack.c.bf16 %v5490, %v5474
  %v5509 = vpack.c.bf16 %v5491, %v5475
  %v5510 = vpack.c.bf16 %v5492, %v5476
  %v5511 = vpack.c.bf16 %v5493, %v5477
  %v5512 = vpack.c.bf16 %v5494, %v5478
  %v5513 = vld [vmem:[#allocation6] sm:$0xf]
  %v5514 = vld [vmem:[#allocation6 + $0x4] sm:$0xf]
  %v5515 = vld [vmem:[#allocation6 + $0x8] sm:$0xf]
  %v5516 = vld [vmem:[#allocation6 + $0xc] sm:$0xf]
  %v5517 = vld [vmem:[#allocation6 + $0x10] sm:$0xf]
  %v5518 = vld [vmem:[#allocation6 + $0x14] sm:$0xf]
  %v5519 = vld [vmem:[#allocation6 + $0x18] sm:$0xf]
  %v5520 = vld [vmem:[#allocation6 + $0x1c] sm:$0xf]
  %v5521 = vld [vmem:[#allocation6 + $0x20] sm:$0xf]
  %v5522 = vld [vmem:[#allocation6 + $0x24] sm:$0xf]
  %v5523 = vld [vmem:[#allocation6 + $0x28] sm:$0xf]
  %v5524 = vld [vmem:[#allocation6 + $0x2c] sm:$0xf]
  %v5525 = vld [vmem:[#allocation6 + $0x30] sm:$0xf]
  %v5526 = vld [vmem:[#allocation6 + $0x34] sm:$0xf]
  %v5527 = vld [vmem:[#allocation6 + $0x38] sm:$0xf]
  %v5528 = vld [vmem:[#allocation6 + $0x3c] sm:$0xf]
  %v5529 = vld [vmem:[#allocation6 + $0x40] sm:$0xf]
  %v5530 = vld [vmem:[#allocation6 + $0x44] sm:$0xf]
  %v5531 = vld [vmem:[#allocation6 + $0x48] sm:$0xf]
  %v5532 = vld [vmem:[#allocation6 + $0x4c] sm:$0xf]
  %v5533 = vld [vmem:[#allocation6 + $0x50] sm:$0xf]
  %v5534 = vld [vmem:[#allocation6 + $0x54] sm:$0xf]
  %v5535 = vld [vmem:[#allocation6 + $0x58] sm:$0xf]
  %v5536 = vld [vmem:[#allocation6 + $0x5c] sm:$0xf]
  %v5537 = vld [vmem:[#allocation6 + $0x60] sm:$0xf]
  %v5538 = vld [vmem:[#allocation6 + $0x64] sm:$0xf]
  %v5539 = vld [vmem:[#allocation6 + $0x68] sm:$0xf]
  %v5540 = vld [vmem:[#allocation6 + $0x6c] sm:$0xf]
  %v5541 = vld [vmem:[#allocation6 + $0x70] sm:$0xf]
  %v5542 = vld [vmem:[#allocation6 + $0x74] sm:$0xf]
  %v5543 = vld [vmem:[#allocation6 + $0x78] sm:$0xf]
  %v5544 = vld [vmem:[#allocation6 + $0x7c] sm:$0xf]
  %v5545 = vld [vmem:[#allocation6 + $0x80] sm:$0xf]
  %v5546 = vld [vmem:[#allocation6 + $0x84] sm:$0xf]
  %v5547 = vld [vmem:[#allocation6 + $0x88] sm:$0xf]
  %v5548 = vld [vmem:[#allocation6 + $0x8c] sm:$0xf]
  %v5549 = vld [vmem:[#allocation6 + $0x90] sm:$0xf]
  %v5550 = vld [vmem:[#allocation6 + $0x94] sm:$0xf]
  %v5551 = vld [vmem:[#allocation6 + $0x98] sm:$0xf]
  %v5552 = vld [vmem:[#allocation6 + $0x9c] sm:$0xf]
  %v5553 = vld [vmem:[#allocation6 + $0xa0] sm:$0xf]
  %v5554 = vld [vmem:[#allocation6 + $0xa4] sm:$0xf]
  %v5555 = vld [vmem:[#allocation6 + $0xa8] sm:$0xf]
  %v5556 = vld [vmem:[#allocation6 + $0xac] sm:$0xf]
  %v5557 = vld [vmem:[#allocation6 + $0xb0] sm:$0xf]
  %v5558 = vld [vmem:[#allocation6 + $0xb4] sm:$0xf]
  %v5559 = vld [vmem:[#allocation6 + $0xb8] sm:$0xf]
  %v5560 = vld [vmem:[#allocation6 + $0xbc] sm:$0xf]
  %v5561 = vld [vmem:[#allocation6 + $0xc0] sm:$0xf]
  %v5562 = vld [vmem:[#allocation6 + $0xc4] sm:$0xf]
  %v5563 = vld [vmem:[#allocation6 + $0xc8] sm:$0xf]
  %v5564 = vld [vmem:[#allocation6 + $0xcc] sm:$0xf]
  %v5565 = vld [vmem:[#allocation6 + $0xd0] sm:$0xf]
  %v5566 = vld [vmem:[#allocation6 + $0xd4] sm:$0xf]
  %v5567 = vld [vmem:[#allocation6 + $0xd8] sm:$0xf]
  %v5568 = vld [vmem:[#allocation6 + $0xdc] sm:$0xf]
  %v5569 = vld [vmem:[#allocation6 + $0xe0] sm:$0xf]
  %v5570 = vld [vmem:[#allocation6 + $0xe4] sm:$0xf]
  %v5571 = vld [vmem:[#allocation6 + $0xe8] sm:$0xf]
  %v5572 = vld [vmem:[#allocation6 + $0xec] sm:$0xf]
  %v5573 = vld [vmem:[#allocation6 + $0xf0] sm:$0xf]
  %v5574 = vld [vmem:[#allocation6 + $0xf4] sm:$0xf]
  %v5575 = vld [vmem:[#allocation6 + $0xf8] sm:$0xf]
  %v5576 = vld [vmem:[#allocation6 + $0xfc] sm:$0xf]
  %v5577 = vld [vmem:[#allocation6 + $0x100] sm:$0xf]
  %v5578 = vld [vmem:[#allocation6 + $0x104] sm:$0xf]
  %v5579 = vld [vmem:[#allocation6 + $0x108] sm:$0xf]
  %v5580 = vld [vmem:[#allocation6 + $0x10c] sm:$0xf]
  %v5581 = vld [vmem:[#allocation6 + $0x110] sm:$0xf]
  %v5582 = vld [vmem:[#allocation6 + $0x114] sm:$0xf]
  %v5583 = vld [vmem:[#allocation6 + $0x118] sm:$0xf]
  %v5584 = vld [vmem:[#allocation6 + $0x11c] sm:$0xf]
  %v5585 = vld [vmem:[#allocation6 + $0x120] sm:$0xf]
  %v5586 = vld [vmem:[#allocation6 + $0x124] sm:$0xf]
  %v5587 = vld [vmem:[#allocation6 + $0x128] sm:$0xf]
  %v5588 = vld [vmem:[#allocation6 + $0x12c] sm:$0xf]
  %v5589 = vld [vmem:[#allocation6 + $0x130] sm:$0xf]
  %v5590 = vld [vmem:[#allocation6 + $0x134] sm:$0xf]
  %v5591 = vld [vmem:[#allocation6 + $0x138] sm:$0xf]
  %v5592 = vld [vmem:[#allocation6 + $0x13c] sm:$0xf]
  %v5593 = vld [vmem:[#allocation6 + $0x140] sm:$0xf]
  %v5594 = vld [vmem:[#allocation6 + $0x144] sm:$0xf]
  %v5595 = vld [vmem:[#allocation6 + $0x148] sm:$0xf]
  %v5596 = vld [vmem:[#allocation6 + $0x14c] sm:$0xf]
  %v5597 = vld [vmem:[#allocation6 + $0x150] sm:$0xf]
  %v5598 = vld [vmem:[#allocation6 + $0x154] sm:$0xf]
  %v5599 = vld [vmem:[#allocation6 + $0x158] sm:$0xf]
  %v5600 = vld [vmem:[#allocation6 + $0x15c] sm:$0xf]
  %v5601 = vld [vmem:[#allocation6 + $0x160] sm:$0xf]
  %v5602 = vld [vmem:[#allocation6 + $0x164] sm:$0xf]
  %v5603 = vld [vmem:[#allocation6 + $0x168] sm:$0xf]
  %v5604 = vld [vmem:[#allocation6 + $0x16c] sm:$0xf]
  %v5605 = vld [vmem:[#allocation6 + $0x170] sm:$0xf]
  %v5606 = vld [vmem:[#allocation6 + $0x174] sm:$0xf]
  %v5607 = vld [vmem:[#allocation6 + $0x178] sm:$0xf]
  %v5608 = vld [vmem:[#allocation6 + $0x17c] sm:$0xf]
  %v5609 = vld [vmem:[#allocation6 + $0x180] sm:$0xf]
  %v5610 = vld [vmem:[#allocation6 + $0x184] sm:$0xf]
  %v5611 = vld [vmem:[#allocation6 + $0x188] sm:$0xf]
  %v5612 = vld [vmem:[#allocation6 + $0x18c] sm:$0xf]
  %v5613 = vld [vmem:[#allocation6 + $0x190] sm:$0xf]
  %v5614 = vld [vmem:[#allocation6 + $0x194] sm:$0xf]
  %v5615 = vld [vmem:[#allocation6 + $0x198] sm:$0xf]
  %v5616 = vld [vmem:[#allocation6 + $0x19c] sm:$0xf]
  %v5617 = vld [vmem:[#allocation6 + $0x1a0] sm:$0xf]
  %v5618 = vld [vmem:[#allocation6 + $0x1a4] sm:$0xf]
  %v5619 = vld [vmem:[#allocation6 + $0x1a8] sm:$0xf]
  %v5620 = vld [vmem:[#allocation6 + $0x1ac] sm:$0xf]
  %v5621 = vld [vmem:[#allocation6 + $0x1b0] sm:$0xf]
  %v5622 = vld [vmem:[#allocation6 + $0x1b4] sm:$0xf]
  %v5623 = vld [vmem:[#allocation6 + $0x1b8] sm:$0xf]
  %v5624 = vld [vmem:[#allocation6 + $0x1bc] sm:$0xf]
  %v5625 = vld [vmem:[#allocation6 + $0x1c0] sm:$0xf]
  %v5626 = vld [vmem:[#allocation6 + $0x1c4] sm:$0xf]
  %v5627 = vld [vmem:[#allocation6 + $0x1c8] sm:$0xf]
  %v5628 = vld [vmem:[#allocation6 + $0x1cc] sm:$0xf]
  %v5629 = vld [vmem:[#allocation6 + $0x1d0] sm:$0xf]
  %v5630 = vld [vmem:[#allocation6 + $0x1d4] sm:$0xf]
  %v5631 = vld [vmem:[#allocation6 + $0x1d8] sm:$0xf]
  %v5632 = vld [vmem:[#allocation6 + $0x1dc] sm:$0xf]
  %v5633 = vld [vmem:[#allocation6 + $0x1e0] sm:$0xf]
  %v5634 = vld [vmem:[#allocation6 + $0x1e4] sm:$0xf]
  %v5635 = vld [vmem:[#allocation6 + $0x1e8] sm:$0xf]
  %v5636 = vld [vmem:[#allocation6 + $0x1ec] sm:$0xf]
  %v5637 = vld [vmem:[#allocation6 + $0x1f0] sm:$0xf]
  %v5638 = vld [vmem:[#allocation6 + $0x1f4] sm:$0xf]
  %v5639 = vld [vmem:[#allocation6 + $0x1f8] sm:$0xf]
  %v5640 = vld [vmem:[#allocation6 + $0x1fc] sm:$0xf]
  %v5641 = vld [vmem:[#allocation6 + $0x200] sm:$0xf]
  %v5642 = vld [vmem:[#allocation6 + $0x204] sm:$0xf]
  %v5643 = vld [vmem:[#allocation6 + $0x208] sm:$0xf]
  %v5644 = vld [vmem:[#allocation6 + $0x20c] sm:$0xf]
  %v5645 = vld [vmem:[#allocation6 + $0x210] sm:$0xf]
  %v5646 = vld [vmem:[#allocation6 + $0x214] sm:$0xf]
  %v5647 = vld [vmem:[#allocation6 + $0x218] sm:$0xf]
  %v5648 = vld [vmem:[#allocation6 + $0x21c] sm:$0xf]
  %v5649 = vld [vmem:[#allocation6 + $0x220] sm:$0xf]
  %v5650 = vld [vmem:[#allocation6 + $0x224] sm:$0xf]
  %v5651 = vld [vmem:[#allocation6 + $0x228] sm:$0xf]
  %v5652 = vld [vmem:[#allocation6 + $0x22c] sm:$0xf]
  %v5653 = vld [vmem:[#allocation6 + $0x230] sm:$0xf]
  %v5654 = vld [vmem:[#allocation6 + $0x234] sm:$0xf]
  %v5655 = vld [vmem:[#allocation6 + $0x238] sm:$0xf]
  %v5656 = vld [vmem:[#allocation6 + $0x23c] sm:$0xf]
  %v5657 = vld [vmem:[#allocation6 + $0x240] sm:$0xf]
  %v5658 = vld [vmem:[#allocation6 + $0x244] sm:$0xf]
  %v5659 = vld [vmem:[#allocation6 + $0x248] sm:$0xf]
  %v5660 = vld [vmem:[#allocation6 + $0x24c] sm:$0xf]
  %v5661 = vld [vmem:[#allocation6 + $0x250] sm:$0xf]
  %v5662 = vld [vmem:[#allocation6 + $0x254] sm:$0xf]
  %v5663 = vld [vmem:[#allocation6 + $0x258] sm:$0xf]
  %v5664 = vld [vmem:[#allocation6 + $0x25c] sm:$0xf]
  %v5665 = vld [vmem:[#allocation6 + $0x260] sm:$0xf]
  %v5666 = vld [vmem:[#allocation6 + $0x264] sm:$0xf]
  %v5667 = vld [vmem:[#allocation6 + $0x268] sm:$0xf]
  %v5668 = vld [vmem:[#allocation6 + $0x26c] sm:$0xf]
  %v5669 = vld [vmem:[#allocation6 + $0x270] sm:$0xf]
  %v5670 = vld [vmem:[#allocation6 + $0x274] sm:$0xf]
  %v5671 = vld [vmem:[#allocation6 + $0x278] sm:$0xf]
  %v5672 = vld [vmem:[#allocation6 + $0x27c] sm:$0xf]
  %v5673 = vld [vmem:[#allocation6 + $0x280] sm:$0xf]
  %v5674 = vld [vmem:[#allocation6 + $0x284] sm:$0xf]
  %v5675 = vld [vmem:[#allocation6 + $0x288] sm:$0xf]
  %v5676 = vld [vmem:[#allocation6 + $0x28c] sm:$0xf]
  %v5677 = vld [vmem:[#allocation6 + $0x290] sm:$0xf]
  %v5678 = vld [vmem:[#allocation6 + $0x294] sm:$0xf]
  %v5679 = vld [vmem:[#allocation6 + $0x298] sm:$0xf]
  %v5680 = vld [vmem:[#allocation6 + $0x29c] sm:$0xf]
  %v5681 = vld [vmem:[#allocation6 + $0x2a0] sm:$0xf]
  %v5682 = vld [vmem:[#allocation6 + $0x2a4] sm:$0xf]
  %v5683 = vld [vmem:[#allocation6 + $0x2a8] sm:$0xf]
  %v5684 = vld [vmem:[#allocation6 + $0x2ac] sm:$0xf]
  %v5685 = vld [vmem:[#allocation6 + $0x2b0] sm:$0xf]
  %v5686 = vld [vmem:[#allocation6 + $0x2b4] sm:$0xf]
  %v5687 = vld [vmem:[#allocation6 + $0x2b8] sm:$0xf]
  %v5688 = vld [vmem:[#allocation6 + $0x2bc] sm:$0xf]
  %v5689 = vld [vmem:[#allocation6 + $0x2c0] sm:$0xf]
  %v5690 = vld [vmem:[#allocation6 + $0x2c4] sm:$0xf]
  %v5691 = vld [vmem:[#allocation6 + $0x2c8] sm:$0xf]
  %v5692 = vld [vmem:[#allocation6 + $0x2cc] sm:$0xf]
  %v5693 = vld [vmem:[#allocation6 + $0x2d0] sm:$0xf]
  %v5694 = vld [vmem:[#allocation6 + $0x2d4] sm:$0xf]
  %v5695 = vld [vmem:[#allocation6 + $0x2d8] sm:$0xf]
  %v5696 = vld [vmem:[#allocation6 + $0x2dc] sm:$0xf]
  %v5697 = vld [vmem:[#allocation6 + $0x2e0] sm:$0xf]
  %v5698 = vld [vmem:[#allocation6 + $0x2e4] sm:$0xf]
  %v5699 = vld [vmem:[#allocation6 + $0x2e8] sm:$0xf]
  %v5700 = vld [vmem:[#allocation6 + $0x2ec] sm:$0xf]
  %v5701 = vld [vmem:[#allocation6 + $0x2f0] sm:$0xf]
  %v5702 = vld [vmem:[#allocation6 + $0x2f4] sm:$0xf]
  %v5703 = vld [vmem:[#allocation6 + $0x2f8] sm:$0xf]
  %v5704 = vld [vmem:[#allocation6 + $0x2fc] sm:$0xf]
  %v5705 = vld [vmem:[#allocation6 + $0x300] sm:$0xf]
  %v5706 = vld [vmem:[#allocation6 + $0x304] sm:$0xf]
  %v5707 = vld [vmem:[#allocation6 + $0x308] sm:$0xf]
  %v5708 = vld [vmem:[#allocation6 + $0x30c] sm:$0xf]
  %v5709 = vld [vmem:[#allocation6 + $0x310] sm:$0xf]
  %v5710 = vld [vmem:[#allocation6 + $0x314] sm:$0xf]
  %v5711 = vld [vmem:[#allocation6 + $0x318] sm:$0xf]
  %v5712 = vld [vmem:[#allocation6 + $0x31c] sm:$0xf]
  %v5713 = vld [vmem:[#allocation6 + $0x320] sm:$0xf]
  %v5714 = vld [vmem:[#allocation6 + $0x324] sm:$0xf]
  %v5715 = vld [vmem:[#allocation6 + $0x328] sm:$0xf]
  %v5716 = vld [vmem:[#allocation6 + $0x32c] sm:$0xf]
  %v5717 = vld [vmem:[#allocation6 + $0x330] sm:$0xf]
  %v5718 = vld [vmem:[#allocation6 + $0x334] sm:$0xf]
  %v5719 = vld [vmem:[#allocation6 + $0x338] sm:$0xf]
  %v5720 = vld [vmem:[#allocation6 + $0x33c] sm:$0xf]
  %v5721 = vld [vmem:[#allocation6 + $0x340] sm:$0xf]
  %v5722 = vld [vmem:[#allocation6 + $0x344] sm:$0xf]
  %v5723 = vld [vmem:[#allocation6 + $0x348] sm:$0xf]
  %v5724 = vld [vmem:[#allocation6 + $0x34c] sm:$0xf]
  %v5725 = vld [vmem:[#allocation6 + $0x350] sm:$0xf]
  %v5726 = vld [vmem:[#allocation6 + $0x354] sm:$0xf]
  %v5727 = vld [vmem:[#allocation6 + $0x358] sm:$0xf]
  %v5728 = vld [vmem:[#allocation6 + $0x35c] sm:$0xf]
  %v5729 = vld [vmem:[#allocation6 + $0x360] sm:$0xf]
  %v5730 = vld [vmem:[#allocation6 + $0x364] sm:$0xf]
  %v5731 = vld [vmem:[#allocation6 + $0x368] sm:$0xf]
  %v5732 = vld [vmem:[#allocation6 + $0x36c] sm:$0xf]
  %v5733 = vld [vmem:[#allocation6 + $0x370] sm:$0xf]
  %v5734 = vld [vmem:[#allocation6 + $0x374] sm:$0xf]
  %v5735 = vld [vmem:[#allocation6 + $0x378] sm:$0xf]
  %v5736 = vld [vmem:[#allocation6 + $0x37c] sm:$0xf]
  %v5737 = vld [vmem:[#allocation6 + $0x380] sm:$0xf]
  %v5738 = vld [vmem:[#allocation6 + $0x384] sm:$0xf]
  %v5739 = vld [vmem:[#allocation6 + $0x388] sm:$0xf]
  %v5740 = vld [vmem:[#allocation6 + $0x38c] sm:$0xf]
  %v5741 = vld [vmem:[#allocation6 + $0x390] sm:$0xf]
  %v5742 = vld [vmem:[#allocation6 + $0x394] sm:$0xf]
  %v5743 = vld [vmem:[#allocation6 + $0x398] sm:$0xf]
  %v5744 = vld [vmem:[#allocation6 + $0x39c] sm:$0xf]
  %v5745 = vld [vmem:[#allocation6 + $0x3a0] sm:$0xf]
  %v5746 = vld [vmem:[#allocation6 + $0x3a4] sm:$0xf]
  %v5747 = vld [vmem:[#allocation6 + $0x3a8] sm:$0xf]
  %v5748 = vld [vmem:[#allocation6 + $0x3ac] sm:$0xf]
  %v5749 = vld [vmem:[#allocation6 + $0x3b0] sm:$0xf]
  %v5750 = vld [vmem:[#allocation6 + $0x3b4] sm:$0xf]
  %v5751 = vld [vmem:[#allocation6 + $0x3b8] sm:$0xf]
  %v5752 = vld [vmem:[#allocation6 + $0x3bc] sm:$0xf]
  %v5753 = vld [vmem:[#allocation6 + $0x3c0] sm:$0xf]
  %v5754 = vld [vmem:[#allocation6 + $0x3c4] sm:$0xf]
  %v5755 = vld [vmem:[#allocation6 + $0x3c8] sm:$0xf]
  %v5756 = vld [vmem:[#allocation6 + $0x3cc] sm:$0xf]
  %v5757 = vld [vmem:[#allocation6 + $0x3d0] sm:$0xf]
  %v5758 = vld [vmem:[#allocation6 + $0x3d4] sm:$0xf]
  %v5759 = vld [vmem:[#allocation6 + $0x3d8] sm:$0xf]
  %v5760 = vld [vmem:[#allocation6 + $0x3dc] sm:$0xf]
  %v5761 = vld [vmem:[#allocation6 + $0x3e0] sm:$0xf]
  %v5762 = vld [vmem:[#allocation6 + $0x3e4] sm:$0xf]
  %v5763 = vld [vmem:[#allocation6 + $0x3e8] sm:$0xf]
  %v5764 = vld [vmem:[#allocation6 + $0x3ec] sm:$0xf]
  %v5765 = vld [vmem:[#allocation6 + $0x3f0] sm:$0xf]
  %v5766 = vld [vmem:[#allocation6 + $0x3f4] sm:$0xf]
  %v5767 = vld [vmem:[#allocation6 + $0x3f8] sm:$0xf]
  %v5768 = vld [vmem:[#allocation6 + $0x3fc] sm:$0xf]
  %v5769 = vperm.slane %v4453, 5
  %v6026 = vunpack.c.l.b16 %v5513
  %v6027 = vunpack.c.l.b16 %v5514
  %v6028 = vunpack.c.l.b16 %v5515
  %v6029 = vunpack.c.l.b16 %v5516
  %v6030 = vunpack.c.l.b16 %v5517
  %v6031 = vunpack.c.l.b16 %v5518
  %v6032 = vunpack.c.l.b16 %v5519
  %v6033 = vunpack.c.l.b16 %v5520
  %v6034 = vunpack.c.l.b16 %v5521
  %v6035 = vunpack.c.l.b16 %v5522
  %v6036 = vunpack.c.l.b16 %v5523
  %v6037 = vunpack.c.l.b16 %v5524
  %v6038 = vunpack.c.l.b16 %v5525
  %v6039 = vunpack.c.l.b16 %v5526
  %v6040 = vunpack.c.l.b16 %v5527
  %v6041 = vunpack.c.l.b16 %v5528
  %v6042 = vunpack.c.l.b16 %v5529
  %v6043 = vunpack.c.l.b16 %v5530
  %v6044 = vunpack.c.l.b16 %v5531
  %v6045 = vunpack.c.l.b16 %v5532
  %v6046 = vunpack.c.l.b16 %v5533
  %v6047 = vunpack.c.l.b16 %v5534
  %v6048 = vunpack.c.l.b16 %v5535
  %v6049 = vunpack.c.l.b16 %v5536
  %v6050 = vunpack.c.l.b16 %v5537
  %v6051 = vunpack.c.l.b16 %v5538
  %v6052 = vunpack.c.l.b16 %v5539
  %v6053 = vunpack.c.l.b16 %v5540
  %v6054 = vunpack.c.l.b16 %v5541
  %v6055 = vunpack.c.l.b16 %v5542
  %v6056 = vunpack.c.l.b16 %v5543
  %v6057 = vunpack.c.l.b16 %v5544
  %v6058 = vunpack.c.l.b16 %v5545
  %v6059 = vunpack.c.l.b16 %v5546
  %v6060 = vunpack.c.l.b16 %v5547
  %v6061 = vunpack.c.l.b16 %v5548
  %v6062 = vunpack.c.l.b16 %v5549
  %v6063 = vunpack.c.l.b16 %v5550
  %v6064 = vunpack.c.l.b16 %v5551
  %v6065 = vunpack.c.l.b16 %v5552
  %v6066 = vunpack.c.l.b16 %v5553
  %v6067 = vunpack.c.l.b16 %v5554
  %v6068 = vunpack.c.l.b16 %v5555
  %v6069 = vunpack.c.l.b16 %v5556
  %v6070 = vunpack.c.l.b16 %v5557
  %v6071 = vunpack.c.l.b16 %v5558
  %v6072 = vunpack.c.l.b16 %v5559
  %v6073 = vunpack.c.l.b16 %v5560
  %v6074 = vunpack.c.l.b16 %v5561
  %v6075 = vunpack.c.l.b16 %v5562
  %v6076 = vunpack.c.l.b16 %v5563
  %v6077 = vunpack.c.l.b16 %v5564
  %v6078 = vunpack.c.l.b16 %v5565
  %v6079 = vunpack.c.l.b16 %v5566
  %v6080 = vunpack.c.l.b16 %v5567
  %v6081 = vunpack.c.l.b16 %v5568
  %v6082 = vunpack.c.l.b16 %v5569
  %v6083 = vunpack.c.l.b16 %v5570
  %v6084 = vunpack.c.l.b16 %v5571
  %v6085 = vunpack.c.l.b16 %v5572
  %v6086 = vunpack.c.l.b16 %v5573
  %v6087 = vunpack.c.l.b16 %v5574
  %v6088 = vunpack.c.l.b16 %v5575
  %v6089 = vunpack.c.l.b16 %v5576
  %v6090 = vunpack.c.l.b16 %v5577
  %v6091 = vunpack.c.l.b16 %v5578
  %v6092 = vunpack.c.l.b16 %v5579
  %v6093 = vunpack.c.l.b16 %v5580
  %v6094 = vunpack.c.l.b16 %v5581
  %v6095 = vunpack.c.l.b16 %v5582
  %v6096 = vunpack.c.l.b16 %v5583
  %v6097 = vunpack.c.l.b16 %v5584
  %v6098 = vunpack.c.l.b16 %v5585
  %v6099 = vunpack.c.l.b16 %v5586
  %v6100 = vunpack.c.l.b16 %v5587
  %v6101 = vunpack.c.l.b16 %v5588
  %v6102 = vunpack.c.l.b16 %v5589
  %v6103 = vunpack.c.l.b16 %v5590
  %v6104 = vunpack.c.l.b16 %v5591
  %v6105 = vunpack.c.l.b16 %v5592
  %v6106 = vunpack.c.l.b16 %v5593
  %v6107 = vunpack.c.l.b16 %v5594
  %v6108 = vunpack.c.l.b16 %v5595
  %v6109 = vunpack.c.l.b16 %v5596
  %v6110 = vunpack.c.l.b16 %v5597
  %v6111 = vunpack.c.l.b16 %v5598
  %v6112 = vunpack.c.l.b16 %v5599
  %v6113 = vunpack.c.l.b16 %v5600
  %v6114 = vunpack.c.l.b16 %v5601
  %v6115 = vunpack.c.l.b16 %v5602
  %v6116 = vunpack.c.l.b16 %v5603
  %v6117 = vunpack.c.l.b16 %v5604
  %v6118 = vunpack.c.l.b16 %v5605
  %v6119 = vunpack.c.l.b16 %v5606
  %v6120 = vunpack.c.l.b16 %v5607
  %v6121 = vunpack.c.l.b16 %v5608
  %v6122 = vunpack.c.l.b16 %v5609
  %v6123 = vunpack.c.l.b16 %v5610
  %v6124 = vunpack.c.l.b16 %v5611
  %v6125 = vunpack.c.l.b16 %v5612
  %v6126 = vunpack.c.l.b16 %v5613
  %v6127 = vunpack.c.l.b16 %v5614
  %v6128 = vunpack.c.l.b16 %v5615
  %v6129 = vunpack.c.l.b16 %v5616
  %v6130 = vunpack.c.l.b16 %v5617
  %v6131 = vunpack.c.l.b16 %v5618
  %v6132 = vunpack.c.l.b16 %v5619
  %v6133 = vunpack.c.l.b16 %v5620
  %v6134 = vunpack.c.l.b16 %v5621
  %v6135 = vunpack.c.l.b16 %v5622
  %v6136 = vunpack.c.l.b16 %v5623
  %v6137 = vunpack.c.l.b16 %v5624
  %v6138 = vunpack.c.l.b16 %v5625
  %v6139 = vunpack.c.l.b16 %v5626
  %v6140 = vunpack.c.l.b16 %v5627
  %v6141 = vunpack.c.l.b16 %v5628
  %v6142 = vunpack.c.l.b16 %v5629
  %v6143 = vunpack.c.l.b16 %v5630
  %v6144 = vunpack.c.l.b16 %v5631
  %v6145 = vunpack.c.l.b16 %v5632
  %v6146 = vunpack.c.l.b16 %v5633
  %v6147 = vunpack.c.l.b16 %v5634
  %v6148 = vunpack.c.l.b16 %v5635
  %v6149 = vunpack.c.l.b16 %v5636
  %v6150 = vunpack.c.l.b16 %v5637
  %v6151 = vunpack.c.l.b16 %v5638
  %v6152 = vunpack.c.l.b16 %v5639
  %v6153 = vunpack.c.l.b16 %v5640
  %v6154 = vunpack.c.l.b16 %v5641
  %v6155 = vunpack.c.l.b16 %v5642
  %v6156 = vunpack.c.l.b16 %v5643
  %v6157 = vunpack.c.l.b16 %v5644
  %v6158 = vunpack.c.l.b16 %v5645
  %v6159 = vunpack.c.l.b16 %v5646
  %v6160 = vunpack.c.l.b16 %v5647
  %v6161 = vunpack.c.l.b16 %v5648
  %v6162 = vunpack.c.l.b16 %v5649
  %v6163 = vunpack.c.l.b16 %v5650
  %v6164 = vunpack.c.l.b16 %v5651
  %v6165 = vunpack.c.l.b16 %v5652
  %v6166 = vunpack.c.l.b16 %v5653
  %v6167 = vunpack.c.l.b16 %v5654
  %v6168 = vunpack.c.l.b16 %v5655
  %v6169 = vunpack.c.l.b16 %v5656
  %v6170 = vunpack.c.l.b16 %v5657
  %v6171 = vunpack.c.l.b16 %v5658
  %v6172 = vunpack.c.l.b16 %v5659
  %v6173 = vunpack.c.l.b16 %v5660
  %v6174 = vunpack.c.l.b16 %v5661
  %v6175 = vunpack.c.l.b16 %v5662
  %v6176 = vunpack.c.l.b16 %v5663
  %v6177 = vunpack.c.l.b16 %v5664
  %v6178 = vunpack.c.l.b16 %v5665
  %v6179 = vunpack.c.l.b16 %v5666
  %v6180 = vunpack.c.l.b16 %v5667
  %v6181 = vunpack.c.l.b16 %v5668
  %v6182 = vunpack.c.l.b16 %v5669
  %v6183 = vunpack.c.l.b16 %v5670
  %v6184 = vunpack.c.l.b16 %v5671
  %v6185 = vunpack.c.l.b16 %v5672
  %v6186 = vunpack.c.l.b16 %v5673
  %v6187 = vunpack.c.l.b16 %v5674
  %v6188 = vunpack.c.l.b16 %v5675
  %v6189 = vunpack.c.l.b16 %v5676
  %v6190 = vunpack.c.l.b16 %v5677
  %v6191 = vunpack.c.l.b16 %v5678
  %v6192 = vunpack.c.l.b16 %v5679
  %v6193 = vunpack.c.l.b16 %v5680
  %v6194 = vunpack.c.l.b16 %v5681
  %v6195 = vunpack.c.l.b16 %v5682
  %v6196 = vunpack.c.l.b16 %v5683
  %v6197 = vunpack.c.l.b16 %v5684
  %v6198 = vunpack.c.l.b16 %v5685
  %v6199 = vunpack.c.l.b16 %v5686
  %v6200 = vunpack.c.l.b16 %v5687
  %v6201 = vunpack.c.l.b16 %v5688
  %v6202 = vunpack.c.l.b16 %v5689
  %v6203 = vunpack.c.l.b16 %v5690
  %v6204 = vunpack.c.l.b16 %v5691
  %v6205 = vunpack.c.l.b16 %v5692
  %v6206 = vunpack.c.l.b16 %v5693
  %v6207 = vunpack.c.l.b16 %v5694
  %v6208 = vunpack.c.l.b16 %v5695
  %v6209 = vunpack.c.l.b16 %v5696
  %v6210 = vunpack.c.l.b16 %v5697
  %v6211 = vunpack.c.l.b16 %v5698
  %v6212 = vunpack.c.l.b16 %v5699
  %v6213 = vunpack.c.l.b16 %v5700
  %v6214 = vunpack.c.l.b16 %v5701
  %v6215 = vunpack.c.l.b16 %v5702
  %v6216 = vunpack.c.l.b16 %v5703
  %v6217 = vunpack.c.l.b16 %v5704
  %v6218 = vunpack.c.l.b16 %v5705
  %v6219 = vunpack.c.l.b16 %v5706
  %v6220 = vunpack.c.l.b16 %v5707
  %v6221 = vunpack.c.l.b16 %v5708
  %v6222 = vunpack.c.l.b16 %v5709
  %v6223 = vunpack.c.l.b16 %v5710
  %v6224 = vunpack.c.l.b16 %v5711
  %v6225 = vunpack.c.l.b16 %v5712
  %v6226 = vunpack.c.l.b16 %v5713
  %v6227 = vunpack.c.l.b16 %v5714
  %v6228 = vunpack.c.l.b16 %v5715
  %v6229 = vunpack.c.l.b16 %v5716
  %v6230 = vunpack.c.l.b16 %v5717
  %v6231 = vunpack.c.l.b16 %v5718
  %v6232 = vunpack.c.l.b16 %v5719
  %v6233 = vunpack.c.l.b16 %v5720
  %v6234 = vunpack.c.l.b16 %v5721
  %v6235 = vunpack.c.l.b16 %v5722
  %v6236 = vunpack.c.l.b16 %v5723
  %v6237 = vunpack.c.l.b16 %v5724
  %v6238 = vunpack.c.l.b16 %v5725
  %v6239 = vunpack.c.l.b16 %v5726
  %v6240 = vunpack.c.l.b16 %v5727
  %v6241 = vunpack.c.l.b16 %v5728
  %v6242 = vunpack.c.l.b16 %v5729
  %v6243 = vunpack.c.l.b16 %v5730
  %v6244 = vunpack.c.l.b16 %v5731
  %v6245 = vunpack.c.l.b16 %v5732
  %v6246 = vunpack.c.l.b16 %v5733
  %v6247 = vunpack.c.l.b16 %v5734
  %v6248 = vunpack.c.l.b16 %v5735
  %v6249 = vunpack.c.l.b16 %v5736
  %v6250 = vunpack.c.l.b16 %v5737
  %v6251 = vunpack.c.l.b16 %v5738
  %v6252 = vunpack.c.l.b16 %v5739
  %v6253 = vunpack.c.l.b16 %v5740
  %v6254 = vunpack.c.l.b16 %v5741
  %v6255 = vunpack.c.l.b16 %v5742
  %v6256 = vunpack.c.l.b16 %v5743
  %v6257 = vunpack.c.l.b16 %v5744
  %v6258 = vunpack.c.l.b16 %v5745
  %v6259 = vunpack.c.l.b16 %v5746
  %v6260 = vunpack.c.l.b16 %v5747
  %v6261 = vunpack.c.l.b16 %v5748
  %v6262 = vunpack.c.l.b16 %v5749
  %v6263 = vunpack.c.l.b16 %v5750
  %v6264 = vunpack.c.l.b16 %v5751
  %v6265 = vunpack.c.l.b16 %v5752
  %v6266 = vunpack.c.l.b16 %v5753
  %v6267 = vunpack.c.l.b16 %v5754
  %v6268 = vunpack.c.l.b16 %v5755
  %v6269 = vunpack.c.l.b16 %v5756
  %v6270 = vunpack.c.l.b16 %v5757
  %v6271 = vunpack.c.l.b16 %v5758
  %v6272 = vunpack.c.l.b16 %v5759
  %v6273 = vunpack.c.l.b16 %v5760
  %v6274 = vunpack.c.l.b16 %v5761
  %v6275 = vunpack.c.l.b16 %v5762
  %v6276 = vunpack.c.l.b16 %v5763
  %v6277 = vunpack.c.l.b16 %v5764
  %v6278 = vunpack.c.l.b16 %v5765
  %v6279 = vunpack.c.l.b16 %v5766
  %v6280 = vunpack.c.l.b16 %v5767
  %v6281 = vunpack.c.l.b16 %v5768
  %v6282 = vpack.c.b16 %v6027, %v6026
  %v6283 = vpack.c.b16 %v6029, %v6028
  %v6284 = vpack.c.b16 %v6031, %v6030
  %v6285 = vpack.c.b16 %v6033, %v6032
  %v6286 = vpack.c.b16 %v6035, %v6034
  %v6287 = vpack.c.b16 %v6037, %v6036
  %v6288 = vpack.c.b16 %v6039, %v6038
  %v6289 = vpack.c.b16 %v6041, %v6040
  %v6290 = vpack.c.b16 %v6043, %v6042
  %v6291 = vpack.c.b16 %v6045, %v6044
  %v6292 = vpack.c.b16 %v6047, %v6046
  %v6293 = vpack.c.b16 %v6049, %v6048
  %v6294 = vpack.c.b16 %v6051, %v6050
  %v6295 = vpack.c.b16 %v6053, %v6052
  %v6296 = vpack.c.b16 %v6055, %v6054
  %v6297 = vpack.c.b16 %v6057, %v6056
  %v6298 = vpack.c.b16 %v6059, %v6058
  %v6299 = vpack.c.b16 %v6061, %v6060
  %v6300 = vpack.c.b16 %v6063, %v6062
  %v6301 = vpack.c.b16 %v6065, %v6064
  %v6302 = vpack.c.b16 %v6067, %v6066
  %v6303 = vpack.c.b16 %v6069, %v6068
  %v6304 = vpack.c.b16 %v6071, %v6070
  %v6305 = vpack.c.b16 %v6073, %v6072
  %v6306 = vpack.c.b16 %v6075, %v6074
  %v6307 = vpack.c.b16 %v6077, %v6076
  %v6308 = vpack.c.b16 %v6079, %v6078
  %v6309 = vpack.c.b16 %v6081, %v6080
  %v6310 = vpack.c.b16 %v6083, %v6082
  %v6311 = vpack.c.b16 %v6085, %v6084
  %v6312 = vpack.c.b16 %v6087, %v6086
  %v6313 = vpack.c.b16 %v6089, %v6088
  %v6314 = vpack.c.b16 %v6091, %v6090
  %v6315 = vpack.c.b16 %v6093, %v6092
  %v6316 = vpack.c.b16 %v6095, %v6094
  %v6317 = vpack.c.b16 %v6097, %v6096
  %v6318 = vpack.c.b16 %v6099, %v6098
  %v6319 = vpack.c.b16 %v6101, %v6100
  %v6320 = vpack.c.b16 %v6103, %v6102
  %v6321 = vpack.c.b16 %v6105, %v6104
  %v6322 = vpack.c.b16 %v6107, %v6106
  %v6323 = vpack.c.b16 %v6109, %v6108
  %v6324 = vpack.c.b16 %v6111, %v6110
  %v6325 = vpack.c.b16 %v6113, %v6112
  %v6326 = vpack.c.b16 %v6115, %v6114
  %v6327 = vpack.c.b16 %v6117, %v6116
  %v6328 = vpack.c.b16 %v6119, %v6118
  %v6329 = vpack.c.b16 %v6121, %v6120
  %v6330 = vpack.c.b16 %v6123, %v6122
  %v6331 = vpack.c.b16 %v6125, %v6124
  %v6332 = vpack.c.b16 %v6127, %v6126
  %v6333 = vpack.c.b16 %v6129, %v6128
  %v6334 = vpack.c.b16 %v6131, %v6130
  %v6335 = vpack.c.b16 %v6133, %v6132
  %v6336 = vpack.c.b16 %v6135, %v6134
  %v6337 = vpack.c.b16 %v6137, %v6136
  %v6338 = vpack.c.b16 %v6139, %v6138
  %v6339 = vpack.c.b16 %v6141, %v6140
  %v6340 = vpack.c.b16 %v6143, %v6142
  %v6341 = vpack.c.b16 %v6145, %v6144
  %v6342 = vpack.c.b16 %v6147, %v6146
  %v6343 = vpack.c.b16 %v6149, %v6148
  %v6344 = vpack.c.b16 %v6151, %v6150
  %v6345 = vpack.c.b16 %v6153, %v6152
  %v6346 = vpack.c.b16 %v6155, %v6154
  %v6347 = vpack.c.b16 %v6157, %v6156
  %v6348 = vpack.c.b16 %v6159, %v6158
  %v6349 = vpack.c.b16 %v6161, %v6160
  %v6350 = vpack.c.b16 %v6163, %v6162
  %v6351 = vpack.c.b16 %v6165, %v6164
  %v6352 = vpack.c.b16 %v6167, %v6166
  %v6353 = vpack.c.b16 %v6169, %v6168
  %v6354 = vpack.c.b16 %v6171, %v6170
  %v6355 = vpack.c.b16 %v6173, %v6172
  %v6356 = vpack.c.b16 %v6175, %v6174
  %v6357 = vpack.c.b16 %v6177, %v6176
  %v6358 = vpack.c.b16 %v6179, %v6178
  %v6359 = vpack.c.b16 %v6181, %v6180
  %v6360 = vpack.c.b16 %v6183, %v6182
  %v6361 = vpack.c.b16 %v6185, %v6184
  %v6362 = vpack.c.b16 %v6187, %v6186
  %v6363 = vpack.c.b16 %v6189, %v6188
  %v6364 = vpack.c.b16 %v6191, %v6190
  %v6365 = vpack.c.b16 %v6193, %v6192
  %v6366 = vpack.c.b16 %v6195, %v6194
  %v6367 = vpack.c.b16 %v6197, %v6196
  %v6368 = vpack.c.b16 %v6199, %v6198
  %v6369 = vpack.c.b16 %v6201, %v6200
  %v6370 = vpack.c.b16 %v6203, %v6202
  %v6371 = vpack.c.b16 %v6205, %v6204
  %v6372 = vpack.c.b16 %v6207, %v6206
  %v6373 = vpack.c.b16 %v6209, %v6208
  %v6374 = vpack.c.b16 %v6211, %v6210
  %v6375 = vpack.c.b16 %v6213, %v6212
  %v6376 = vpack.c.b16 %v6215, %v6214
  %v6377 = vpack.c.b16 %v6217, %v6216
  %v6378 = vpack.c.b16 %v6219, %v6218
  %v6379 = vpack.c.b16 %v6221, %v6220
  %v6380 = vpack.c.b16 %v6223, %v6222
  %v6381 = vpack.c.b16 %v6225, %v6224
  %v6382 = vpack.c.b16 %v6227, %v6226
  %v6383 = vpack.c.b16 %v6229, %v6228
  %v6384 = vpack.c.b16 %v6231, %v6230
  %v6385 = vpack.c.b16 %v6233, %v6232
  %v6386 = vpack.c.b16 %v6235, %v6234
  %v6387 = vpack.c.b16 %v6237, %v6236
  %v6388 = vpack.c.b16 %v6239, %v6238
  %v6389 = vpack.c.b16 %v6241, %v6240
  %v6390 = vpack.c.b16 %v6243, %v6242
  %v6391 = vpack.c.b16 %v6245, %v6244
  %v6392 = vpack.c.b16 %v6247, %v6246
  %v6393 = vpack.c.b16 %v6249, %v6248
  %v6394 = vpack.c.b16 %v6251, %v6250
  %v6395 = vpack.c.b16 %v6253, %v6252
  %v6396 = vpack.c.b16 %v6255, %v6254
  %v6397 = vpack.c.b16 %v6257, %v6256
  %v6398 = vpack.c.b16 %v6259, %v6258
  %v6399 = vpack.c.b16 %v6261, %v6260
  %v6400 = vpack.c.b16 %v6263, %v6262
  %v6401 = vpack.c.b16 %v6265, %v6264
  %v6402 = vpack.c.b16 %v6267, %v6266
  %v6403 = vpack.c.b16 %v6269, %v6268
  %v6404 = vpack.c.b16 %v6271, %v6270
  %v6405 = vpack.c.b16 %v6273, %v6272
  %v6406 = vpack.c.b16 %v6275, %v6274
  %v6407 = vpack.c.b16 %v6277, %v6276
  %v6408 = vpack.c.b16 %v6279, %v6278
  %v6409 = vpack.c.b16 %v6281, %v6280
  %6538 = vmatpush.bf16.msra.mxu0 %v6289
  %6539 = vmatpush.bf16.msra.mxu0 %v6288
  %6540 = vmatpush.bf16.msra.mxu0 %v6287
  %6541 = vmatpush.bf16.msra.mxu0 %v6286
  %6542 = vmatpush.bf16.msra.mxu0 %v6285
  %6543 = vmatpush.bf16.msra.mxu0 %v6284
  %6544 = vmatpush.bf16.msra.mxu0 %v6283
  %6545 = vmatpush.bf16.msra.mxu0 %v6282
  %6546 = vmatmul.bf16.gmra.mxu0 %v5497
  %v6547 = vpop.f32.mrf.mxu0
  %v6548 = vpop.f32.mrf.mxu0
  %v6549 = vadd.f32 %v5769, %v6548
  %6550 = vdwg.mxu0
  %6551 = vmatpush.bf16.msra.mxu0 %v6297
  %6552 = vmatpush.bf16.msra.mxu0 %v6296
  %6553 = vmatpush.bf16.msra.mxu0 %v6295
  %6554 = vmatpush.bf16.msra.mxu0 %v6294
  %6555 = vmatpush.bf16.msra.mxu0 %v6293
  %6556 = vmatpush.bf16.msra.mxu0 %v6292
  %6557 = vmatpush.bf16.msra.mxu0 %v6291
  %6558 = vmatpush.bf16.msra.mxu0 %v6290
  %6559 = vmatmul.bf16.gmra.mxu0 %v5498
  %v6560 = vpop.f32.mrf.mxu0
  %v6561 = vpop.f32.mrf.mxu0
  %v6562 = vadd.f32 %v6549, %v6561
  %6563 = vdwg.mxu0
  %6564 = vmatpush.bf16.msra.mxu0 %v6305
  %6565 = vmatpush.bf16.msra.mxu0 %v6304
  %6566 = vmatpush.bf16.msra.mxu0 %v6303
  %6567 = vmatpush.bf16.msra.mxu0 %v6302
  %6568 = vmatpush.bf16.msra.mxu0 %v6301
  %6569 = vmatpush.bf16.msra.mxu0 %v6300
  %6570 = vmatpush.bf16.msra.mxu0 %v6299
  %6571 = vmatpush.bf16.msra.mxu0 %v6298
  %6572 = vmatmul.bf16.gmra.mxu0 %v5499
  %v6573 = vpop.f32.mrf.mxu0
  %v6574 = vpop.f32.mrf.mxu0
  %v6575 = vadd.f32 %v6562, %v6574
  %6576 = vdwg.mxu0
  %6577 = vmatpush.bf16.msra.mxu0 %v6313
  %6578 = vmatpush.bf16.msra.mxu0 %v6312
  %6579 = vmatpush.bf16.msra.mxu0 %v6311
  %6580 = vmatpush.bf16.msra.mxu0 %v6310
  %6581 = vmatpush.bf16.msra.mxu0 %v6309
  %6582 = vmatpush.bf16.msra.mxu0 %v6308
  %6583 = vmatpush.bf16.msra.mxu0 %v6307
  %6584 = vmatpush.bf16.msra.mxu0 %v6306
  %6585 = vmatmul.bf16.gmra.mxu0 %v5500
  %v6586 = vpop.f32.mrf.mxu0
  %v6587 = vpop.f32.mrf.mxu0
  %v6588 = vadd.f32 %v6575, %v6587
  %6589 = vdwg.mxu0
  %6590 = vmatpush.bf16.msra.mxu0 %v6321
  %6591 = vmatpush.bf16.msra.mxu0 %v6320
  %6592 = vmatpush.bf16.msra.mxu0 %v6319
  %6593 = vmatpush.bf16.msra.mxu0 %v6318
  %6594 = vmatpush.bf16.msra.mxu0 %v6317
  %6595 = vmatpush.bf16.msra.mxu0 %v6316
  %6596 = vmatpush.bf16.msra.mxu0 %v6315
  %6597 = vmatpush.bf16.msra.mxu0 %v6314
  %6598 = vmatmul.bf16.gmra.mxu0 %v5501
  %v6599 = vpop.f32.mrf.mxu0
  %v6600 = vpop.f32.mrf.mxu0
  %v6601 = vadd.f32 %v6588, %v6600
  %6602 = vdwg.mxu0
  %6603 = vmatpush.bf16.msra.mxu0 %v6329
  %6604 = vmatpush.bf16.msra.mxu0 %v6328
  %6605 = vmatpush.bf16.msra.mxu0 %v6327
  %6606 = vmatpush.bf16.msra.mxu0 %v6326
  %6607 = vmatpush.bf16.msra.mxu0 %v6325
  %6608 = vmatpush.bf16.msra.mxu0 %v6324
  %6609 = vmatpush.bf16.msra.mxu0 %v6323
  %6610 = vmatpush.bf16.msra.mxu0 %v6322
  %6611 = vmatmul.bf16.gmra.mxu0 %v5502
  %v6612 = vpop.f32.mrf.mxu0
  %v6613 = vpop.f32.mrf.mxu0
  %v6614 = vadd.f32 %v6601, %v6613
  %6615 = vdwg.mxu0
  %6616 = vmatpush.bf16.msra.mxu0 %v6337
  %6617 = vmatpush.bf16.msra.mxu0 %v6336
  %6618 = vmatpush.bf16.msra.mxu0 %v6335
  %6619 = vmatpush.bf16.msra.mxu0 %v6334
  %6620 = vmatpush.bf16.msra.mxu0 %v6333
  %6621 = vmatpush.bf16.msra.mxu0 %v6332
  %6622 = vmatpush.bf16.msra.mxu0 %v6331
  %6623 = vmatpush.bf16.msra.mxu0 %v6330
  %6624 = vmatmul.bf16.gmra.mxu0 %v5503
  %v6625 = vpop.f32.mrf.mxu0
  %v6626 = vpop.f32.mrf.mxu0
  %v6627 = vadd.f32 %v6614, %v6626
  %6628 = vdwg.mxu0
  %6629 = vmatpush.bf16.msra.mxu0 %v6345
  %6630 = vmatpush.bf16.msra.mxu0 %v6344
  %6631 = vmatpush.bf16.msra.mxu0 %v6343
  %6632 = vmatpush.bf16.msra.mxu0 %v6342
  %6633 = vmatpush.bf16.msra.mxu0 %v6341
  %6634 = vmatpush.bf16.msra.mxu0 %v6340
  %6635 = vmatpush.bf16.msra.mxu0 %v6339
  %6636 = vmatpush.bf16.msra.mxu0 %v6338
  %6637 = vmatmul.bf16.gmra.mxu0 %v5504
  %v6638 = vpop.f32.mrf.mxu0
  %v6639 = vpop.f32.mrf.mxu0
  %v6640 = vadd.f32 %v6627, %v6639
  %6641 = vdwg.mxu0
  %6642 = vmatpush.bf16.msra.mxu0 %v6353
  %6643 = vmatpush.bf16.msra.mxu0 %v6352
  %6644 = vmatpush.bf16.msra.mxu0 %v6351
  %6645 = vmatpush.bf16.msra.mxu0 %v6350
  %6646 = vmatpush.bf16.msra.mxu0 %v6349
  %6647 = vmatpush.bf16.msra.mxu0 %v6348
  %6648 = vmatpush.bf16.msra.mxu0 %v6347
  %6649 = vmatpush.bf16.msra.mxu0 %v6346
  %6650 = vmatmul.bf16.gmra.mxu0 %v5505
  %v6651 = vpop.f32.mrf.mxu0
  %v6652 = vpop.f32.mrf.mxu0
  %v6653 = vadd.f32 %v6640, %v6652
  %6654 = vdwg.mxu0
  %6655 = vmatpush.bf16.msra.mxu0 %v6361
  %6656 = vmatpush.bf16.msra.mxu0 %v6360
  %6657 = vmatpush.bf16.msra.mxu0 %v6359
  %6658 = vmatpush.bf16.msra.mxu0 %v6358
  %6659 = vmatpush.bf16.msra.mxu0 %v6357
  %6660 = vmatpush.bf16.msra.mxu0 %v6356
  %6661 = vmatpush.bf16.msra.mxu0 %v6355
  %6662 = vmatpush.bf16.msra.mxu0 %v6354
  %6663 = vmatmul.bf16.gmra.mxu0 %v5506
  %v6664 = vpop.f32.mrf.mxu0
  %v6665 = vpop.f32.mrf.mxu0
  %v6666 = vadd.f32 %v6653, %v6665
  %6667 = vdwg.mxu0
  %6668 = vmatpush.bf16.msra.mxu0 %v6369
  %6669 = vmatpush.bf16.msra.mxu0 %v6368
  %6670 = vmatpush.bf16.msra.mxu0 %v6367
  %6671 = vmatpush.bf16.msra.mxu0 %v6366
  %6672 = vmatpush.bf16.msra.mxu0 %v6365
  %6673 = vmatpush.bf16.msra.mxu0 %v6364
  %6674 = vmatpush.bf16.msra.mxu0 %v6363
  %6675 = vmatpush.bf16.msra.mxu0 %v6362
  %6676 = vmatmul.bf16.gmra.mxu0 %v5507
  %v6677 = vpop.f32.mrf.mxu0
  %v6678 = vpop.f32.mrf.mxu0
  %v6679 = vadd.f32 %v6666, %v6678
  %6680 = vdwg.mxu0
  %6681 = vmatpush.bf16.msra.mxu0 %v6377
  %6682 = vmatpush.bf16.msra.mxu0 %v6376
  %6683 = vmatpush.bf16.msra.mxu0 %v6375
  %6684 = vmatpush.bf16.msra.mxu0 %v6374
  %6685 = vmatpush.bf16.msra.mxu0 %v6373
  %6686 = vmatpush.bf16.msra.mxu0 %v6372
  %6687 = vmatpush.bf16.msra.mxu0 %v6371
  %6688 = vmatpush.bf16.msra.mxu0 %v6370
  %6689 = vmatmul.bf16.gmra.mxu0 %v5508
  %v6690 = vpop.f32.mrf.mxu0
  %v6691 = vpop.f32.mrf.mxu0
  %v6692 = vadd.f32 %v6679, %v6691
  %6693 = vdwg.mxu0
  %6694 = vmatpush.bf16.msra.mxu0 %v6385
  %6695 = vmatpush.bf16.msra.mxu0 %v6384
  %6696 = vmatpush.bf16.msra.mxu0 %v6383
  %6697 = vmatpush.bf16.msra.mxu0 %v6382
  %6698 = vmatpush.bf16.msra.mxu0 %v6381
  %6699 = vmatpush.bf16.msra.mxu0 %v6380
  %6700 = vmatpush.bf16.msra.mxu0 %v6379
  %6701 = vmatpush.bf16.msra.mxu0 %v6378
  %6702 = vmatmul.bf16.gmra.mxu0 %v5509
  %v6703 = vpop.f32.mrf.mxu0
  %v6704 = vpop.f32.mrf.mxu0
  %v6705 = vadd.f32 %v6692, %v6704
  %6706 = vdwg.mxu0
  %6707 = vmatpush.bf16.msra.mxu0 %v6393
  %6708 = vmatpush.bf16.msra.mxu0 %v6392
  %6709 = vmatpush.bf16.msra.mxu0 %v6391
  %6710 = vmatpush.bf16.msra.mxu0 %v6390
  %6711 = vmatpush.bf16.msra.mxu0 %v6389
  %6712 = vmatpush.bf16.msra.mxu0 %v6388
  %6713 = vmatpush.bf16.msra.mxu0 %v6387
  %6714 = vmatpush.bf16.msra.mxu0 %v6386
  %6715 = vmatmul.bf16.gmra.mxu0 %v5510
  %v6716 = vpop.f32.mrf.mxu0
  %v6717 = vpop.f32.mrf.mxu0
  %v6718 = vadd.f32 %v6705, %v6717
  %6719 = vdwg.mxu0
  %6720 = vmatpush.bf16.msra.mxu0 %v6401
  %6721 = vmatpush.bf16.msra.mxu0 %v6400
  %6722 = vmatpush.bf16.msra.mxu0 %v6399
  %6723 = vmatpush.bf16.msra.mxu0 %v6398
  %6724 = vmatpush.bf16.msra.mxu0 %v6397
  %6725 = vmatpush.bf16.msra.mxu0 %v6396
  %6726 = vmatpush.bf16.msra.mxu0 %v6395
  %6727 = vmatpush.bf16.msra.mxu0 %v6394
  %6728 = vmatmul.bf16.gmra.mxu0 %v5511
  %v6729 = vpop.f32.mrf.mxu0
  %v6730 = vpop.f32.mrf.mxu0
  %v6731 = vadd.f32 %v6718, %v6730
  %6732 = vdwg.mxu0
  %6733 = vmatpush.bf16.msra.mxu0 %v6409
  %6734 = vmatpush.bf16.msra.mxu0 %v6408
  %6735 = vmatpush.bf16.msra.mxu0 %v6407
  %6736 = vmatpush.bf16.msra.mxu0 %v6406
  %6737 = vmatpush.bf16.msra.mxu0 %v6405
  %6738 = vmatpush.bf16.msra.mxu0 %v6404
  %6739 = vmatpush.bf16.msra.mxu0 %v6403
  %6740 = vmatpush.bf16.msra.mxu0 %v6402
  %6741 = vmatmul.bf16.gmra.mxu0 %v5512
  %v6742 = vpop.f32.mrf.mxu0
  %v6743 = vpop.f32.mrf.mxu0
  %v6744 = vadd.f32 %v6731, %v6743
  %6745 = vdwg.mxu0
  %v6746 = vadd.f32 %v5004, %v6744
  %v6747 = vsel %vm479, %v6746, 0.0
  %6748 = vadd.xlane.f32.xlu0 %v6747
  %v6749 = vpop.xlane.xlu0 %6748
  %v6750 = vmul.f32 %v6749, %v2595
  %v6751 = vsub.f32 %v6746, %v6750
  %v6752 = vmul.f32 %v6751, %v6751
  %v6753 = vsel %vm479, %v6752, 0.0
  %6754 = vadd.xlane.f32.xlu0 %v6753
  %v6755 = vpop.xlane.xlu0 %6754
  %v6756 = vmul.f32 %v6755, %v2595
  %v6757 = vadd.f32 %v6756, 1e-05
  %v6758 = vrsqrt.pop %v6757
  %v6759 = vmul.f32 %v6758, %v6757
  %v6760 = vmul.f32 %v6759, %v6758
  %v6761 = vmul.f32 0.5, %v6760
  %v6762 = vsub.f32 1.5, %v6761
  %v6763 = vmul.f32 %v6758, %v6762
  %vm6764 = vweird.f32 %v6757
  %vm6765 = vweird.f32 %v6758
  %vm6766 = vmor %vm6764, %vm6765
  %v6767 = vsel %vm6766, %v6758, %v6763
  %v6768 = vmul.f32 %v6751, %v6767
  %v6769 = vperm.slane %v4453, 3
  %v6770 = vmul.f32 %v6768, %v6769
  %v6771 = vperm.slane %v4453, 4
  %v6772 = vadd.f32 %v6770, %v6771
  %v6773 = vld [vmem:[%s18] sm:$0xff]
  %v6774 = vld [vmem:[%s18 + $0x8] sm:$0xff]
  %v6775 = vld [vmem:[%s18 + $0x10] sm:$0xff]
  %v6776 = vld [vmem:[%s18 + $0x18] sm:$0xff]
  %v6777 = vld [vmem:[#allocation8] sm:$0x1]
  %v6779 = vperm.slane %v6777, 0
  %v6782 = vrot.slane %v6772, 6
  %v6783 = vsel %vm479, %v6782, 0
  %6785 = vmatpush.msra.mxu0 0.0
  %6786 = vmatpush.msra.mxu0 0.0
  %6787 = vmatpush.msra.mxu0 0.0
  %6788 = vmatpush.msra.mxu0 0.0
  %6789 = vmatpush.msra.mxu0 0.0
  %6790 = vmatpush.msra.mxu0 0.0
  %6791 = vmatpush.msra.mxu0 0.0
  %6792 = vmatpush.msra.mxu0 0.0
  %6793 = vmatpush.msra.mxu0 0.0
  %6794 = vmatpush.msra.mxu0 0.0
  %6795 = vmatpush.msra.mxu0 0.0
  %6796 = vmatpush.msra.mxu0 0.0
  %6797 = vmatpush.msra.mxu0 %v6776
  %6798 = vmatpush.msra.mxu0 %v6775
  %6799 = vmatpush.msra.mxu0 %v6774
  %6800 = vmatpush.msra.mxu0 %v6773
  %6801 = vmatmul.f32.gmra.mxu0 %v6783
  %v6802 = vpop.f32.mrf.mxu0
  %v6803 = vadd.f32 %v6779, %v6802
  %6804 = vdwg.mxu0
  %vm6805 = vcmask 1024
  %6806 = vst.msk [vmem:[%s24] sm:$0x3] %vm6805, %v6803
  // Predicated region
  $region158: #{time_series_model.1} parent=0 // pred_check
    _
  $region159: #{time_series_model.1} parent=0 // pred_check_branch
    %6808 = sbr.rel (0) target = $region161
  $region160: #{time_series_model.1} parent=0 // pred_region
    _
  $region161: #{time_series_model.1} parent=0 // pred_fallthru
    _
  // Predicated region
  $region162: #{time_series_model.1} parent=0 // pred_check
    _
  $region163: #{time_series_model.1} parent=0 // pred_check_branch
    %6810 = sbr.rel (0) target = $region165
  $region164: #{time_series_model.1} parent=0 // pred_region
    _
  $region165: #{time_series_model.1} parent=0 // pred_fallthru
    _
  %6811 = vsyncmov [#allocation7]
  %s6812 = vpop.sfrf %6811
  %p6813 = scmp.eq.s32.totalorder %s6812, 0
  %p6814 = pneg %p6813
  %6816 = shalt.err (%p6814)
  %s6817 = scalar_lea.sflag [#allocation7], 1
  %6818 = vsyncmov %s6817
  %s6819 = vpop.sfrf %6818
  %p6820 = scmp.eq.s32.totalorder %s6819, 0
  %p6821 = pneg %p6820
  %6823 = shalt.err (%p6821)
  %s6824 = scalar_lea.sflag [#allocation7], 2
  %6825 = vsyncmov %s6824
  %s6826 = vpop.sfrf %6825
  %p6827 = scmp.eq.s32.totalorder %s6826, 0
  %p6828 = pneg %p6827
  %6830 = shalt.err (%p6828)
  %s6831 = scalar_lea.sflag [#allocation7], 3
  %6832 = vsyncmov %s6831
  %s6833 = vpop.sfrf %6832
  %p6834 = scmp.eq.s32.totalorder %s6833, 0
  %p6835 = pneg %p6834
  %6837 = shalt.err (%p6835)

</llo_original>
